<compile_context>
chip_gen: v7x
topology: tpu7x:2x2x1
jax: 0.10.0
libtpu: 0.0.40
codegen_flags: <defaults>
</compile_context>

<pallas_src>
import jax
import jax.numpy as jnp
from jax.experimental import pallas as pl
from jax.experimental.pallas import tpu as pltpu

EPS = 1e-5                       # nn.InstanceNorm2d default eps
INV_SQRT2 = 0.7071067811865476   # 1/sqrt(2) for exact (erf) GELU
LANES = 128


def _gelu(x):
    # PyTorch nn.GELU() default: exact erf formulation
    return 0.5 * x * (1.0 + jax.lax.erf(x * INV_SQRT2))


def _round_up(n, m):
    return ((n + m - 1) // m) * m


# ---------------------------------------------------------------------------
# Fused kernel (one grid step = one batch element).
#
# Sub-pixel decomposition: the ConvTranspose2d(k=2,s=2) output y (H2, W2, C)
# is four (H, W, C) parity grids a[p][q] with
#   y[2i+p, 2j+q, :] = x[i, j, :] @ wt[:, :, p, q]        (bias cancels in IN)
# After InstanceNorm+GELU the grids are staged into the parity decomposition
# of the replicate-padded image:
#   P[p'][q'][i', j', :] = y_pad[2i'+p', 2j'+q', :],   P buffers (H+1, W+1, C)
# so that for output parity (p, q) and tap (kh, kw) the conv source is the
# static window  P[(p+kh)%2][(q+kw)%2][(p+kh)//2:+H, (q+kw)//2:+W].
# ---------------------------------------------------------------------------
def ginka_upsample_fused_kernel(x_ref, wt_ref, wc_ref, o_ref, p_ref, patch_ref):
    _, H, W, Cin = x_ref.shape
    Cp = o_ref.shape[-1]          # lane-padded channels (multiple of 128)
    HW = H * W
    n_pix = 4.0 * HW              # H2 * W2 spatial positions per instance

    # ---- ConvTranspose2d(k=2, s=2): one bf16 MXU matmul over all 4 parities
    x2 = x_ref[0].reshape(HW, Cin)                              # bf16 (HW, Cin)
    y4 = jnp.dot(x2, wt_ref[...],
                 preferred_element_type=jnp.float32)            # f32 (HW, 4Cp)
    # column block k = 2*p + q holds parity grid (row parity p, col parity q)

    # ---- InstanceNorm #1: one-pass f32 stats folded over the 4 parity blocks
    s = jnp.sum(y4, axis=0, keepdims=True)                      # (1, 4Cp)
    ss = jnp.sum(y4 * y4, axis=0, keepdims=True)                # (1, 4Cp)
    sC = s[:, 0:Cp] + s[:, Cp:2 * Cp] + s[:, 2 * Cp:3 * Cp] + s[:, 3 * Cp:4 * Cp]
    ssC = ss[:, 0:Cp] + ss[:, Cp:2 * Cp] + ss[:, 2 * Cp:3 * Cp] + ss[:, 3 * Cp:4 * Cp]
    mean1 = sC / n_pix
    var1 = jnp.maximum(ssC / n_pix - mean1 * mean1, 0.0)
    inv1 = jax.lax.rsqrt(var1 + EPS)

    # ---- per parity: normalize + GELU, stage into the padded parity grids ---
    for k in range(4):
        p, q = k // 2, k % 2
        ak = _gelu((y4[:, k * Cp:(k + 1) * Cp] - mean1) * inv1)
        ak = ak.astype(p_ref.dtype).reshape(H, W, Cp)           # bf16 (H, W, Cp)
        rb = 0 if p == 0 else H - 1     # replicated border row (source, in a)
        cb = 0 if q == 0 else W - 1     # replicated border col (source, in a)
        ro = 0 if p == 0 else H         # border row (dest, in P)
        co = 0 if q == 0 else W         # border col (dest, in P)
        # interior / row border / col border / corner (disjoint, cover P fully)
        p_ref[2 * (1 - p) + (1 - q), p:p + H, q:q + W, :] = ak
        p_ref[2 * p + (1 - q), ro:ro + 1, q:q + W, :] = ak[rb:rb + 1, :, :]
        p_ref[2 * (1 - p) + q, p:p + H, co:co + 1, :] = ak[:, cb:cb + 1, :]
        p_ref[2 * p + q, ro:ro + 1, co:co + 1, :] = ak[rb:rb + 1, cb:cb + 1, :]

    # ---- 3x3 conv (replicate pad): one fat im2col matmul per output parity --
    s2 = jnp.zeros((1, Cp), jnp.float32)
    ss2 = jnp.zeros((1, Cp), jnp.float32)
    for k in range(4):
        p, q = k // 2, k % 2
        for kh in range(3):
            rp, rs = (p + kh) % 2, (p + kh) // 2
            for kw in range(3):
                cq, cs = (q + kw) % 2, (q + kw) // 2
                t = kh * 3 + kw
                src = p_ref[2 * rp + cq, rs:rs + H, cs:cs + W, :]   # (H, W, Cp)
                patch_ref[:, t * Cp:(t + 1) * Cp] = src.reshape(HW, Cp)
        zk = jnp.dot(patch_ref[...], wc_ref[...],
                     preferred_element_type=jnp.float32)            # f32 (HW, Cp)
        o_ref[0, k] = zk
        s2 = s2 + jnp.sum(zk, axis=0, keepdims=True)
        ss2 = ss2 + jnp.sum(zk * zk, axis=0, keepdims=True)

    # ---- InstanceNorm #2 (one-pass) + GELU, in place on the output block ----
    mean2 = s2 / n_pix
    var2 = jnp.maximum(ss2 / n_pix - mean2 * mean2, 0.0)
    inv2 = jax.lax.rsqrt(var2 + EPS)
    for k in range(4):
        o_ref[0, k] = _gelu((o_ref[0, k] - mean2) * inv2)


# ---------------------------------------------------------------------------
# Wrapper (NCHW in / NCHW out, matching PyTorch)
# ---------------------------------------------------------------------------
def _vmem_limit_bytes():
    # generation-aware scoped-VMEM request: physical capacity minus headroom
    try:
        cap = pltpu.get_tpu_info().vmem_capacity_bytes
        return int(max(32 * 1024 * 1024, cap - 16 * 1024 * 1024))
    except Exception:
        return None


def ginka_upsample(x_nchw, params):
    wt = params["wt"]            # ConvTranspose2d weight: (Cin, Cout, 2, 2)
    wc = params["wc"]            # Conv2d weight:          (Cout, Cout, 3, 3)
    # bt / bc intentionally unused: they cancel in the non-affine InstanceNorms

    N, Cin, H, W = x_nchw.shape
    Cout = wt.shape[1]
    Cp = _round_up(Cout, LANES)  # lane-dense channel count
    H2, W2 = 2 * H, 2 * W
    HW = H * W

    # NCHW -> NHWC, bf16 matmul operand (keep W a multiple of 8 where possible)
    x = jnp.transpose(x_nchw, (0, 2, 3, 1)).astype(jnp.bfloat16)

    # ConvTranspose weight -> (Cin, 4*Cp); column block k = 2*p + q
    wt4 = jnp.transpose(wt, (0, 2, 3, 1))                              # (Cin,2,2,Cout)
    wt4 = jnp.pad(wt4, ((0, 0), (0, 0), (0, 0), (0, Cp - Cout)))
    wt4 = wt4.reshape(Cin, 4 * Cp).astype(jnp.bfloat16)

    # Conv weight -> (9*Cp, Cp); row = (kh*3 + kw)*Cp + ci
    wc9 = jnp.transpose(wc, (2, 3, 1, 0))                              # (3,3,Cin,Cout)
    wc9 = jnp.pad(wc9, ((0, 0), (0, 0), (0, Cp - Cout), (0, Cp - Cout)))
    wc9 = wc9.reshape(9 * Cp, Cp).astype(jnp.bfloat16)

    flops = N * (2 * HW * Cin * 4 * Cp + 2 * 4 * HW * 9 * Cp * Cp)
    transcendentals = N * (8 * HW * Cp + 2 * Cp)
    bytes_accessed = (2 * x.size + 2 * wt4.size + 2 * wc9.size
                      + 4 * N * 4 * HW * Cp)

    cp_kwargs = dict(dimension_semantics=("parallel",))
    vmem_limit = _vmem_limit_bytes()
    if vmem_limit is not None:
        cp_kwargs["vmem_limit_bytes"] = vmem_limit

    z = pl.pallas_call(
        ginka_upsample_fused_kernel,
        out_shape=jax.ShapeDtypeStruct((N, 4, HW, Cp), jnp.float32),
        grid=(N,),
        in_specs=[
            pl.BlockSpec((1, H, W, Cin), lambda n: (n, 0, 0, 0)),
            pl.BlockSpec((Cin, 4 * Cp), lambda n: (0, 0)),
            pl.BlockSpec((9 * Cp, Cp), lambda n: (0, 0)),
        ],
        out_specs=pl.BlockSpec((1, 4, HW, Cp), lambda n: (n, 0, 0, 0)),
        scratch_shapes=[
            pltpu.VMEM((4, H + 1, W + 1, Cp), jnp.bfloat16),   # padded parity grids
            pltpu.VMEM((HW, 9 * Cp), jnp.bfloat16),            # per-parity im2col patch
        ],
        compiler_params=pltpu.CompilerParams(**cp_kwargs),
        cost_estimate=pl.CostEstimate(flops=flops,
                                      transcendentals=transcendentals,
                                      bytes_accessed=bytes_accessed),
    )(x, wt4, wc9)

    # fold parity blocks back into (H2, W2) while converting to NCHW
    out = (z.reshape(N, 2, 2, H, W, Cp)[..., :Cout]
             .transpose(0, 5, 3, 1, 4, 2)                    # (N, C, H, 2, W, 2)
             .reshape(N, Cout, H2, W2))
    return out


# ---------------------------------------------------------------------------
# Pure-JAX fp32 reference (same math as the PyTorch module, biases included)
# ---------------------------------------------------------------------------
def ginka_upsample_ref(x_nchw, params):
    wt, bt, wc, bc = params["wt"], params["bt"], params["wc"], params["bc"]
    N, Cin, H, W = x_nchw.shape
    Cout = wt.shape[1]
    H2, W2 = 2 * H, 2 * W

    x = jnp.transpose(x_nchw, (0, 2, 3, 1)).astype(jnp.float32)
    t = jnp.einsum("nhwc,codk->nhwdko", x, wt)              # (N,H,W,2,2,Cout)
    y = t.transpose(0, 1, 3, 2, 4, 5).reshape(N, H2, W2, Cout) + bt

    def inorm(a):
        m = jnp.mean(a, axis=(1, 2), keepdims=True)
        v = jnp.mean((a - m) ** 2, axis=(1, 2), keepdims=True)
        return (a - m) * jax.lax.rsqrt(v + EPS)

    y = _gelu(inorm(y))
    yp = jnp.pad(y, ((0, 0), (1, 1), (1, 1), (0, 0)), mode="edge")
    w2 = jnp.transpose(wc, (2, 3, 1, 0))
    z = jnp.zeros((N, H2, W2, Cout), jnp.float32)
    for kh in range(3):
        for kw in range(3):
            z = z + jnp.einsum("nhwc,cd->nhwd",
                               yp[:, kh:kh + H2, kw:kw + W2, :], w2[kh, kw])
    z = z + bc
    z = _gelu(inorm(z))
    return jnp.transpose(z, (0, 3, 1, 2))


if __name__ == "__main__":
    IN_CH, OUT_CH = 4, 8
    N, H, W = 2, 8, 8

    key = jax.random.PRNGKey(0)
    k1, k2, k3, k4, k5 = jax.random.split(key, 5)

    params = {
        "wt": 0.2 * jax.random.normal(k1, (IN_CH, OUT_CH, 2, 2), jnp.float32),
        "bt": 0.1 * jax.random.normal(k2, (OUT_CH,), jnp.float32),
        "wc": 0.2 * jax.random.normal(k3, (OUT_CH, OUT_CH, 3, 3), jnp.float32),
        "bc": 0.1 * jax.random.normal(k4, (OUT_CH,), jnp.float32),
    }
    x = jax.random.normal(k5, (N, IN_CH, H, W), jnp.float32)   # NCHW like PyTorch

    out = jax.block_until_ready(jax.jit(ginka_upsample)(x, params))
    ref = jax.block_until_ready(ginka_upsample_ref(x, params))

    assert out.shape == (N, OUT_CH, 2 * H, 2 * W), out.shape
    # tolerance sized for bf16 MXU operands (fp32 accumulation / fp32 stats)
    # vs. the pure-fp32 reference: ~2^-8 relative operand rounding through a
    # two-matmul + two-InstanceNorm + GELU chain.
    diff = float(jnp.max(jnp.abs(out - ref)))
    assert jnp.allclose(out, ref, atol=3e-2, rtol=3e-2), f"max|diff|={diff}"
    print("KERNEL_OK")
</pallas_src>

<mosaic_0001>
module attributes {stable_mosaic.version = 11 : i64} {
  func.func @ginka_upsample_fused_kernel(%arg0: i32, %arg1: memref<1x8x8x4xbf16, #tpu.memory_space<vmem>>, %arg2: memref<4x512xbf16, #tpu.memory_space<vmem>>, %arg3: memref<1152x128xbf16, #tpu.memory_space<vmem>>, %arg4: memref<1x4x64x128xf32, #tpu.memory_space<vmem>>, %arg5: memref<4x9x9x128xbf16, #tpu.memory_space<vmem>>, %arg6: memref<64x1152xbf16, #tpu.memory_space<vmem>>) attributes {dimension_semantics = [#tpu.dimension_semantics<parallel>], iteration_bounds = array<i64: 2>, scalar_prefetch = 0 : i64, scratch_operands = 2 : i64, tpu.core_type = #tpu.core_type<tc>, window_params = [{transform_indices = @transform_0, window_bounds = array<i64: 1, 8, 8, 4>}, {pipeline_mode = #tpu.pipeline_mode<synchronous>, transform_indices = @transform_1, window_bounds = array<i64: 4, 512>}, {pipeline_mode = #tpu.pipeline_mode<synchronous>, transform_indices = @transform_2, window_bounds = array<i64: 1152, 128>}, {transform_indices = @transform_3, window_bounds = array<i64: 1, 4, 64, 128>}]} {
    %c0 = arith.constant 0 : index
    %c0_0 = arith.constant 0 : index
    %c0_1 = arith.constant 0 : index
    %c0_2 = arith.constant 0 : index
    %0 = vector.load %arg1[%c0, %c0_0, %c0_1, %c0_2] : memref<1x8x8x4xbf16, #tpu.memory_space<vmem>>, vector<1x8x8x4xbf16>
    %1 = vector.shape_cast %0 : vector<1x8x8x4xbf16> to vector<8x8x4xbf16>
    %2 = vector.shape_cast %1 : vector<8x8x4xbf16> to vector<64x4xbf16>
    %c0_3 = arith.constant 0 : index
    %c0_4 = arith.constant 0 : index
    %3 = vector.load %arg2[%c0_3, %c0_4] : memref<4x512xbf16, #tpu.memory_space<vmem>>, vector<4x512xbf16>
    %cst = arith.constant dense<0.000000e+00> : vector<64x512xf32>
    %4 = tpu.matmul %2, %3, %cst {dimension_numbers = #tpu.dot_dimension_numbers<[1], [0], [0], [1], [0, 0, 1, 1], [], []>} : vector<64x4xbf16>, vector<4x512xbf16>, vector<64x512xf32> -> vector<64x512xf32>
    %cst_5 = arith.constant dense<0.000000e+00> : vector<512xf32>
    %5 = vector.multi_reduction <add>, %4, %cst_5 [0] : vector<64x512xf32> to vector<512xf32>
    %6 = vector.shape_cast %5 : vector<512xf32> to vector<1x512xf32>
    %7 = arith.mulf %4, %4 : vector<64x512xf32>
    %cst_6 = arith.constant dense<0.000000e+00> : vector<512xf32>
    %8 = vector.multi_reduction <add>, %7, %cst_6 [0] : vector<64x512xf32> to vector<512xf32>
    %9 = vector.shape_cast %8 : vector<512xf32> to vector<1x512xf32>
    %10 = vector.extract_strided_slice %6 {offsets = [0, 0], sizes = [1, 128], strides = [1, 1]} : vector<1x512xf32> to vector<1x128xf32>
    %11 = vector.extract_strided_slice %6 {offsets = [0, 128], sizes = [1, 128], strides = [1, 1]} : vector<1x512xf32> to vector<1x128xf32>
    %12 = arith.addf %10, %11 : vector<1x128xf32>
    %13 = vector.extract_strided_slice %6 {offsets = [0, 256], sizes = [1, 128], strides = [1, 1]} : vector<1x512xf32> to vector<1x128xf32>
    %14 = arith.addf %12, %13 : vector<1x128xf32>
    %15 = vector.extract_strided_slice %6 {offsets = [0, 384], sizes = [1, 128], strides = [1, 1]} : vector<1x512xf32> to vector<1x128xf32>
    %16 = arith.addf %14, %15 : vector<1x128xf32>
    %17 = vector.extract_strided_slice %9 {offsets = [0, 0], sizes = [1, 128], strides = [1, 1]} : vector<1x512xf32> to vector<1x128xf32>
    %18 = vector.extract_strided_slice %9 {offsets = [0, 128], sizes = [1, 128], strides = [1, 1]} : vector<1x512xf32> to vector<1x128xf32>
    %19 = arith.addf %17, %18 : vector<1x128xf32>
    %20 = vector.extract_strided_slice %9 {offsets = [0, 256], sizes = [1, 128], strides = [1, 1]} : vector<1x512xf32> to vector<1x128xf32>
    %21 = arith.addf %19, %20 : vector<1x128xf32>
    %22 = vector.extract_strided_slice %9 {offsets = [0, 384], sizes = [1, 128], strides = [1, 1]} : vector<1x512xf32> to vector<1x128xf32>
    %23 = arith.addf %21, %22 : vector<1x128xf32>
    %cst_7 = arith.constant 2.560000e+02 : f32
    %24 = vector.broadcast %cst_7 : f32 to vector<1x128xf32>
    %25 = arith.divf %16, %24 : vector<1x128xf32>
    %cst_8 = arith.constant 2.560000e+02 : f32
    %26 = vector.broadcast %cst_8 : f32 to vector<1x128xf32>
    %27 = arith.divf %23, %26 : vector<1x128xf32>
    %28 = arith.mulf %25, %25 : vector<1x128xf32>
    %29 = arith.subf %27, %28 : vector<1x128xf32>
    %cst_9 = arith.constant 0.000000e+00 : f32
    %30 = vector.broadcast %cst_9 : f32 to vector<1x128xf32>
    %31 = arith.maximumf %29, %30 : vector<1x128xf32>
    %cst_10 = arith.constant 9.99999974E-6 : f32
    %32 = vector.broadcast %cst_10 : f32 to vector<1x128xf32>
    %33 = arith.addf %31, %32 : vector<1x128xf32>
    %34 = math.rsqrt %33 : vector<1x128xf32>
    %35 = vector.extract_strided_slice %4 {offsets = [0, 0], sizes = [64, 128], strides = [1, 1]} : vector<64x512xf32> to vector<64x128xf32>
    %36 = vector.broadcast %25 : vector<1x128xf32> to vector<64x128xf32>
    %37 = arith.subf %35, %36 : vector<64x128xf32>
    %38 = vector.broadcast %34 : vector<1x128xf32> to vector<64x128xf32>
    %39 = arith.mulf %37, %38 : vector<64x128xf32>
    %cst_11 = arith.constant 5.000000e-01 : f32
    %40 = vector.broadcast %cst_11 : f32 to vector<64x128xf32>
    %41 = arith.mulf %40, %39 : vector<64x128xf32>
    %cst_12 = arith.constant 0.707106769 : f32
    %42 = vector.broadcast %cst_12 : f32 to vector<64x128xf32>
    %43 = arith.mulf %39, %42 : vector<64x128xf32>
    %44 = math.erf %43 : vector<64x128xf32>
    %cst_13 = arith.constant 1.000000e+00 : f32
    %45 = vector.broadcast %cst_13 : f32 to vector<64x128xf32>
    %46 = arith.addf %45, %44 : vector<64x128xf32>
    %47 = arith.mulf %41, %46 : vector<64x128xf32>
    %48 = arith.truncf %47 : vector<64x128xf32> to vector<64x128xbf16>
    %49 = vector.shape_cast %48 : vector<64x128xbf16> to vector<8x8x128xbf16>
    %c3 = arith.constant 3 : index
    %c0_14 = arith.constant 0 : index
    %c0_15 = arith.constant 0 : index
    %c0_16 = arith.constant 0 : index
    %50 = vector.load %arg5[%c3, %c0_14, %c0_15, %c0_16] : memref<4x9x9x128xbf16, #tpu.memory_space<vmem>>, vector<1x8x8x128xbf16>
    %51 = vector.shape_cast %50 : vector<1x8x8x128xbf16> to vector<8x8x128xbf16>
    %52 = vector.shape_cast %49 : vector<8x8x128xbf16> to vector<1x8x8x128xbf16>
    tpu.vector_store %arg5[%c3, %c0_14, %c0_15, %c0_16], %52 {strides = array<i32>} : memref<4x9x9x128xbf16, #tpu.memory_space<vmem>>, vector<1x8x8x128xbf16>,
    %53 = vector.extract_strided_slice %49 {offsets = [0, 0, 0], sizes = [1, 8, 128], strides = [1, 1, 1]} : vector<8x8x128xbf16> to vector<1x8x128xbf16>
    %c1 = arith.constant 1 : index
    %c0_17 = arith.constant 0 : index
    %c0_18 = arith.constant 0 : index
    %c0_19 = arith.constant 0 : index
    %54 = vector.load %arg5[%c1, %c0_17, %c0_18, %c0_19] : memref<4x9x9x128xbf16, #tpu.memory_space<vmem>>, vector<1x1x8x128xbf16>
    %55 = vector.shape_cast %54 : vector<1x1x8x128xbf16> to vector<1x8x128xbf16>
    %56 = vector.shape_cast %53 : vector<1x8x128xbf16> to vector<1x1x8x128xbf16>
    tpu.vector_store %arg5[%c1, %c0_17, %c0_18, %c0_19], %56 {strides = array<i32>} : memref<4x9x9x128xbf16, #tpu.memory_space<vmem>>, vector<1x1x8x128xbf16>,
    %57 = vector.extract_strided_slice %49 {offsets = [0, 0, 0], sizes = [8, 1, 128], strides = [1, 1, 1]} : vector<8x8x128xbf16> to vector<8x1x128xbf16>
    %c2 = arith.constant 2 : index
    %c0_20 = arith.constant 0 : index
    %c0_21 = arith.constant 0 : index
    %c0_22 = arith.constant 0 : index
    %58 = vector.load %arg5[%c2, %c0_20, %c0_21, %c0_22] : memref<4x9x9x128xbf16, #tpu.memory_space<vmem>>, vector<1x8x1x128xbf16>
    %59 = vector.shape_cast %58 : vector<1x8x1x128xbf16> to vector<8x1x128xbf16>
    %60 = vector.shape_cast %57 : vector<8x1x128xbf16> to vector<1x8x1x128xbf16>
    tpu.vector_store %arg5[%c2, %c0_20, %c0_21, %c0_22], %60 {strides = array<i32>} : memref<4x9x9x128xbf16, #tpu.memory_space<vmem>>, vector<1x8x1x128xbf16>,
    %61 = vector.extract_strided_slice %49 {offsets = [0, 0, 0], sizes = [1, 1, 128], strides = [1, 1, 1]} : vector<8x8x128xbf16> to vector<1x1x128xbf16>
    %c0_23 = arith.constant 0 : index
    %c0_24 = arith.constant 0 : index
    %c0_25 = arith.constant 0 : index
    %c0_26 = arith.constant 0 : index
    %62 = vector.load %arg5[%c0_23, %c0_24, %c0_25, %c0_26] : memref<4x9x9x128xbf16, #tpu.memory_space<vmem>>, vector<1x1x1x128xbf16>
    %63 = vector.shape_cast %62 : vector<1x1x1x128xbf16> to vector<1x1x128xbf16>
    %64 = vector.shape_cast %61 : vector<1x1x128xbf16> to vector<1x1x1x128xbf16>
    tpu.vector_store %arg5[%c0_23, %c0_24, %c0_25, %c0_26], %64 {strides = array<i32>} : memref<4x9x9x128xbf16, #tpu.memory_space<vmem>>, vector<1x1x1x128xbf16>,
    %65 = vector.extract_strided_slice %4 {offsets = [0, 128], sizes = [64, 128], strides = [1, 1]} : vector<64x512xf32> to vector<64x128xf32>
    %66 = vector.broadcast %25 : vector<1x128xf32> to vector<64x128xf32>
    %67 = arith.subf %65, %66 : vector<64x128xf32>
    %68 = vector.broadcast %34 : vector<1x128xf32> to vector<64x128xf32>
    %69 = arith.mulf %67, %68 : vector<64x128xf32>
    %cst_27 = arith.constant 5.000000e-01 : f32
    %70 = vector.broadcast %cst_27 : f32 to vector<64x128xf32>
    %71 = arith.mulf %70, %69 : vector<64x128xf32>
    %cst_28 = arith.constant 0.707106769 : f32
    %72 = vector.broadcast %cst_28 : f32 to vector<64x128xf32>
    %73 = arith.mulf %69, %72 : vector<64x128xf32>
    %74 = math.erf %73 : vector<64x128xf32>
    %cst_29 = arith.constant 1.000000e+00 : f32
    %75 = vector.broadcast %cst_29 : f32 to vector<64x128xf32>
    %76 = arith.addf %75, %74 : vector<64x128xf32>
    %77 = arith.mulf %71, %76 : vector<64x128xf32>
    %78 = arith.truncf %77 : vector<64x128xf32> to vector<64x128xbf16>
    %79 = vector.shape_cast %78 : vector<64x128xbf16> to vector<8x8x128xbf16>
    %c2_30 = arith.constant 2 : index
    %c0_31 = arith.constant 0 : index
    %c1_32 = arith.constant 1 : index
    %c0_33 = arith.constant 0 : index
    %80 = vector.load %arg5[%c2_30, %c0_31, %c1_32, %c0_33] : memref<4x9x9x128xbf16, #tpu.memory_space<vmem>>, vector<1x8x8x128xbf16>
    %81 = vector.shape_cast %80 : vector<1x8x8x128xbf16> to vector<8x8x128xbf16>
    %82 = vector.shape_cast %79 : vector<8x8x128xbf16> to vector<1x8x8x128xbf16>
    tpu.vector_store %arg5[%c2_30, %c0_31, %c1_32, %c0_33], %82 {strides = array<i32>} : memref<4x9x9x128xbf16, #tpu.memory_space<vmem>>, vector<1x8x8x128xbf16>,
    %83 = vector.extract_strided_slice %79 {offsets = [0, 0, 0], sizes = [1, 8, 128], strides = [1, 1, 1]} : vector<8x8x128xbf16> to vector<1x8x128xbf16>
    %c0_34 = arith.constant 0 : index
    %c0_35 = arith.constant 0 : index
    %c1_36 = arith.constant 1 : index
    %c0_37 = arith.constant 0 : index
    %84 = vector.load %arg5[%c0_34, %c0_35, %c1_36, %c0_37] : memref<4x9x9x128xbf16, #tpu.memory_space<vmem>>, vector<1x1x8x128xbf16>
    %85 = vector.shape_cast %84 : vector<1x1x8x128xbf16> to vector<1x8x128xbf16>
    %86 = vector.shape_cast %83 : vector<1x8x128xbf16> to vector<1x1x8x128xbf16>
    tpu.vector_store %arg5[%c0_34, %c0_35, %c1_36, %c0_37], %86 {strides = array<i32>} : memref<4x9x9x128xbf16, #tpu.memory_space<vmem>>, vector<1x1x8x128xbf16>,
    %87 = vector.extract_strided_slice %79 {offsets = [0, 7, 0], sizes = [8, 1, 128], strides = [1, 1, 1]} : vector<8x8x128xbf16> to vector<8x1x128xbf16>
    %c3_38 = arith.constant 3 : index
    %c0_39 = arith.constant 0 : index
    %c8 = arith.constant 8 : index
    %c0_40 = arith.constant 0 : index
    %88 = vector.load %arg5[%c3_38, %c0_39, %c8, %c0_40] : memref<4x9x9x128xbf16, #tpu.memory_space<vmem>>, vector<1x8x1x128xbf16>
    %89 = vector.shape_cast %88 : vector<1x8x1x128xbf16> to vector<8x1x128xbf16>
    %90 = vector.shape_cast %87 : vector<8x1x128xbf16> to vector<1x8x1x128xbf16>
    tpu.vector_store %arg5[%c3_38, %c0_39, %c8, %c0_40], %90 {strides = array<i32>} : memref<4x9x9x128xbf16, #tpu.memory_space<vmem>>, vector<1x8x1x128xbf16>,
    %91 = vector.extract_strided_slice %79 {offsets = [0, 7, 0], sizes = [1, 1, 128], strides = [1, 1, 1]} : vector<8x8x128xbf16> to vector<1x1x128xbf16>
    %c1_41 = arith.constant 1 : index
    %c0_42 = arith.constant 0 : index
    %c8_43 = arith.constant 8 : index
    %c0_44 = arith.constant 0 : index
    %92 = vector.load %arg5[%c1_41, %c0_42, %c8_43, %c0_44] : memref<4x9x9x128xbf16, #tpu.memory_space<vmem>>, vector<1x1x1x128xbf16>
    %93 = vector.shape_cast %92 : vector<1x1x1x128xbf16> to vector<1x1x128xbf16>
    %94 = vector.shape_cast %91 : vector<1x1x128xbf16> to vector<1x1x1x128xbf16>
    tpu.vector_store %arg5[%c1_41, %c0_42, %c8_43, %c0_44], %94 {strides = array<i32>} : memref<4x9x9x128xbf16, #tpu.memory_space<vmem>>, vector<1x1x1x128xbf16>,
    %95 = vector.extract_strided_slice %4 {offsets = [0, 256], sizes = [64, 128], strides = [1, 1]} : vector<64x512xf32> to vector<64x128xf32>
    %96 = vector.broadcast %25 : vector<1x128xf32> to vector<64x128xf32>
    %97 = arith.subf %95, %96 : vector<64x128xf32>
    %98 = vector.broadcast %34 : vector<1x128xf32> to vector<64x128xf32>
    %99 = arith.mulf %97, %98 : vector<64x128xf32>
    %cst_45 = arith.constant 5.000000e-01 : f32
    %100 = vector.broadcast %cst_45 : f32 to vector<64x128xf32>
    %101 = arith.mulf %100, %99 : vector<64x128xf32>
    %cst_46 = arith.constant 0.707106769 : f32
    %102 = vector.broadcast %cst_46 : f32 to vector<64x128xf32>
    %103 = arith.mulf %99, %102 : vector<64x128xf32>
    %104 = math.erf %103 : vector<64x128xf32>
    %cst_47 = arith.constant 1.000000e+00 : f32
    %105 = vector.broadcast %cst_47 : f32 to vector<64x128xf32>
    %106 = arith.addf %105, %104 : vector<64x128xf32>
    %107 = arith.mulf %101, %106 : vector<64x128xf32>
    %108 = arith.truncf %107 : vector<64x128xf32> to vector<64x128xbf16>
    %109 = vector.shape_cast %108 : vector<64x128xbf16> to vector<8x8x128xbf16>
    %c1_48 = arith.constant 1 : index
    %c1_49 = arith.constant 1 : index
    %c0_50 = arith.constant 0 : index
    %c0_51 = arith.constant 0 : index
    %110 = vector.load %arg5[%c1_48, %c1_49, %c0_50, %c0_51] : memref<4x9x9x128xbf16, #tpu.memory_space<vmem>>, vector<1x8x8x128xbf16>
    %111 = vector.shape_cast %110 : vector<1x8x8x128xbf16> to vector<8x8x128xbf16>
    %112 = vector.shape_cast %109 : vector<8x8x128xbf16> to vector<1x8x8x128xbf16>
    tpu.vector_store %arg5[%c1_48, %c1_49, %c0_50, %c0_51], %112 {strides = array<i32>} : memref<4x9x9x128xbf16, #tpu.memory_space<vmem>>, vector<1x8x8x128xbf16>,
    %113 = vector.extract_strided_slice %109 {offsets = [7, 0, 0], sizes = [1, 8, 128], strides = [1, 1, 1]} : vector<8x8x128xbf16> to vector<1x8x128xbf16>
    %c3_52 = arith.constant 3 : index
    %c8_53 = arith.constant 8 : index
    %c0_54 = arith.constant 0 : index
    %c0_55 = arith.constant 0 : index
    %114 = vector.load %arg5[%c3_52, %c8_53, %c0_54, %c0_55] : memref<4x9x9x128xbf16, #tpu.memory_space<vmem>>, vector<1x1x8x128xbf16>
    %115 = vector.shape_cast %114 : vector<1x1x8x128xbf16> to vector<1x8x128xbf16>
    %116 = vector.shape_cast %113 : vector<1x8x128xbf16> to vector<1x1x8x128xbf16>
    tpu.vector_store %arg5[%c3_52, %c8_53, %c0_54, %c0_55], %116 {strides = array<i32>} : memref<4x9x9x128xbf16, #tpu.memory_space<vmem>>, vector<1x1x8x128xbf16>,
    %117 = vector.extract_strided_slice %109 {offsets = [0, 0, 0], sizes = [8, 1, 128], strides = [1, 1, 1]} : vector<8x8x128xbf16> to vector<8x1x128xbf16>
    %c0_56 = arith.constant 0 : index
    %c1_57 = arith.constant 1 : index
    %c0_58 = arith.constant 0 : index
    %c0_59 = arith.constant 0 : index
    %118 = vector.load %arg5[%c0_56, %c1_57, %c0_58, %c0_59] : memref<4x9x9x128xbf16, #tpu.memory_space<vmem>>, vector<1x8x1x128xbf16>
    %119 = vector.shape_cast %118 : vector<1x8x1x128xbf16> to vector<8x1x128xbf16>
    %120 = vector.shape_cast %117 : vector<8x1x128xbf16> to vector<1x8x1x128xbf16>
    tpu.vector_store %arg5[%c0_56, %c1_57, %c0_58, %c0_59], %120 {strides = array<i32>} : memref<4x9x9x128xbf16, #tpu.memory_space<vmem>>, vector<1x8x1x128xbf16>,
    %121 = vector.extract_strided_slice %109 {offsets = [7, 0, 0], sizes = [1, 1, 128], strides = [1, 1, 1]} : vector<8x8x128xbf16> to vector<1x1x128xbf16>
    %c2_60 = arith.constant 2 : index
    %c8_61 = arith.constant 8 : index
    %c0_62 = arith.constant 0 : index
    %c0_63 = arith.constant 0 : index
    %122 = vector.load %arg5[%c2_60, %c8_61, %c0_62, %c0_63] : memref<4x9x9x128xbf16, #tpu.memory_space<vmem>>, vector<1x1x1x128xbf16>
    %123 = vector.shape_cast %122 : vector<1x1x1x128xbf16> to vector<1x1x128xbf16>
    %124 = vector.shape_cast %121 : vector<1x1x128xbf16> to vector<1x1x1x128xbf16>
    tpu.vector_store %arg5[%c2_60, %c8_61, %c0_62, %c0_63], %124 {strides = array<i32>} : memref<4x9x9x128xbf16, #tpu.memory_space<vmem>>, vector<1x1x1x128xbf16>,
    %125 = vector.extract_strided_slice %4 {offsets = [0, 384], sizes = [64, 128], strides = [1, 1]} : vector<64x512xf32> to vector<64x128xf32>
    %126 = vector.broadcast %25 : vector<1x128xf32> to vector<64x128xf32>
    %127 = arith.subf %125, %126 : vector<64x128xf32>
    %128 = vector.broadcast %34 : vector<1x128xf32> to vector<64x128xf32>
    %129 = arith.mulf %127, %128 : vector<64x128xf32>
    %cst_64 = arith.constant 5.000000e-01 : f32
    %130 = vector.broadcast %cst_64 : f32 to vector<64x128xf32>
    %131 = arith.mulf %130, %129 : vector<64x128xf32>
    %cst_65 = arith.constant 0.707106769 : f32
    %132 = vector.broadcast %cst_65 : f32 to vector<64x128xf32>
    %133 = arith.mulf %129, %132 : vector<64x128xf32>
    %134 = math.erf %133 : vector<64x128xf32>
    %cst_66 = arith.constant 1.000000e+00 : f32
    %135 = vector.broadcast %cst_66 : f32 to vector<64x128xf32>
    %136 = arith.addf %135, %134 : vector<64x128xf32>
    %137 = arith.mulf %131, %136 : vector<64x128xf32>
    %138 = arith.truncf %137 : vector<64x128xf32> to vector<64x128xbf16>
    %139 = vector.shape_cast %138 : vector<64x128xbf16> to vector<8x8x128xbf16>
    %c0_67 = arith.constant 0 : index
    %c1_68 = arith.constant 1 : index
    %c1_69 = arith.constant 1 : index
    %c0_70 = arith.constant 0 : index
    %140 = vector.load %arg5[%c0_67, %c1_68, %c1_69, %c0_70] : memref<4x9x9x128xbf16, #tpu.memory_space<vmem>>, vector<1x8x8x128xbf16>
    %141 = vector.shape_cast %140 : vector<1x8x8x128xbf16> to vector<8x8x128xbf16>
    %142 = vector.shape_cast %139 : vector<8x8x128xbf16> to vector<1x8x8x128xbf16>
    tpu.vector_store %arg5[%c0_67, %c1_68, %c1_69, %c0_70], %142 {strides = array<i32>} : memref<4x9x9x128xbf16, #tpu.memory_space<vmem>>, vector<1x8x8x128xbf16>,
    %143 = vector.extract_strided_slice %139 {offsets = [7, 0, 0], sizes = [1, 8, 128], strides = [1, 1, 1]} : vector<8x8x128xbf16> to vector<1x8x128xbf16>
    %c2_71 = arith.constant 2 : index
    %c8_72 = arith.constant 8 : index
    %c1_73 = arith.constant 1 : index
    %c0_74 = arith.constant 0 : index
    %144 = vector.load %arg5[%c2_71, %c8_72, %c1_73, %c0_74] : memref<4x9x9x128xbf16, #tpu.memory_space<vmem>>, vector<1x1x8x128xbf16>
    %145 = vector.shape_cast %144 : vector<1x1x8x128xbf16> to vector<1x8x128xbf16>
    %146 = vector.shape_cast %143 : vector<1x8x128xbf16> to vector<1x1x8x128xbf16>
    tpu.vector_store %arg5[%c2_71, %c8_72, %c1_73, %c0_74], %146 {strides = array<i32>} : memref<4x9x9x128xbf16, #tpu.memory_space<vmem>>, vector<1x1x8x128xbf16>,
    %147 = vector.extract_strided_slice %139 {offsets = [0, 7, 0], sizes = [8, 1, 128], strides = [1, 1, 1]} : vector<8x8x128xbf16> to vector<8x1x128xbf16>
    %c1_75 = arith.constant 1 : index
    %c1_76 = arith.constant 1 : index
    %c8_77 = arith.constant 8 : index
    %c0_78 = arith.constant 0 : index
    %148 = vector.load %arg5[%c1_75, %c1_76, %c8_77, %c0_78] : memref<4x9x9x128xbf16, #tpu.memory_space<vmem>>, vector<1x8x1x128xbf16>
    %149 = vector.shape_cast %148 : vector<1x8x1x128xbf16> to vector<8x1x128xbf16>
    %150 = vector.shape_cast %147 : vector<8x1x128xbf16> to vector<1x8x1x128xbf16>
    tpu.vector_store %arg5[%c1_75, %c1_76, %c8_77, %c0_78], %150 {strides = array<i32>} : memref<4x9x9x128xbf16, #tpu.memory_space<vmem>>, vector<1x8x1x128xbf16>,
    %151 = vector.extract_strided_slice %139 {offsets = [7, 7, 0], sizes = [1, 1, 128], strides = [1, 1, 1]} : vector<8x8x128xbf16> to vector<1x1x128xbf16>
    %c3_79 = arith.constant 3 : index
    %c8_80 = arith.constant 8 : index
    %c8_81 = arith.constant 8 : index
    %c0_82 = arith.constant 0 : index
    %152 = vector.load %arg5[%c3_79, %c8_80, %c8_81, %c0_82] : memref<4x9x9x128xbf16, #tpu.memory_space<vmem>>, vector<1x1x1x128xbf16>
    %153 = vector.shape_cast %152 : vector<1x1x1x128xbf16> to vector<1x1x128xbf16>
    %154 = vector.shape_cast %151 : vector<1x1x128xbf16> to vector<1x1x1x128xbf16>
    tpu.vector_store %arg5[%c3_79, %c8_80, %c8_81, %c0_82], %154 {strides = array<i32>} : memref<4x9x9x128xbf16, #tpu.memory_space<vmem>>, vector<1x1x1x128xbf16>,
    %cst_83 = arith.constant 0.000000e+00 : f32
    %155 = vector.broadcast %cst_83 : f32 to vector<1x128xf32>
    %cst_84 = arith.constant 0.000000e+00 : f32
    %156 = vector.broadcast %cst_84 : f32 to vector<1x128xf32>
    %c0_85 = arith.constant 0 : index
    %c0_86 = arith.constant 0 : index
    %c0_87 = arith.constant 0 : index
    %c0_88 = arith.constant 0 : index
    %157 = vector.load %arg5[%c0_85, %c0_86, %c0_87, %c0_88] : memref<4x9x9x128xbf16, #tpu.memory_space<vmem>>, vector<1x8x8x128xbf16>
    %158 = vector.shape_cast %157 : vector<1x8x8x128xbf16> to vector<8x8x128xbf16>
    %159 = vector.shape_cast %158 : vector<8x8x128xbf16> to vector<64x128xbf16>
    %c0_89 = arith.constant 0 : index
    %c0_90 = arith.constant 0 : index
    %160 = vector.load %arg6[%c0_89, %c0_90] : memref<64x1152xbf16, #tpu.memory_space<vmem>>, vector<64x128xbf16>
    tpu.vector_store %arg6[%c0_89, %c0_90], %159 {strides = array<i32>} : memref<64x1152xbf16, #tpu.memory_space<vmem>>, vector<64x128xbf16>,
    %c1_91 = arith.constant 1 : index
    %c0_92 = arith.constant 0 : index
    %c0_93 = arith.constant 0 : index
    %c0_94 = arith.constant 0 : index
    %161 = vector.load %arg5[%c1_91, %c0_92, %c0_93, %c0_94] : memref<4x9x9x128xbf16, #tpu.memory_space<vmem>>, vector<1x8x8x128xbf16>
    %162 = vector.shape_cast %161 : vector<1x8x8x128xbf16> to vector<8x8x128xbf16>
    %163 = vector.shape_cast %162 : vector<8x8x128xbf16> to vector<64x128xbf16>
    %c0_95 = arith.constant 0 : index
    %c128 = arith.constant 128 : index
    %164 = vector.load %arg6[%c0_95, %c128] : memref<64x1152xbf16, #tpu.memory_space<vmem>>, vector<64x128xbf16>
    tpu.vector_store %arg6[%c0_95, %c128], %163 {strides = array<i32>} : memref<64x1152xbf16, #tpu.memory_space<vmem>>, vector<64x128xbf16>,
    %c0_96 = arith.constant 0 : index
    %c0_97 = arith.constant 0 : index
    %c1_98 = arith.constant 1 : index
    %c0_99 = arith.constant 0 : index
    %165 = vector.load %arg5[%c0_96, %c0_97, %c1_98, %c0_99] : memref<4x9x9x128xbf16, #tpu.memory_space<vmem>>, vector<1x8x8x128xbf16>
    %166 = vector.shape_cast %165 : vector<1x8x8x128xbf16> to vector<8x8x128xbf16>
    %167 = vector.shape_cast %166 : vector<8x8x128xbf16> to vector<64x128xbf16>
    %c0_100 = arith.constant 0 : index
    %c256 = arith.constant 256 : index
    %168 = vector.load %arg6[%c0_100, %c256] : memref<64x1152xbf16, #tpu.memory_space<vmem>>, vector<64x128xbf16>
    tpu.vector_store %arg6[%c0_100, %c256], %167 {strides = array<i32>} : memref<64x1152xbf16, #tpu.memory_space<vmem>>, vector<64x128xbf16>,
    %c2_101 = arith.constant 2 : index
    %c0_102 = arith.constant 0 : index
    %c0_103 = arith.constant 0 : index
    %c0_104 = arith.constant 0 : index
    %169 = vector.load %arg5[%c2_101, %c0_102, %c0_103, %c0_104] : memref<4x9x9x128xbf16, #tpu.memory_space<vmem>>, vector<1x8x8x128xbf16>
    %170 = vector.shape_cast %169 : vector<1x8x8x128xbf16> to vector<8x8x128xbf16>
    %171 = vector.shape_cast %170 : vector<8x8x128xbf16> to vector<64x128xbf16>
    %c0_105 = arith.constant 0 : index
    %c384 = arith.constant 384 : index
    %172 = vector.load %arg6[%c0_105, %c384] : memref<64x1152xbf16, #tpu.memory_space<vmem>>, vector<64x128xbf16>
    tpu.vector_store %arg6[%c0_105, %c384], %171 {strides = array<i32>} : memref<64x1152xbf16, #tpu.memory_space<vmem>>, vector<64x128xbf16>,
    %c3_106 = arith.constant 3 : index
    %c0_107 = arith.constant 0 : index
    %c0_108 = arith.constant 0 : index
    %c0_109 = arith.constant 0 : index
    %173 = vector.load %arg5[%c3_106, %c0_107, %c0_108, %c0_109] : memref<4x9x9x128xbf16, #tpu.memory_space<vmem>>, vector<1x8x8x128xbf16>
    %174 = vector.shape_cast %173 : vector<1x8x8x128xbf16> to vector<8x8x128xbf16>
    %175 = vector.shape_cast %174 : vector<8x8x128xbf16> to vector<64x128xbf16>
    %c0_110 = arith.constant 0 : index
    %c512 = arith.constant 512 : index
    %176 = vector.load %arg6[%c0_110, %c512] : memref<64x1152xbf16, #tpu.memory_space<vmem>>, vector<64x128xbf16>
    tpu.vector_store %arg6[%c0_110, %c512], %175 {strides = array<i32>} : memref<64x1152xbf16, #tpu.memory_space<vmem>>, vector<64x128xbf16>,
    %c2_111 = arith.constant 2 : index
    %c0_112 = arith.constant 0 : index
    %c1_113 = arith.constant 1 : index
    %c0_114 = arith.constant 0 : index
    %177 = vector.load %arg5[%c2_111, %c0_112, %c1_113, %c0_114] : memref<4x9x9x128xbf16, #tpu.memory_space<vmem>>, vector<1x8x8x128xbf16>
    %178 = vector.shape_cast %177 : vector<1x8x8x128xbf16> to vector<8x8x128xbf16>
    %179 = vector.shape_cast %178 : vector<8x8x128xbf16> to vector<64x128xbf16>
    %c0_115 = arith.constant 0 : index
    %c640 = arith.constant 640 : index
    %180 = vector.load %arg6[%c0_115, %c640] : memref<64x1152xbf16, #tpu.memory_space<vmem>>, vector<64x128xbf16>
    tpu.vector_store %arg6[%c0_115, %c640], %179 {strides = array<i32>} : memref<64x1152xbf16, #tpu.memory_space<vmem>>, vector<64x128xbf16>,
    %c0_116 = arith.constant 0 : index
    %c1_117 = arith.constant 1 : index
    %c0_118 = arith.constant 0 : index
    %c0_119 = arith.constant 0 : index
    %181 = vector.load %arg5[%c0_116, %c1_117, %c0_118, %c0_119] : memref<4x9x9x128xbf16, #tpu.memory_space<vmem>>, vector<1x8x8x128xbf16>
    %182 = vector.shape_cast %181 : vector<1x8x8x128xbf16> to vector<8x8x128xbf16>
    %183 = vector.shape_cast %182 : vector<8x8x128xbf16> to vector<64x128xbf16>
    %c0_120 = arith.constant 0 : index
    %c768 = arith.constant 768 : index
    %184 = vector.load %arg6[%c0_120, %c768] : memref<64x1152xbf16, #tpu.memory_space<vmem>>, vector<64x128xbf16>
    tpu.vector_store %arg6[%c0_120, %c768], %183 {strides = array<i32>} : memref<64x1152xbf16, #tpu.memory_space<vmem>>, vector<64x128xbf16>,
    %c1_121 = arith.constant 1 : index
    %c1_122 = arith.constant 1 : index
    %c0_123 = arith.constant 0 : index
    %c0_124 = arith.constant 0 : index
    %185 = vector.load %arg5[%c1_121, %c1_122, %c0_123, %c0_124] : memref<4x9x9x128xbf16, #tpu.memory_space<vmem>>, vector<1x8x8x128xbf16>
    %186 = vector.shape_cast %185 : vector<1x8x8x128xbf16> to vector<8x8x128xbf16>
    %187 = vector.shape_cast %186 : vector<8x8x128xbf16> to vector<64x128xbf16>
    %c0_125 = arith.constant 0 : index
    %c896 = arith.constant 896 : index
    %188 = vector.load %arg6[%c0_125, %c896] : memref<64x1152xbf16, #tpu.memory_space<vmem>>, vector<64x128xbf16>
    tpu.vector_store %arg6[%c0_125, %c896], %187 {strides = array<i32>} : memref<64x1152xbf16, #tpu.memory_space<vmem>>, vector<64x128xbf16>,
    %c0_126 = arith.constant 0 : index
    %c1_127 = arith.constant 1 : index
    %c1_128 = arith.constant 1 : index
    %c0_129 = arith.constant 0 : index
    %189 = vector.load %arg5[%c0_126, %c1_127, %c1_128, %c0_129] : memref<4x9x9x128xbf16, #tpu.memory_space<vmem>>, vector<1x8x8x128xbf16>
    %190 = vector.shape_cast %189 : vector<1x8x8x128xbf16> to vector<8x8x128xbf16>
    %191 = vector.shape_cast %190 : vector<8x8x128xbf16> to vector<64x128xbf16>
    %c0_130 = arith.constant 0 : index
    %c1024 = arith.constant 1024 : index
    %192 = vector.load %arg6[%c0_130, %c1024] : memref<64x1152xbf16, #tpu.memory_space<vmem>>, vector<64x128xbf16>
    tpu.vector_store %arg6[%c0_130, %c1024], %191 {strides = array<i32>} : memref<64x1152xbf16, #tpu.memory_space<vmem>>, vector<64x128xbf16>,
    %c0_131 = arith.constant 0 : index
    %c0_132 = arith.constant 0 : index
    %193 = vector.load %arg6[%c0_131, %c0_132] : memref<64x1152xbf16, #tpu.memory_space<vmem>>, vector<64x1152xbf16>
    %c0_133 = arith.constant 0 : index
    %c0_134 = arith.constant 0 : index
    %194 = vector.load %arg3[%c0_133, %c0_134] : memref<1152x128xbf16, #tpu.memory_space<vmem>>, vector<1152x128xbf16>
    %cst_135 = arith.constant dense<0.000000e+00> : vector<64x128xf32>
    %195 = tpu.matmul %193, %194, %cst_135 {dimension_numbers = #tpu.dot_dimension_numbers<[1], [0], [0], [1], [0, 0, 1, 1], [], []>} : vector<64x1152xbf16>, vector<1152x128xbf16>, vector<64x128xf32> -> vector<64x128xf32>
    %c0_136 = arith.constant 0 : index
    %c0_137 = arith.constant 0 : index
    %c0_138 = arith.constant 0 : index
    %c0_139 = arith.constant 0 : index
    %196 = vector.load %arg4[%c0_136, %c0_137, %c0_138, %c0_139] : memref<1x4x64x128xf32, #tpu.memory_space<vmem>>, vector<1x1x64x128xf32>
    %197 = vector.shape_cast %196 : vector<1x1x64x128xf32> to vector<64x128xf32>
    %198 = vector.shape_cast %195 : vector<64x128xf32> to vector<1x1x64x128xf32>
    tpu.vector_store %arg4[%c0_136, %c0_137, %c0_138, %c0_139], %198 {strides = array<i32>} : memref<1x4x64x128xf32, #tpu.memory_space<vmem>>, vector<1x1x64x128xf32>,
    %cst_140 = arith.constant dense<0.000000e+00> : vector<128xf32>
    %199 = vector.multi_reduction <add>, %195, %cst_140 [0] : vector<64x128xf32> to vector<128xf32>
    %200 = vector.shape_cast %199 : vector<128xf32> to vector<1x128xf32>
    %201 = arith.addf %155, %200 : vector<1x128xf32>
    %202 = arith.mulf %195, %195 : vector<64x128xf32>
    %cst_141 = arith.constant dense<0.000000e+00> : vector<128xf32>
    %203 = vector.multi_reduction <add>, %202, %cst_141 [0] : vector<64x128xf32> to vector<128xf32>
    %204 = vector.shape_cast %203 : vector<128xf32> to vector<1x128xf32>
    %205 = arith.addf %156, %204 : vector<1x128xf32>
    %c1_142 = arith.constant 1 : index
    %c0_143 = arith.constant 0 : index
    %c0_144 = arith.constant 0 : index
    %c0_145 = arith.constant 0 : index
    %206 = vector.load %arg5[%c1_142, %c0_143, %c0_144, %c0_145] : memref<4x9x9x128xbf16, #tpu.memory_space<vmem>>, vector<1x8x8x128xbf16>
    %207 = vector.shape_cast %206 : vector<1x8x8x128xbf16> to vector<8x8x128xbf16>
    %208 = vector.shape_cast %207 : vector<8x8x128xbf16> to vector<64x128xbf16>
    %c0_146 = arith.constant 0 : index
    %c0_147 = arith.constant 0 : index
    %209 = vector.load %arg6[%c0_146, %c0_147] : memref<64x1152xbf16, #tpu.memory_space<vmem>>, vector<64x128xbf16>
    tpu.vector_store %arg6[%c0_146, %c0_147], %208 {strides = array<i32>} : memref<64x1152xbf16, #tpu.memory_space<vmem>>, vector<64x128xbf16>,
    %c0_148 = arith.constant 0 : index
    %c0_149 = arith.constant 0 : index
    %c1_150 = arith.constant 1 : index
    %c0_151 = arith.constant 0 : index
    %210 = vector.load %arg5[%c0_148, %c0_149, %c1_150, %c0_151] : memref<4x9x9x128xbf16, #tpu.memory_space<vmem>>, vector<1x8x8x128xbf16>
    %211 = vector.shape_cast %210 : vector<1x8x8x128xbf16> to vector<8x8x128xbf16>
    %212 = vector.shape_cast %211 : vector<8x8x128xbf16> to vector<64x128xbf16>
    %c0_152 = arith.constant 0 : index
    %c128_153 = arith.constant 128 : index
    %213 = vector.load %arg6[%c0_152, %c128_153] : memref<64x1152xbf16, #tpu.memory_space<vmem>>, vector<64x128xbf16>
    tpu.vector_store %arg6[%c0_152, %c128_153], %212 {strides = array<i32>} : memref<64x1152xbf16, #tpu.memory_space<vmem>>, vector<64x128xbf16>,
    %c1_154 = arith.constant 1 : index
    %c0_155 = arith.constant 0 : index
    %c1_156 = arith.constant 1 : index
    %c0_157 = arith.constant 0 : index
    %214 = vector.load %arg5[%c1_154, %c0_155, %c1_156, %c0_157] : memref<4x9x9x128xbf16, #tpu.memory_space<vmem>>, vector<1x8x8x128xbf16>
    %215 = vector.shape_cast %214 : vector<1x8x8x128xbf16> to vector<8x8x128xbf16>
    %216 = vector.shape_cast %215 : vector<8x8x128xbf16> to vector<64x128xbf16>
    %c0_158 = arith.constant 0 : index
    %c256_159 = arith.constant 256 : index
    %217 = vector.load %arg6[%c0_158, %c256_159] : memref<64x1152xbf16, #tpu.memory_space<vmem>>, vector<64x128xbf16>
    tpu.vector_store %arg6[%c0_158, %c256_159], %216 {strides = array<i32>} : memref<64x1152xbf16, #tpu.memory_space<vmem>>, vector<64x128xbf16>,
    %c3_160 = arith.constant 3 : index
    %c0_161 = arith.constant 0 : index
    %c0_162 = arith.constant 0 : index
    %c0_163 = arith.constant 0 : index
    %218 = vector.load %arg5[%c3_160, %c0_161, %c0_162, %c0_163] : memref<4x9x9x128xbf16, #tpu.memory_space<vmem>>, vector<1x8x8x128xbf16>
    %219 = vector.shape_cast %218 : vector<1x8x8x128xbf16> to vector<8x8x128xbf16>
    %220 = vector.shape_cast %219 : vector<8x8x128xbf16> to vector<64x128xbf16>
    %c0_164 = arith.constant 0 : index
    %c384_165 = arith.constant 384 : index
    %221 = vector.load %arg6[%c0_164, %c384_165] : memref<64x1152xbf16, #tpu.memory_space<vmem>>, vector<64x128xbf16>
    tpu.vector_store %arg6[%c0_164, %c384_165], %220 {strides = array<i32>} : memref<64x1152xbf16, #tpu.memory_space<vmem>>, vector<64x128xbf16>,
    %c2_166 = arith.constant 2 : index
    %c0_167 = arith.constant 0 : index
    %c1_168 = arith.constant 1 : index
    %c0_169 = arith.constant 0 : index
    %222 = vector.load %arg5[%c2_166, %c0_167, %c1_168, %c0_169] : memref<4x9x9x128xbf16, #tpu.memory_space<vmem>>, vector<1x8x8x128xbf16>
    %223 = vector.shape_cast %222 : vector<1x8x8x128xbf16> to vector<8x8x128xbf16>
    %224 = vector.shape_cast %223 : vector<8x8x128xbf16> to vector<64x128xbf16>
    %c0_170 = arith.constant 0 : index
    %c512_171 = arith.constant 512 : index
    %225 = vector.load %arg6[%c0_170, %c512_171] : memref<64x1152xbf16, #tpu.memory_space<vmem>>, vector<64x128xbf16>
    tpu.vector_store %arg6[%c0_170, %c512_171], %224 {strides = array<i32>} : memref<64x1152xbf16, #tpu.memory_space<vmem>>, vector<64x128xbf16>,
    %c3_172 = arith.constant 3 : index
    %c0_173 = arith.constant 0 : index
    %c1_174 = arith.constant 1 : index
    %c0_175 = arith.constant 0 : index
    %226 = vector.load %arg5[%c3_172, %c0_173, %c1_174, %c0_175] : memref<4x9x9x128xbf16, #tpu.memory_space<vmem>>, vector<1x8x8x128xbf16>
    %227 = vector.shape_cast %226 : vector<1x8x8x128xbf16> to vector<8x8x128xbf16>
    %228 = vector.shape_cast %227 : vector<8x8x128xbf16> to vector<64x128xbf16>
    %c0_176 = arith.constant 0 : index
    %c640_177 = arith.constant 640 : index
    %229 = vector.load %arg6[%c0_176, %c640_177] : memref<64x1152xbf16, #tpu.memory_space<vmem>>, vector<64x128xbf16>
    tpu.vector_store %arg6[%c0_176, %c640_177], %228 {strides = array<i32>} : memref<64x1152xbf16, #tpu.memory_space<vmem>>, vector<64x128xbf16>,
    %c1_178 = arith.constant 1 : index
    %c1_179 = arith.constant 1 : index
    %c0_180 = arith.constant 0 : index
    %c0_181 = arith.constant 0 : index
    %230 = vector.load %arg5[%c1_178, %c1_179, %c0_180, %c0_181] : memref<4x9x9x128xbf16, #tpu.memory_space<vmem>>, vector<1x8x8x128xbf16>
    %231 = vector.shape_cast %230 : vector<1x8x8x128xbf16> to vector<8x8x128xbf16>
    %232 = vector.shape_cast %231 : vector<8x8x128xbf16> to vector<64x128xbf16>
    %c0_182 = arith.constant 0 : index
    %c768_183 = arith.constant 768 : index
    %233 = vector.load %arg6[%c0_182, %c768_183] : memref<64x1152xbf16, #tpu.memory_space<vmem>>, vector<64x128xbf16>
    tpu.vector_store %arg6[%c0_182, %c768_183], %232 {strides = array<i32>} : memref<64x1152xbf16, #tpu.memory_space<vmem>>, vector<64x128xbf16>,
    %c0_184 = arith.constant 0 : index
    %c1_185 = arith.constant 1 : index
    %c1_186 = arith.constant 1 : index
    %c0_187 = arith.constant 0 : index
    %234 = vector.load %arg5[%c0_184, %c1_185, %c1_186, %c0_187] : memref<4x9x9x128xbf16, #tpu.memory_space<vmem>>, vector<1x8x8x128xbf16>
    %235 = vector.shape_cast %234 : vector<1x8x8x128xbf16> to vector<8x8x128xbf16>
    %236 = vector.shape_cast %235 : vector<8x8x128xbf16> to vector<64x128xbf16>
    %c0_188 = arith.constant 0 : index
    %c896_189 = arith.constant 896 : index
    %237 = vector.load %arg6[%c0_188, %c896_189] : memref<64x1152xbf16, #tpu.memory_space<vmem>>, vector<64x128xbf16>
    tpu.vector_store %arg6[%c0_188, %c896_189], %236 {strides = array<i32>} : memref<64x1152xbf16, #tpu.memory_space<vmem>>, vector<64x128xbf16>,
    %c1_190 = arith.constant 1 : index
    %c1_191 = arith.constant 1 : index
    %c1_192 = arith.constant 1 : index
    %c0_193 = arith.constant 0 : index
    %238 = vector.load %arg5[%c1_190, %c1_191, %c1_192, %c0_193] : memref<4x9x9x128xbf16, #tpu.memory_space<vmem>>, vector<1x8x8x128xbf16>
    %239 = vector.shape_cast %238 : vector<1x8x8x128xbf16> to vector<8x8x128xbf16>
    %240 = vector.shape_cast %239 : vector<8x8x128xbf16> to vector<64x128xbf16>
    %c0_194 = arith.constant 0 : index
    %c1024_195 = arith.constant 1024 : index
    %241 = vector.load %arg6[%c0_194, %c1024_195] : memref<64x1152xbf16, #tpu.memory_space<vmem>>, vector<64x128xbf16>
    tpu.vector_store %arg6[%c0_194, %c1024_195], %240 {strides = array<i32>} : memref<64x1152xbf16, #tpu.memory_space<vmem>>, vector<64x128xbf16>,
    %c0_196 = arith.constant 0 : index
    %c0_197 = arith.constant 0 : index
    %242 = vector.load %arg6[%c0_196, %c0_197] : memref<64x1152xbf16, #tpu.memory_space<vmem>>, vector<64x1152xbf16>
    %c0_198 = arith.constant 0 : index
    %c0_199 = arith.constant 0 : index
    %243 = vector.load %arg3[%c0_198, %c0_199] : memref<1152x128xbf16, #tpu.memory_space<vmem>>, vector<1152x128xbf16>
    %cst_200 = arith.constant dense<0.000000e+00> : vector<64x128xf32>
    %244 = tpu.matmul %242, %243, %cst_200 {dimension_numbers = #tpu.dot_dimension_numbers<[1], [0], [0], [1], [0, 0, 1, 1], [], []>} : vector<64x1152xbf16>, vector<1152x128xbf16>, vector<64x128xf32> -> vector<64x128xf32>
    %c0_201 = arith.constant 0 : index
    %c1_202 = arith.constant 1 : index
    %c0_203 = arith.constant 0 : index
    %c0_204 = arith.constant 0 : index
    %245 = vector.load %arg4[%c0_201, %c1_202, %c0_203, %c0_204] : memref<1x4x64x128xf32, #tpu.memory_space<vmem>>, vector<1x1x64x128xf32>
    %246 = vector.shape_cast %245 : vector<1x1x64x128xf32> to vector<64x128xf32>
    %247 = vector.shape_cast %244 : vector<64x128xf32> to vector<1x1x64x128xf32>
    tpu.vector_store %arg4[%c0_201, %c1_202, %c0_203, %c0_204], %247 {strides = array<i32>} : memref<1x4x64x128xf32, #tpu.memory_space<vmem>>, vector<1x1x64x128xf32>,
    %cst_205 = arith.constant dense<0.000000e+00> : vector<128xf32>
    %248 = vector.multi_reduction <add>, %244, %cst_205 [0] : vector<64x128xf32> to vector<128xf32>
    %249 = vector.shape_cast %248 : vector<128xf32> to vector<1x128xf32>
    %250 = arith.addf %201, %249 : vector<1x128xf32>
    %251 = arith.mulf %244, %244 : vector<64x128xf32>
    %cst_206 = arith.constant dense<0.000000e+00> : vector<128xf32>
    %252 = vector.multi_reduction <add>, %251, %cst_206 [0] : vector<64x128xf32> to vector<128xf32>
    %253 = vector.shape_cast %252 : vector<128xf32> to vector<1x128xf32>
    %254 = arith.addf %205, %253 : vector<1x128xf32>
    %c2_207 = arith.constant 2 : index
    %c0_208 = arith.constant 0 : index
    %c0_209 = arith.constant 0 : index
    %c0_210 = arith.constant 0 : index
    %255 = vector.load %arg5[%c2_207, %c0_208, %c0_209, %c0_210] : memref<4x9x9x128xbf16, #tpu.memory_space<vmem>>, vector<1x8x8x128xbf16>
    %256 = vector.shape_cast %255 : vector<1x8x8x128xbf16> to vector<8x8x128xbf16>
    %257 = vector.shape_cast %256 : vector<8x8x128xbf16> to vector<64x128xbf16>
    %c0_211 = arith.constant 0 : index
    %c0_212 = arith.constant 0 : index
    %258 = vector.load %arg6[%c0_211, %c0_212] : memref<64x1152xbf16, #tpu.memory_space<vmem>>, vector<64x128xbf16>
    tpu.vector_store %arg6[%c0_211, %c0_212], %257 {strides = array<i32>} : memref<64x1152xbf16, #tpu.memory_space<vmem>>, vector<64x128xbf16>,
    %c3_213 = arith.constant 3 : index
    %c0_214 = arith.constant 0 : index
    %c0_215 = arith.constant 0 : index
    %c0_216 = arith.constant 0 : index
    %259 = vector.load %arg5[%c3_213, %c0_214, %c0_215, %c0_216] : memref<4x9x9x128xbf16, #tpu.memory_space<vmem>>, vector<1x8x8x128xbf16>
    %260 = vector.shape_cast %259 : vector<1x8x8x128xbf16> to vector<8x8x128xbf16>
    %261 = vector.shape_cast %260 : vector<8x8x128xbf16> to vector<64x128xbf16>
    %c0_217 = arith.constant 0 : index
    %c128_218 = arith.constant 128 : index
    %262 = vector.load %arg6[%c0_217, %c128_218] : memref<64x1152xbf16, #tpu.memory_space<vmem>>, vector<64x128xbf16>
    tpu.vector_store %arg6[%c0_217, %c128_218], %261 {strides = array<i32>} : memref<64x1152xbf16, #tpu.memory_space<vmem>>, vector<64x128xbf16>,
    %c2_219 = arith.constant 2 : index
    %c0_220 = arith.constant 0 : index
    %c1_221 = arith.constant 1 : index
    %c0_222 = arith.constant 0 : index
    %263 = vector.load %arg5[%c2_219, %c0_220, %c1_221, %c0_222] : memref<4x9x9x128xbf16, #tpu.memory_space<vmem>>, vector<1x8x8x128xbf16>
    %264 = vector.shape_cast %263 : vector<1x8x8x128xbf16> to vector<8x8x128xbf16>
    %265 = vector.shape_cast %264 : vector<8x8x128xbf16> to vector<64x128xbf16>
    %c0_223 = arith.constant 0 : index
    %c256_224 = arith.constant 256 : index
    %266 = vector.load %arg6[%c0_223, %c256_224] : memref<64x1152xbf16, #tpu.memory_space<vmem>>, vector<64x128xbf16>
    tpu.vector_store %arg6[%c0_223, %c256_224], %265 {strides = array<i32>} : memref<64x1152xbf16, #tpu.memory_space<vmem>>, vector<64x128xbf16>,
    %c0_225 = arith.constant 0 : index
    %c1_226 = arith.constant 1 : index
    %c0_227 = arith.constant 0 : index
    %c0_228 = arith.constant 0 : index
    %267 = vector.load %arg5[%c0_225, %c1_226, %c0_227, %c0_228] : memref<4x9x9x128xbf16, #tpu.memory_space<vmem>>, vector<1x8x8x128xbf16>
    %268 = vector.shape_cast %267 : vector<1x8x8x128xbf16> to vector<8x8x128xbf16>
    %269 = vector.shape_cast %268 : vector<8x8x128xbf16> to vector<64x128xbf16>
    %c0_229 = arith.constant 0 : index
    %c384_230 = arith.constant 384 : index
    %270 = vector.load %arg6[%c0_229, %c384_230] : memref<64x1152xbf16, #tpu.memory_space<vmem>>, vector<64x128xbf16>
    tpu.vector_store %arg6[%c0_229, %c384_230], %269 {strides = array<i32>} : memref<64x1152xbf16, #tpu.memory_space<vmem>>, vector<64x128xbf16>,
    %c1_231 = arith.constant 1 : index
    %c1_232 = arith.constant 1 : index
    %c0_233 = arith.constant 0 : index
    %c0_234 = arith.constant 0 : index
    %271 = vector.load %arg5[%c1_231, %c1_232, %c0_233, %c0_234] : memref<4x9x9x128xbf16, #tpu.memory_space<vmem>>, vector<1x8x8x128xbf16>
    %272 = vector.shape_cast %271 : vector<1x8x8x128xbf16> to vector<8x8x128xbf16>
    %273 = vector.shape_cast %272 : vector<8x8x128xbf16> to vector<64x128xbf16>
    %c0_235 = arith.constant 0 : index
    %c512_236 = arith.constant 512 : index
    %274 = vector.load %arg6[%c0_235, %c512_236] : memref<64x1152xbf16, #tpu.memory_space<vmem>>, vector<64x128xbf16>
    tpu.vector_store %arg6[%c0_235, %c512_236], %273 {strides = array<i32>} : memref<64x1152xbf16, #tpu.memory_space<vmem>>, vector<64x128xbf16>,
    %c0_237 = arith.constant 0 : index
    %c1_238 = arith.constant 1 : index
    %c1_239 = arith.constant 1 : index
    %c0_240 = arith.constant 0 : index
    %275 = vector.load %arg5[%c0_237, %c1_238, %c1_239, %c0_240] : memref<4x9x9x128xbf16, #tpu.memory_space<vmem>>, vector<1x8x8x128xbf16>
    %276 = vector.shape_cast %275 : vector<1x8x8x128xbf16> to vector<8x8x128xbf16>
    %277 = vector.shape_cast %276 : vector<8x8x128xbf16> to vector<64x128xbf16>
    %c0_241 = arith.constant 0 : index
    %c640_242 = arith.constant 640 : index
    %278 = vector.load %arg6[%c0_241, %c640_242] : memref<64x1152xbf16, #tpu.memory_space<vmem>>, vector<64x128xbf16>
    tpu.vector_store %arg6[%c0_241, %c640_242], %277 {strides = array<i32>} : memref<64x1152xbf16, #tpu.memory_space<vmem>>, vector<64x128xbf16>,
    %c2_243 = arith.constant 2 : index
    %c1_244 = arith.constant 1 : index
    %c0_245 = arith.constant 0 : index
    %c0_246 = arith.constant 0 : index
    %279 = vector.load %arg5[%c2_243, %c1_244, %c0_245, %c0_246] : memref<4x9x9x128xbf16, #tpu.memory_space<vmem>>, vector<1x8x8x128xbf16>
    %280 = vector.shape_cast %279 : vector<1x8x8x128xbf16> to vector<8x8x128xbf16>
    %281 = vector.shape_cast %280 : vector<8x8x128xbf16> to vector<64x128xbf16>
    %c0_247 = arith.constant 0 : index
    %c768_248 = arith.constant 768 : index
    %282 = vector.load %arg6[%c0_247, %c768_248] : memref<64x1152xbf16, #tpu.memory_space<vmem>>, vector<64x128xbf16>
    tpu.vector_store %arg6[%c0_247, %c768_248], %281 {strides = array<i32>} : memref<64x1152xbf16, #tpu.memory_space<vmem>>, vector<64x128xbf16>,
    %c3_249 = arith.constant 3 : index
    %c1_250 = arith.constant 1 : index
    %c0_251 = arith.constant 0 : index
    %c0_252 = arith.constant 0 : index
    %283 = vector.load %arg5[%c3_249, %c1_250, %c0_251, %c0_252] : memref<4x9x9x128xbf16, #tpu.memory_space<vmem>>, vector<1x8x8x128xbf16>
    %284 = vector.shape_cast %283 : vector<1x8x8x128xbf16> to vector<8x8x128xbf16>
    %285 = vector.shape_cast %284 : vector<8x8x128xbf16> to vector<64x128xbf16>
    %c0_253 = arith.constant 0 : index
    %c896_254 = arith.constant 896 : index
    %286 = vector.load %arg6[%c0_253, %c896_254] : memref<64x1152xbf16, #tpu.memory_space<vmem>>, vector<64x128xbf16>
    tpu.vector_store %arg6[%c0_253, %c896_254], %285 {strides = array<i32>} : memref<64x1152xbf16, #tpu.memory_space<vmem>>, vector<64x128xbf16>,
    %c2_255 = arith.constant 2 : index
    %c1_256 = arith.constant 1 : index
    %c1_257 = arith.constant 1 : index
    %c0_258 = arith.constant 0 : index
    %287 = vector.load %arg5[%c2_255, %c1_256, %c1_257, %c0_258] : memref<4x9x9x128xbf16, #tpu.memory_space<vmem>>, vector<1x8x8x128xbf16>
    %288 = vector.shape_cast %287 : vector<1x8x8x128xbf16> to vector<8x8x128xbf16>
    %289 = vector.shape_cast %288 : vector<8x8x128xbf16> to vector<64x128xbf16>
    %c0_259 = arith.constant 0 : index
    %c1024_260 = arith.constant 1024 : index
    %290 = vector.load %arg6[%c0_259, %c1024_260] : memref<64x1152xbf16, #tpu.memory_space<vmem>>, vector<64x128xbf16>
    tpu.vector_store %arg6[%c0_259, %c1024_260], %289 {strides = array<i32>} : memref<64x1152xbf16, #tpu.memory_space<vmem>>, vector<64x128xbf16>,
    %c0_261 = arith.constant 0 : index
    %c0_262 = arith.constant 0 : index
    %291 = vector.load %arg6[%c0_261, %c0_262] : memref<64x1152xbf16, #tpu.memory_space<vmem>>, vector<64x1152xbf16>
    %c0_263 = arith.constant 0 : index
    %c0_264 = arith.constant 0 : index
    %292 = vector.load %arg3[%c0_263, %c0_264] : memref<1152x128xbf16, #tpu.memory_space<vmem>>, vector<1152x128xbf16>
    %cst_265 = arith.constant dense<0.000000e+00> : vector<64x128xf32>
    %293 = tpu.matmul %291, %292, %cst_265 {dimension_numbers = #tpu.dot_dimension_numbers<[1], [0], [0], [1], [0, 0, 1, 1], [], []>} : vector<64x1152xbf16>, vector<1152x128xbf16>, vector<64x128xf32> -> vector<64x128xf32>
    %c0_266 = arith.constant 0 : index
    %c2_267 = arith.constant 2 : index
    %c0_268 = arith.constant 0 : index
    %c0_269 = arith.constant 0 : index
    %294 = vector.load %arg4[%c0_266, %c2_267, %c0_268, %c0_269] : memref<1x4x64x128xf32, #tpu.memory_space<vmem>>, vector<1x1x64x128xf32>
    %295 = vector.shape_cast %294 : vector<1x1x64x128xf32> to vector<64x128xf32>
    %296 = vector.shape_cast %293 : vector<64x128xf32> to vector<1x1x64x128xf32>
    tpu.vector_store %arg4[%c0_266, %c2_267, %c0_268, %c0_269], %296 {strides = array<i32>} : memref<1x4x64x128xf32, #tpu.memory_space<vmem>>, vector<1x1x64x128xf32>,
    %cst_270 = arith.constant dense<0.000000e+00> : vector<128xf32>
    %297 = vector.multi_reduction <add>, %293, %cst_270 [0] : vector<64x128xf32> to vector<128xf32>
    %298 = vector.shape_cast %297 : vector<128xf32> to vector<1x128xf32>
    %299 = arith.addf %250, %298 : vector<1x128xf32>
    %300 = arith.mulf %293, %293 : vector<64x128xf32>
    %cst_271 = arith.constant dense<0.000000e+00> : vector<128xf32>
    %301 = vector.multi_reduction <add>, %300, %cst_271 [0] : vector<64x128xf32> to vector<128xf32>
    %302 = vector.shape_cast %301 : vector<128xf32> to vector<1x128xf32>
    %303 = arith.addf %254, %302 : vector<1x128xf32>
    %c3_272 = arith.constant 3 : index
    %c0_273 = arith.constant 0 : index
    %c0_274 = arith.constant 0 : index
    %c0_275 = arith.constant 0 : index
    %304 = vector.load %arg5[%c3_272, %c0_273, %c0_274, %c0_275] : memref<4x9x9x128xbf16, #tpu.memory_space<vmem>>, vector<1x8x8x128xbf16>
    %305 = vector.shape_cast %304 : vector<1x8x8x128xbf16> to vector<8x8x128xbf16>
    %306 = vector.shape_cast %305 : vector<8x8x128xbf16> to vector<64x128xbf16>
    %c0_276 = arith.constant 0 : index
    %c0_277 = arith.constant 0 : index
    %307 = vector.load %arg6[%c0_276, %c0_277] : memref<64x1152xbf16, #tpu.memory_space<vmem>>, vector<64x128xbf16>
    tpu.vector_store %arg6[%c0_276, %c0_277], %306 {strides = array<i32>} : memref<64x1152xbf16, #tpu.memory_space<vmem>>, vector<64x128xbf16>,
    %c2_278 = arith.constant 2 : index
    %c0_279 = arith.constant 0 : index
    %c1_280 = arith.constant 1 : index
    %c0_281 = arith.constant 0 : index
    %308 = vector.load %arg5[%c2_278, %c0_279, %c1_280, %c0_281] : memref<4x9x9x128xbf16, #tpu.memory_space<vmem>>, vector<1x8x8x128xbf16>
    %309 = vector.shape_cast %308 : vector<1x8x8x128xbf16> to vector<8x8x128xbf16>
    %310 = vector.shape_cast %309 : vector<8x8x128xbf16> to vector<64x128xbf16>
    %c0_282 = arith.constant 0 : index
    %c128_283 = arith.constant 128 : index
    %311 = vector.load %arg6[%c0_282, %c128_283] : memref<64x1152xbf16, #tpu.memory_space<vmem>>, vector<64x128xbf16>
    tpu.vector_store %arg6[%c0_282, %c128_283], %310 {strides = array<i32>} : memref<64x1152xbf16, #tpu.memory_space<vmem>>, vector<64x128xbf16>,
    %c3_284 = arith.constant 3 : index
    %c0_285 = arith.constant 0 : index
    %c1_286 = arith.constant 1 : index
    %c0_287 = arith.constant 0 : index
    %312 = vector.load %arg5[%c3_284, %c0_285, %c1_286, %c0_287] : memref<4x9x9x128xbf16, #tpu.memory_space<vmem>>, vector<1x8x8x128xbf16>
    %313 = vector.shape_cast %312 : vector<1x8x8x128xbf16> to vector<8x8x128xbf16>
    %314 = vector.shape_cast %313 : vector<8x8x128xbf16> to vector<64x128xbf16>
    %c0_288 = arith.constant 0 : index
    %c256_289 = arith.constant 256 : index
    %315 = vector.load %arg6[%c0_288, %c256_289] : memref<64x1152xbf16, #tpu.memory_space<vmem>>, vector<64x128xbf16>
    tpu.vector_store %arg6[%c0_288, %c256_289], %314 {strides = array<i32>} : memref<64x1152xbf16, #tpu.memory_space<vmem>>, vector<64x128xbf16>,
    %c1_290 = arith.constant 1 : index
    %c1_291 = arith.constant 1 : index
    %c0_292 = arith.constant 0 : index
    %c0_293 = arith.constant 0 : index
    %316 = vector.load %arg5[%c1_290, %c1_291, %c0_292, %c0_293] : memref<4x9x9x128xbf16, #tpu.memory_space<vmem>>, vector<1x8x8x128xbf16>
    %317 = vector.shape_cast %316 : vector<1x8x8x128xbf16> to vector<8x8x128xbf16>
    %318 = vector.shape_cast %317 : vector<8x8x128xbf16> to vector<64x128xbf16>
    %c0_294 = arith.constant 0 : index
    %c384_295 = arith.constant 384 : index
    %319 = vector.load %arg6[%c0_294, %c384_295] : memref<64x1152xbf16, #tpu.memory_space<vmem>>, vector<64x128xbf16>
    tpu.vector_store %arg6[%c0_294, %c384_295], %318 {strides = array<i32>} : memref<64x1152xbf16, #tpu.memory_space<vmem>>, vector<64x128xbf16>,
    %c0_296 = arith.constant 0 : index
    %c1_297 = arith.constant 1 : index
    %c1_298 = arith.constant 1 : index
    %c0_299 = arith.constant 0 : index
    %320 = vector.load %arg5[%c0_296, %c1_297, %c1_298, %c0_299] : memref<4x9x9x128xbf16, #tpu.memory_space<vmem>>, vector<1x8x8x128xbf16>
    %321 = vector.shape_cast %320 : vector<1x8x8x128xbf16> to vector<8x8x128xbf16>
    %322 = vector.shape_cast %321 : vector<8x8x128xbf16> to vector<64x128xbf16>
    %c0_300 = arith.constant 0 : index
    %c512_301 = arith.constant 512 : index
    %323 = vector.load %arg6[%c0_300, %c512_301] : memref<64x1152xbf16, #tpu.memory_space<vmem>>, vector<64x128xbf16>
    tpu.vector_store %arg6[%c0_300, %c512_301], %322 {strides = array<i32>} : memref<64x1152xbf16, #tpu.memory_space<vmem>>, vector<64x128xbf16>,
    %c1_302 = arith.constant 1 : index
    %c1_303 = arith.constant 1 : index
    %c1_304 = arith.constant 1 : index
    %c0_305 = arith.constant 0 : index
    %324 = vector.load %arg5[%c1_302, %c1_303, %c1_304, %c0_305] : memref<4x9x9x128xbf16, #tpu.memory_space<vmem>>, vector<1x8x8x128xbf16>
    %325 = vector.shape_cast %324 : vector<1x8x8x128xbf16> to vector<8x8x128xbf16>
    %326 = vector.shape_cast %325 : vector<8x8x128xbf16> to vector<64x128xbf16>
    %c0_306 = arith.constant 0 : index
    %c640_307 = arith.constant 640 : index
    %327 = vector.load %arg6[%c0_306, %c640_307] : memref<64x1152xbf16, #tpu.memory_space<vmem>>, vector<64x128xbf16>
    tpu.vector_store %arg6[%c0_306, %c640_307], %326 {strides = array<i32>} : memref<64x1152xbf16, #tpu.memory_space<vmem>>, vector<64x128xbf16>,
    %c3_308 = arith.constant 3 : index
    %c1_309 = arith.constant 1 : index
    %c0_310 = arith.constant 0 : index
    %c0_311 = arith.constant 0 : index
    %328 = vector.load %arg5[%c3_308, %c1_309, %c0_310, %c0_311] : memref<4x9x9x128xbf16, #tpu.memory_space<vmem>>, vector<1x8x8x128xbf16>
    %329 = vector.shape_cast %328 : vector<1x8x8x128xbf16> to vector<8x8x128xbf16>
    %330 = vector.shape_cast %329 : vector<8x8x128xbf16> to vector<64x128xbf16>
    %c0_312 = arith.constant 0 : index
    %c768_313 = arith.constant 768 : index
    %331 = vector.load %arg6[%c0_312, %c768_313] : memref<64x1152xbf16, #tpu.memory_space<vmem>>, vector<64x128xbf16>
    tpu.vector_store %arg6[%c0_312, %c768_313], %330 {strides = array<i32>} : memref<64x1152xbf16, #tpu.memory_space<vmem>>, vector<64x128xbf16>,
    %c2_314 = arith.constant 2 : index
    %c1_315 = arith.constant 1 : index
    %c1_316 = arith.constant 1 : index
    %c0_317 = arith.constant 0 : index
    %332 = vector.load %arg5[%c2_314, %c1_315, %c1_316, %c0_317] : memref<4x9x9x128xbf16, #tpu.memory_space<vmem>>, vector<1x8x8x128xbf16>
    %333 = vector.shape_cast %332 : vector<1x8x8x128xbf16> to vector<8x8x128xbf16>
    %334 = vector.shape_cast %333 : vector<8x8x128xbf16> to vector<64x128xbf16>
    %c0_318 = arith.constant 0 : index
    %c896_319 = arith.constant 896 : index
    %335 = vector.load %arg6[%c0_318, %c896_319] : memref<64x1152xbf16, #tpu.memory_space<vmem>>, vector<64x128xbf16>
    tpu.vector_store %arg6[%c0_318, %c896_319], %334 {strides = array<i32>} : memref<64x1152xbf16, #tpu.memory_space<vmem>>, vector<64x128xbf16>,
    %c3_320 = arith.constant 3 : index
    %c1_321 = arith.constant 1 : index
    %c1_322 = arith.constant 1 : index
    %c0_323 = arith.constant 0 : index
    %336 = vector.load %arg5[%c3_320, %c1_321, %c1_322, %c0_323] : memref<4x9x9x128xbf16, #tpu.memory_space<vmem>>, vector<1x8x8x128xbf16>
    %337 = vector.shape_cast %336 : vector<1x8x8x128xbf16> to vector<8x8x128xbf16>
    %338 = vector.shape_cast %337 : vector<8x8x128xbf16> to vector<64x128xbf16>
    %c0_324 = arith.constant 0 : index
    %c1024_325 = arith.constant 1024 : index
    %339 = vector.load %arg6[%c0_324, %c1024_325] : memref<64x1152xbf16, #tpu.memory_space<vmem>>, vector<64x128xbf16>
    tpu.vector_store %arg6[%c0_324, %c1024_325], %338 {strides = array<i32>} : memref<64x1152xbf16, #tpu.memory_space<vmem>>, vector<64x128xbf16>,
    %c0_326 = arith.constant 0 : index
    %c0_327 = arith.constant 0 : index
    %340 = vector.load %arg6[%c0_326, %c0_327] : memref<64x1152xbf16, #tpu.memory_space<vmem>>, vector<64x1152xbf16>
    %c0_328 = arith.constant 0 : index
    %c0_329 = arith.constant 0 : index
    %341 = vector.load %arg3[%c0_328, %c0_329] : memref<1152x128xbf16, #tpu.memory_space<vmem>>, vector<1152x128xbf16>
    %cst_330 = arith.constant dense<0.000000e+00> : vector<64x128xf32>
    %342 = tpu.matmul %340, %341, %cst_330 {dimension_numbers = #tpu.dot_dimension_numbers<[1], [0], [0], [1], [0, 0, 1, 1], [], []>} : vector<64x1152xbf16>, vector<1152x128xbf16>, vector<64x128xf32> -> vector<64x128xf32>
    %c0_331 = arith.constant 0 : index
    %c3_332 = arith.constant 3 : index
    %c0_333 = arith.constant 0 : index
    %c0_334 = arith.constant 0 : index
    %343 = vector.load %arg4[%c0_331, %c3_332, %c0_333, %c0_334] : memref<1x4x64x128xf32, #tpu.memory_space<vmem>>, vector<1x1x64x128xf32>
    %344 = vector.shape_cast %343 : vector<1x1x64x128xf32> to vector<64x128xf32>
    %345 = vector.shape_cast %342 : vector<64x128xf32> to vector<1x1x64x128xf32>
    tpu.vector_store %arg4[%c0_331, %c3_332, %c0_333, %c0_334], %345 {strides = array<i32>} : memref<1x4x64x128xf32, #tpu.memory_space<vmem>>, vector<1x1x64x128xf32>,
    %cst_335 = arith.constant dense<0.000000e+00> : vector<128xf32>
    %346 = vector.multi_reduction <add>, %342, %cst_335 [0] : vector<64x128xf32> to vector<128xf32>
    %347 = vector.shape_cast %346 : vector<128xf32> to vector<1x128xf32>
    %348 = arith.addf %299, %347 : vector<1x128xf32>
    %349 = arith.mulf %342, %342 : vector<64x128xf32>
    %cst_336 = arith.constant dense<0.000000e+00> : vector<128xf32>
    %350 = vector.multi_reduction <add>, %349, %cst_336 [0] : vector<64x128xf32> to vector<128xf32>
    %351 = vector.shape_cast %350 : vector<128xf32> to vector<1x128xf32>
    %352 = arith.addf %303, %351 : vector<1x128xf32>
    %cst_337 = arith.constant 2.560000e+02 : f32
    %353 = vector.broadcast %cst_337 : f32 to vector<1x128xf32>
    %354 = arith.divf %348, %353 : vector<1x128xf32>
    %cst_338 = arith.constant 2.560000e+02 : f32
    %355 = vector.broadcast %cst_338 : f32 to vector<1x128xf32>
    %356 = arith.divf %352, %355 : vector<1x128xf32>
    %357 = arith.mulf %354, %354 : vector<1x128xf32>
    %358 = arith.subf %356, %357 : vector<1x128xf32>
    %cst_339 = arith.constant 0.000000e+00 : f32
    %359 = vector.broadcast %cst_339 : f32 to vector<1x128xf32>
    %360 = arith.maximumf %358, %359 : vector<1x128xf32>
    %cst_340 = arith.constant 9.99999974E-6 : f32
    %361 = vector.broadcast %cst_340 : f32 to vector<1x128xf32>
    %362 = arith.addf %360, %361 : vector<1x128xf32>
    %363 = math.rsqrt %362 : vector<1x128xf32>
    %c0_341 = arith.constant 0 : index
    %c0_342 = arith.constant 0 : index
    %c0_343 = arith.constant 0 : index
    %c0_344 = arith.constant 0 : index
    %364 = vector.load %arg4[%c0_341, %c0_342, %c0_343, %c0_344] : memref<1x4x64x128xf32, #tpu.memory_space<vmem>>, vector<1x1x64x128xf32>
    %365 = vector.shape_cast %364 : vector<1x1x64x128xf32> to vector<64x128xf32>
    %366 = vector.broadcast %354 : vector<1x128xf32> to vector<64x128xf32>
    %367 = arith.subf %365, %366 : vector<64x128xf32>
    %368 = vector.broadcast %363 : vector<1x128xf32> to vector<64x128xf32>
    %369 = arith.mulf %367, %368 : vector<64x128xf32>
    %cst_345 = arith.constant 5.000000e-01 : f32
    %370 = vector.broadcast %cst_345 : f32 to vector<64x128xf32>
    %371 = arith.mulf %370, %369 : vector<64x128xf32>
    %cst_346 = arith.constant 0.707106769 : f32
    %372 = vector.broadcast %cst_346 : f32 to vector<64x128xf32>
    %373 = arith.mulf %369, %372 : vector<64x128xf32>
    %374 = math.erf %373 : vector<64x128xf32>
    %cst_347 = arith.constant 1.000000e+00 : f32
    %375 = vector.broadcast %cst_347 : f32 to vector<64x128xf32>
    %376 = arith.addf %375, %374 : vector<64x128xf32>
    %377 = arith.mulf %371, %376 : vector<64x128xf32>
    %c0_348 = arith.constant 0 : index
    %c0_349 = arith.constant 0 : index
    %c0_350 = arith.constant 0 : index
    %c0_351 = arith.constant 0 : index
    %378 = vector.load %arg4[%c0_348, %c0_349, %c0_350, %c0_351] : memref<1x4x64x128xf32, #tpu.memory_space<vmem>>, vector<1x1x64x128xf32>
    %379 = vector.shape_cast %378 : vector<1x1x64x128xf32> to vector<64x128xf32>
    %380 = vector.shape_cast %377 : vector<64x128xf32> to vector<1x1x64x128xf32>
    tpu.vector_store %arg4[%c0_348, %c0_349, %c0_350, %c0_351], %380 {strides = array<i32>} : memref<1x4x64x128xf32, #tpu.memory_space<vmem>>, vector<1x1x64x128xf32>,
    %c0_352 = arith.constant 0 : index
    %c1_353 = arith.constant 1 : index
    %c0_354 = arith.constant 0 : index
    %c0_355 = arith.constant 0 : index
    %381 = vector.load %arg4[%c0_352, %c1_353, %c0_354, %c0_355] : memref<1x4x64x128xf32, #tpu.memory_space<vmem>>, vector<1x1x64x128xf32>
    %382 = vector.shape_cast %381 : vector<1x1x64x128xf32> to vector<64x128xf32>
    %383 = vector.broadcast %354 : vector<1x128xf32> to vector<64x128xf32>
    %384 = arith.subf %382, %383 : vector<64x128xf32>
    %385 = vector.broadcast %363 : vector<1x128xf32> to vector<64x128xf32>
    %386 = arith.mulf %384, %385 : vector<64x128xf32>
    %cst_356 = arith.constant 5.000000e-01 : f32
    %387 = vector.broadcast %cst_356 : f32 to vector<64x128xf32>
    %388 = arith.mulf %387, %386 : vector<64x128xf32>
    %cst_357 = arith.constant 0.707106769 : f32
    %389 = vector.broadcast %cst_357 : f32 to vector<64x128xf32>
    %390 = arith.mulf %386, %389 : vector<64x128xf32>
    %391 = math.erf %390 : vector<64x128xf32>
    %cst_358 = arith.constant 1.000000e+00 : f32
    %392 = vector.broadcast %cst_358 : f32 to vector<64x128xf32>
    %393 = arith.addf %392, %391 : vector<64x128xf32>
    %394 = arith.mulf %388, %393 : vector<64x128xf32>
    %c0_359 = arith.constant 0 : index
    %c1_360 = arith.constant 1 : index
    %c0_361 = arith.constant 0 : index
    %c0_362 = arith.constant 0 : index
    %395 = vector.load %arg4[%c0_359, %c1_360, %c0_361, %c0_362] : memref<1x4x64x128xf32, #tpu.memory_space<vmem>>, vector<1x1x64x128xf32>
    %396 = vector.shape_cast %395 : vector<1x1x64x128xf32> to vector<64x128xf32>
    %397 = vector.shape_cast %394 : vector<64x128xf32> to vector<1x1x64x128xf32>
    tpu.vector_store %arg4[%c0_359, %c1_360, %c0_361, %c0_362], %397 {strides = array<i32>} : memref<1x4x64x128xf32, #tpu.memory_space<vmem>>, vector<1x1x64x128xf32>,
    %c0_363 = arith.constant 0 : index
    %c2_364 = arith.constant 2 : index
    %c0_365 = arith.constant 0 : index
    %c0_366 = arith.constant 0 : index
    %398 = vector.load %arg4[%c0_363, %c2_364, %c0_365, %c0_366] : memref<1x4x64x128xf32, #tpu.memory_space<vmem>>, vector<1x1x64x128xf32>
    %399 = vector.shape_cast %398 : vector<1x1x64x128xf32> to vector<64x128xf32>
    %400 = vector.broadcast %354 : vector<1x128xf32> to vector<64x128xf32>
    %401 = arith.subf %399, %400 : vector<64x128xf32>
    %402 = vector.broadcast %363 : vector<1x128xf32> to vector<64x128xf32>
    %403 = arith.mulf %401, %402 : vector<64x128xf32>
    %cst_367 = arith.constant 5.000000e-01 : f32
    %404 = vector.broadcast %cst_367 : f32 to vector<64x128xf32>
    %405 = arith.mulf %404, %403 : vector<64x128xf32>
    %cst_368 = arith.constant 0.707106769 : f32
    %406 = vector.broadcast %cst_368 : f32 to vector<64x128xf32>
    %407 = arith.mulf %403, %406 : vector<64x128xf32>
    %408 = math.erf %407 : vector<64x128xf32>
    %cst_369 = arith.constant 1.000000e+00 : f32
    %409 = vector.broadcast %cst_369 : f32 to vector<64x128xf32>
    %410 = arith.addf %409, %408 : vector<64x128xf32>
    %411 = arith.mulf %405, %410 : vector<64x128xf32>
    %c0_370 = arith.constant 0 : index
    %c2_371 = arith.constant 2 : index
    %c0_372 = arith.constant 0 : index
    %c0_373 = arith.constant 0 : index
    %412 = vector.load %arg4[%c0_370, %c2_371, %c0_372, %c0_373] : memref<1x4x64x128xf32, #tpu.memory_space<vmem>>, vector<1x1x64x128xf32>
    %413 = vector.shape_cast %412 : vector<1x1x64x128xf32> to vector<64x128xf32>
    %414 = vector.shape_cast %411 : vector<64x128xf32> to vector<1x1x64x128xf32>
    tpu.vector_store %arg4[%c0_370, %c2_371, %c0_372, %c0_373], %414 {strides = array<i32>} : memref<1x4x64x128xf32, #tpu.memory_space<vmem>>, vector<1x1x64x128xf32>,
    %c0_374 = arith.constant 0 : index
    %c3_375 = arith.constant 3 : index
    %c0_376 = arith.constant 0 : index
    %c0_377 = arith.constant 0 : index
    %415 = vector.load %arg4[%c0_374, %c3_375, %c0_376, %c0_377] : memref<1x4x64x128xf32, #tpu.memory_space<vmem>>, vector<1x1x64x128xf32>
    %416 = vector.shape_cast %415 : vector<1x1x64x128xf32> to vector<64x128xf32>
    %417 = vector.broadcast %354 : vector<1x128xf32> to vector<64x128xf32>
    %418 = arith.subf %416, %417 : vector<64x128xf32>
    %419 = vector.broadcast %363 : vector<1x128xf32> to vector<64x128xf32>
    %420 = arith.mulf %418, %419 : vector<64x128xf32>
    %cst_378 = arith.constant 5.000000e-01 : f32
    %421 = vector.broadcast %cst_378 : f32 to vector<64x128xf32>
    %422 = arith.mulf %421, %420 : vector<64x128xf32>
    %cst_379 = arith.constant 0.707106769 : f32
    %423 = vector.broadcast %cst_379 : f32 to vector<64x128xf32>
    %424 = arith.mulf %420, %423 : vector<64x128xf32>
    %425 = math.erf %424 : vector<64x128xf32>
    %cst_380 = arith.constant 1.000000e+00 : f32
    %426 = vector.broadcast %cst_380 : f32 to vector<64x128xf32>
    %427 = arith.addf %426, %425 : vector<64x128xf32>
    %428 = arith.mulf %422, %427 : vector<64x128xf32>
    %c0_381 = arith.constant 0 : index
    %c3_382 = arith.constant 3 : index
    %c0_383 = arith.constant 0 : index
    %c0_384 = arith.constant 0 : index
    %429 = vector.load %arg4[%c0_381, %c3_382, %c0_383, %c0_384] : memref<1x4x64x128xf32, #tpu.memory_space<vmem>>, vector<1x1x64x128xf32>
    %430 = vector.shape_cast %429 : vector<1x1x64x128xf32> to vector<64x128xf32>
    %431 = vector.shape_cast %428 : vector<64x128xf32> to vector<1x1x64x128xf32>
    tpu.vector_store %arg4[%c0_381, %c3_382, %c0_383, %c0_384], %431 {strides = array<i32>} : memref<1x4x64x128xf32, #tpu.memory_space<vmem>>, vector<1x1x64x128xf32>,
    return
  }
  func.func @transform_0(%arg0: i32) -> (i32, i32, i32, i32) {
    %c0_i32 = arith.constant 0 : i32
    %c0_i32_0 = arith.constant 0 : i32
    %c0_i32_1 = arith.constant 0 : i32
    %c0_i32_2 = arith.constant 0 : i32
    return %arg0, %c0_i32, %c0_i32_0, %c0_i32_1 : i32, i32, i32, i32
  }
  func.func @transform_1(%arg0: i32) -> (i32, i32) {
    %c0_i32 = arith.constant 0 : i32
    %c0_i32_0 = arith.constant 0 : i32
    %c0_i32_1 = arith.constant 0 : i32
    return %c0_i32, %c0_i32_0 : i32, i32
  }
  func.func @transform_2(%arg0: i32) -> (i32, i32) {
    %c0_i32 = arith.constant 0 : i32
    %c0_i32_0 = arith.constant 0 : i32
    %c0_i32_1 = arith.constant 0 : i32
    return %c0_i32, %c0_i32_0 : i32, i32
  }
  func.func @transform_3(%arg0: i32) -> (i32, i32, i32, i32) {
    %c0_i32 = arith.constant 0 : i32
    %c0_i32_0 = arith.constant 0 : i32
    %c0_i32_1 = arith.constant 0 : i32
    %c0_i32_2 = arith.constant 0 : i32
    return %arg0, %c0_i32, %c0_i32_0, %c0_i32_1 : i32, i32, i32, i32
  }
}

</mosaic_0001>

<llo_original>
// kernel: ginka_upsample.1
$region0: #{ginka_upsample.1}
  #allocation0 [shape = 'u32[]', space=smem, size = 0x4, offset = 0x4, fixed_abs, tag = 'smem constant byte address 0x4 - core index']
  #allocation1 [shape = 'u32[144,128]{1,0:T(1,128)}', space=vmem, size = 0x12000, scoped, tag = 'internal scratch']
  #allocation2 [shape = 'bf16[4,9,9,128]{3,2,1,0:T(8,128)(2,1)}', space=vmem, size = 0x24000, scoped, tag = 'scratch operand']
  #allocation3 [shape = 'bf16[64,1152]{1,0:T(16,128)(2,1)}', space=vmem, size = 0x24000, scoped, tag = 'scratch operand']
  %s0 = inlined_call_operand.vmem [shape: bf16[2,8,8,4], index: 0, kind: input, shape index: {}]
  %s1 = inlined_call_operand.vmem [shape: bf16[4,512], index: 1, kind: input, shape index: {}]
  %s2 = inlined_call_operand.vmem [shape: bf16[1152,128], index: 2, kind: input, shape index: {}]
  %s3 = inlined_call_operand.vmem [shape: f32[2,4,64,128], index: 3, kind: output, shape index: {}]
  %s4 = sld [smem:[#allocation0]]
  $region45: #{ginka_upsample.1} parent=0
    _
  %s6 = ssub.s32 1, %s4
  %s7 = scalar_select 0, %s6, %s4
  loop: start=0, step=1, limit=4
  $region2: #{ginka_upsample.1} parent=0 // loop_pre_header
    _
  $region3: #{ginka_upsample.1} parent=0 // loop_header
    %s9 = sphi 0, %s13
    %p10 = scmp.ge.s32.totalorder %s9, 4
    %s19 = sphi 0, %s21
    %s22 = sphi 0, %s19
    %s23 = sphi 0, %s22
    %s39 = sphi 0, %s23
    %s43 = sphi 0, %s43
    %s45 = sphi 0, %s43
    %s46 = sphi 0, %s45
    %s60 = sphi 0, %s46
    %s64 = sphi 0, %s64
    %s66 = sphi 0, %s64
    %s67 = sphi 0, %s66
    %s81 = sphi 0, %s67
    %s87 = sphi 0, %s89
    %s90 = sphi 0, %s87
    %s91 = sphi 0, %s90
    %s107 = sphi 0, %s91
  $region4: #{ginka_upsample.1} parent=0 // loop_header_branch
    %12 = sbr.rel (%p10) target = $region8
  $region5: #{ginka_upsample.1} parent=0 // loop_body
    %s14 = ssub.s32 %s9, 1
    %s15 = ssub.s32 %s9, 2
    %s16 = sadd.s32 %s9, 1
    %s17 = ssub.s32 %s9, %s16
    %p18 = scmp.eq.s32.totalorder %s17, 0
    %s20 = sadd.s32 %s19, 1
    %s21 = scalar_select %p18, %s19, %s20
    %p24 = pneg %p18
    %p25 = scmp.eq.s32.totalorder %s9, 1
    %p26 = por %p24, %p25
    %p27 = scmp.ne.s32.totalorder %s19, %s22
    %p28 = scmp.eq.s32.totalorder %s9, 0
    %p29 = por %p27, %p28
    %p30 = scmp.ne.s32.totalorder %s19, %s22
    %p31 = scmp.eq.s32.totalorder %s14, 1
    %p32 = por %p30, %p31
    %p33 = scmp.ne.s32.totalorder %s22, %s23
    %p34 = scmp.eq.s32.totalorder %s14, 0
    %p35 = por %p33, %p34
    %p36 = scmp.ne.s32.totalorder %s22, %s23
    %p37 = scmp.eq.s32.totalorder %s15, 1
    %p38 = por %p36, %p37
    %p40 = scmp.ne.s32.totalorder %s23, %s39
    %p41 = scmp.eq.s32.totalorder %s15, 0
    %p42 = por %p40, %p41
    %s44 = sadd.s32 %s43, 1
    %p47 = scmp.eq.s32.totalorder %s9, 1
    %p48 = scmp.ne.s32.totalorder %s43, %s45
    %p49 = scmp.eq.s32.totalorder %s9, 0
    %p50 = por %p48, %p49
    %p51 = scmp.ne.s32.totalorder %s43, %s45
    %p52 = scmp.eq.s32.totalorder %s14, 1
    %p53 = por %p51, %p52
    %p54 = scmp.ne.s32.totalorder %s45, %s46
    %p55 = scmp.eq.s32.totalorder %s14, 0
    %p56 = por %p54, %p55
    %p57 = scmp.ne.s32.totalorder %s45, %s46
    %p58 = scmp.eq.s32.totalorder %s15, 1
    %p59 = por %p57, %p58
    %p61 = scmp.ne.s32.totalorder %s46, %s60
    %p62 = scmp.eq.s32.totalorder %s15, 0
    %p63 = por %p61, %p62
    %s65 = sadd.s32 %s64, 1
    %p68 = scmp.eq.s32.totalorder %s9, 1
    %p69 = scmp.ne.s32.totalorder %s64, %s66
    %p70 = scmp.eq.s32.totalorder %s9, 0
    %p71 = por %p69, %p70
    %p72 = scmp.ne.s32.totalorder %s64, %s66
    %p73 = scmp.eq.s32.totalorder %s14, 1
    %p74 = por %p72, %p73
    %p75 = scmp.ne.s32.totalorder %s66, %s67
    %p76 = scmp.eq.s32.totalorder %s14, 0
    %p77 = por %p75, %p76
    %p78 = scmp.ne.s32.totalorder %s66, %s67
    %p79 = scmp.eq.s32.totalorder %s15, 1
    %p80 = por %p78, %p79
    %p82 = scmp.ne.s32.totalorder %s67, %s81
    %p83 = scmp.eq.s32.totalorder %s15, 0
    %p84 = por %p82, %p83
    %s85 = ssub.s32 %s9, %s16
    %p86 = scmp.eq.s32.totalorder %s85, 0
    %s88 = sadd.s32 %s87, 1
    %s89 = scalar_select %p86, %s87, %s88
    %p92 = pneg %p86
    %p93 = scmp.eq.s32.totalorder %s9, 1
    %p94 = por %p92, %p93
    %p95 = scmp.ne.s32.totalorder %s87, %s90
    %p96 = scmp.eq.s32.totalorder %s9, 0
    %p97 = por %p95, %p96
    %p98 = scmp.ne.s32.totalorder %s87, %s90
    %p99 = scmp.eq.s32.totalorder %s14, 1
    %p100 = por %p98, %p99
    %p101 = scmp.ne.s32.totalorder %s90, %s91
    %p102 = scmp.eq.s32.totalorder %s14, 0
    %p103 = por %p101, %p102
    %p104 = scmp.ne.s32.totalorder %s90, %s91
    %p105 = scmp.eq.s32.totalorder %s15, 1
    %p106 = por %p104, %p105
    %p108 = scmp.ne.s32.totalorder %s91, %s107
    %p109 = scmp.eq.s32.totalorder %s15, 0
    %p110 = por %p108, %p109
    %p111 = scmp.le.s32.totalorder 1, %s9
    %p112 = scmp.lt.s32.totalorder %s9, 3
    %p113 = pnand %p111, %p112
    %p114 = pneg %p113
    // Predicated region
    $region9: #{ginka_upsample.1} parent=5 // pred_check
      _
    $region10: #{ginka_upsample.1} parent=5 // pred_check_branch
      %116 = sbr.rel (%p113) target = $region12
    $region11: #{ginka_upsample.1} parent=5 // pred_region
      %s117 = ssub.s32 %s9, 1
      // Predicated region
      $region13: #{ginka_upsample.1} parent=11 // pred_check
        %p118 = pneg %p56
      $region14: #{ginka_upsample.1} parent=11 // pred_check_branch
        %120 = sbr.rel (%p118) target = $region16
      $region15: #{ginka_upsample.1} parent=11 // pred_region
        _
      $region16: #{ginka_upsample.1} parent=11 // pred_fallthru
        _
      // Predicated region
      $region17: #{ginka_upsample.1} parent=11 // pred_check
        %p121 = pneg %p77
      $region18: #{ginka_upsample.1} parent=11 // pred_check_branch
        %123 = sbr.rel (%p121) target = $region20
      $region19: #{ginka_upsample.1} parent=11 // pred_region
        _
      $region20: #{ginka_upsample.1} parent=11 // pred_fallthru
        _
    $region12: #{ginka_upsample.1} parent=5 // pred_fallthru
      _
    %p124 = scmp.lt.s32.totalorder %s9, 2
    // Predicated region
    $region21: #{ginka_upsample.1} parent=5 // pred_check
      %p125 = pneg %p124
    $region22: #{ginka_upsample.1} parent=5 // pred_check_branch
      %127 = sbr.rel (%p125) target = $region24
    $region23: #{ginka_upsample.1} parent=5 // pred_region
      // Predicated region
      $region25: #{ginka_upsample.1} parent=23 // pred_check
        %p128 = pneg %p29
      $region26: #{ginka_upsample.1} parent=23 // pred_check_branch
        %130 = sbr.rel (%p128) target = $region28
      $region27: #{ginka_upsample.1} parent=23 // pred_region
        %p131 = scmp.lt.s32.totalorder %s9, 1
        %s132 = scalar_select %p131, %s9, 1
        %s133 = smul.addr %s132, 8
        %s134 = smul.addr %s133, 4
        %s135 = scalar_lea.vmem %s0, %s134
      $region28: #{ginka_upsample.1} parent=23 // pred_fallthru
        _
    $region24: #{ginka_upsample.1} parent=5 // pred_fallthru
      _
    %p136 = scmp.le.s32.totalorder 1, %s9
    %p137 = scmp.lt.s32.totalorder %s9, 3
    %p138 = pnand %p136, %p137
    %p139 = pneg %p138
    // Predicated region
    $region29: #{ginka_upsample.1} parent=5 // pred_check
      _
    $region30: #{ginka_upsample.1} parent=5 // pred_check_branch
      %141 = sbr.rel (%p138) target = $region32
    $region31: #{ginka_upsample.1} parent=5 // pred_region
      %s142 = ssub.s32 %s9, 1
      %p143 = scmp.lt.s32.totalorder %s14, 1
      %s144 = scalar_select %p143, %s14, 1
      %s145 = smul.addr %s144, 8
      %s146 = smul.addr %s145, 4
      %s147 = scalar_lea.vmem %s0, %s146
      %p148 = pneg %p35
      %p149 = pneg %p32
      %p150 = pneg %p56
      %p151 = pneg %p53
      %p152 = pneg %p77
      %p153 = pneg %p74
      %p154 = pneg %p103
      %p155 = pneg %p100
      %p156 = scmp.lt.s32.totalorder %s14, 1
      %s157 = scalar_select %p156, %s14, 1
      %s158 = smul.addr %s157, 32
      %s159 = smul.addr %s158, 8
      %s160 = scalar_lea.vmem %s3, %s159
      %p161 = scmp.lt.s32.totalorder %s14, 1
      %s162 = scalar_select %p161, %s14, 1
      %s163 = smul.addr %s162, 8
      %s164 = smul.addr %s163, 4
      %s165 = scalar_lea.vmem %s0, %s164
      %p166 = scmp.lt.s32.totalorder %s14, 1
      %s167 = scalar_select %p166, %s14, 1
      %s168 = smul.addr %s167, 32
      %s169 = smul.addr %s168, 8
      %s170 = scalar_lea.vmem %s3, %s169
      %v172 = vld [vmem:[%s165] sm:$0xf]
      %v173 = vld [vmem:[%s165 + $0x4] sm:$0xf]
      %v174 = vld [vmem:[%s165 + $0x8] sm:$0xf]
      %v175 = vld [vmem:[%s165 + $0xc] sm:$0xf]
      %v176 = vld [vmem:[%s165 + $0x10] sm:$0xf]
      %v177 = vld [vmem:[%s165 + $0x14] sm:$0xf]
      %v178 = vld [vmem:[%s165 + $0x18] sm:$0xf]
      %v179 = vld [vmem:[%s165 + $0x1c] sm:$0xf]
      %v180 = vld [vmem:[%s1] sm:$0xff]
      %v189 = vunpack.c.l.b16 %v172
      %v190 = vunpack.c.l.b16 %v173
      %v191 = vunpack.c.l.b16 %v174
      %v192 = vunpack.c.l.b16 %v175
      %v193 = vunpack.c.l.b16 %v176
      %v194 = vunpack.c.l.b16 %v177
      %v195 = vunpack.c.l.b16 %v178
      %v196 = vunpack.c.l.b16 %v179
      %v197 = vpack.c.b16 %v190, %v189
      %v198 = vpack.c.b16 %v192, %v191
      %v199 = vpack.c.b16 %v194, %v193
      %v200 = vpack.c.b16 %v196, %v195
      %v202 = vcombine.high %v180, %v180
      %v204 = vunpack.c.l.s4 1983009808
      %v205 = vunpack.c.0.s8 %v204
      %v206 = vlaneseq
      %v207 = vshrl.u32 %v206, 7
      %v208 = vsub.s32 %v205, %v207
      %v209 = vrot.slane %v180, %v208
      %v211 = vunpack.c.l.s4 1983009808
      %v212 = vunpack.c.0.s8 %v211
      %v213 = vlaneseq
      %v214 = vshrl.u32 %v213, 7
      %v215 = vsub.s32 %v212, %v214
      %v216 = vrot.slane %v202, %v215
      %v217 = vcombine.high %v209, %v209
      %v218 = vcombine.high %v216, %v216
      %vm219 = vcmask 31744
      %v221 = vsel %vm219, %v197, 0
      %v224 = vsel %vm219, %v198, 0
      %v227 = vsel %vm219, %v199, 0
      %v230 = vsel %vm219, %v200, 0
      %vm232 = vcmask 1041408
      %v234 = vsel %vm232, %v209, 0
      %v237 = vsel %vm232, %v217, 0
      %v240 = vsel %vm232, %v216, 0
      %v243 = vsel %vm232, %v218, 0
      %245 = vmatprep.subr.bf16.mxu0 %v237
      %246 = vmatpush1.bf16.msra.mxu0 %v234
      %247 = vmatprep.subr.bf16.mxu0 0
      %248 = vmatpush1.bf16.msra.mxu0 0
      %249 = vmatprep.subr.bf16.mxu0 0
      %250 = vmatpush1.bf16.msra.mxu0 0
      %251 = vmatprep.subr.bf16.mxu0 0
      %252 = vmatpush1.bf16.msra.mxu0 0
      %253 = vmatprep.subr.bf16.mxu0 0
      %254 = vmatpush1.bf16.msra.mxu0 0
      %255 = vmatprep.subr.bf16.mxu0 0
      %256 = vmatpush1.bf16.msra.mxu0 0
      %257 = vmatprep.subr.bf16.mxu0 0
      %258 = vmatpush1.bf16.msra.mxu0 0
      %259 = vmatprep.subr.bf16.mxu0 0
      %260 = vmatpush1.bf16.msra.mxu0 0
      %261 = vmatprep.subr.bf16.mxu0 0
      %262 = vmatpush1.bf16.msra.mxu0 0
      %263 = vmatprep.subr.bf16.mxu0 0
      %264 = vmatpush1.bf16.msra.mxu0 0
      %265 = vmatprep.subr.bf16.mxu0 0
      %266 = vmatpush1.bf16.msra.mxu0 0
      %267 = vmatprep.subr.bf16.mxu0 0
      %268 = vmatpush1.bf16.msra.mxu0 0
      %269 = vmatprep.subr.bf16.mxu0 0
      %270 = vmatpush1.bf16.msra.mxu0 0
      %271 = vmatprep.subr.bf16.mxu0 0
      %272 = vmatpush1.bf16.msra.mxu0 0
      %273 = vmatprep.subr.bf16.mxu0 0
      %274 = vmatpush1.bf16.msra.mxu0 0
      %275 = vmatprep.subr.bf16.mxu0 0
      %276 = vmatpush1.bf16.msra.mxu0 0
      %277 = vmatprep.mubr.bf16.mxu0 0
      %278 = vmatmul.mubr.bf16.gmra.mrb[0].mxu0 %v221
      %v279 = vpop.f32.mrb[0].mxu0
      %v280 = vadd.f32 0.0, %v279
      %v281 = vpop.f32.mrb[0].mxu0
      %v282 = vadd.f32 0.0, %v281
      %v283 = vpop.f32.mrb[0].mxu0
      %v284 = vadd.f32 0.0, %v283
      %v285 = vpop.f32.mrb[0].mxu0
      %v286 = vadd.f32 0.0, %v285
      %287 = vmatprep.mubr.bf16.mxu0 0
      %288 = vmatmul.mubr.bf16.gmra.mrb[0].mxu0 %v224
      %v289 = vpop.f32.mrb[0].mxu0
      %v290 = vadd.f32 0.0, %v289
      %v291 = vpop.f32.mrb[0].mxu0
      %v292 = vadd.f32 0.0, %v291
      %v293 = vpop.f32.mrb[0].mxu0
      %v294 = vadd.f32 0.0, %v293
      %v295 = vpop.f32.mrb[0].mxu0
      %v296 = vadd.f32 0.0, %v295
      %297 = vmatprep.mubr.bf16.mxu0 0
      %298 = vmatmul.mubr.bf16.gmra.mrb[0].mxu0 %v227
      %v299 = vpop.f32.mrb[0].mxu0
      %v300 = vadd.f32 0.0, %v299
      %v301 = vpop.f32.mrb[0].mxu0
      %v302 = vadd.f32 0.0, %v301
      %v303 = vpop.f32.mrb[0].mxu0
      %v304 = vadd.f32 0.0, %v303
      %v305 = vpop.f32.mrb[0].mxu0
      %v306 = vadd.f32 0.0, %v305
      %307 = vmatprep.mubr.bf16.mxu0 0
      %308 = vmatmul.mubr.bf16.gmra.mrb[0].mxu0 %v230
      %v309 = vpop.f32.mrb[0].mxu0
      %v310 = vadd.f32 0.0, %v309
      %v311 = vpop.f32.mrb[0].mxu0
      %v312 = vadd.f32 0.0, %v311
      %v313 = vpop.f32.mrb[0].mxu0
      %v314 = vadd.f32 0.0, %v313
      %v315 = vpop.f32.mrb[0].mxu0
      %v316 = vadd.f32 0.0, %v315
      %317 = vdwg.mxu0
      %318 = vmatprep.subr.bf16.mxu0 %v243
      %319 = vmatpush1.bf16.msra.mxu0 %v240
      %320 = vmatprep.subr.bf16.mxu0 0
      %321 = vmatpush1.bf16.msra.mxu0 0
      %322 = vmatprep.subr.bf16.mxu0 0
      %323 = vmatpush1.bf16.msra.mxu0 0
      %324 = vmatprep.subr.bf16.mxu0 0
      %325 = vmatpush1.bf16.msra.mxu0 0
      %326 = vmatprep.subr.bf16.mxu0 0
      %327 = vmatpush1.bf16.msra.mxu0 0
      %328 = vmatprep.subr.bf16.mxu0 0
      %329 = vmatpush1.bf16.msra.mxu0 0
      %330 = vmatprep.subr.bf16.mxu0 0
      %331 = vmatpush1.bf16.msra.mxu0 0
      %332 = vmatprep.subr.bf16.mxu0 0
      %333 = vmatpush1.bf16.msra.mxu0 0
      %334 = vmatprep.subr.bf16.mxu0 0
      %335 = vmatpush1.bf16.msra.mxu0 0
      %336 = vmatprep.subr.bf16.mxu0 0
      %337 = vmatpush1.bf16.msra.mxu0 0
      %338 = vmatprep.subr.bf16.mxu0 0
      %339 = vmatpush1.bf16.msra.mxu0 0
      %340 = vmatprep.subr.bf16.mxu0 0
      %341 = vmatpush1.bf16.msra.mxu0 0
      %342 = vmatprep.subr.bf16.mxu0 0
      %343 = vmatpush1.bf16.msra.mxu0 0
      %344 = vmatprep.subr.bf16.mxu0 0
      %345 = vmatpush1.bf16.msra.mxu0 0
      %346 = vmatprep.subr.bf16.mxu0 0
      %347 = vmatpush1.bf16.msra.mxu0 0
      %348 = vmatprep.subr.bf16.mxu0 0
      %349 = vmatpush1.bf16.msra.mxu0 0
      %350 = vmatprep.mubr.bf16.mxu0 0
      %351 = vmatmul.mubr.bf16.gmra.mrb[0].mxu0 %v221
      %v352 = vpop.f32.mrb[0].mxu0
      %v353 = vadd.f32 0.0, %v352
      %v354 = vpop.f32.mrb[0].mxu0
      %v355 = vadd.f32 0.0, %v354
      %v356 = vpop.f32.mrb[0].mxu0
      %v357 = vadd.f32 0.0, %v356
      %v358 = vpop.f32.mrb[0].mxu0
      %v359 = vadd.f32 0.0, %v358
      %360 = vmatprep.mubr.bf16.mxu0 0
      %361 = vmatmul.mubr.bf16.gmra.mrb[0].mxu0 %v224
      %v362 = vpop.f32.mrb[0].mxu0
      %v363 = vadd.f32 0.0, %v362
      %v364 = vpop.f32.mrb[0].mxu0
      %v365 = vadd.f32 0.0, %v364
      %v366 = vpop.f32.mrb[0].mxu0
      %v367 = vadd.f32 0.0, %v366
      %v368 = vpop.f32.mrb[0].mxu0
      %v369 = vadd.f32 0.0, %v368
      %370 = vmatprep.mubr.bf16.mxu0 0
      %371 = vmatmul.mubr.bf16.gmra.mrb[0].mxu0 %v227
      %v372 = vpop.f32.mrb[0].mxu0
      %v373 = vadd.f32 0.0, %v372
      %v374 = vpop.f32.mrb[0].mxu0
      %v375 = vadd.f32 0.0, %v374
      %v376 = vpop.f32.mrb[0].mxu0
      %v377 = vadd.f32 0.0, %v376
      %v378 = vpop.f32.mrb[0].mxu0
      %v379 = vadd.f32 0.0, %v378
      %380 = vmatprep.mubr.bf16.mxu0 0
      %381 = vmatmul.mubr.bf16.gmra.mrb[0].mxu0 %v230
      %v382 = vpop.f32.mrb[0].mxu0
      %v383 = vadd.f32 0.0, %v382
      %v384 = vpop.f32.mrb[0].mxu0
      %v385 = vadd.f32 0.0, %v384
      %v386 = vpop.f32.mrb[0].mxu0
      %v387 = vadd.f32 0.0, %v386
      %v388 = vpop.f32.mrb[0].mxu0
      %v389 = vadd.f32 0.0, %v388
      %390 = vdwg.mxu0
      %v391 = vadd.f32 %v280, %v284
      %v392 = vadd.f32 %v391, %v290
      %v393 = vadd.f32 %v392, %v294
      %v394 = vadd.f32 %v393, %v300
      %v395 = vadd.f32 %v394, %v304
      %v396 = vadd.f32 %v395, %v310
      %v397 = vadd.f32 %v396, %v314
      %v398 = vrot.slane %v397, 4
      %v399 = vadd.f32 %v397, %v398
      %v400 = vrot.slane %v399, 2
      %v401 = vadd.f32 %v399, %v400
      %v402 = vrot.slane %v401, 1
      %v403 = vadd.f32 %v401, %v402
      %v404 = vadd.f32 %v282, %v286
      %v405 = vadd.f32 %v404, %v292
      %v406 = vadd.f32 %v405, %v296
      %v407 = vadd.f32 %v406, %v302
      %v408 = vadd.f32 %v407, %v306
      %v409 = vadd.f32 %v408, %v312
      %v410 = vadd.f32 %v409, %v316
      %v411 = vrot.slane %v410, 4
      %v412 = vadd.f32 %v410, %v411
      %v413 = vrot.slane %v412, 2
      %v414 = vadd.f32 %v412, %v413
      %v415 = vrot.slane %v414, 1
      %v416 = vadd.f32 %v414, %v415
      %v417 = vadd.f32 %v353, %v357
      %v418 = vadd.f32 %v417, %v363
      %v419 = vadd.f32 %v418, %v367
      %v420 = vadd.f32 %v419, %v373
      %v421 = vadd.f32 %v420, %v377
      %v422 = vadd.f32 %v421, %v383
      %v423 = vadd.f32 %v422, %v387
      %v424 = vrot.slane %v423, 4
      %v425 = vadd.f32 %v423, %v424
      %v426 = vrot.slane %v425, 2
      %v427 = vadd.f32 %v425, %v426
      %v428 = vrot.slane %v427, 1
      %v429 = vadd.f32 %v427, %v428
      %v430 = vadd.f32 %v355, %v359
      %v431 = vadd.f32 %v430, %v365
      %v432 = vadd.f32 %v431, %v369
      %v433 = vadd.f32 %v432, %v375
      %v434 = vadd.f32 %v433, %v379
      %v435 = vadd.f32 %v434, %v385
      %v436 = vadd.f32 %v435, %v389
      %v437 = vrot.slane %v436, 4
      %v438 = vadd.f32 %v436, %v437
      %v439 = vrot.slane %v438, 2
      %v440 = vadd.f32 %v438, %v439
      %v441 = vrot.slane %v440, 1
      %v442 = vadd.f32 %v440, %v441
      %v443 = vmul.f32 %v280, %v280
      %v444 = vmul.f32 %v282, %v282
      %v445 = vmul.f32 %v353, %v353
      %v446 = vmul.f32 %v355, %v355
      %v447 = vmul.f32 %v284, %v284
      %v448 = vmul.f32 %v286, %v286
      %v449 = vmul.f32 %v357, %v357
      %v450 = vmul.f32 %v359, %v359
      %v451 = vmul.f32 %v290, %v290
      %v452 = vmul.f32 %v292, %v292
      %v453 = vmul.f32 %v363, %v363
      %v454 = vmul.f32 %v365, %v365
      %v455 = vmul.f32 %v294, %v294
      %v456 = vmul.f32 %v296, %v296
      %v457 = vmul.f32 %v367, %v367
      %v458 = vmul.f32 %v369, %v369
      %v459 = vmul.f32 %v300, %v300
      %v460 = vmul.f32 %v302, %v302
      %v461 = vmul.f32 %v373, %v373
      %v462 = vmul.f32 %v375, %v375
      %v463 = vmul.f32 %v304, %v304
      %v464 = vmul.f32 %v306, %v306
      %v465 = vmul.f32 %v377, %v377
      %v466 = vmul.f32 %v379, %v379
      %v467 = vmul.f32 %v310, %v310
      %v468 = vmul.f32 %v312, %v312
      %v469 = vmul.f32 %v383, %v383
      %v470 = vmul.f32 %v385, %v385
      %v471 = vmul.f32 %v314, %v314
      %v472 = vmul.f32 %v316, %v316
      %v473 = vmul.f32 %v387, %v387
      %v474 = vmul.f32 %v389, %v389
      %v475 = vadd.f32 %v443, %v447
      %v476 = vadd.f32 %v475, %v451
      %v477 = vadd.f32 %v476, %v455
      %v478 = vadd.f32 %v477, %v459
      %v479 = vadd.f32 %v478, %v463
      %v480 = vadd.f32 %v479, %v467
      %v481 = vadd.f32 %v480, %v471
      %v482 = vrot.slane %v481, 4
      %v483 = vadd.f32 %v481, %v482
      %v484 = vrot.slane %v483, 2
      %v485 = vadd.f32 %v483, %v484
      %v486 = vrot.slane %v485, 1
      %v487 = vadd.f32 %v485, %v486
      %v488 = vadd.f32 %v444, %v448
      %v489 = vadd.f32 %v488, %v452
      %v490 = vadd.f32 %v489, %v456
      %v491 = vadd.f32 %v490, %v460
      %v492 = vadd.f32 %v491, %v464
      %v493 = vadd.f32 %v492, %v468
      %v494 = vadd.f32 %v493, %v472
      %v495 = vrot.slane %v494, 4
      %v496 = vadd.f32 %v494, %v495
      %v497 = vrot.slane %v496, 2
      %v498 = vadd.f32 %v496, %v497
      %v499 = vrot.slane %v498, 1
      %v500 = vadd.f32 %v498, %v499
      %v501 = vadd.f32 %v445, %v449
      %v502 = vadd.f32 %v501, %v453
      %v503 = vadd.f32 %v502, %v457
      %v504 = vadd.f32 %v503, %v461
      %v505 = vadd.f32 %v504, %v465
      %v506 = vadd.f32 %v505, %v469
      %v507 = vadd.f32 %v506, %v473
      %v508 = vrot.slane %v507, 4
      %v509 = vadd.f32 %v507, %v508
      %v510 = vrot.slane %v509, 2
      %v511 = vadd.f32 %v509, %v510
      %v512 = vrot.slane %v511, 1
      %v513 = vadd.f32 %v511, %v512
      %v514 = vadd.f32 %v446, %v450
      %v515 = vadd.f32 %v514, %v454
      %v516 = vadd.f32 %v515, %v458
      %v517 = vadd.f32 %v516, %v462
      %v518 = vadd.f32 %v517, %v466
      %v519 = vadd.f32 %v518, %v470
      %v520 = vadd.f32 %v519, %v474
      %v521 = vrot.slane %v520, 4
      %v522 = vadd.f32 %v520, %v521
      %v523 = vrot.slane %v522, 2
      %v524 = vadd.f32 %v522, %v523
      %v525 = vrot.slane %v524, 1
      %v526 = vadd.f32 %v524, %v525
      %v527 = vadd.f32 %v403, %v416
      %v528 = vadd.f32 %v527, %v429
      %v529 = vadd.f32 %v528, %v442
      %v530 = vadd.f32 %v487, %v500
      %v531 = vadd.f32 %v530, %v513
      %v532 = vadd.f32 %v531, %v526
      %v533 = vrcp.pop 256.0
      %v534 = vmul.f32 %v529, %v533
      %v535 = vmul.f32 %v532, %v533
      %v536 = vmul.f32 %v534, %v534
      %v537 = vsub.f32 %v535, %v536
      %v538 = vmax.f32 %v537, 0.0
      %v539 = vadd.f32 %v538, 1e-05
      %v540 = vrsqrt.pop %v539
      %v541 = vsub.f32 %v280, %v534
      %v542 = vsub.f32 %v284, %v534
      %v543 = vsub.f32 %v290, %v534
      %v544 = vsub.f32 %v294, %v534
      %v545 = vsub.f32 %v300, %v534
      %v546 = vsub.f32 %v304, %v534
      %v547 = vsub.f32 %v310, %v534
      %v548 = vsub.f32 %v314, %v534
      %v549 = vmul.f32 %v541, %v540
      %v550 = vmul.f32 %v542, %v540
      %v551 = vmul.f32 %v543, %v540
      %v552 = vmul.f32 %v544, %v540
      %v553 = vmul.f32 %v545, %v540
      %v554 = vmul.f32 %v546, %v540
      %v555 = vmul.f32 %v547, %v540
      %v556 = vmul.f32 %v548, %v540
      %v557 = vmul.f32 %v549, 0.5
      %v558 = vmul.f32 %v550, 0.5
      %v559 = vmul.f32 %v551, 0.5
      %v560 = vmul.f32 %v552, 0.5
      %v561 = vmul.f32 %v553, 0.5
      %v562 = vmul.f32 %v554, 0.5
      %v563 = vmul.f32 %v555, 0.5
      %v564 = vmul.f32 %v556, 0.5
      %v565 = vmul.f32 %v549, 0.70710677
      %v566 = vmul.f32 %v550, 0.70710677
      %v567 = vmul.f32 %v551, 0.70710677
      %v568 = vmul.f32 %v552, 0.70710677
      %v569 = vmul.f32 %v553, 0.70710677
      %v570 = vmul.f32 %v554, 0.70710677
      %v571 = vmul.f32 %v555, 0.70710677
      %v572 = vmul.f32 %v556, 0.70710677
      %v573 = verf.f32.pop %v565
      %v574 = verf.f32.pop %v566
      %v575 = verf.f32.pop %v567
      %v576 = verf.f32.pop %v568
      %v577 = verf.f32.pop %v569
      %v578 = verf.f32.pop %v570
      %v579 = verf.f32.pop %v571
      %v580 = verf.f32.pop %v572
      %v581 = vadd.f32 %v573, 1.0
      %v582 = vadd.f32 %v574, 1.0
      %v583 = vadd.f32 %v575, 1.0
      %v584 = vadd.f32 %v576, 1.0
      %v585 = vadd.f32 %v577, 1.0
      %v586 = vadd.f32 %v578, 1.0
      %v587 = vadd.f32 %v579, 1.0
      %v588 = vadd.f32 %v580, 1.0
      %v589 = vmul.f32 %v557, %v581
      %v590 = vmul.f32 %v558, %v582
      %v591 = vmul.f32 %v559, %v583
      %v592 = vmul.f32 %v560, %v584
      %v593 = vmul.f32 %v561, %v585
      %v594 = vmul.f32 %v562, %v586
      %v595 = vmul.f32 %v563, %v587
      %v596 = vmul.f32 %v564, %v588
      %v597 = vpack.c.bf16 %v590, %v589
      %v598 = vpack.c.bf16 %v592, %v591
      %v599 = vpack.c.bf16 %v594, %v593
      %v600 = vpack.c.bf16 %v596, %v595
      %v605 = vunpack.c.l.b16 %v597
      %v606 = vunpack.c.h.b16 %v597
      %v607 = vunpack.c.l.b16 %v598
      %v608 = vunpack.c.h.b16 %v598
      %v609 = vunpack.c.l.b16 %v599
      %v610 = vunpack.c.h.b16 %v599
      %v611 = vunpack.c.l.b16 %v600
      %v612 = vunpack.c.h.b16 %v600
      %v613 = vpack.c.b16 %v605, %v605
      %v614 = vpack.c.b16 %v606, %v606
      %v615 = vpack.c.b16 %v607, %v607
      %v616 = vpack.c.b16 %v608, %v608
      %v617 = vpack.c.b16 %v609, %v609
      %v618 = vpack.c.b16 %v610, %v610
      %v619 = vpack.c.b16 %v611, %v611
      %v620 = vpack.c.b16 %v612, %v612
      %s629 = scalar_lea.vmem [#allocation2], 216
      %630 = vst [vmem:[%s629] sm:$0xf] %v613
      %631 = vst [vmem:[%s629 + $0x8] sm:$0xf] %v614
      %632 = vst [vmem:[%s629 + $0x10] sm:$0xf] %v615
      %633 = vst [vmem:[%s629 + $0x18] sm:$0xf] %v616
      %634 = vst [vmem:[%s629 + $0x20] sm:$0xf] %v617
      %635 = vst [vmem:[%s629 + $0x28] sm:$0xf] %v618
      %636 = vst [vmem:[%s629 + $0x30] sm:$0xf] %v619
      %637 = vst [vmem:[%s629 + $0x38] sm:$0xf] %v620
      %s638 = scalar_lea.vmem [#allocation2], 72
      %639 = vst [vmem:[%s638] sm:$0xf] %v613
      %s640 = scalar_lea.vmem [#allocation2], 144
      %vm641 = vcmask 1040384
      %vm642 = vsmask.f32 256
      %vm643 = vmand %vm641, %vm642
      %v644 = vld [vmem:[%s640] sm:$0x1]
      %v645 = vsel %vm643, %v613, %v644
      %646 = vst [vmem:[%s640] sm:$0x1] %v645
      %v647 = vld [vmem:[%s640 + $0x8] sm:$0x1]
      %v648 = vsel %vm643, %v614, %v647
      %649 = vst [vmem:[%s640 + $0x8] sm:$0x1] %v648
      %v650 = vld [vmem:[%s640 + $0x10] sm:$0x1]
      %v651 = vsel %vm643, %v615, %v650
      %652 = vst [vmem:[%s640 + $0x10] sm:$0x1] %v651
      %v653 = vld [vmem:[%s640 + $0x18] sm:$0x1]
      %v654 = vsel %vm643, %v616, %v653
      %655 = vst [vmem:[%s640 + $0x18] sm:$0x1] %v654
      %v656 = vld [vmem:[%s640 + $0x20] sm:$0x1]
      %v657 = vsel %vm643, %v617, %v656
      %658 = vst [vmem:[%s640 + $0x20] sm:$0x1] %v657
      %v659 = vld [vmem:[%s640 + $0x28] sm:$0x1]
      %v660 = vsel %vm643, %v618, %v659
      %661 = vst [vmem:[%s640 + $0x28] sm:$0x1] %v660
      %v662 = vld [vmem:[%s640 + $0x30] sm:$0x1]
      %v663 = vsel %vm643, %v619, %v662
      %664 = vst [vmem:[%s640 + $0x30] sm:$0x1] %v663
      %v665 = vld [vmem:[%s640 + $0x38] sm:$0x1]
      %v666 = vsel %vm643, %v620, %v665
      %667 = vst [vmem:[%s640 + $0x38] sm:$0x1] %v666
      %v668 = vld [vmem:[#allocation2] sm:$0x1]
      %v669 = vsel %vm643, %v597, %v668
      %670 = vst [vmem:[#allocation2] sm:$0x1] %v669
      %v671 = vsub.f32 %v282, %v534
      %v672 = vsub.f32 %v286, %v534
      %v673 = vsub.f32 %v292, %v534
      %v674 = vsub.f32 %v296, %v534
      %v675 = vsub.f32 %v302, %v534
      %v676 = vsub.f32 %v306, %v534
      %v677 = vsub.f32 %v312, %v534
      %v678 = vsub.f32 %v316, %v534
      %v679 = vmul.f32 %v671, %v540
      %v680 = vmul.f32 %v672, %v540
      %v681 = vmul.f32 %v673, %v540
      %v682 = vmul.f32 %v674, %v540
      %v683 = vmul.f32 %v675, %v540
      %v684 = vmul.f32 %v676, %v540
      %v685 = vmul.f32 %v677, %v540
      %v686 = vmul.f32 %v678, %v540
      %v687 = vmul.f32 %v679, 0.5
      %v688 = vmul.f32 %v680, 0.5
      %v689 = vmul.f32 %v681, 0.5
      %v690 = vmul.f32 %v682, 0.5
      %v691 = vmul.f32 %v683, 0.5
      %v692 = vmul.f32 %v684, 0.5
      %v693 = vmul.f32 %v685, 0.5
      %v694 = vmul.f32 %v686, 0.5
      %v695 = vmul.f32 %v679, 0.70710677
      %v696 = vmul.f32 %v680, 0.70710677
      %v697 = vmul.f32 %v681, 0.70710677
      %v698 = vmul.f32 %v682, 0.70710677
      %v699 = vmul.f32 %v683, 0.70710677
      %v700 = vmul.f32 %v684, 0.70710677
      %v701 = vmul.f32 %v685, 0.70710677
      %v702 = vmul.f32 %v686, 0.70710677
      %v703 = verf.f32.pop %v695
      %v704 = verf.f32.pop %v696
      %v705 = verf.f32.pop %v697
      %v706 = verf.f32.pop %v698
      %v707 = verf.f32.pop %v699
      %v708 = verf.f32.pop %v700
      %v709 = verf.f32.pop %v701
      %v710 = verf.f32.pop %v702
      %v711 = vadd.f32 %v703, 1.0
      %v712 = vadd.f32 %v704, 1.0
      %v713 = vadd.f32 %v705, 1.0
      %v714 = vadd.f32 %v706, 1.0
      %v715 = vadd.f32 %v707, 1.0
      %v716 = vadd.f32 %v708, 1.0
      %v717 = vadd.f32 %v709, 1.0
      %v718 = vadd.f32 %v710, 1.0
      %v719 = vmul.f32 %v687, %v711
      %v720 = vmul.f32 %v688, %v712
      %v721 = vmul.f32 %v689, %v713
      %v722 = vmul.f32 %v690, %v714
      %v723 = vmul.f32 %v691, %v715
      %v724 = vmul.f32 %v692, %v716
      %v725 = vmul.f32 %v693, %v717
      %v726 = vmul.f32 %v694, %v718
      %v727 = vpack.c.bf16 %v720, %v719
      %v728 = vpack.c.bf16 %v722, %v721
      %v729 = vpack.c.bf16 %v724, %v723
      %v730 = vpack.c.bf16 %v726, %v725
      %v735 = vunpack.c.l.b16 %v727
      %v736 = vunpack.c.h.b16 %v727
      %v737 = vunpack.c.l.b16 %v728
      %v738 = vunpack.c.h.b16 %v728
      %v739 = vunpack.c.l.b16 %v729
      %v740 = vunpack.c.h.b16 %v729
      %v741 = vunpack.c.l.b16 %v730
      %v742 = vunpack.c.h.b16 %v730
      %v743 = vpack.c.b16 %v735, %v735
      %v744 = vpack.c.b16 %v736, %v736
      %v745 = vpack.c.b16 %v737, %v737
      %v746 = vpack.c.b16 %v738, %v738
      %v747 = vpack.c.b16 %v739, %v739
      %v748 = vpack.c.b16 %v740, %v740
      %v749 = vpack.c.b16 %v741, %v741
      %v750 = vpack.c.b16 %v742, %v742
      %v752 = vshrl.u32 %v743, 16
      %v754 = vrot.slane %v752, 7
      %v755 = vshll.u32 %v743, 16
      %v757 = vor.u32 %v754, %v755
      %v758 = vrot.slane %v754, 4
      %v760 = vshrl.u32 %v744, 16
      %v762 = vrot.slane %v760, 7
      %v763 = vshll.u32 %v744, 16
      %v765 = vor.u32 %v762, %v763
      %v766 = vrot.slane %v762, 4
      %v768 = vshrl.u32 %v745, 16
      %v770 = vrot.slane %v768, 7
      %v771 = vshll.u32 %v745, 16
      %v773 = vor.u32 %v770, %v771
      %v774 = vrot.slane %v770, 4
      %v776 = vshrl.u32 %v746, 16
      %v778 = vrot.slane %v776, 7
      %v779 = vshll.u32 %v746, 16
      %v781 = vor.u32 %v778, %v779
      %v782 = vrot.slane %v778, 4
      %v784 = vshrl.u32 %v747, 16
      %v786 = vrot.slane %v784, 7
      %v787 = vshll.u32 %v747, 16
      %v789 = vor.u32 %v786, %v787
      %v790 = vrot.slane %v786, 4
      %v792 = vshrl.u32 %v748, 16
      %v794 = vrot.slane %v792, 7
      %v795 = vshll.u32 %v748, 16
      %v797 = vor.u32 %v794, %v795
      %v798 = vrot.slane %v794, 4
      %v800 = vshrl.u32 %v749, 16
      %v802 = vrot.slane %v800, 7
      %v803 = vshll.u32 %v749, 16
      %v805 = vor.u32 %v802, %v803
      %v806 = vrot.slane %v802, 4
      %v808 = vshrl.u32 %v750, 16
      %v810 = vrot.slane %v808, 7
      %v811 = vshll.u32 %v750, 16
      %v813 = vor.u32 %v810, %v811
      %v814 = vrot.slane %v810, 4
      %vm831 = vcmask 1043456
      %vm832 = vsmask.f32 7938
      %vm833 = vmand %vm831, %vm832
      %v834 = vld [vmem:[%s640] sm:$0xf]
      %v835 = vsel %vm833, %v757, %v834
      %836 = vst [vmem:[%s640] sm:$0xf] %v835
      %v837 = vld [vmem:[%s640 + $0x4] sm:$0x1]
      %v838 = vsel %vm643, %v758, %v837
      %839 = vst [vmem:[%s640 + $0x4] sm:$0x1] %v838
      %v840 = vld [vmem:[%s640 + $0x8] sm:$0xf]
      %v841 = vsel %vm833, %v765, %v840
      %842 = vst [vmem:[%s640 + $0x8] sm:$0xf] %v841
      %v843 = vld [vmem:[%s640 + $0xc] sm:$0x1]
      %v844 = vsel %vm643, %v766, %v843
      %845 = vst [vmem:[%s640 + $0xc] sm:$0x1] %v844
      %v846 = vld [vmem:[%s640 + $0x10] sm:$0xf]
      %v847 = vsel %vm833, %v773, %v846
      %848 = vst [vmem:[%s640 + $0x10] sm:$0xf] %v847
      %v849 = vld [vmem:[%s640 + $0x14] sm:$0x1]
      %v850 = vsel %vm643, %v774, %v849
      %851 = vst [vmem:[%s640 + $0x14] sm:$0x1] %v850
      %v852 = vld [vmem:[%s640 + $0x18] sm:$0xf]
      %v853 = vsel %vm833, %v781, %v852
      %854 = vst [vmem:[%s640 + $0x18] sm:$0xf] %v853
      %v855 = vld [vmem:[%s640 + $0x1c] sm:$0x1]
      %v856 = vsel %vm643, %v782, %v855
      %857 = vst [vmem:[%s640 + $0x1c] sm:$0x1] %v856
      %v858 = vld [vmem:[%s640 + $0x20] sm:$0xf]
      %v859 = vsel %vm833, %v789, %v858
      %860 = vst [vmem:[%s640 + $0x20] sm:$0xf] %v859
      %v861 = vld [vmem:[%s640 + $0x24] sm:$0x1]
      %v862 = vsel %vm643, %v790, %v861
      %863 = vst [vmem:[%s640 + $0x24] sm:$0x1] %v862
      %v864 = vld [vmem:[%s640 + $0x28] sm:$0xf]
      %v865 = vsel %vm833, %v797, %v864
      %866 = vst [vmem:[%s640 + $0x28] sm:$0xf] %v865
      %v867 = vld [vmem:[%s640 + $0x2c] sm:$0x1]
      %v868 = vsel %vm643, %v798, %v867
      %869 = vst [vmem:[%s640 + $0x2c] sm:$0x1] %v868
      %v870 = vld [vmem:[%s640 + $0x30] sm:$0xf]
      %v871 = vsel %vm833, %v805, %v870
      %872 = vst [vmem:[%s640 + $0x30] sm:$0xf] %v871
      %v873 = vld [vmem:[%s640 + $0x34] sm:$0x1]
      %v874 = vsel %vm643, %v806, %v873
      %875 = vst [vmem:[%s640 + $0x34] sm:$0x1] %v874
      %v876 = vld [vmem:[%s640 + $0x38] sm:$0xf]
      %v877 = vsel %vm833, %v813, %v876
      %878 = vst [vmem:[%s640 + $0x38] sm:$0xf] %v877
      %v879 = vld [vmem:[%s640 + $0x3c] sm:$0x1]
      %v880 = vsel %vm643, %v814, %v879
      %881 = vst [vmem:[%s640 + $0x3c] sm:$0x1] %v880
      %v882 = vld [vmem:[#allocation2] sm:$0xf]
      %v883 = vsel %vm833, %v757, %v882
      %884 = vst [vmem:[#allocation2] sm:$0xf] %v883
      %v885 = vld [vmem:[#allocation2 + $0x4] sm:$0x1]
      %v886 = vsel %vm643, %v758, %v885
      %887 = vst [vmem:[#allocation2 + $0x4] sm:$0x1] %v886
      %v888 = vld [vmem:[%s629 + $0x4] sm:$0x1]
      %v889 = vsel %vm643, %v758, %v888
      %890 = vst [vmem:[%s629 + $0x4] sm:$0x1] %v889
      %v891 = vld [vmem:[%s629 + $0xc] sm:$0x1]
      %v892 = vsel %vm643, %v766, %v891
      %893 = vst [vmem:[%s629 + $0xc] sm:$0x1] %v892
      %v894 = vld [vmem:[%s629 + $0x14] sm:$0x1]
      %v895 = vsel %vm643, %v774, %v894
      %896 = vst [vmem:[%s629 + $0x14] sm:$0x1] %v895
      %v897 = vld [vmem:[%s629 + $0x1c] sm:$0x1]
      %v898 = vsel %vm643, %v782, %v897
      %899 = vst [vmem:[%s629 + $0x1c] sm:$0x1] %v898
      %v900 = vld [vmem:[%s629 + $0x24] sm:$0x1]
      %v901 = vsel %vm643, %v790, %v900
      %902 = vst [vmem:[%s629 + $0x24] sm:$0x1] %v901
      %v903 = vld [vmem:[%s629 + $0x2c] sm:$0x1]
      %v904 = vsel %vm643, %v798, %v903
      %905 = vst [vmem:[%s629 + $0x2c] sm:$0x1] %v904
      %v906 = vld [vmem:[%s629 + $0x34] sm:$0x1]
      %v907 = vsel %vm643, %v806, %v906
      %908 = vst [vmem:[%s629 + $0x34] sm:$0x1] %v907
      %v909 = vld [vmem:[%s629 + $0x3c] sm:$0x1]
      %v910 = vsel %vm643, %v814, %v909
      %911 = vst [vmem:[%s629 + $0x3c] sm:$0x1] %v910
      %v912 = vld [vmem:[%s638 + $0x4] sm:$0x1]
      %v913 = vsel %vm643, %v758, %v912
      %914 = vst [vmem:[%s638 + $0x4] sm:$0x1] %v913
      %v915 = vsub.f32 %v353, %v534
      %v916 = vsub.f32 %v357, %v534
      %v917 = vsub.f32 %v363, %v534
      %v918 = vsub.f32 %v367, %v534
      %v919 = vsub.f32 %v373, %v534
      %v920 = vsub.f32 %v377, %v534
      %v921 = vsub.f32 %v383, %v534
      %v922 = vsub.f32 %v387, %v534
      %v923 = vmul.f32 %v915, %v540
      %v924 = vmul.f32 %v916, %v540
      %v925 = vmul.f32 %v917, %v540
      %v926 = vmul.f32 %v918, %v540
      %v927 = vmul.f32 %v919, %v540
      %v928 = vmul.f32 %v920, %v540
      %v929 = vmul.f32 %v921, %v540
      %v930 = vmul.f32 %v922, %v540
      %v931 = vmul.f32 %v923, 0.5
      %v932 = vmul.f32 %v924, 0.5
      %v933 = vmul.f32 %v925, 0.5
      %v934 = vmul.f32 %v926, 0.5
      %v935 = vmul.f32 %v927, 0.5
      %v936 = vmul.f32 %v928, 0.5
      %v937 = vmul.f32 %v929, 0.5
      %v938 = vmul.f32 %v930, 0.5
      %v939 = vmul.f32 %v923, 0.70710677
      %v940 = vmul.f32 %v924, 0.70710677
      %v941 = vmul.f32 %v925, 0.70710677
      %v942 = vmul.f32 %v926, 0.70710677
      %v943 = vmul.f32 %v927, 0.70710677
      %v944 = vmul.f32 %v928, 0.70710677
      %v945 = vmul.f32 %v929, 0.70710677
      %v946 = vmul.f32 %v930, 0.70710677
      %v947 = verf.f32.pop %v939
      %v948 = verf.f32.pop %v940
      %v949 = verf.f32.pop %v941
      %v950 = verf.f32.pop %v942
      %v951 = verf.f32.pop %v943
      %v952 = verf.f32.pop %v944
      %v953 = verf.f32.pop %v945
      %v954 = verf.f32.pop %v946
      %v955 = vadd.f32 %v947, 1.0
      %v956 = vadd.f32 %v948, 1.0
      %v957 = vadd.f32 %v949, 1.0
      %v958 = vadd.f32 %v950, 1.0
      %v959 = vadd.f32 %v951, 1.0
      %v960 = vadd.f32 %v952, 1.0
      %v961 = vadd.f32 %v953, 1.0
      %v962 = vadd.f32 %v954, 1.0
      %v963 = vmul.f32 %v931, %v955
      %v964 = vmul.f32 %v932, %v956
      %v965 = vmul.f32 %v933, %v957
      %v966 = vmul.f32 %v934, %v958
      %v967 = vmul.f32 %v935, %v959
      %v968 = vmul.f32 %v936, %v960
      %v969 = vmul.f32 %v937, %v961
      %v970 = vmul.f32 %v938, %v962
      %v971 = vpack.c.bf16 %v964, %v963
      %v972 = vpack.c.bf16 %v966, %v965
      %v973 = vpack.c.bf16 %v968, %v967
      %v974 = vpack.c.bf16 %v970, %v969
      %v979 = vunpack.c.l.b16 %v971
      %v980 = vunpack.c.h.b16 %v971
      %v981 = vunpack.c.l.b16 %v972
      %v982 = vunpack.c.h.b16 %v972
      %v983 = vunpack.c.l.b16 %v973
      %v984 = vunpack.c.h.b16 %v973
      %v985 = vunpack.c.l.b16 %v974
      %v986 = vunpack.c.h.b16 %v974
      %v987 = vpack.c.b16 %v979, %v979
      %v988 = vpack.c.b16 %v980, %v980
      %v989 = vpack.c.b16 %v981, %v981
      %v990 = vpack.c.b16 %v982, %v982
      %v991 = vpack.c.b16 %v983, %v983
      %v992 = vpack.c.b16 %v984, %v984
      %v993 = vpack.c.b16 %v985, %v985
      %v994 = vpack.c.b16 %v986, %v986
      %s1003 = scalar_lea.vmem [#allocation2], 80
      %1004 = vst [vmem:[%s1003] sm:$0xf] %v987
      %1005 = vst [vmem:[%s1003 + $0x8] sm:$0xf] %v988
      %1006 = vst [vmem:[%s1003 + $0x10] sm:$0xf] %v989
      %1007 = vst [vmem:[%s1003 + $0x18] sm:$0xf] %v990
      %1008 = vst [vmem:[%s1003 + $0x20] sm:$0xf] %v991
      %1009 = vst [vmem:[%s1003 + $0x28] sm:$0xf] %v992
      %1010 = vst [vmem:[%s1003 + $0x30] sm:$0xf] %v993
      %1011 = vst [vmem:[%s1003 + $0x38] sm:$0xf] %v994
      %s1012 = scalar_lea.vmem [#allocation2], 280
      %1013 = vst [vmem:[%s1012] sm:$0xf] %v994
      %s1014 = scalar_lea.vmem [#allocation2], 8
      %v1015 = vld [vmem:[%s1014] sm:$0x1]
      %v1016 = vsel %vm643, %v987, %v1015
      %1017 = vst [vmem:[%s1014] sm:$0x1] %v1016
      %v1018 = vld [vmem:[%s1014 + $0x8] sm:$0x1]
      %v1019 = vsel %vm643, %v988, %v1018
      %1020 = vst [vmem:[%s1014 + $0x8] sm:$0x1] %v1019
      %v1021 = vld [vmem:[%s1014 + $0x10] sm:$0x1]
      %v1022 = vsel %vm643, %v989, %v1021
      %1023 = vst [vmem:[%s1014 + $0x10] sm:$0x1] %v1022
      %v1024 = vld [vmem:[%s1014 + $0x18] sm:$0x1]
      %v1025 = vsel %vm643, %v990, %v1024
      %1026 = vst [vmem:[%s1014 + $0x18] sm:$0x1] %v1025
      %v1027 = vld [vmem:[%s1014 + $0x20] sm:$0x1]
      %v1028 = vsel %vm643, %v991, %v1027
      %1029 = vst [vmem:[%s1014 + $0x20] sm:$0x1] %v1028
      %v1030 = vld [vmem:[%s1014 + $0x28] sm:$0x1]
      %v1031 = vsel %vm643, %v992, %v1030
      %1032 = vst [vmem:[%s1014 + $0x28] sm:$0x1] %v1031
      %v1033 = vld [vmem:[%s1014 + $0x30] sm:$0x1]
      %v1034 = vsel %vm643, %v993, %v1033
      %1035 = vst [vmem:[%s1014 + $0x30] sm:$0x1] %v1034
      %v1036 = vld [vmem:[%s1014 + $0x38] sm:$0x1]
      %v1037 = vsel %vm643, %v994, %v1036
      %1038 = vst [vmem:[%s1014 + $0x38] sm:$0x1] %v1037
      %s1039 = scalar_lea.vmem [#allocation2], 208
      %v1040 = vld [vmem:[%s1039] sm:$0x1]
      %v1041 = vsel %vm643, %v994, %v1040
      %1042 = vst [vmem:[%s1039] sm:$0x1] %v1041
      %v1043 = vsub.f32 %v355, %v534
      %v1044 = vsub.f32 %v359, %v534
      %v1045 = vsub.f32 %v365, %v534
      %v1046 = vsub.f32 %v369, %v534
      %v1047 = vsub.f32 %v375, %v534
      %v1048 = vsub.f32 %v379, %v534
      %v1049 = vsub.f32 %v385, %v534
      %v1050 = vsub.f32 %v389, %v534
      %v1051 = vmul.f32 %v1043, %v540
      %v1052 = vmul.f32 %v1044, %v540
      %v1053 = vmul.f32 %v1045, %v540
      %v1054 = vmul.f32 %v1046, %v540
      %v1055 = vmul.f32 %v1047, %v540
      %v1056 = vmul.f32 %v1048, %v540
      %v1057 = vmul.f32 %v1049, %v540
      %v1058 = vmul.f32 %v1050, %v540
      %v1059 = vmul.f32 %v1051, 0.5
      %v1060 = vmul.f32 %v1052, 0.5
      %v1061 = vmul.f32 %v1053, 0.5
      %v1062 = vmul.f32 %v1054, 0.5
      %v1063 = vmul.f32 %v1055, 0.5
      %v1064 = vmul.f32 %v1056, 0.5
      %v1065 = vmul.f32 %v1057, 0.5
      %v1066 = vmul.f32 %v1058, 0.5
      %v1067 = vmul.f32 %v1051, 0.70710677
      %v1068 = vmul.f32 %v1052, 0.70710677
      %v1069 = vmul.f32 %v1053, 0.70710677
      %v1070 = vmul.f32 %v1054, 0.70710677
      %v1071 = vmul.f32 %v1055, 0.70710677
      %v1072 = vmul.f32 %v1056, 0.70710677
      %v1073 = vmul.f32 %v1057, 0.70710677
      %v1074 = vmul.f32 %v1058, 0.70710677
      %v1075 = verf.f32.pop %v1067
      %v1076 = verf.f32.pop %v1068
      %v1077 = verf.f32.pop %v1069
      %v1078 = verf.f32.pop %v1070
      %v1079 = verf.f32.pop %v1071
      %v1080 = verf.f32.pop %v1072
      %v1081 = verf.f32.pop %v1073
      %v1082 = verf.f32.pop %v1074
      %v1083 = vadd.f32 %v1075, 1.0
      %v1084 = vadd.f32 %v1076, 1.0
      %v1085 = vadd.f32 %v1077, 1.0
      %v1086 = vadd.f32 %v1078, 1.0
      %v1087 = vadd.f32 %v1079, 1.0
      %v1088 = vadd.f32 %v1080, 1.0
      %v1089 = vadd.f32 %v1081, 1.0
      %v1090 = vadd.f32 %v1082, 1.0
      %v1091 = vmul.f32 %v1059, %v1083
      %v1092 = vmul.f32 %v1060, %v1084
      %v1093 = vmul.f32 %v1061, %v1085
      %v1094 = vmul.f32 %v1062, %v1086
      %v1095 = vmul.f32 %v1063, %v1087
      %v1096 = vmul.f32 %v1064, %v1088
      %v1097 = vmul.f32 %v1065, %v1089
      %v1098 = vmul.f32 %v1066, %v1090
      %v1099 = vpack.c.bf16 %v1092, %v1091
      %v1100 = vpack.c.bf16 %v1094, %v1093
      %v1101 = vpack.c.bf16 %v1096, %v1095
      %v1102 = vpack.c.bf16 %v1098, %v1097
      %v1107 = vunpack.c.l.b16 %v1099
      %v1108 = vunpack.c.h.b16 %v1099
      %v1109 = vunpack.c.l.b16 %v1100
      %v1110 = vunpack.c.h.b16 %v1100
      %v1111 = vunpack.c.l.b16 %v1101
      %v1112 = vunpack.c.h.b16 %v1101
      %v1113 = vunpack.c.l.b16 %v1102
      %v1114 = vunpack.c.h.b16 %v1102
      %v1115 = vpack.c.b16 %v1107, %v1107
      %v1116 = vpack.c.b16 %v1108, %v1108
      %v1117 = vpack.c.b16 %v1109, %v1109
      %v1118 = vpack.c.b16 %v1110, %v1110
      %v1119 = vpack.c.b16 %v1111, %v1111
      %v1120 = vpack.c.b16 %v1112, %v1112
      %v1121 = vpack.c.b16 %v1113, %v1113
      %v1122 = vpack.c.b16 %v1114, %v1114
      %v1124 = vshrl.u32 %v1115, 16
      %v1126 = vrot.slane %v1124, 7
      %v1127 = vshll.u32 %v1115, 16
      %v1129 = vor.u32 %v1126, %v1127
      %v1130 = vrot.slane %v1126, 4
      %v1132 = vshrl.u32 %v1116, 16
      %v1134 = vrot.slane %v1132, 7
      %v1135 = vshll.u32 %v1116, 16
      %v1137 = vor.u32 %v1134, %v1135
      %v1138 = vrot.slane %v1134, 4
      %v1140 = vshrl.u32 %v1117, 16
      %v1142 = vrot.slane %v1140, 7
      %v1143 = vshll.u32 %v1117, 16
      %v1145 = vor.u32 %v1142, %v1143
      %v1146 = vrot.slane %v1142, 4
      %v1148 = vshrl.u32 %v1118, 16
      %v1150 = vrot.slane %v1148, 7
      %v1151 = vshll.u32 %v1118, 16
      %v1153 = vor.u32 %v1150, %v1151
      %v1154 = vrot.slane %v1150, 4
      %v1156 = vshrl.u32 %v1119, 16
      %v1158 = vrot.slane %v1156, 7
      %v1159 = vshll.u32 %v1119, 16
      %v1161 = vor.u32 %v1158, %v1159
      %v1162 = vrot.slane %v1158, 4
      %v1164 = vshrl.u32 %v1120, 16
      %v1166 = vrot.slane %v1164, 7
      %v1167 = vshll.u32 %v1120, 16
      %v1169 = vor.u32 %v1166, %v1167
      %v1170 = vrot.slane %v1166, 4
      %v1172 = vshrl.u32 %v1121, 16
      %v1174 = vrot.slane %v1172, 7
      %v1175 = vshll.u32 %v1121, 16
      %v1177 = vor.u32 %v1174, %v1175
      %v1178 = vrot.slane %v1174, 4
      %v1180 = vshrl.u32 %v1122, 16
      %v1182 = vrot.slane %v1180, 7
      %v1183 = vshll.u32 %v1122, 16
      %v1185 = vor.u32 %v1182, %v1183
      %v1186 = vrot.slane %v1182, 4
      %v1203 = vld [vmem:[%s1014] sm:$0xf]
      %v1204 = vsel %vm833, %v1129, %v1203
      %1205 = vst [vmem:[%s1014] sm:$0xf] %v1204
      %v1206 = vld [vmem:[%s1014 + $0x4] sm:$0x1]
      %v1207 = vsel %vm643, %v1130, %v1206
      %1208 = vst [vmem:[%s1014 + $0x4] sm:$0x1] %v1207
      %v1209 = vld [vmem:[%s1014 + $0x8] sm:$0xf]
      %v1210 = vsel %vm833, %v1137, %v1209
      %1211 = vst [vmem:[%s1014 + $0x8] sm:$0xf] %v1210
      %v1212 = vld [vmem:[%s1014 + $0xc] sm:$0x1]
      %v1213 = vsel %vm643, %v1138, %v1212
      %1214 = vst [vmem:[%s1014 + $0xc] sm:$0x1] %v1213
      %v1215 = vld [vmem:[%s1014 + $0x10] sm:$0xf]
      %v1216 = vsel %vm833, %v1145, %v1215
      %1217 = vst [vmem:[%s1014 + $0x10] sm:$0xf] %v1216
      %v1218 = vld [vmem:[%s1014 + $0x14] sm:$0x1]
      %v1219 = vsel %vm643, %v1146, %v1218
      %1220 = vst [vmem:[%s1014 + $0x14] sm:$0x1] %v1219
      %v1221 = vld [vmem:[%s1014 + $0x18] sm:$0xf]
      %v1222 = vsel %vm833, %v1153, %v1221
      %1223 = vst [vmem:[%s1014 + $0x18] sm:$0xf] %v1222
      %v1224 = vld [vmem:[%s1014 + $0x1c] sm:$0x1]
      %v1225 = vsel %vm643, %v1154, %v1224
      %1226 = vst [vmem:[%s1014 + $0x1c] sm:$0x1] %v1225
      %v1227 = vld [vmem:[%s1014 + $0x20] sm:$0xf]
      %v1228 = vsel %vm833, %v1161, %v1227
      %1229 = vst [vmem:[%s1014 + $0x20] sm:$0xf] %v1228
      %v1230 = vld [vmem:[%s1014 + $0x24] sm:$0x1]
      %v1231 = vsel %vm643, %v1162, %v1230
      %1232 = vst [vmem:[%s1014 + $0x24] sm:$0x1] %v1231
      %v1233 = vld [vmem:[%s1014 + $0x28] sm:$0xf]
      %v1234 = vsel %vm833, %v1169, %v1233
      %1235 = vst [vmem:[%s1014 + $0x28] sm:$0xf] %v1234
      %v1236 = vld [vmem:[%s1014 + $0x2c] sm:$0x1]
      %v1237 = vsel %vm643, %v1170, %v1236
      %1238 = vst [vmem:[%s1014 + $0x2c] sm:$0x1] %v1237
      %v1239 = vld [vmem:[%s1014 + $0x30] sm:$0xf]
      %v1240 = vsel %vm833, %v1177, %v1239
      %1241 = vst [vmem:[%s1014 + $0x30] sm:$0xf] %v1240
      %v1242 = vld [vmem:[%s1014 + $0x34] sm:$0x1]
      %v1243 = vsel %vm643, %v1178, %v1242
      %1244 = vst [vmem:[%s1014 + $0x34] sm:$0x1] %v1243
      %v1245 = vld [vmem:[%s1014 + $0x38] sm:$0xf]
      %v1246 = vsel %vm833, %v1185, %v1245
      %1247 = vst [vmem:[%s1014 + $0x38] sm:$0xf] %v1246
      %v1248 = vld [vmem:[%s1014 + $0x3c] sm:$0x1]
      %v1249 = vsel %vm643, %v1186, %v1248
      %1250 = vst [vmem:[%s1014 + $0x3c] sm:$0x1] %v1249
      %v1251 = vld [vmem:[%s1039] sm:$0xf]
      %v1252 = vsel %vm833, %v1185, %v1251
      %1253 = vst [vmem:[%s1039] sm:$0xf] %v1252
      %v1254 = vld [vmem:[%s1039 + $0x4] sm:$0x1]
      %v1255 = vsel %vm643, %v1186, %v1254
      %1256 = vst [vmem:[%s1039 + $0x4] sm:$0x1] %v1255
      %v1257 = vld [vmem:[%s1003 + $0x4] sm:$0x1]
      %v1258 = vsel %vm643, %v1130, %v1257
      %1259 = vst [vmem:[%s1003 + $0x4] sm:$0x1] %v1258
      %v1260 = vld [vmem:[%s1003 + $0xc] sm:$0x1]
      %v1261 = vsel %vm643, %v1138, %v1260
      %1262 = vst [vmem:[%s1003 + $0xc] sm:$0x1] %v1261
      %v1263 = vld [vmem:[%s1003 + $0x14] sm:$0x1]
      %v1264 = vsel %vm643, %v1146, %v1263
      %1265 = vst [vmem:[%s1003 + $0x14] sm:$0x1] %v1264
      %v1266 = vld [vmem:[%s1003 + $0x1c] sm:$0x1]
      %v1267 = vsel %vm643, %v1154, %v1266
      %1268 = vst [vmem:[%s1003 + $0x1c] sm:$0x1] %v1267
      %v1269 = vld [vmem:[%s1003 + $0x24] sm:$0x1]
      %v1270 = vsel %vm643, %v1162, %v1269
      %1271 = vst [vmem:[%s1003 + $0x24] sm:$0x1] %v1270
      %v1272 = vld [vmem:[%s1003 + $0x2c] sm:$0x1]
      %v1273 = vsel %vm643, %v1170, %v1272
      %1274 = vst [vmem:[%s1003 + $0x2c] sm:$0x1] %v1273
      %v1275 = vld [vmem:[%s1003 + $0x34] sm:$0x1]
      %v1276 = vsel %vm643, %v1178, %v1275
      %1277 = vst [vmem:[%s1003 + $0x34] sm:$0x1] %v1276
      %v1278 = vld [vmem:[%s1003 + $0x3c] sm:$0x1]
      %v1279 = vsel %vm643, %v1186, %v1278
      %1280 = vst [vmem:[%s1003 + $0x3c] sm:$0x1] %v1279
      %v1281 = vld [vmem:[%s1012 + $0x4] sm:$0x1]
      %v1282 = vsel %vm643, %v1186, %v1281
      %1283 = vst [vmem:[%s1012 + $0x4] sm:$0x1] %v1282
      %v1284 = vld [vmem:[#allocation2] sm:$0xf]
      %v1285 = vld [vmem:[#allocation2 + $0x8] sm:$0xf]
      %v1286 = vld [vmem:[#allocation2 + $0x10] sm:$0xf]
      %v1287 = vld [vmem:[#allocation2 + $0x18] sm:$0xf]
      %v1288 = vld [vmem:[#allocation2 + $0x20] sm:$0xf]
      %v1289 = vld [vmem:[#allocation2 + $0x28] sm:$0xf]
      %v1290 = vld [vmem:[#allocation2 + $0x30] sm:$0xf]
      %v1291 = vld [vmem:[#allocation2 + $0x38] sm:$0xf]
      %v1300 = vunpack.c.l.b16 %v1284
      %v1301 = vunpack.c.l.b16 %v1285
      %v1302 = vunpack.c.l.b16 %v1286
      %v1303 = vunpack.c.l.b16 %v1287
      %v1304 = vunpack.c.l.b16 %v1288
      %v1305 = vunpack.c.l.b16 %v1289
      %v1306 = vunpack.c.l.b16 %v1290
      %v1307 = vunpack.c.l.b16 %v1291
      %v1308 = vpack.c.b16 %v1301, %v1300
      %v1309 = vpack.c.b16 %v1303, %v1302
      %v1310 = vpack.c.b16 %v1305, %v1304
      %v1311 = vpack.c.b16 %v1307, %v1306
      %1316 = vst [vmem:[#allocation3] sm:$0xff] %v1308
      %1317 = vst [vmem:[#allocation3 + $0x48] sm:$0xff] %v1309
      %1318 = vst [vmem:[#allocation3 + $0x90] sm:$0xff] %v1310
      %1319 = vst [vmem:[#allocation3 + $0xd8] sm:$0xff] %v1311
      %v1320 = vld [vmem:[%s638] sm:$0xf]
      %v1321 = vld [vmem:[%s638 + $0x8] sm:$0xf]
      %v1322 = vld [vmem:[%s638 + $0x10] sm:$0xf]
      %v1323 = vld [vmem:[%s638 + $0x18] sm:$0xf]
      %v1324 = vld [vmem:[%s638 + $0x20] sm:$0xf]
      %v1325 = vld [vmem:[%s638 + $0x28] sm:$0xf]
      %v1326 = vld [vmem:[%s638 + $0x30] sm:$0xf]
      %v1327 = vld [vmem:[%s638 + $0x38] sm:$0xf]
      %v1336 = vunpack.c.l.b16 %v1320
      %v1337 = vunpack.c.l.b16 %v1321
      %v1338 = vunpack.c.l.b16 %v1322
      %v1339 = vunpack.c.l.b16 %v1323
      %v1340 = vunpack.c.l.b16 %v1324
      %v1341 = vunpack.c.l.b16 %v1325
      %v1342 = vunpack.c.l.b16 %v1326
      %v1343 = vunpack.c.l.b16 %v1327
      %v1344 = vpack.c.b16 %v1337, %v1336
      %v1345 = vpack.c.b16 %v1339, %v1338
      %v1346 = vpack.c.b16 %v1341, %v1340
      %v1347 = vpack.c.b16 %v1343, %v1342
      %1352 = vst [vmem:[#allocation3 + $0x8] sm:$0xff] %v1344
      %1353 = vst [vmem:[#allocation3 + $0x50] sm:$0xff] %v1345
      %1354 = vst [vmem:[#allocation3 + $0x98] sm:$0xff] %v1346
      %1355 = vst [vmem:[#allocation3 + $0xe0] sm:$0xff] %v1347
      %v1356 = vld [vmem:[#allocation2] sm:$0xf]
      %v1357 = vld [vmem:[#allocation2 + $0x4] sm:$0x1]
      %v1358 = vld [vmem:[#allocation2 + $0x8] sm:$0xf]
      %v1359 = vld [vmem:[#allocation2 + $0xc] sm:$0x1]
      %v1360 = vld [vmem:[#allocation2 + $0x10] sm:$0xf]
      %v1361 = vld [vmem:[#allocation2 + $0x14] sm:$0x1]
      %v1362 = vld [vmem:[#allocation2 + $0x18] sm:$0xf]
      %v1363 = vld [vmem:[#allocation2 + $0x1c] sm:$0x1]
      %v1364 = vld [vmem:[#allocation2 + $0x20] sm:$0xf]
      %v1365 = vld [vmem:[#allocation2 + $0x24] sm:$0x1]
      %v1366 = vld [vmem:[#allocation2 + $0x28] sm:$0xf]
      %v1367 = vld [vmem:[#allocation2 + $0x2c] sm:$0x1]
      %v1368 = vld [vmem:[#allocation2 + $0x30] sm:$0xf]
      %v1369 = vld [vmem:[#allocation2 + $0x34] sm:$0x1]
      %v1370 = vld [vmem:[#allocation2 + $0x38] sm:$0xf]
      %v1371 = vld [vmem:[#allocation2 + $0x3c] sm:$0x1]
      %vm1372 = vsmask.f32 3328
      %vm1373 = vsmask.f32 7440
      %vm1374 = vmor %vm1372, %vm1373
      %v1376 = vshrl.u32 %v1356, 16
      %v1378 = vrot.slane %v1376, 4
      %v1379 = vshll.u32 %v1356, 16
      %v1381 = vrot.slane %v1379, 5
      %v1382 = vor.u32 %v1378, %v1381
      %v1383 = vrot.slane %v1382, 4
      %v1385 = vshll.u32 %v1357, 16
      %v1387 = vrot.slane %v1385, 5
      %v1388 = vsel %vm1374, %v1383, %v1387
      %v1390 = vshrl.u32 %v1358, 16
      %v1392 = vrot.slane %v1390, 4
      %v1393 = vshll.u32 %v1358, 16
      %v1395 = vrot.slane %v1393, 5
      %v1396 = vor.u32 %v1392, %v1395
      %v1397 = vrot.slane %v1396, 4
      %v1399 = vshll.u32 %v1359, 16
      %v1401 = vrot.slane %v1399, 5
      %v1402 = vsel %vm1374, %v1397, %v1401
      %v1404 = vshrl.u32 %v1360, 16
      %v1406 = vrot.slane %v1404, 4
      %v1407 = vshll.u32 %v1360, 16
      %v1409 = vrot.slane %v1407, 5
      %v1410 = vor.u32 %v1406, %v1409
      %v1411 = vrot.slane %v1410, 4
      %v1413 = vshll.u32 %v1361, 16
      %v1415 = vrot.slane %v1413, 5
      %v1416 = vsel %vm1374, %v1411, %v1415
      %v1418 = vshrl.u32 %v1362, 16
      %v1420 = vrot.slane %v1418, 4
      %v1421 = vshll.u32 %v1362, 16
      %v1423 = vrot.slane %v1421, 5
      %v1424 = vor.u32 %v1420, %v1423
      %v1425 = vrot.slane %v1424, 4
      %v1427 = vshll.u32 %v1363, 16
      %v1429 = vrot.slane %v1427, 5
      %v1430 = vsel %vm1374, %v1425, %v1429
      %v1432 = vshrl.u32 %v1364, 16
      %v1434 = vrot.slane %v1432, 4
      %v1435 = vshll.u32 %v1364, 16
      %v1437 = vrot.slane %v1435, 5
      %v1438 = vor.u32 %v1434, %v1437
      %v1439 = vrot.slane %v1438, 4
      %v1441 = vshll.u32 %v1365, 16
      %v1443 = vrot.slane %v1441, 5
      %v1444 = vsel %vm1374, %v1439, %v1443
      %v1446 = vshrl.u32 %v1366, 16
      %v1448 = vrot.slane %v1446, 4
      %v1449 = vshll.u32 %v1366, 16
      %v1451 = vrot.slane %v1449, 5
      %v1452 = vor.u32 %v1448, %v1451
      %v1453 = vrot.slane %v1452, 4
      %v1455 = vshll.u32 %v1367, 16
      %v1457 = vrot.slane %v1455, 5
      %v1458 = vsel %vm1374, %v1453, %v1457
      %v1460 = vshrl.u32 %v1368, 16
      %v1462 = vrot.slane %v1460, 4
      %v1463 = vshll.u32 %v1368, 16
      %v1465 = vrot.slane %v1463, 5
      %v1466 = vor.u32 %v1462, %v1465
      %v1467 = vrot.slane %v1466, 4
      %v1469 = vshll.u32 %v1369, 16
      %v1471 = vrot.slane %v1469, 5
      %v1472 = vsel %vm1374, %v1467, %v1471
      %v1474 = vshrl.u32 %v1370, 16
      %v1476 = vrot.slane %v1474, 4
      %v1477 = vshll.u32 %v1370, 16
      %v1479 = vrot.slane %v1477, 5
      %v1480 = vor.u32 %v1476, %v1479
      %v1481 = vrot.slane %v1480, 4
      %v1483 = vshll.u32 %v1371, 16
      %v1485 = vrot.slane %v1483, 5
      %v1486 = vsel %vm1374, %v1481, %v1485
      %v1487 = vunpack.c.l.b16 %v1388
      %v1488 = vunpack.c.l.b16 %v1402
      %v1489 = vunpack.c.l.b16 %v1416
      %v1490 = vunpack.c.l.b16 %v1430
      %v1491 = vunpack.c.l.b16 %v1444
      %v1492 = vunpack.c.l.b16 %v1458
      %v1493 = vunpack.c.l.b16 %v1472
      %v1494 = vunpack.c.l.b16 %v1486
      %v1495 = vpack.c.b16 %v1488, %v1487
      %v1496 = vpack.c.b16 %v1490, %v1489
      %v1497 = vpack.c.b16 %v1492, %v1491
      %v1498 = vpack.c.b16 %v1494, %v1493
      %1503 = vst [vmem:[#allocation3 + $0x10] sm:$0xff] %v1495
      %1504 = vst [vmem:[#allocation3 + $0x58] sm:$0xff] %v1496
      %1505 = vst [vmem:[#allocation3 + $0xa0] sm:$0xff] %v1497
      %1506 = vst [vmem:[#allocation3 + $0xe8] sm:$0xff] %v1498
      %v1507 = vld [vmem:[%s640] sm:$0xf]
      %v1508 = vld [vmem:[%s640 + $0x8] sm:$0xf]
      %v1509 = vld [vmem:[%s640 + $0x10] sm:$0xf]
      %v1510 = vld [vmem:[%s640 + $0x18] sm:$0xf]
      %v1511 = vld [vmem:[%s640 + $0x20] sm:$0xf]
      %v1512 = vld [vmem:[%s640 + $0x28] sm:$0xf]
      %v1513 = vld [vmem:[%s640 + $0x30] sm:$0xf]
      %v1514 = vld [vmem:[%s640 + $0x38] sm:$0xf]
      %v1523 = vunpack.c.l.b16 %v1507
      %v1524 = vunpack.c.l.b16 %v1508
      %v1525 = vunpack.c.l.b16 %v1509
      %v1526 = vunpack.c.l.b16 %v1510
      %v1527 = vunpack.c.l.b16 %v1511
      %v1528 = vunpack.c.l.b16 %v1512
      %v1529 = vunpack.c.l.b16 %v1513
      %v1530 = vunpack.c.l.b16 %v1514
      %v1531 = vpack.c.b16 %v1524, %v1523
      %v1532 = vpack.c.b16 %v1526, %v1525
      %v1533 = vpack.c.b16 %v1528, %v1527
      %v1534 = vpack.c.b16 %v1530, %v1529
      %1539 = vst [vmem:[#allocation3 + $0x18] sm:$0xff] %v1531
      %1540 = vst [vmem:[#allocation3 + $0x60] sm:$0xff] %v1532
      %1541 = vst [vmem:[#allocation3 + $0xa8] sm:$0xff] %v1533
      %1542 = vst [vmem:[#allocation3 + $0xf0] sm:$0xff] %v1534
      %v1543 = vld [vmem:[%s629] sm:$0xf]
      %v1544 = vld [vmem:[%s629 + $0x8] sm:$0xf]
      %v1545 = vld [vmem:[%s629 + $0x10] sm:$0xf]
      %v1546 = vld [vmem:[%s629 + $0x18] sm:$0xf]
      %v1547 = vld [vmem:[%s629 + $0x20] sm:$0xf]
      %v1548 = vld [vmem:[%s629 + $0x28] sm:$0xf]
      %v1549 = vld [vmem:[%s629 + $0x30] sm:$0xf]
      %v1550 = vld [vmem:[%s629 + $0x38] sm:$0xf]
      %v1559 = vunpack.c.l.b16 %v1543
      %v1560 = vunpack.c.l.b16 %v1544
      %v1561 = vunpack.c.l.b16 %v1545
      %v1562 = vunpack.c.l.b16 %v1546
      %v1563 = vunpack.c.l.b16 %v1547
      %v1564 = vunpack.c.l.b16 %v1548
      %v1565 = vunpack.c.l.b16 %v1549
      %v1566 = vunpack.c.l.b16 %v1550
      %v1567 = vpack.c.b16 %v1560, %v1559
      %v1568 = vpack.c.b16 %v1562, %v1561
      %v1569 = vpack.c.b16 %v1564, %v1563
      %v1570 = vpack.c.b16 %v1566, %v1565
      %1575 = vst [vmem:[#allocation3 + $0x20] sm:$0xff] %v1567
      %1576 = vst [vmem:[#allocation3 + $0x68] sm:$0xff] %v1568
      %1577 = vst [vmem:[#allocation3 + $0xb0] sm:$0xff] %v1569
      %1578 = vst [vmem:[#allocation3 + $0xf8] sm:$0xff] %v1570
      %v1579 = vld [vmem:[%s640] sm:$0xf]
      %v1580 = vld [vmem:[%s640 + $0x4] sm:$0x1]
      %v1581 = vld [vmem:[%s640 + $0x8] sm:$0xf]
      %v1582 = vld [vmem:[%s640 + $0xc] sm:$0x1]
      %v1583 = vld [vmem:[%s640 + $0x10] sm:$0xf]
      %v1584 = vld [vmem:[%s640 + $0x14] sm:$0x1]
      %v1585 = vld [vmem:[%s640 + $0x18] sm:$0xf]
      %v1586 = vld [vmem:[%s640 + $0x1c] sm:$0x1]
      %v1587 = vld [vmem:[%s640 + $0x20] sm:$0xf]
      %v1588 = vld [vmem:[%s640 + $0x24] sm:$0x1]
      %v1589 = vld [vmem:[%s640 + $0x28] sm:$0xf]
      %v1590 = vld [vmem:[%s640 + $0x2c] sm:$0x1]
      %v1591 = vld [vmem:[%s640 + $0x30] sm:$0xf]
      %v1592 = vld [vmem:[%s640 + $0x34] sm:$0x1]
      %v1593 = vld [vmem:[%s640 + $0x38] sm:$0xf]
      %v1594 = vld [vmem:[%s640 + $0x3c] sm:$0x1]
      %v1596 = vshrl.u32 %v1579, 16
      %v1598 = vrot.slane %v1596, 4
      %v1599 = vshll.u32 %v1579, 16
      %v1601 = vrot.slane %v1599, 5
      %v1602 = vor.u32 %v1598, %v1601
      %v1603 = vrot.slane %v1602, 4
      %v1605 = vshll.u32 %v1580, 16
      %v1607 = vrot.slane %v1605, 5
      %v1608 = vsel %vm1374, %v1603, %v1607
      %v1610 = vshrl.u32 %v1581, 16
      %v1612 = vrot.slane %v1610, 4
      %v1613 = vshll.u32 %v1581, 16
      %v1615 = vrot.slane %v1613, 5
      %v1616 = vor.u32 %v1612, %v1615
      %v1617 = vrot.slane %v1616, 4
      %v1619 = vshll.u32 %v1582, 16
      %v1621 = vrot.slane %v1619, 5
      %v1622 = vsel %vm1374, %v1617, %v1621
      %v1624 = vshrl.u32 %v1583, 16
      %v1626 = vrot.slane %v1624, 4
      %v1627 = vshll.u32 %v1583, 16
      %v1629 = vrot.slane %v1627, 5
      %v1630 = vor.u32 %v1626, %v1629
      %v1631 = vrot.slane %v1630, 4
      %v1633 = vshll.u32 %v1584, 16
      %v1635 = vrot.slane %v1633, 5
      %v1636 = vsel %vm1374, %v1631, %v1635
      %v1638 = vshrl.u32 %v1585, 16
      %v1640 = vrot.slane %v1638, 4
      %v1641 = vshll.u32 %v1585, 16
      %v1643 = vrot.slane %v1641, 5
      %v1644 = vor.u32 %v1640, %v1643
      %v1645 = vrot.slane %v1644, 4
      %v1647 = vshll.u32 %v1586, 16
      %v1649 = vrot.slane %v1647, 5
      %v1650 = vsel %vm1374, %v1645, %v1649
      %v1652 = vshrl.u32 %v1587, 16
      %v1654 = vrot.slane %v1652, 4
      %v1655 = vshll.u32 %v1587, 16
      %v1657 = vrot.slane %v1655, 5
      %v1658 = vor.u32 %v1654, %v1657
      %v1659 = vrot.slane %v1658, 4
      %v1661 = vshll.u32 %v1588, 16
      %v1663 = vrot.slane %v1661, 5
      %v1664 = vsel %vm1374, %v1659, %v1663
      %v1666 = vshrl.u32 %v1589, 16
      %v1668 = vrot.slane %v1666, 4
      %v1669 = vshll.u32 %v1589, 16
      %v1671 = vrot.slane %v1669, 5
      %v1672 = vor.u32 %v1668, %v1671
      %v1673 = vrot.slane %v1672, 4
      %v1675 = vshll.u32 %v1590, 16
      %v1677 = vrot.slane %v1675, 5
      %v1678 = vsel %vm1374, %v1673, %v1677
      %v1680 = vshrl.u32 %v1591, 16
      %v1682 = vrot.slane %v1680, 4
      %v1683 = vshll.u32 %v1591, 16
      %v1685 = vrot.slane %v1683, 5
      %v1686 = vor.u32 %v1682, %v1685
      %v1687 = vrot.slane %v1686, 4
      %v1689 = vshll.u32 %v1592, 16
      %v1691 = vrot.slane %v1689, 5
      %v1692 = vsel %vm1374, %v1687, %v1691
      %v1694 = vshrl.u32 %v1593, 16
      %v1696 = vrot.slane %v1694, 4
      %v1697 = vshll.u32 %v1593, 16
      %v1699 = vrot.slane %v1697, 5
      %v1700 = vor.u32 %v1696, %v1699
      %v1701 = vrot.slane %v1700, 4
      %v1703 = vshll.u32 %v1594, 16
      %v1705 = vrot.slane %v1703, 5
      %v1706 = vsel %vm1374, %v1701, %v1705
      %v1707 = vunpack.c.l.b16 %v1608
      %v1708 = vunpack.c.l.b16 %v1622
      %v1709 = vunpack.c.l.b16 %v1636
      %v1710 = vunpack.c.l.b16 %v1650
      %v1711 = vunpack.c.l.b16 %v1664
      %v1712 = vunpack.c.l.b16 %v1678
      %v1713 = vunpack.c.l.b16 %v1692
      %v1714 = vunpack.c.l.b16 %v1706
      %v1715 = vpack.c.b16 %v1708, %v1707
      %v1716 = vpack.c.b16 %v1710, %v1709
      %v1717 = vpack.c.b16 %v1712, %v1711
      %v1718 = vpack.c.b16 %v1714, %v1713
      %1723 = vst [vmem:[#allocation3 + $0x28] sm:$0xff] %v1715
      %1724 = vst [vmem:[#allocation3 + $0x70] sm:$0xff] %v1716
      %1725 = vst [vmem:[#allocation3 + $0xb8] sm:$0xff] %v1717
      %1726 = vst [vmem:[#allocation3 + $0x100] sm:$0xff] %v1718
      %v1727 = vld [vmem:[%s1014] sm:$0xf]
      %v1728 = vld [vmem:[%s1014 + $0x8] sm:$0xf]
      %v1729 = vld [vmem:[%s1014 + $0x10] sm:$0xf]
      %v1730 = vld [vmem:[%s1014 + $0x18] sm:$0xf]
      %v1731 = vld [vmem:[%s1014 + $0x20] sm:$0xf]
      %v1732 = vld [vmem:[%s1014 + $0x28] sm:$0xf]
      %v1733 = vld [vmem:[%s1014 + $0x30] sm:$0xf]
      %v1734 = vld [vmem:[%s1014 + $0x38] sm:$0xf]
      %v1743 = vunpack.c.l.b16 %v1727
      %v1744 = vunpack.c.l.b16 %v1728
      %v1745 = vunpack.c.l.b16 %v1729
      %v1746 = vunpack.c.l.b16 %v1730
      %v1747 = vunpack.c.l.b16 %v1731
      %v1748 = vunpack.c.l.b16 %v1732
      %v1749 = vunpack.c.l.b16 %v1733
      %v1750 = vunpack.c.l.b16 %v1734
      %v1751 = vpack.c.b16 %v1744, %v1743
      %v1752 = vpack.c.b16 %v1746, %v1745
      %v1753 = vpack.c.b16 %v1748, %v1747
      %v1754 = vpack.c.b16 %v1750, %v1749
      %1759 = vst [vmem:[#allocation3 + $0x30] sm:$0xff] %v1751
      %1760 = vst [vmem:[#allocation3 + $0x78] sm:$0xff] %v1752
      %1761 = vst [vmem:[#allocation3 + $0xc0] sm:$0xff] %v1753
      %1762 = vst [vmem:[#allocation3 + $0x108] sm:$0xff] %v1754
      %v1763 = vld [vmem:[%s1003] sm:$0xf]
      %v1764 = vld [vmem:[%s1003 + $0x8] sm:$0xf]
      %v1765 = vld [vmem:[%s1003 + $0x10] sm:$0xf]
      %v1766 = vld [vmem:[%s1003 + $0x18] sm:$0xf]
      %v1767 = vld [vmem:[%s1003 + $0x20] sm:$0xf]
      %v1768 = vld [vmem:[%s1003 + $0x28] sm:$0xf]
      %v1769 = vld [vmem:[%s1003 + $0x30] sm:$0xf]
      %v1770 = vld [vmem:[%s1003 + $0x38] sm:$0xf]
      %v1779 = vunpack.c.l.b16 %v1763
      %v1780 = vunpack.c.l.b16 %v1764
      %v1781 = vunpack.c.l.b16 %v1765
      %v1782 = vunpack.c.l.b16 %v1766
      %v1783 = vunpack.c.l.b16 %v1767
      %v1784 = vunpack.c.l.b16 %v1768
      %v1785 = vunpack.c.l.b16 %v1769
      %v1786 = vunpack.c.l.b16 %v1770
      %v1787 = vpack.c.b16 %v1780, %v1779
      %v1788 = vpack.c.b16 %v1782, %v1781
      %v1789 = vpack.c.b16 %v1784, %v1783
      %v1790 = vpack.c.b16 %v1786, %v1785
      %1795 = vst [vmem:[#allocation3 + $0x38] sm:$0xff] %v1787
      %1796 = vst [vmem:[#allocation3 + $0x80] sm:$0xff] %v1788
      %1797 = vst [vmem:[#allocation3 + $0xc8] sm:$0xff] %v1789
      %1798 = vst [vmem:[#allocation3 + $0x110] sm:$0xff] %v1790
      %v1799 = vld [vmem:[%s1014] sm:$0xf]
      %v1800 = vld [vmem:[%s1014 + $0x4] sm:$0x1]
      %v1801 = vld [vmem:[%s1014 + $0x8] sm:$0xf]
      %v1802 = vld [vmem:[%s1014 + $0xc] sm:$0x1]
      %v1803 = vld [vmem:[%s1014 + $0x10] sm:$0xf]
      %v1804 = vld [vmem:[%s1014 + $0x14] sm:$0x1]
      %v1805 = vld [vmem:[%s1014 + $0x18] sm:$0xf]
      %v1806 = vld [vmem:[%s1014 + $0x1c] sm:$0x1]
      %v1807 = vld [vmem:[%s1014 + $0x20] sm:$0xf]
      %v1808 = vld [vmem:[%s1014 + $0x24] sm:$0x1]
      %v1809 = vld [vmem:[%s1014 + $0x28] sm:$0xf]
      %v1810 = vld [vmem:[%s1014 + $0x2c] sm:$0x1]
      %v1811 = vld [vmem:[%s1014 + $0x30] sm:$0xf]
      %v1812 = vld [vmem:[%s1014 + $0x34] sm:$0x1]
      %v1813 = vld [vmem:[%s1014 + $0x38] sm:$0xf]
      %v1814 = vld [vmem:[%s1014 + $0x3c] sm:$0x1]
      %v1816 = vshrl.u32 %v1799, 16
      %v1818 = vrot.slane %v1816, 4
      %v1819 = vshll.u32 %v1799, 16
      %v1821 = vrot.slane %v1819, 5
      %v1822 = vor.u32 %v1818, %v1821
      %v1823 = vrot.slane %v1822, 4
      %v1825 = vshll.u32 %v1800, 16
      %v1827 = vrot.slane %v1825, 5
      %v1828 = vsel %vm1374, %v1823, %v1827
      %v1830 = vshrl.u32 %v1801, 16
      %v1832 = vrot.slane %v1830, 4
      %v1833 = vshll.u32 %v1801, 16
      %v1835 = vrot.slane %v1833, 5
      %v1836 = vor.u32 %v1832, %v1835
      %v1837 = vrot.slane %v1836, 4
      %v1839 = vshll.u32 %v1802, 16
      %v1841 = vrot.slane %v1839, 5
      %v1842 = vsel %vm1374, %v1837, %v1841
      %v1844 = vshrl.u32 %v1803, 16
      %v1846 = vrot.slane %v1844, 4
      %v1847 = vshll.u32 %v1803, 16
      %v1849 = vrot.slane %v1847, 5
      %v1850 = vor.u32 %v1846, %v1849
      %v1851 = vrot.slane %v1850, 4
      %v1853 = vshll.u32 %v1804, 16
      %v1855 = vrot.slane %v1853, 5
      %v1856 = vsel %vm1374, %v1851, %v1855
      %v1858 = vshrl.u32 %v1805, 16
      %v1860 = vrot.slane %v1858, 4
      %v1861 = vshll.u32 %v1805, 16
      %v1863 = vrot.slane %v1861, 5
      %v1864 = vor.u32 %v1860, %v1863
      %v1865 = vrot.slane %v1864, 4
      %v1867 = vshll.u32 %v1806, 16
      %v1869 = vrot.slane %v1867, 5
      %v1870 = vsel %vm1374, %v1865, %v1869
      %v1872 = vshrl.u32 %v1807, 16
      %v1874 = vrot.slane %v1872, 4
      %v1875 = vshll.u32 %v1807, 16
      %v1877 = vrot.slane %v1875, 5
      %v1878 = vor.u32 %v1874, %v1877
      %v1879 = vrot.slane %v1878, 4
      %v1881 = vshll.u32 %v1808, 16
      %v1883 = vrot.slane %v1881, 5
      %v1884 = vsel %vm1374, %v1879, %v1883
      %v1886 = vshrl.u32 %v1809, 16
      %v1888 = vrot.slane %v1886, 4
      %v1889 = vshll.u32 %v1809, 16
      %v1891 = vrot.slane %v1889, 5
      %v1892 = vor.u32 %v1888, %v1891
      %v1893 = vrot.slane %v1892, 4
      %v1895 = vshll.u32 %v1810, 16
      %v1897 = vrot.slane %v1895, 5
      %v1898 = vsel %vm1374, %v1893, %v1897
      %v1900 = vshrl.u32 %v1811, 16
      %v1902 = vrot.slane %v1900, 4
      %v1903 = vshll.u32 %v1811, 16
      %v1905 = vrot.slane %v1903, 5
      %v1906 = vor.u32 %v1902, %v1905
      %v1907 = vrot.slane %v1906, 4
      %v1909 = vshll.u32 %v1812, 16
      %v1911 = vrot.slane %v1909, 5
      %v1912 = vsel %vm1374, %v1907, %v1911
      %v1914 = vshrl.u32 %v1813, 16
      %v1916 = vrot.slane %v1914, 4
      %v1917 = vshll.u32 %v1813, 16
      %v1919 = vrot.slane %v1917, 5
      %v1920 = vor.u32 %v1916, %v1919
      %v1921 = vrot.slane %v1920, 4
      %v1923 = vshll.u32 %v1814, 16
      %v1925 = vrot.slane %v1923, 5
      %v1926 = vsel %vm1374, %v1921, %v1925
      %v1927 = vunpack.c.l.b16 %v1828
      %v1928 = vunpack.c.l.b16 %v1842
      %v1929 = vunpack.c.l.b16 %v1856
      %v1930 = vunpack.c.l.b16 %v1870
      %v1931 = vunpack.c.l.b16 %v1884
      %v1932 = vunpack.c.l.b16 %v1898
      %v1933 = vunpack.c.l.b16 %v1912
      %v1934 = vunpack.c.l.b16 %v1926
      %v1935 = vpack.c.b16 %v1928, %v1927
      %v1936 = vpack.c.b16 %v1930, %v1929
      %v1937 = vpack.c.b16 %v1932, %v1931
      %v1938 = vpack.c.b16 %v1934, %v1933
      %1943 = vst [vmem:[#allocation3 + $0x40] sm:$0xff] %v1935
      %1944 = vst [vmem:[#allocation3 + $0x88] sm:$0xff] %v1936
      %1945 = vst [vmem:[#allocation3 + $0xd0] sm:$0xff] %v1937
      %1946 = vst [vmem:[#allocation3 + $0x118] sm:$0xff] %v1938
      %v1947 = vld [vmem:[#allocation3] sm:$0xff]
      %v1948 = vld [vmem:[#allocation3 + $0x8] sm:$0xff]
      %v1949 = vld [vmem:[#allocation3 + $0x10] sm:$0xff]
      %v1950 = vld [vmem:[#allocation3 + $0x18] sm:$0xff]
      %v1951 = vld [vmem:[#allocation3 + $0x20] sm:$0xff]
      %v1952 = vld [vmem:[#allocation3 + $0x28] sm:$0xff]
      %v1953 = vld [vmem:[#allocation3 + $0x30] sm:$0xff]
      %v1954 = vld [vmem:[#allocation3 + $0x38] sm:$0xff]
      %v1955 = vld [vmem:[#allocation3 + $0x40] sm:$0xff]
      %v1956 = vld [vmem:[#allocation3 + $0x48] sm:$0xff]
      %v1957 = vld [vmem:[#allocation3 + $0x50] sm:$0xff]
      %v1958 = vld [vmem:[#allocation3 + $0x58] sm:$0xff]
      %v1959 = vld [vmem:[#allocation3 + $0x60] sm:$0xff]
      %v1960 = vld [vmem:[#allocation3 + $0x68] sm:$0xff]
      %v1961 = vld [vmem:[#allocation3 + $0x70] sm:$0xff]
      %v1962 = vld [vmem:[#allocation3 + $0x78] sm:$0xff]
      %v1963 = vld [vmem:[#allocation3 + $0x80] sm:$0xff]
      %v1964 = vld [vmem:[#allocation3 + $0x88] sm:$0xff]
      %v1965 = vld [vmem:[#allocation3 + $0x90] sm:$0xff]
      %v1966 = vld [vmem:[#allocation3 + $0x98] sm:$0xff]
      %v1967 = vld [vmem:[#allocation3 + $0xa0] sm:$0xff]
      %v1968 = vld [vmem:[#allocation3 + $0xa8] sm:$0xff]
      %v1969 = vld [vmem:[#allocation3 + $0xb0] sm:$0xff]
      %v1970 = vld [vmem:[#allocation3 + $0xb8] sm:$0xff]
      %v1971 = vld [vmem:[#allocation3 + $0xc0] sm:$0xff]
      %v1972 = vld [vmem:[#allocation3 + $0xc8] sm:$0xff]
      %v1973 = vld [vmem:[#allocation3 + $0xd0] sm:$0xff]
      %v1974 = vld [vmem:[#allocation3 + $0xd8] sm:$0xff]
      %v1975 = vld [vmem:[#allocation3 + $0xe0] sm:$0xff]
      %v1976 = vld [vmem:[#allocation3 + $0xe8] sm:$0xff]
      %v1977 = vld [vmem:[#allocation3 + $0xf0] sm:$0xff]
      %v1978 = vld [vmem:[#allocation3 + $0xf8] sm:$0xff]
      %v1979 = vld [vmem:[#allocation3 + $0x100] sm:$0xff]
      %v1980 = vld [vmem:[#allocation3 + $0x108] sm:$0xff]
      %v1981 = vld [vmem:[#allocation3 + $0x110] sm:$0xff]
      %v1982 = vld [vmem:[#allocation3 + $0x118] sm:$0xff]
      %v1983 = vld [vmem:[%s2] sm:$0xf]
      %v1984 = vld [vmem:[%s2 + $0x4] sm:$0xf]
      %v1985 = vld [vmem:[%s2 + $0x8] sm:$0xf]
      %v1986 = vld [vmem:[%s2 + $0xc] sm:$0xf]
      %v1987 = vld [vmem:[%s2 + $0x10] sm:$0xf]
      %v1988 = vld [vmem:[%s2 + $0x14] sm:$0xf]
      %v1989 = vld [vmem:[%s2 + $0x18] sm:$0xf]
      %v1990 = vld [vmem:[%s2 + $0x1c] sm:$0xf]
      %v1991 = vld [vmem:[%s2 + $0x20] sm:$0xf]
      %v1992 = vld [vmem:[%s2 + $0x24] sm:$0xf]
      %v1993 = vld [vmem:[%s2 + $0x28] sm:$0xf]
      %v1994 = vld [vmem:[%s2 + $0x2c] sm:$0xf]
      %v1995 = vld [vmem:[%s2 + $0x30] sm:$0xf]
      %v1996 = vld [vmem:[%s2 + $0x34] sm:$0xf]
      %v1997 = vld [vmem:[%s2 + $0x38] sm:$0xf]
      %v1998 = vld [vmem:[%s2 + $0x3c] sm:$0xf]
      %v1999 = vld [vmem:[%s2 + $0x40] sm:$0xf]
      %v2000 = vld [vmem:[%s2 + $0x44] sm:$0xf]
      %v2001 = vld [vmem:[%s2 + $0x48] sm:$0xf]
      %v2002 = vld [vmem:[%s2 + $0x4c] sm:$0xf]
      %v2003 = vld [vmem:[%s2 + $0x50] sm:$0xf]
      %v2004 = vld [vmem:[%s2 + $0x54] sm:$0xf]
      %v2005 = vld [vmem:[%s2 + $0x58] sm:$0xf]
      %v2006 = vld [vmem:[%s2 + $0x5c] sm:$0xf]
      %v2007 = vld [vmem:[%s2 + $0x60] sm:$0xf]
      %v2008 = vld [vmem:[%s2 + $0x64] sm:$0xf]
      %v2009 = vld [vmem:[%s2 + $0x68] sm:$0xf]
      %v2010 = vld [vmem:[%s2 + $0x6c] sm:$0xf]
      %v2011 = vld [vmem:[%s2 + $0x70] sm:$0xf]
      %v2012 = vld [vmem:[%s2 + $0x74] sm:$0xf]
      %v2013 = vld [vmem:[%s2 + $0x78] sm:$0xf]
      %v2014 = vld [vmem:[%s2 + $0x7c] sm:$0xf]
      %v2015 = vld [vmem:[%s2 + $0x80] sm:$0xf]
      %v2016 = vld [vmem:[%s2 + $0x84] sm:$0xf]
      %v2017 = vld [vmem:[%s2 + $0x88] sm:$0xf]
      %v2018 = vld [vmem:[%s2 + $0x8c] sm:$0xf]
      %v2019 = vld [vmem:[%s2 + $0x90] sm:$0xf]
      %v2020 = vld [vmem:[%s2 + $0x94] sm:$0xf]
      %v2021 = vld [vmem:[%s2 + $0x98] sm:$0xf]
      %v2022 = vld [vmem:[%s2 + $0x9c] sm:$0xf]
      %v2023 = vld [vmem:[%s2 + $0xa0] sm:$0xf]
      %v2024 = vld [vmem:[%s2 + $0xa4] sm:$0xf]
      %v2025 = vld [vmem:[%s2 + $0xa8] sm:$0xf]
      %v2026 = vld [vmem:[%s2 + $0xac] sm:$0xf]
      %v2027 = vld [vmem:[%s2 + $0xb0] sm:$0xf]
      %v2028 = vld [vmem:[%s2 + $0xb4] sm:$0xf]
      %v2029 = vld [vmem:[%s2 + $0xb8] sm:$0xf]
      %v2030 = vld [vmem:[%s2 + $0xbc] sm:$0xf]
      %v2031 = vld [vmem:[%s2 + $0xc0] sm:$0xf]
      %v2032 = vld [vmem:[%s2 + $0xc4] sm:$0xf]
      %v2033 = vld [vmem:[%s2 + $0xc8] sm:$0xf]
      %v2034 = vld [vmem:[%s2 + $0xcc] sm:$0xf]
      %v2035 = vld [vmem:[%s2 + $0xd0] sm:$0xf]
      %v2036 = vld [vmem:[%s2 + $0xd4] sm:$0xf]
      %v2037 = vld [vmem:[%s2 + $0xd8] sm:$0xf]
      %v2038 = vld [vmem:[%s2 + $0xdc] sm:$0xf]
      %v2039 = vld [vmem:[%s2 + $0xe0] sm:$0xf]
      %v2040 = vld [vmem:[%s2 + $0xe4] sm:$0xf]
      %v2041 = vld [vmem:[%s2 + $0xe8] sm:$0xf]
      %v2042 = vld [vmem:[%s2 + $0xec] sm:$0xf]
      %v2043 = vld [vmem:[%s2 + $0xf0] sm:$0xf]
      %v2044 = vld [vmem:[%s2 + $0xf4] sm:$0xf]
      %v2045 = vld [vmem:[%s2 + $0xf8] sm:$0xf]
      %v2046 = vld [vmem:[%s2 + $0xfc] sm:$0xf]
      %v2047 = vld [vmem:[%s2 + $0x100] sm:$0xf]
      %v2048 = vld [vmem:[%s2 + $0x104] sm:$0xf]
      %v2049 = vld [vmem:[%s2 + $0x108] sm:$0xf]
      %v2050 = vld [vmem:[%s2 + $0x10c] sm:$0xf]
      %v2051 = vld [vmem:[%s2 + $0x110] sm:$0xf]
      %v2052 = vld [vmem:[%s2 + $0x114] sm:$0xf]
      %v2053 = vld [vmem:[%s2 + $0x118] sm:$0xf]
      %v2054 = vld [vmem:[%s2 + $0x11c] sm:$0xf]
      %v2055 = vld [vmem:[%s2 + $0x120] sm:$0xf]
      %v2056 = vld [vmem:[%s2 + $0x124] sm:$0xf]
      %v2057 = vld [vmem:[%s2 + $0x128] sm:$0xf]
      %v2058 = vld [vmem:[%s2 + $0x12c] sm:$0xf]
      %v2059 = vld [vmem:[%s2 + $0x130] sm:$0xf]
      %v2060 = vld [vmem:[%s2 + $0x134] sm:$0xf]
      %v2061 = vld [vmem:[%s2 + $0x138] sm:$0xf]
      %v2062 = vld [vmem:[%s2 + $0x13c] sm:$0xf]
      %v2063 = vld [vmem:[%s2 + $0x140] sm:$0xf]
      %v2064 = vld [vmem:[%s2 + $0x144] sm:$0xf]
      %v2065 = vld [vmem:[%s2 + $0x148] sm:$0xf]
      %v2066 = vld [vmem:[%s2 + $0x14c] sm:$0xf]
      %v2067 = vld [vmem:[%s2 + $0x150] sm:$0xf]
      %v2068 = vld [vmem:[%s2 + $0x154] sm:$0xf]
      %v2069 = vld [vmem:[%s2 + $0x158] sm:$0xf]
      %v2070 = vld [vmem:[%s2 + $0x15c] sm:$0xf]
      %v2071 = vld [vmem:[%s2 + $0x160] sm:$0xf]
      %v2072 = vld [vmem:[%s2 + $0x164] sm:$0xf]
      %v2073 = vld [vmem:[%s2 + $0x168] sm:$0xf]
      %v2074 = vld [vmem:[%s2 + $0x16c] sm:$0xf]
      %v2075 = vld [vmem:[%s2 + $0x170] sm:$0xf]
      %v2076 = vld [vmem:[%s2 + $0x174] sm:$0xf]
      %v2077 = vld [vmem:[%s2 + $0x178] sm:$0xf]
      %v2078 = vld [vmem:[%s2 + $0x17c] sm:$0xf]
      %v2079 = vld [vmem:[%s2 + $0x180] sm:$0xf]
      %v2080 = vld [vmem:[%s2 + $0x184] sm:$0xf]
      %v2081 = vld [vmem:[%s2 + $0x188] sm:$0xf]
      %v2082 = vld [vmem:[%s2 + $0x18c] sm:$0xf]
      %v2083 = vld [vmem:[%s2 + $0x190] sm:$0xf]
      %v2084 = vld [vmem:[%s2 + $0x194] sm:$0xf]
      %v2085 = vld [vmem:[%s2 + $0x198] sm:$0xf]
      %v2086 = vld [vmem:[%s2 + $0x19c] sm:$0xf]
      %v2087 = vld [vmem:[%s2 + $0x1a0] sm:$0xf]
      %v2088 = vld [vmem:[%s2 + $0x1a4] sm:$0xf]
      %v2089 = vld [vmem:[%s2 + $0x1a8] sm:$0xf]
      %v2090 = vld [vmem:[%s2 + $0x1ac] sm:$0xf]
      %v2091 = vld [vmem:[%s2 + $0x1b0] sm:$0xf]
      %v2092 = vld [vmem:[%s2 + $0x1b4] sm:$0xf]
      %v2093 = vld [vmem:[%s2 + $0x1b8] sm:$0xf]
      %v2094 = vld [vmem:[%s2 + $0x1bc] sm:$0xf]
      %v2095 = vld [vmem:[%s2 + $0x1c0] sm:$0xf]
      %v2096 = vld [vmem:[%s2 + $0x1c4] sm:$0xf]
      %v2097 = vld [vmem:[%s2 + $0x1c8] sm:$0xf]
      %v2098 = vld [vmem:[%s2 + $0x1cc] sm:$0xf]
      %v2099 = vld [vmem:[%s2 + $0x1d0] sm:$0xf]
      %v2100 = vld [vmem:[%s2 + $0x1d4] sm:$0xf]
      %v2101 = vld [vmem:[%s2 + $0x1d8] sm:$0xf]
      %v2102 = vld [vmem:[%s2 + $0x1dc] sm:$0xf]
      %v2103 = vld [vmem:[%s2 + $0x1e0] sm:$0xf]
      %v2104 = vld [vmem:[%s2 + $0x1e4] sm:$0xf]
      %v2105 = vld [vmem:[%s2 + $0x1e8] sm:$0xf]
      %v2106 = vld [vmem:[%s2 + $0x1ec] sm:$0xf]
      %v2107 = vld [vmem:[%s2 + $0x1f0] sm:$0xf]
      %v2108 = vld [vmem:[%s2 + $0x1f4] sm:$0xf]
      %v2109 = vld [vmem:[%s2 + $0x1f8] sm:$0xf]
      %v2110 = vld [vmem:[%s2 + $0x1fc] sm:$0xf]
      %v2111 = vld [vmem:[%s2 + $0x200] sm:$0xf]
      %v2112 = vld [vmem:[%s2 + $0x204] sm:$0xf]
      %v2113 = vld [vmem:[%s2 + $0x208] sm:$0xf]
      %v2114 = vld [vmem:[%s2 + $0x20c] sm:$0xf]
      %v2115 = vld [vmem:[%s2 + $0x210] sm:$0xf]
      %v2116 = vld [vmem:[%s2 + $0x214] sm:$0xf]
      %v2117 = vld [vmem:[%s2 + $0x218] sm:$0xf]
      %v2118 = vld [vmem:[%s2 + $0x21c] sm:$0xf]
      %v2119 = vld [vmem:[%s2 + $0x220] sm:$0xf]
      %v2120 = vld [vmem:[%s2 + $0x224] sm:$0xf]
      %v2121 = vld [vmem:[%s2 + $0x228] sm:$0xf]
      %v2122 = vld [vmem:[%s2 + $0x22c] sm:$0xf]
      %v2123 = vld [vmem:[%s2 + $0x230] sm:$0xf]
      %v2124 = vld [vmem:[%s2 + $0x234] sm:$0xf]
      %v2125 = vld [vmem:[%s2 + $0x238] sm:$0xf]
      %v2126 = vld [vmem:[%s2 + $0x23c] sm:$0xf]
      %v2271 = vunpack.c.l.b16 %v1983
      %v2272 = vunpack.c.l.b16 %v1984
      %v2273 = vunpack.c.l.b16 %v1985
      %v2274 = vunpack.c.l.b16 %v1986
      %v2275 = vunpack.c.l.b16 %v1987
      %v2276 = vunpack.c.l.b16 %v1988
      %v2277 = vunpack.c.l.b16 %v1989
      %v2278 = vunpack.c.l.b16 %v1990
      %v2279 = vunpack.c.l.b16 %v1991
      %v2280 = vunpack.c.l.b16 %v1992
      %v2281 = vunpack.c.l.b16 %v1993
      %v2282 = vunpack.c.l.b16 %v1994
      %v2283 = vunpack.c.l.b16 %v1995
      %v2284 = vunpack.c.l.b16 %v1996
      %v2285 = vunpack.c.l.b16 %v1997
      %v2286 = vunpack.c.l.b16 %v1998
      %v2287 = vunpack.c.l.b16 %v1999
      %v2288 = vunpack.c.l.b16 %v2000
      %v2289 = vunpack.c.l.b16 %v2001
      %v2290 = vunpack.c.l.b16 %v2002
      %v2291 = vunpack.c.l.b16 %v2003
      %v2292 = vunpack.c.l.b16 %v2004
      %v2293 = vunpack.c.l.b16 %v2005
      %v2294 = vunpack.c.l.b16 %v2006
      %v2295 = vunpack.c.l.b16 %v2007
      %v2296 = vunpack.c.l.b16 %v2008
      %v2297 = vunpack.c.l.b16 %v2009
      %v2298 = vunpack.c.l.b16 %v2010
      %v2299 = vunpack.c.l.b16 %v2011
      %v2300 = vunpack.c.l.b16 %v2012
      %v2301 = vunpack.c.l.b16 %v2013
      %v2302 = vunpack.c.l.b16 %v2014
      %v2303 = vunpack.c.l.b16 %v2015
      %v2304 = vunpack.c.l.b16 %v2016
      %v2305 = vunpack.c.l.b16 %v2017
      %v2306 = vunpack.c.l.b16 %v2018
      %v2307 = vunpack.c.l.b16 %v2019
      %v2308 = vunpack.c.l.b16 %v2020
      %v2309 = vunpack.c.l.b16 %v2021
      %v2310 = vunpack.c.l.b16 %v2022
      %v2311 = vunpack.c.l.b16 %v2023
      %v2312 = vunpack.c.l.b16 %v2024
      %v2313 = vunpack.c.l.b16 %v2025
      %v2314 = vunpack.c.l.b16 %v2026
      %v2315 = vunpack.c.l.b16 %v2027
      %v2316 = vunpack.c.l.b16 %v2028
      %v2317 = vunpack.c.l.b16 %v2029
      %v2318 = vunpack.c.l.b16 %v2030
      %v2319 = vunpack.c.l.b16 %v2031
      %v2320 = vunpack.c.l.b16 %v2032
      %v2321 = vunpack.c.l.b16 %v2033
      %v2322 = vunpack.c.l.b16 %v2034
      %v2323 = vunpack.c.l.b16 %v2035
      %v2324 = vunpack.c.l.b16 %v2036
      %v2325 = vunpack.c.l.b16 %v2037
      %v2326 = vunpack.c.l.b16 %v2038
      %v2327 = vunpack.c.l.b16 %v2039
      %v2328 = vunpack.c.l.b16 %v2040
      %v2329 = vunpack.c.l.b16 %v2041
      %v2330 = vunpack.c.l.b16 %v2042
      %v2331 = vunpack.c.l.b16 %v2043
      %v2332 = vunpack.c.l.b16 %v2044
      %v2333 = vunpack.c.l.b16 %v2045
      %v2334 = vunpack.c.l.b16 %v2046
      %v2335 = vunpack.c.l.b16 %v2047
      %v2336 = vunpack.c.l.b16 %v2048
      %v2337 = vunpack.c.l.b16 %v2049
      %v2338 = vunpack.c.l.b16 %v2050
      %v2339 = vunpack.c.l.b16 %v2051
      %v2340 = vunpack.c.l.b16 %v2052
      %v2341 = vunpack.c.l.b16 %v2053
      %v2342 = vunpack.c.l.b16 %v2054
      %v2343 = vunpack.c.l.b16 %v2055
      %v2344 = vunpack.c.l.b16 %v2056
      %v2345 = vunpack.c.l.b16 %v2057
      %v2346 = vunpack.c.l.b16 %v2058
      %v2347 = vunpack.c.l.b16 %v2059
      %v2348 = vunpack.c.l.b16 %v2060
      %v2349 = vunpack.c.l.b16 %v2061
      %v2350 = vunpack.c.l.b16 %v2062
      %v2351 = vunpack.c.l.b16 %v2063
      %v2352 = vunpack.c.l.b16 %v2064
      %v2353 = vunpack.c.l.b16 %v2065
      %v2354 = vunpack.c.l.b16 %v2066
      %v2355 = vunpack.c.l.b16 %v2067
      %v2356 = vunpack.c.l.b16 %v2068
      %v2357 = vunpack.c.l.b16 %v2069
      %v2358 = vunpack.c.l.b16 %v2070
      %v2359 = vunpack.c.l.b16 %v2071
      %v2360 = vunpack.c.l.b16 %v2072
      %v2361 = vunpack.c.l.b16 %v2073
      %v2362 = vunpack.c.l.b16 %v2074
      %v2363 = vunpack.c.l.b16 %v2075
      %v2364 = vunpack.c.l.b16 %v2076
      %v2365 = vunpack.c.l.b16 %v2077
      %v2366 = vunpack.c.l.b16 %v2078
      %v2367 = vunpack.c.l.b16 %v2079
      %v2368 = vunpack.c.l.b16 %v2080
      %v2369 = vunpack.c.l.b16 %v2081
      %v2370 = vunpack.c.l.b16 %v2082
      %v2371 = vunpack.c.l.b16 %v2083
      %v2372 = vunpack.c.l.b16 %v2084
      %v2373 = vunpack.c.l.b16 %v2085
      %v2374 = vunpack.c.l.b16 %v2086
      %v2375 = vunpack.c.l.b16 %v2087
      %v2376 = vunpack.c.l.b16 %v2088
      %v2377 = vunpack.c.l.b16 %v2089
      %v2378 = vunpack.c.l.b16 %v2090
      %v2379 = vunpack.c.l.b16 %v2091
      %v2380 = vunpack.c.l.b16 %v2092
      %v2381 = vunpack.c.l.b16 %v2093
      %v2382 = vunpack.c.l.b16 %v2094
      %v2383 = vunpack.c.l.b16 %v2095
      %v2384 = vunpack.c.l.b16 %v2096
      %v2385 = vunpack.c.l.b16 %v2097
      %v2386 = vunpack.c.l.b16 %v2098
      %v2387 = vunpack.c.l.b16 %v2099
      %v2388 = vunpack.c.l.b16 %v2100
      %v2389 = vunpack.c.l.b16 %v2101
      %v2390 = vunpack.c.l.b16 %v2102
      %v2391 = vunpack.c.l.b16 %v2103
      %v2392 = vunpack.c.l.b16 %v2104
      %v2393 = vunpack.c.l.b16 %v2105
      %v2394 = vunpack.c.l.b16 %v2106
      %v2395 = vunpack.c.l.b16 %v2107
      %v2396 = vunpack.c.l.b16 %v2108
      %v2397 = vunpack.c.l.b16 %v2109
      %v2398 = vunpack.c.l.b16 %v2110
      %v2399 = vunpack.c.l.b16 %v2111
      %v2400 = vunpack.c.l.b16 %v2112
      %v2401 = vunpack.c.l.b16 %v2113
      %v2402 = vunpack.c.l.b16 %v2114
      %v2403 = vunpack.c.l.b16 %v2115
      %v2404 = vunpack.c.l.b16 %v2116
      %v2405 = vunpack.c.l.b16 %v2117
      %v2406 = vunpack.c.l.b16 %v2118
      %v2407 = vunpack.c.l.b16 %v2119
      %v2408 = vunpack.c.l.b16 %v2120
      %v2409 = vunpack.c.l.b16 %v2121
      %v2410 = vunpack.c.l.b16 %v2122
      %v2411 = vunpack.c.l.b16 %v2123
      %v2412 = vunpack.c.l.b16 %v2124
      %v2413 = vunpack.c.l.b16 %v2125
      %v2414 = vunpack.c.l.b16 %v2126
      %v2415 = vpack.c.b16 %v2272, %v2271
      %v2416 = vpack.c.b16 %v2274, %v2273
      %v2417 = vpack.c.b16 %v2276, %v2275
      %v2418 = vpack.c.b16 %v2278, %v2277
      %v2419 = vpack.c.b16 %v2280, %v2279
      %v2420 = vpack.c.b16 %v2282, %v2281
      %v2421 = vpack.c.b16 %v2284, %v2283
      %v2422 = vpack.c.b16 %v2286, %v2285
      %v2423 = vpack.c.b16 %v2288, %v2287
      %v2424 = vpack.c.b16 %v2290, %v2289
      %v2425 = vpack.c.b16 %v2292, %v2291
      %v2426 = vpack.c.b16 %v2294, %v2293
      %v2427 = vpack.c.b16 %v2296, %v2295
      %v2428 = vpack.c.b16 %v2298, %v2297
      %v2429 = vpack.c.b16 %v2300, %v2299
      %v2430 = vpack.c.b16 %v2302, %v2301
      %v2431 = vpack.c.b16 %v2304, %v2303
      %v2432 = vpack.c.b16 %v2306, %v2305
      %v2433 = vpack.c.b16 %v2308, %v2307
      %v2434 = vpack.c.b16 %v2310, %v2309
      %v2435 = vpack.c.b16 %v2312, %v2311
      %v2436 = vpack.c.b16 %v2314, %v2313
      %v2437 = vpack.c.b16 %v2316, %v2315
      %v2438 = vpack.c.b16 %v2318, %v2317
      %v2439 = vpack.c.b16 %v2320, %v2319
      %v2440 = vpack.c.b16 %v2322, %v2321
      %v2441 = vpack.c.b16 %v2324, %v2323
      %v2442 = vpack.c.b16 %v2326, %v2325
      %v2443 = vpack.c.b16 %v2328, %v2327
      %v2444 = vpack.c.b16 %v2330, %v2329
      %v2445 = vpack.c.b16 %v2332, %v2331
      %v2446 = vpack.c.b16 %v2334, %v2333
      %v2447 = vpack.c.b16 %v2336, %v2335
      %v2448 = vpack.c.b16 %v2338, %v2337
      %v2449 = vpack.c.b16 %v2340, %v2339
      %v2450 = vpack.c.b16 %v2342, %v2341
      %v2451 = vpack.c.b16 %v2344, %v2343
      %v2452 = vpack.c.b16 %v2346, %v2345
      %v2453 = vpack.c.b16 %v2348, %v2347
      %v2454 = vpack.c.b16 %v2350, %v2349
      %v2455 = vpack.c.b16 %v2352, %v2351
      %v2456 = vpack.c.b16 %v2354, %v2353
      %v2457 = vpack.c.b16 %v2356, %v2355
      %v2458 = vpack.c.b16 %v2358, %v2357
      %v2459 = vpack.c.b16 %v2360, %v2359
      %v2460 = vpack.c.b16 %v2362, %v2361
      %v2461 = vpack.c.b16 %v2364, %v2363
      %v2462 = vpack.c.b16 %v2366, %v2365
      %v2463 = vpack.c.b16 %v2368, %v2367
      %v2464 = vpack.c.b16 %v2370, %v2369
      %v2465 = vpack.c.b16 %v2372, %v2371
      %v2466 = vpack.c.b16 %v2374, %v2373
      %v2467 = vpack.c.b16 %v2376, %v2375
      %v2468 = vpack.c.b16 %v2378, %v2377
      %v2469 = vpack.c.b16 %v2380, %v2379
      %v2470 = vpack.c.b16 %v2382, %v2381
      %v2471 = vpack.c.b16 %v2384, %v2383
      %v2472 = vpack.c.b16 %v2386, %v2385
      %v2473 = vpack.c.b16 %v2388, %v2387
      %v2474 = vpack.c.b16 %v2390, %v2389
      %v2475 = vpack.c.b16 %v2392, %v2391
      %v2476 = vpack.c.b16 %v2394, %v2393
      %v2477 = vpack.c.b16 %v2396, %v2395
      %v2478 = vpack.c.b16 %v2398, %v2397
      %v2479 = vpack.c.b16 %v2400, %v2399
      %v2480 = vpack.c.b16 %v2402, %v2401
      %v2481 = vpack.c.b16 %v2404, %v2403
      %v2482 = vpack.c.b16 %v2406, %v2405
      %v2483 = vpack.c.b16 %v2408, %v2407
      %v2484 = vpack.c.b16 %v2410, %v2409
      %v2485 = vpack.c.b16 %v2412, %v2411
      %v2486 = vpack.c.b16 %v2414, %v2413
      %2559 = vmatprep.subr.bf16.mxu0 0
      %2560 = vmatpush1.bf16.msra.mxu0 %v2415
      %2561 = vmatprep.subr.bf16.mxu0 0
      %2562 = vmatpush1.bf16.msra.mxu0 %v2416
      %2563 = vmatprep.subr.bf16.mxu0 0
      %2564 = vmatpush1.bf16.msra.mxu0 %v2417
      %2565 = vmatprep.subr.bf16.mxu0 0
      %2566 = vmatpush1.bf16.msra.mxu0 %v2418
      %2567 = vmatprep.subr.bf16.mxu0 0
      %2568 = vmatpush1.bf16.msra.mxu0 %v2419
      %2569 = vmatprep.subr.bf16.mxu0 0
      %2570 = vmatpush1.bf16.msra.mxu0 %v2420
      %2571 = vmatprep.subr.bf16.mxu0 0
      %2572 = vmatpush1.bf16.msra.mxu0 %v2421
      %2573 = vmatprep.subr.bf16.mxu0 0
      %2574 = vmatpush1.bf16.msra.mxu0 %v2422
      %2575 = vmatprep.subr.bf16.mxu0 0
      %2576 = vmatpush1.bf16.msra.mxu0 %v2423
      %2577 = vmatprep.subr.bf16.mxu0 0
      %2578 = vmatpush1.bf16.msra.mxu0 %v2424
      %2579 = vmatprep.subr.bf16.mxu0 0
      %2580 = vmatpush1.bf16.msra.mxu0 %v2425
      %2581 = vmatprep.subr.bf16.mxu0 0
      %2582 = vmatpush1.bf16.msra.mxu0 %v2426
      %2583 = vmatprep.subr.bf16.mxu0 0
      %2584 = vmatpush1.bf16.msra.mxu0 %v2427
      %2585 = vmatprep.subr.bf16.mxu0 0
      %2586 = vmatpush1.bf16.msra.mxu0 %v2428
      %2587 = vmatprep.subr.bf16.mxu0 0
      %2588 = vmatpush1.bf16.msra.mxu0 %v2429
      %2589 = vmatprep.subr.bf16.mxu0 0
      %2590 = vmatpush1.bf16.msra.mxu0 %v2430
      %2591 = vmatprep.mubr.bf16.mxu0 %v1948
      %2592 = vmatmul.mubr.bf16.gmra.mrb[0].mxu0 %v1947
      %v2593 = vpop.f32.mrb[0].mxu0
      %v2594 = vadd.f32 0.0, %v2593
      %v2595 = vpop.f32.mrb[0].mxu0
      %v2596 = vpop.f32.mrb[0].mxu0
      %v2597 = vadd.f32 0.0, %v2596
      %v2598 = vpop.f32.mrb[0].mxu0
      %2599 = vmatprep.mubr.bf16.mxu0 %v1957
      %2600 = vmatmul.mubr.bf16.gmra.mrb[0].mxu0 %v1956
      %v2601 = vpop.f32.mrb[0].mxu0
      %v2602 = vadd.f32 0.0, %v2601
      %v2603 = vpop.f32.mrb[0].mxu0
      %v2604 = vpop.f32.mrb[0].mxu0
      %v2605 = vadd.f32 0.0, %v2604
      %v2606 = vpop.f32.mrb[0].mxu0
      %2607 = vmatprep.mubr.bf16.mxu0 %v1966
      %2608 = vmatmul.mubr.bf16.gmra.mrb[0].mxu0 %v1965
      %v2609 = vpop.f32.mrb[0].mxu0
      %v2610 = vadd.f32 0.0, %v2609
      %v2611 = vpop.f32.mrb[0].mxu0
      %v2612 = vpop.f32.mrb[0].mxu0
      %v2613 = vadd.f32 0.0, %v2612
      %v2614 = vpop.f32.mrb[0].mxu0
      %2615 = vmatprep.mubr.bf16.mxu0 %v1975
      %2616 = vmatmul.mubr.bf16.gmra.mrb[0].mxu0 %v1974
      %v2617 = vpop.f32.mrb[0].mxu0
      %v2618 = vadd.f32 0.0, %v2617
      %v2619 = vpop.f32.mrb[0].mxu0
      %v2620 = vpop.f32.mrb[0].mxu0
      %v2621 = vadd.f32 0.0, %v2620
      %v2622 = vpop.f32.mrb[0].mxu0
      %2623 = vdwg.mxu0
      %2624 = vmatprep.subr.bf16.mxu0 0
      %2625 = vmatpush1.bf16.msra.mxu0 %v2431
      %2626 = vmatprep.subr.bf16.mxu0 0
      %2627 = vmatpush1.bf16.msra.mxu0 %v2432
      %2628 = vmatprep.subr.bf16.mxu0 0
      %2629 = vmatpush1.bf16.msra.mxu0 %v2433
      %2630 = vmatprep.subr.bf16.mxu0 0
      %2631 = vmatpush1.bf16.msra.mxu0 %v2434
      %2632 = vmatprep.subr.bf16.mxu0 0
      %2633 = vmatpush1.bf16.msra.mxu0 %v2435
      %2634 = vmatprep.subr.bf16.mxu0 0
      %2635 = vmatpush1.bf16.msra.mxu0 %v2436
      %2636 = vmatprep.subr.bf16.mxu0 0
      %2637 = vmatpush1.bf16.msra.mxu0 %v2437
      %2638 = vmatprep.subr.bf16.mxu0 0
      %2639 = vmatpush1.bf16.msra.mxu0 %v2438
      %2640 = vmatprep.subr.bf16.mxu0 0
      %2641 = vmatpush1.bf16.msra.mxu0 %v2439
      %2642 = vmatprep.subr.bf16.mxu0 0
      %2643 = vmatpush1.bf16.msra.mxu0 %v2440
      %2644 = vmatprep.subr.bf16.mxu0 0
      %2645 = vmatpush1.bf16.msra.mxu0 %v2441
      %2646 = vmatprep.subr.bf16.mxu0 0
      %2647 = vmatpush1.bf16.msra.mxu0 %v2442
      %2648 = vmatprep.subr.bf16.mxu0 0
      %2649 = vmatpush1.bf16.msra.mxu0 %v2443
      %2650 = vmatprep.subr.bf16.mxu0 0
      %2651 = vmatpush1.bf16.msra.mxu0 %v2444
      %2652 = vmatprep.subr.bf16.mxu0 0
      %2653 = vmatpush1.bf16.msra.mxu0 %v2445
      %2654 = vmatprep.subr.bf16.mxu0 0
      %2655 = vmatpush1.bf16.msra.mxu0 %v2446
      %2656 = vmatprep.mubr.bf16.mxu0 %v1950
      %2657 = vmatmul.mubr.bf16.gmra.mrb[0].mxu0 %v1949
      %v2658 = vpop.f32.mrb[0].mxu0
      %v2659 = vadd.f32 %v2594, %v2658
      %v2660 = vpop.f32.mrb[0].mxu0
      %v2661 = vpop.f32.mrb[0].mxu0
      %v2662 = vadd.f32 %v2597, %v2661
      %v2663 = vpop.f32.mrb[0].mxu0
      %2664 = vmatprep.mubr.bf16.mxu0 %v1959
      %2665 = vmatmul.mubr.bf16.gmra.mrb[0].mxu0 %v1958
      %v2666 = vpop.f32.mrb[0].mxu0
      %v2667 = vadd.f32 %v2602, %v2666
      %v2668 = vpop.f32.mrb[0].mxu0
      %v2669 = vpop.f32.mrb[0].mxu0
      %v2670 = vadd.f32 %v2605, %v2669
      %v2671 = vpop.f32.mrb[0].mxu0
      %2672 = vmatprep.mubr.bf16.mxu0 %v1968
      %2673 = vmatmul.mubr.bf16.gmra.mrb[0].mxu0 %v1967
      %v2674 = vpop.f32.mrb[0].mxu0
      %v2675 = vadd.f32 %v2610, %v2674
      %v2676 = vpop.f32.mrb[0].mxu0
      %v2677 = vpop.f32.mrb[0].mxu0
      %v2678 = vadd.f32 %v2613, %v2677
      %v2679 = vpop.f32.mrb[0].mxu0
      %2680 = vmatprep.mubr.bf16.mxu0 %v1977
      %2681 = vmatmul.mubr.bf16.gmra.mrb[0].mxu0 %v1976
      %v2682 = vpop.f32.mrb[0].mxu0
      %v2683 = vadd.f32 %v2618, %v2682
      %v2684 = vpop.f32.mrb[0].mxu0
      %v2685 = vpop.f32.mrb[0].mxu0
      %v2686 = vadd.f32 %v2621, %v2685
      %v2687 = vpop.f32.mrb[0].mxu0
      %2688 = vdwg.mxu0
      %2689 = vmatprep.subr.bf16.mxu0 0
      %2690 = vmatpush1.bf16.msra.mxu0 %v2447
      %2691 = vmatprep.subr.bf16.mxu0 0
      %2692 = vmatpush1.bf16.msra.mxu0 %v2448
      %2693 = vmatprep.subr.bf16.mxu0 0
      %2694 = vmatpush1.bf16.msra.mxu0 %v2449
      %2695 = vmatprep.subr.bf16.mxu0 0
      %2696 = vmatpush1.bf16.msra.mxu0 %v2450
      %2697 = vmatprep.subr.bf16.mxu0 0
      %2698 = vmatpush1.bf16.msra.mxu0 %v2451
      %2699 = vmatprep.subr.bf16.mxu0 0
      %2700 = vmatpush1.bf16.msra.mxu0 %v2452
      %2701 = vmatprep.subr.bf16.mxu0 0
      %2702 = vmatpush1.bf16.msra.mxu0 %v2453
      %2703 = vmatprep.subr.bf16.mxu0 0
      %2704 = vmatpush1.bf16.msra.mxu0 %v2454
      %2705 = vmatprep.subr.bf16.mxu0 0
      %2706 = vmatpush1.bf16.msra.mxu0 %v2455
      %2707 = vmatprep.subr.bf16.mxu0 0
      %2708 = vmatpush1.bf16.msra.mxu0 %v2456
      %2709 = vmatprep.subr.bf16.mxu0 0
      %2710 = vmatpush1.bf16.msra.mxu0 %v2457
      %2711 = vmatprep.subr.bf16.mxu0 0
      %2712 = vmatpush1.bf16.msra.mxu0 %v2458
      %2713 = vmatprep.subr.bf16.mxu0 0
      %2714 = vmatpush1.bf16.msra.mxu0 %v2459
      %2715 = vmatprep.subr.bf16.mxu0 0
      %2716 = vmatpush1.bf16.msra.mxu0 %v2460
      %2717 = vmatprep.subr.bf16.mxu0 0
      %2718 = vmatpush1.bf16.msra.mxu0 %v2461
      %2719 = vmatprep.subr.bf16.mxu0 0
      %2720 = vmatpush1.bf16.msra.mxu0 %v2462
      %2721 = vmatprep.mubr.bf16.mxu0 %v1952
      %2722 = vmatmul.mubr.bf16.gmra.mrb[0].mxu0 %v1951
      %v2723 = vpop.f32.mrb[0].mxu0
      %v2724 = vadd.f32 %v2659, %v2723
      %v2725 = vpop.f32.mrb[0].mxu0
      %v2726 = vpop.f32.mrb[0].mxu0
      %v2727 = vadd.f32 %v2662, %v2726
      %v2728 = vpop.f32.mrb[0].mxu0
      %2729 = vmatprep.mubr.bf16.mxu0 %v1961
      %2730 = vmatmul.mubr.bf16.gmra.mrb[0].mxu0 %v1960
      %v2731 = vpop.f32.mrb[0].mxu0
      %v2732 = vadd.f32 %v2667, %v2731
      %v2733 = vpop.f32.mrb[0].mxu0
      %v2734 = vpop.f32.mrb[0].mxu0
      %v2735 = vadd.f32 %v2670, %v2734
      %v2736 = vpop.f32.mrb[0].mxu0
      %2737 = vmatprep.mubr.bf16.mxu0 %v1970
      %2738 = vmatmul.mubr.bf16.gmra.mrb[0].mxu0 %v1969
      %v2739 = vpop.f32.mrb[0].mxu0
      %v2740 = vadd.f32 %v2675, %v2739
      %v2741 = vpop.f32.mrb[0].mxu0
      %v2742 = vpop.f32.mrb[0].mxu0
      %v2743 = vadd.f32 %v2678, %v2742
      %v2744 = vpop.f32.mrb[0].mxu0
      %2745 = vmatprep.mubr.bf16.mxu0 %v1979
      %2746 = vmatmul.mubr.bf16.gmra.mrb[0].mxu0 %v1978
      %v2747 = vpop.f32.mrb[0].mxu0
      %v2748 = vadd.f32 %v2683, %v2747
      %v2749 = vpop.f32.mrb[0].mxu0
      %v2750 = vpop.f32.mrb[0].mxu0
      %v2751 = vadd.f32 %v2686, %v2750
      %v2752 = vpop.f32.mrb[0].mxu0
      %2753 = vdwg.mxu0
      %2754 = vmatprep.subr.bf16.mxu0 0
      %2755 = vmatpush1.bf16.msra.mxu0 %v2463
      %2756 = vmatprep.subr.bf16.mxu0 0
      %2757 = vmatpush1.bf16.msra.mxu0 %v2464
      %2758 = vmatprep.subr.bf16.mxu0 0
      %2759 = vmatpush1.bf16.msra.mxu0 %v2465
      %2760 = vmatprep.subr.bf16.mxu0 0
      %2761 = vmatpush1.bf16.msra.mxu0 %v2466
      %2762 = vmatprep.subr.bf16.mxu0 0
      %2763 = vmatpush1.bf16.msra.mxu0 %v2467
      %2764 = vmatprep.subr.bf16.mxu0 0
      %2765 = vmatpush1.bf16.msra.mxu0 %v2468
      %2766 = vmatprep.subr.bf16.mxu0 0
      %2767 = vmatpush1.bf16.msra.mxu0 %v2469
      %2768 = vmatprep.subr.bf16.mxu0 0
      %2769 = vmatpush1.bf16.msra.mxu0 %v2470
      %2770 = vmatprep.subr.bf16.mxu0 0
      %2771 = vmatpush1.bf16.msra.mxu0 %v2471
      %2772 = vmatprep.subr.bf16.mxu0 0
      %2773 = vmatpush1.bf16.msra.mxu0 %v2472
      %2774 = vmatprep.subr.bf16.mxu0 0
      %2775 = vmatpush1.bf16.msra.mxu0 %v2473
      %2776 = vmatprep.subr.bf16.mxu0 0
      %2777 = vmatpush1.bf16.msra.mxu0 %v2474
      %2778 = vmatprep.subr.bf16.mxu0 0
      %2779 = vmatpush1.bf16.msra.mxu0 %v2475
      %2780 = vmatprep.subr.bf16.mxu0 0
      %2781 = vmatpush1.bf16.msra.mxu0 %v2476
      %2782 = vmatprep.subr.bf16.mxu0 0
      %2783 = vmatpush1.bf16.msra.mxu0 %v2477
      %2784 = vmatprep.subr.bf16.mxu0 0
      %2785 = vmatpush1.bf16.msra.mxu0 %v2478
      %2786 = vmatprep.mubr.bf16.mxu0 %v1954
      %2787 = vmatmul.mubr.bf16.gmra.mrb[0].mxu0 %v1953
      %v2788 = vpop.f32.mrb[0].mxu0
      %v2789 = vadd.f32 %v2724, %v2788
      %v2790 = vpop.f32.mrb[0].mxu0
      %v2791 = vpop.f32.mrb[0].mxu0
      %v2792 = vadd.f32 %v2727, %v2791
      %v2793 = vpop.f32.mrb[0].mxu0
      %2794 = vmatprep.mubr.bf16.mxu0 %v1963
      %2795 = vmatmul.mubr.bf16.gmra.mrb[0].mxu0 %v1962
      %v2796 = vpop.f32.mrb[0].mxu0
      %v2797 = vadd.f32 %v2732, %v2796
      %v2798 = vpop.f32.mrb[0].mxu0
      %v2799 = vpop.f32.mrb[0].mxu0
      %v2800 = vadd.f32 %v2735, %v2799
      %v2801 = vpop.f32.mrb[0].mxu0
      %2802 = vmatprep.mubr.bf16.mxu0 %v1972
      %2803 = vmatmul.mubr.bf16.gmra.mrb[0].mxu0 %v1971
      %v2804 = vpop.f32.mrb[0].mxu0
      %v2805 = vadd.f32 %v2740, %v2804
      %v2806 = vpop.f32.mrb[0].mxu0
      %v2807 = vpop.f32.mrb[0].mxu0
      %v2808 = vadd.f32 %v2743, %v2807
      %v2809 = vpop.f32.mrb[0].mxu0
      %2810 = vmatprep.mubr.bf16.mxu0 %v1981
      %2811 = vmatmul.mubr.bf16.gmra.mrb[0].mxu0 %v1980
      %v2812 = vpop.f32.mrb[0].mxu0
      %v2813 = vadd.f32 %v2748, %v2812
      %v2814 = vpop.f32.mrb[0].mxu0
      %v2815 = vpop.f32.mrb[0].mxu0
      %v2816 = vadd.f32 %v2751, %v2815
      %v2817 = vpop.f32.mrb[0].mxu0
      %2818 = vdwg.mxu0
      %2819 = vmatprep.subr.bf16.mxu0 0
      %2820 = vmatpush1.bf16.msra.mxu0 %v2479
      %2821 = vmatprep.subr.bf16.mxu0 0
      %2822 = vmatpush1.bf16.msra.mxu0 %v2480
      %2823 = vmatprep.subr.bf16.mxu0 0
      %2824 = vmatpush1.bf16.msra.mxu0 %v2481
      %2825 = vmatprep.subr.bf16.mxu0 0
      %2826 = vmatpush1.bf16.msra.mxu0 %v2482
      %2827 = vmatprep.subr.bf16.mxu0 0
      %2828 = vmatpush1.bf16.msra.mxu0 %v2483
      %2829 = vmatprep.subr.bf16.mxu0 0
      %2830 = vmatpush1.bf16.msra.mxu0 %v2484
      %2831 = vmatprep.subr.bf16.mxu0 0
      %2832 = vmatpush1.bf16.msra.mxu0 %v2485
      %2833 = vmatprep.subr.bf16.mxu0 0
      %2834 = vmatpush1.bf16.msra.mxu0 %v2486
      %2835 = vmatprep.subr.bf16.mxu0 0
      %2836 = vmatpush1.bf16.msra.mxu0 0
      %2837 = vmatprep.subr.bf16.mxu0 0
      %2838 = vmatpush1.bf16.msra.mxu0 0
      %2839 = vmatprep.subr.bf16.mxu0 0
      %2840 = vmatpush1.bf16.msra.mxu0 0
      %2841 = vmatprep.subr.bf16.mxu0 0
      %2842 = vmatpush1.bf16.msra.mxu0 0
      %2843 = vmatprep.subr.bf16.mxu0 0
      %2844 = vmatpush1.bf16.msra.mxu0 0
      %2845 = vmatprep.subr.bf16.mxu0 0
      %2846 = vmatpush1.bf16.msra.mxu0 0
      %2847 = vmatprep.subr.bf16.mxu0 0
      %2848 = vmatpush1.bf16.msra.mxu0 0
      %2849 = vmatprep.subr.bf16.mxu0 0
      %2850 = vmatpush1.bf16.msra.mxu0 0
      %2851 = vmatprep.mubr.bf16.mxu0 0
      %2852 = vmatmul.mubr.bf16.gmra.mrb[0].mxu0 %v1955
      %v2853 = vpop.f32.mrb[0].mxu0
      %v2854 = vadd.f32 %v2789, %v2853
      %v2855 = vpop.f32.mrb[0].mxu0
      %v2856 = vpop.f32.mrb[0].mxu0
      %v2857 = vadd.f32 %v2792, %v2856
      %v2858 = vpop.f32.mrb[0].mxu0
      %2859 = vmatprep.mubr.bf16.mxu0 0
      %2860 = vmatmul.mubr.bf16.gmra.mrb[0].mxu0 %v1964
      %v2861 = vpop.f32.mrb[0].mxu0
      %v2862 = vadd.f32 %v2797, %v2861
      %v2863 = vpop.f32.mrb[0].mxu0
      %v2864 = vpop.f32.mrb[0].mxu0
      %v2865 = vadd.f32 %v2800, %v2864
      %v2866 = vpop.f32.mrb[0].mxu0
      %2867 = vmatprep.mubr.bf16.mxu0 0
      %2868 = vmatmul.mubr.bf16.gmra.mrb[0].mxu0 %v1973
      %v2869 = vpop.f32.mrb[0].mxu0
      %v2870 = vadd.f32 %v2805, %v2869
      %v2871 = vpop.f32.mrb[0].mxu0
      %v2872 = vpop.f32.mrb[0].mxu0
      %v2873 = vadd.f32 %v2808, %v2872
      %v2874 = vpop.f32.mrb[0].mxu0
      %2875 = vmatprep.mubr.bf16.mxu0 0
      %2876 = vmatmul.mubr.bf16.gmra.mrb[0].mxu0 %v1982
      %v2877 = vpop.f32.mrb[0].mxu0
      %v2878 = vadd.f32 %v2813, %v2877
      %v2879 = vpop.f32.mrb[0].mxu0
      %v2880 = vpop.f32.mrb[0].mxu0
      %v2881 = vadd.f32 %v2816, %v2880
      %v2882 = vpop.f32.mrb[0].mxu0
      %2883 = vdwg.mxu0
      %2884 = vst [vmem:[%s170] sm:$0xff] %v2854
      %2885 = vst [vmem:[%s170 + $0x8] sm:$0xff] %v2857
      %2886 = vst [vmem:[%s170 + $0x10] sm:$0xff] %v2862
      %2887 = vst [vmem:[%s170 + $0x18] sm:$0xff] %v2865
      %2888 = vst [vmem:[%s170 + $0x20] sm:$0xff] %v2870
      %2889 = vst [vmem:[%s170 + $0x28] sm:$0xff] %v2873
      %2890 = vst [vmem:[%s170 + $0x30] sm:$0xff] %v2878
      %2891 = vst [vmem:[%s170 + $0x38] sm:$0xff] %v2881
      %v2892 = vadd.f32 %v2854, %v2857
      %v2893 = vadd.f32 %v2892, %v2862
      %v2894 = vadd.f32 %v2893, %v2865
      %v2895 = vadd.f32 %v2894, %v2870
      %v2896 = vadd.f32 %v2895, %v2873
      %v2897 = vadd.f32 %v2896, %v2878
      %v2898 = vadd.f32 %v2897, %v2881
      %v2899 = vrot.slane %v2898, 4
      %v2900 = vadd.f32 %v2898, %v2899
      %v2901 = vrot.slane %v2900, 2
      %v2902 = vadd.f32 %v2900, %v2901
      %v2903 = vrot.slane %v2902, 1
      %v2904 = vadd.f32 %v2902, %v2903
      %v2905 = vadd.f32 %v2904, 0.0
      %v2906 = vmul.f32 %v2854, %v2854
      %v2907 = vmul.f32 %v2857, %v2857
      %v2908 = vmul.f32 %v2862, %v2862
      %v2909 = vmul.f32 %v2865, %v2865
      %v2910 = vmul.f32 %v2870, %v2870
      %v2911 = vmul.f32 %v2873, %v2873
      %v2912 = vmul.f32 %v2878, %v2878
      %v2913 = vmul.f32 %v2881, %v2881
      %v2914 = vadd.f32 %v2906, %v2907
      %v2915 = vadd.f32 %v2914, %v2908
      %v2916 = vadd.f32 %v2915, %v2909
      %v2917 = vadd.f32 %v2916, %v2910
      %v2918 = vadd.f32 %v2917, %v2911
      %v2919 = vadd.f32 %v2918, %v2912
      %v2920 = vadd.f32 %v2919, %v2913
      %v2921 = vrot.slane %v2920, 4
      %v2922 = vadd.f32 %v2920, %v2921
      %v2923 = vrot.slane %v2922, 2
      %v2924 = vadd.f32 %v2922, %v2923
      %v2925 = vrot.slane %v2924, 1
      %v2926 = vadd.f32 %v2924, %v2925
      %v2927 = vadd.f32 %v2926, 0.0
      %v2928 = vld [vmem:[%s638] sm:$0xf]
      %v2929 = vld [vmem:[%s638 + $0x8] sm:$0xf]
      %v2930 = vld [vmem:[%s638 + $0x10] sm:$0xf]
      %v2931 = vld [vmem:[%s638 + $0x18] sm:$0xf]
      %v2932 = vld [vmem:[%s638 + $0x20] sm:$0xf]
      %v2933 = vld [vmem:[%s638 + $0x28] sm:$0xf]
      %v2934 = vld [vmem:[%s638 + $0x30] sm:$0xf]
      %v2935 = vld [vmem:[%s638 + $0x38] sm:$0xf]
      %v2944 = vunpack.c.l.b16 %v2928
      %v2945 = vunpack.c.l.b16 %v2929
      %v2946 = vunpack.c.l.b16 %v2930
      %v2947 = vunpack.c.l.b16 %v2931
      %v2948 = vunpack.c.l.b16 %v2932
      %v2949 = vunpack.c.l.b16 %v2933
      %v2950 = vunpack.c.l.b16 %v2934
      %v2951 = vunpack.c.l.b16 %v2935
      %v2952 = vpack.c.b16 %v2945, %v2944
      %v2953 = vpack.c.b16 %v2947, %v2946
      %v2954 = vpack.c.b16 %v2949, %v2948
      %v2955 = vpack.c.b16 %v2951, %v2950
      %2960 = vst [vmem:[#allocation3] sm:$0xff] %v2952
      %2961 = vst [vmem:[#allocation3 + $0x48] sm:$0xff] %v2953
      %2962 = vst [vmem:[#allocation3 + $0x90] sm:$0xff] %v2954
      %2963 = vst [vmem:[#allocation3 + $0xd8] sm:$0xff] %v2955
      %v2964 = vld [vmem:[#allocation2] sm:$0xf]
      %v2965 = vld [vmem:[#allocation2 + $0x4] sm:$0x1]
      %v2966 = vld [vmem:[#allocation2 + $0x8] sm:$0xf]
      %v2967 = vld [vmem:[#allocation2 + $0xc] sm:$0x1]
      %v2968 = vld [vmem:[#allocation2 + $0x10] sm:$0xf]
      %v2969 = vld [vmem:[#allocation2 + $0x14] sm:$0x1]
      %v2970 = vld [vmem:[#allocation2 + $0x18] sm:$0xf]
      %v2971 = vld [vmem:[#allocation2 + $0x1c] sm:$0x1]
      %v2972 = vld [vmem:[#allocation2 + $0x20] sm:$0xf]
      %v2973 = vld [vmem:[#allocation2 + $0x24] sm:$0x1]
      %v2974 = vld [vmem:[#allocation2 + $0x28] sm:$0xf]
      %v2975 = vld [vmem:[#allocation2 + $0x2c] sm:$0x1]
      %v2976 = vld [vmem:[#allocation2 + $0x30] sm:$0xf]
      %v2977 = vld [vmem:[#allocation2 + $0x34] sm:$0x1]
      %v2978 = vld [vmem:[#allocation2 + $0x38] sm:$0xf]
      %v2979 = vld [vmem:[#allocation2 + $0x3c] sm:$0x1]
      %v2981 = vshrl.u32 %v2964, 16
      %v2983 = vrot.slane %v2981, 4
      %v2984 = vshll.u32 %v2964, 16
      %v2986 = vrot.slane %v2984, 5
      %v2987 = vor.u32 %v2983, %v2986
      %v2988 = vrot.slane %v2987, 4
      %v2990 = vshll.u32 %v2965, 16
      %v2992 = vrot.slane %v2990, 5
      %v2993 = vsel %vm1374, %v2988, %v2992
      %v2995 = vshrl.u32 %v2966, 16
      %v2997 = vrot.slane %v2995, 4
      %v2998 = vshll.u32 %v2966, 16
      %v3000 = vrot.slane %v2998, 5
      %v3001 = vor.u32 %v2997, %v3000
      %v3002 = vrot.slane %v3001, 4
      %v3004 = vshll.u32 %v2967, 16
      %v3006 = vrot.slane %v3004, 5
      %v3007 = vsel %vm1374, %v3002, %v3006
      %v3009 = vshrl.u32 %v2968, 16
      %v3011 = vrot.slane %v3009, 4
      %v3012 = vshll.u32 %v2968, 16
      %v3014 = vrot.slane %v3012, 5
      %v3015 = vor.u32 %v3011, %v3014
      %v3016 = vrot.slane %v3015, 4
      %v3018 = vshll.u32 %v2969, 16
      %v3020 = vrot.slane %v3018, 5
      %v3021 = vsel %vm1374, %v3016, %v3020
      %v3023 = vshrl.u32 %v2970, 16
      %v3025 = vrot.slane %v3023, 4
      %v3026 = vshll.u32 %v2970, 16
      %v3028 = vrot.slane %v3026, 5
      %v3029 = vor.u32 %v3025, %v3028
      %v3030 = vrot.slane %v3029, 4
      %v3032 = vshll.u32 %v2971, 16
      %v3034 = vrot.slane %v3032, 5
      %v3035 = vsel %vm1374, %v3030, %v3034
      %v3037 = vshrl.u32 %v2972, 16
      %v3039 = vrot.slane %v3037, 4
      %v3040 = vshll.u32 %v2972, 16
      %v3042 = vrot.slane %v3040, 5
      %v3043 = vor.u32 %v3039, %v3042
      %v3044 = vrot.slane %v3043, 4
      %v3046 = vshll.u32 %v2973, 16
      %v3048 = vrot.slane %v3046, 5
      %v3049 = vsel %vm1374, %v3044, %v3048
      %v3051 = vshrl.u32 %v2974, 16
      %v3053 = vrot.slane %v3051, 4
      %v3054 = vshll.u32 %v2974, 16
      %v3056 = vrot.slane %v3054, 5
      %v3057 = vor.u32 %v3053, %v3056
      %v3058 = vrot.slane %v3057, 4
      %v3060 = vshll.u32 %v2975, 16
      %v3062 = vrot.slane %v3060, 5
      %v3063 = vsel %vm1374, %v3058, %v3062
      %v3065 = vshrl.u32 %v2976, 16
      %v3067 = vrot.slane %v3065, 4
      %v3068 = vshll.u32 %v2976, 16
      %v3070 = vrot.slane %v3068, 5
      %v3071 = vor.u32 %v3067, %v3070
      %v3072 = vrot.slane %v3071, 4
      %v3074 = vshll.u32 %v2977, 16
      %v3076 = vrot.slane %v3074, 5
      %v3077 = vsel %vm1374, %v3072, %v3076
      %v3079 = vshrl.u32 %v2978, 16
      %v3081 = vrot.slane %v3079, 4
      %v3082 = vshll.u32 %v2978, 16
      %v3084 = vrot.slane %v3082, 5
      %v3085 = vor.u32 %v3081, %v3084
      %v3086 = vrot.slane %v3085, 4
      %v3088 = vshll.u32 %v2979, 16
      %v3090 = vrot.slane %v3088, 5
      %v3091 = vsel %vm1374, %v3086, %v3090
      %v3092 = vunpack.c.l.b16 %v2993
      %v3093 = vunpack.c.l.b16 %v3007
      %v3094 = vunpack.c.l.b16 %v3021
      %v3095 = vunpack.c.l.b16 %v3035
      %v3096 = vunpack.c.l.b16 %v3049
      %v3097 = vunpack.c.l.b16 %v3063
      %v3098 = vunpack.c.l.b16 %v3077
      %v3099 = vunpack.c.l.b16 %v3091
      %v3100 = vpack.c.b16 %v3093, %v3092
      %v3101 = vpack.c.b16 %v3095, %v3094
      %v3102 = vpack.c.b16 %v3097, %v3096
      %v3103 = vpack.c.b16 %v3099, %v3098
      %3108 = vst [vmem:[#allocation3 + $0x8] sm:$0xff] %v3100
      %3109 = vst [vmem:[#allocation3 + $0x50] sm:$0xff] %v3101
      %3110 = vst [vmem:[#allocation3 + $0x98] sm:$0xff] %v3102
      %3111 = vst [vmem:[#allocation3 + $0xe0] sm:$0xff] %v3103
      %v3112 = vld [vmem:[%s638] sm:$0xf]
      %v3113 = vld [vmem:[%s638 + $0x4] sm:$0x1]
      %v3114 = vld [vmem:[%s638 + $0x8] sm:$0xf]
      %v3115 = vld [vmem:[%s638 + $0xc] sm:$0x1]
      %v3116 = vld [vmem:[%s638 + $0x10] sm:$0xf]
      %v3117 = vld [vmem:[%s638 + $0x14] sm:$0x1]
      %v3118 = vld [vmem:[%s638 + $0x18] sm:$0xf]
      %v3119 = vld [vmem:[%s638 + $0x1c] sm:$0x1]
      %v3120 = vld [vmem:[%s638 + $0x20] sm:$0xf]
      %v3121 = vld [vmem:[%s638 + $0x24] sm:$0x1]
      %v3122 = vld [vmem:[%s638 + $0x28] sm:$0xf]
      %v3123 = vld [vmem:[%s638 + $0x2c] sm:$0x1]
      %v3124 = vld [vmem:[%s638 + $0x30] sm:$0xf]
      %v3125 = vld [vmem:[%s638 + $0x34] sm:$0x1]
      %v3126 = vld [vmem:[%s638 + $0x38] sm:$0xf]
      %v3127 = vld [vmem:[%s638 + $0x3c] sm:$0x1]
      %v3129 = vshrl.u32 %v3112, 16
      %v3131 = vrot.slane %v3129, 4
      %v3132 = vshll.u32 %v3112, 16
      %v3134 = vrot.slane %v3132, 5
      %v3135 = vor.u32 %v3131, %v3134
      %v3136 = vrot.slane %v3135, 4
      %v3138 = vshll.u32 %v3113, 16
      %v3140 = vrot.slane %v3138, 5
      %v3141 = vsel %vm1374, %v3136, %v3140
      %v3143 = vshrl.u32 %v3114, 16
      %v3145 = vrot.slane %v3143, 4
      %v3146 = vshll.u32 %v3114, 16
      %v3148 = vrot.slane %v3146, 5
      %v3149 = vor.u32 %v3145, %v3148
      %v3150 = vrot.slane %v3149, 4
      %v3152 = vshll.u32 %v3115, 16
      %v3154 = vrot.slane %v3152, 5
      %v3155 = vsel %vm1374, %v3150, %v3154
      %v3157 = vshrl.u32 %v3116, 16
      %v3159 = vrot.slane %v3157, 4
      %v3160 = vshll.u32 %v3116, 16
      %v3162 = vrot.slane %v3160, 5
      %v3163 = vor.u32 %v3159, %v3162
      %v3164 = vrot.slane %v3163, 4
      %v3166 = vshll.u32 %v3117, 16
      %v3168 = vrot.slane %v3166, 5
      %v3169 = vsel %vm1374, %v3164, %v3168
      %v3171 = vshrl.u32 %v3118, 16
      %v3173 = vrot.slane %v3171, 4
      %v3174 = vshll.u32 %v3118, 16
      %v3176 = vrot.slane %v3174, 5
      %v3177 = vor.u32 %v3173, %v3176
      %v3178 = vrot.slane %v3177, 4
      %v3180 = vshll.u32 %v3119, 16
      %v3182 = vrot.slane %v3180, 5
      %v3183 = vsel %vm1374, %v3178, %v3182
      %v3185 = vshrl.u32 %v3120, 16
      %v3187 = vrot.slane %v3185, 4
      %v3188 = vshll.u32 %v3120, 16
      %v3190 = vrot.slane %v3188, 5
      %v3191 = vor.u32 %v3187, %v3190
      %v3192 = vrot.slane %v3191, 4
      %v3194 = vshll.u32 %v3121, 16
      %v3196 = vrot.slane %v3194, 5
      %v3197 = vsel %vm1374, %v3192, %v3196
      %v3199 = vshrl.u32 %v3122, 16
      %v3201 = vrot.slane %v3199, 4
      %v3202 = vshll.u32 %v3122, 16
      %v3204 = vrot.slane %v3202, 5
      %v3205 = vor.u32 %v3201, %v3204
      %v3206 = vrot.slane %v3205, 4
      %v3208 = vshll.u32 %v3123, 16
      %v3210 = vrot.slane %v3208, 5
      %v3211 = vsel %vm1374, %v3206, %v3210
      %v3213 = vshrl.u32 %v3124, 16
      %v3215 = vrot.slane %v3213, 4
      %v3216 = vshll.u32 %v3124, 16
      %v3218 = vrot.slane %v3216, 5
      %v3219 = vor.u32 %v3215, %v3218
      %v3220 = vrot.slane %v3219, 4
      %v3222 = vshll.u32 %v3125, 16
      %v3224 = vrot.slane %v3222, 5
      %v3225 = vsel %vm1374, %v3220, %v3224
      %v3227 = vshrl.u32 %v3126, 16
      %v3229 = vrot.slane %v3227, 4
      %v3230 = vshll.u32 %v3126, 16
      %v3232 = vrot.slane %v3230, 5
      %v3233 = vor.u32 %v3229, %v3232
      %v3234 = vrot.slane %v3233, 4
      %v3236 = vshll.u32 %v3127, 16
      %v3238 = vrot.slane %v3236, 5
      %v3239 = vsel %vm1374, %v3234, %v3238
      %v3240 = vunpack.c.l.b16 %v3141
      %v3241 = vunpack.c.l.b16 %v3155
      %v3242 = vunpack.c.l.b16 %v3169
      %v3243 = vunpack.c.l.b16 %v3183
      %v3244 = vunpack.c.l.b16 %v3197
      %v3245 = vunpack.c.l.b16 %v3211
      %v3246 = vunpack.c.l.b16 %v3225
      %v3247 = vunpack.c.l.b16 %v3239
      %v3248 = vpack.c.b16 %v3241, %v3240
      %v3249 = vpack.c.b16 %v3243, %v3242
      %v3250 = vpack.c.b16 %v3245, %v3244
      %v3251 = vpack.c.b16 %v3247, %v3246
      %3256 = vst [vmem:[#allocation3 + $0x10] sm:$0xff] %v3248
      %3257 = vst [vmem:[#allocation3 + $0x58] sm:$0xff] %v3249
      %3258 = vst [vmem:[#allocation3 + $0xa0] sm:$0xff] %v3250
      %3259 = vst [vmem:[#allocation3 + $0xe8] sm:$0xff] %v3251
      %v3260 = vld [vmem:[%s629] sm:$0xf]
      %v3261 = vld [vmem:[%s629 + $0x8] sm:$0xf]
      %v3262 = vld [vmem:[%s629 + $0x10] sm:$0xf]
      %v3263 = vld [vmem:[%s629 + $0x18] sm:$0xf]
      %v3264 = vld [vmem:[%s629 + $0x20] sm:$0xf]
      %v3265 = vld [vmem:[%s629 + $0x28] sm:$0xf]
      %v3266 = vld [vmem:[%s629 + $0x30] sm:$0xf]
      %v3267 = vld [vmem:[%s629 + $0x38] sm:$0xf]
      %v3276 = vunpack.c.l.b16 %v3260
      %v3277 = vunpack.c.l.b16 %v3261
      %v3278 = vunpack.c.l.b16 %v3262
      %v3279 = vunpack.c.l.b16 %v3263
      %v3280 = vunpack.c.l.b16 %v3264
      %v3281 = vunpack.c.l.b16 %v3265
      %v3282 = vunpack.c.l.b16 %v3266
      %v3283 = vunpack.c.l.b16 %v3267
      %v3284 = vpack.c.b16 %v3277, %v3276
      %v3285 = vpack.c.b16 %v3279, %v3278
      %v3286 = vpack.c.b16 %v3281, %v3280
      %v3287 = vpack.c.b16 %v3283, %v3282
      %3292 = vst [vmem:[#allocation3 + $0x18] sm:$0xff] %v3284
      %3293 = vst [vmem:[#allocation3 + $0x60] sm:$0xff] %v3285
      %3294 = vst [vmem:[#allocation3 + $0xa8] sm:$0xff] %v3286
      %3295 = vst [vmem:[#allocation3 + $0xf0] sm:$0xff] %v3287
      %v3296 = vld [vmem:[%s640] sm:$0xf]
      %v3297 = vld [vmem:[%s640 + $0x4] sm:$0x1]
      %v3298 = vld [vmem:[%s640 + $0x8] sm:$0xf]
      %v3299 = vld [vmem:[%s640 + $0xc] sm:$0x1]
      %v3300 = vld [vmem:[%s640 + $0x10] sm:$0xf]
      %v3301 = vld [vmem:[%s640 + $0x14] sm:$0x1]
      %v3302 = vld [vmem:[%s640 + $0x18] sm:$0xf]
      %v3303 = vld [vmem:[%s640 + $0x1c] sm:$0x1]
      %v3304 = vld [vmem:[%s640 + $0x20] sm:$0xf]
      %v3305 = vld [vmem:[%s640 + $0x24] sm:$0x1]
      %v3306 = vld [vmem:[%s640 + $0x28] sm:$0xf]
      %v3307 = vld [vmem:[%s640 + $0x2c] sm:$0x1]
      %v3308 = vld [vmem:[%s640 + $0x30] sm:$0xf]
      %v3309 = vld [vmem:[%s640 + $0x34] sm:$0x1]
      %v3310 = vld [vmem:[%s640 + $0x38] sm:$0xf]
      %v3311 = vld [vmem:[%s640 + $0x3c] sm:$0x1]
      %v3313 = vshrl.u32 %v3296, 16
      %v3315 = vrot.slane %v3313, 4
      %v3316 = vshll.u32 %v3296, 16
      %v3318 = vrot.slane %v3316, 5
      %v3319 = vor.u32 %v3315, %v3318
      %v3320 = vrot.slane %v3319, 4
      %v3322 = vshll.u32 %v3297, 16
      %v3324 = vrot.slane %v3322, 5
      %v3325 = vsel %vm1374, %v3320, %v3324
      %v3327 = vshrl.u32 %v3298, 16
      %v3329 = vrot.slane %v3327, 4
      %v3330 = vshll.u32 %v3298, 16
      %v3332 = vrot.slane %v3330, 5
      %v3333 = vor.u32 %v3329, %v3332
      %v3334 = vrot.slane %v3333, 4
      %v3336 = vshll.u32 %v3299, 16
      %v3338 = vrot.slane %v3336, 5
      %v3339 = vsel %vm1374, %v3334, %v3338
      %v3341 = vshrl.u32 %v3300, 16
      %v3343 = vrot.slane %v3341, 4
      %v3344 = vshll.u32 %v3300, 16
      %v3346 = vrot.slane %v3344, 5
      %v3347 = vor.u32 %v3343, %v3346
      %v3348 = vrot.slane %v3347, 4
      %v3350 = vshll.u32 %v3301, 16
      %v3352 = vrot.slane %v3350, 5
      %v3353 = vsel %vm1374, %v3348, %v3352
      %v3355 = vshrl.u32 %v3302, 16
      %v3357 = vrot.slane %v3355, 4
      %v3358 = vshll.u32 %v3302, 16
      %v3360 = vrot.slane %v3358, 5
      %v3361 = vor.u32 %v3357, %v3360
      %v3362 = vrot.slane %v3361, 4
      %v3364 = vshll.u32 %v3303, 16
      %v3366 = vrot.slane %v3364, 5
      %v3367 = vsel %vm1374, %v3362, %v3366
      %v3369 = vshrl.u32 %v3304, 16
      %v3371 = vrot.slane %v3369, 4
      %v3372 = vshll.u32 %v3304, 16
      %v3374 = vrot.slane %v3372, 5
      %v3375 = vor.u32 %v3371, %v3374
      %v3376 = vrot.slane %v3375, 4
      %v3378 = vshll.u32 %v3305, 16
      %v3380 = vrot.slane %v3378, 5
      %v3381 = vsel %vm1374, %v3376, %v3380
      %v3383 = vshrl.u32 %v3306, 16
      %v3385 = vrot.slane %v3383, 4
      %v3386 = vshll.u32 %v3306, 16
      %v3388 = vrot.slane %v3386, 5
      %v3389 = vor.u32 %v3385, %v3388
      %v3390 = vrot.slane %v3389, 4
      %v3392 = vshll.u32 %v3307, 16
      %v3394 = vrot.slane %v3392, 5
      %v3395 = vsel %vm1374, %v3390, %v3394
      %v3397 = vshrl.u32 %v3308, 16
      %v3399 = vrot.slane %v3397, 4
      %v3400 = vshll.u32 %v3308, 16
      %v3402 = vrot.slane %v3400, 5
      %v3403 = vor.u32 %v3399, %v3402
      %v3404 = vrot.slane %v3403, 4
      %v3406 = vshll.u32 %v3309, 16
      %v3408 = vrot.slane %v3406, 5
      %v3409 = vsel %vm1374, %v3404, %v3408
      %v3411 = vshrl.u32 %v3310, 16
      %v3413 = vrot.slane %v3411, 4
      %v3414 = vshll.u32 %v3310, 16
      %v3416 = vrot.slane %v3414, 5
      %v3417 = vor.u32 %v3413, %v3416
      %v3418 = vrot.slane %v3417, 4
      %v3420 = vshll.u32 %v3311, 16
      %v3422 = vrot.slane %v3420, 5
      %v3423 = vsel %vm1374, %v3418, %v3422
      %v3424 = vunpack.c.l.b16 %v3325
      %v3425 = vunpack.c.l.b16 %v3339
      %v3426 = vunpack.c.l.b16 %v3353
      %v3427 = vunpack.c.l.b16 %v3367
      %v3428 = vunpack.c.l.b16 %v3381
      %v3429 = vunpack.c.l.b16 %v3395
      %v3430 = vunpack.c.l.b16 %v3409
      %v3431 = vunpack.c.l.b16 %v3423
      %v3432 = vpack.c.b16 %v3425, %v3424
      %v3433 = vpack.c.b16 %v3427, %v3426
      %v3434 = vpack.c.b16 %v3429, %v3428
      %v3435 = vpack.c.b16 %v3431, %v3430
      %3440 = vst [vmem:[#allocation3 + $0x20] sm:$0xff] %v3432
      %3441 = vst [vmem:[#allocation3 + $0x68] sm:$0xff] %v3433
      %3442 = vst [vmem:[#allocation3 + $0xb0] sm:$0xff] %v3434
      %3443 = vst [vmem:[#allocation3 + $0xf8] sm:$0xff] %v3435
      %v3444 = vld [vmem:[%s629] sm:$0xf]
      %v3445 = vld [vmem:[%s629 + $0x4] sm:$0x1]
      %v3446 = vld [vmem:[%s629 + $0x8] sm:$0xf]
      %v3447 = vld [vmem:[%s629 + $0xc] sm:$0x1]
      %v3448 = vld [vmem:[%s629 + $0x10] sm:$0xf]
      %v3449 = vld [vmem:[%s629 + $0x14] sm:$0x1]
      %v3450 = vld [vmem:[%s629 + $0x18] sm:$0xf]
      %v3451 = vld [vmem:[%s629 + $0x1c] sm:$0x1]
      %v3452 = vld [vmem:[%s629 + $0x20] sm:$0xf]
      %v3453 = vld [vmem:[%s629 + $0x24] sm:$0x1]
      %v3454 = vld [vmem:[%s629 + $0x28] sm:$0xf]
      %v3455 = vld [vmem:[%s629 + $0x2c] sm:$0x1]
      %v3456 = vld [vmem:[%s629 + $0x30] sm:$0xf]
      %v3457 = vld [vmem:[%s629 + $0x34] sm:$0x1]
      %v3458 = vld [vmem:[%s629 + $0x38] sm:$0xf]
      %v3459 = vld [vmem:[%s629 + $0x3c] sm:$0x1]
      %v3461 = vshrl.u32 %v3444, 16
      %v3463 = vrot.slane %v3461, 4
      %v3464 = vshll.u32 %v3444, 16
      %v3466 = vrot.slane %v3464, 5
      %v3467 = vor.u32 %v3463, %v3466
      %v3468 = vrot.slane %v3467, 4
      %v3470 = vshll.u32 %v3445, 16
      %v3472 = vrot.slane %v3470, 5
      %v3473 = vsel %vm1374, %v3468, %v3472
      %v3475 = vshrl.u32 %v3446, 16
      %v3477 = vrot.slane %v3475, 4
      %v3478 = vshll.u32 %v3446, 16
      %v3480 = vrot.slane %v3478, 5
      %v3481 = vor.u32 %v3477, %v3480
      %v3482 = vrot.slane %v3481, 4
      %v3484 = vshll.u32 %v3447, 16
      %v3486 = vrot.slane %v3484, 5
      %v3487 = vsel %vm1374, %v3482, %v3486
      %v3489 = vshrl.u32 %v3448, 16
      %v3491 = vrot.slane %v3489, 4
      %v3492 = vshll.u32 %v3448, 16
      %v3494 = vrot.slane %v3492, 5
      %v3495 = vor.u32 %v3491, %v3494
      %v3496 = vrot.slane %v3495, 4
      %v3498 = vshll.u32 %v3449, 16
      %v3500 = vrot.slane %v3498, 5
      %v3501 = vsel %vm1374, %v3496, %v3500
      %v3503 = vshrl.u32 %v3450, 16
      %v3505 = vrot.slane %v3503, 4
      %v3506 = vshll.u32 %v3450, 16
      %v3508 = vrot.slane %v3506, 5
      %v3509 = vor.u32 %v3505, %v3508
      %v3510 = vrot.slane %v3509, 4
      %v3512 = vshll.u32 %v3451, 16
      %v3514 = vrot.slane %v3512, 5
      %v3515 = vsel %vm1374, %v3510, %v3514
      %v3517 = vshrl.u32 %v3452, 16
      %v3519 = vrot.slane %v3517, 4
      %v3520 = vshll.u32 %v3452, 16
      %v3522 = vrot.slane %v3520, 5
      %v3523 = vor.u32 %v3519, %v3522
      %v3524 = vrot.slane %v3523, 4
      %v3526 = vshll.u32 %v3453, 16
      %v3528 = vrot.slane %v3526, 5
      %v3529 = vsel %vm1374, %v3524, %v3528
      %v3531 = vshrl.u32 %v3454, 16
      %v3533 = vrot.slane %v3531, 4
      %v3534 = vshll.u32 %v3454, 16
      %v3536 = vrot.slane %v3534, 5
      %v3537 = vor.u32 %v3533, %v3536
      %v3538 = vrot.slane %v3537, 4
      %v3540 = vshll.u32 %v3455, 16
      %v3542 = vrot.slane %v3540, 5
      %v3543 = vsel %vm1374, %v3538, %v3542
      %v3545 = vshrl.u32 %v3456, 16
      %v3547 = vrot.slane %v3545, 4
      %v3548 = vshll.u32 %v3456, 16
      %v3550 = vrot.slane %v3548, 5
      %v3551 = vor.u32 %v3547, %v3550
      %v3552 = vrot.slane %v3551, 4
      %v3554 = vshll.u32 %v3457, 16
      %v3556 = vrot.slane %v3554, 5
      %v3557 = vsel %vm1374, %v3552, %v3556
      %v3559 = vshrl.u32 %v3458, 16
      %v3561 = vrot.slane %v3559, 4
      %v3562 = vshll.u32 %v3458, 16
      %v3564 = vrot.slane %v3562, 5
      %v3565 = vor.u32 %v3561, %v3564
      %v3566 = vrot.slane %v3565, 4
      %v3568 = vshll.u32 %v3459, 16
      %v3570 = vrot.slane %v3568, 5
      %v3571 = vsel %vm1374, %v3566, %v3570
      %v3572 = vunpack.c.l.b16 %v3473
      %v3573 = vunpack.c.l.b16 %v3487
      %v3574 = vunpack.c.l.b16 %v3501
      %v3575 = vunpack.c.l.b16 %v3515
      %v3576 = vunpack.c.l.b16 %v3529
      %v3577 = vunpack.c.l.b16 %v3543
      %v3578 = vunpack.c.l.b16 %v3557
      %v3579 = vunpack.c.l.b16 %v3571
      %v3580 = vpack.c.b16 %v3573, %v3572
      %v3581 = vpack.c.b16 %v3575, %v3574
      %v3582 = vpack.c.b16 %v3577, %v3576
      %v3583 = vpack.c.b16 %v3579, %v3578
      %3588 = vst [vmem:[#allocation3 + $0x28] sm:$0xff] %v3580
      %3589 = vst [vmem:[#allocation3 + $0x70] sm:$0xff] %v3581
      %3590 = vst [vmem:[#allocation3 + $0xb8] sm:$0xff] %v3582
      %3591 = vst [vmem:[#allocation3 + $0x100] sm:$0xff] %v3583
      %v3592 = vld [vmem:[%s1003] sm:$0xf]
      %v3593 = vld [vmem:[%s1003 + $0x8] sm:$0xf]
      %v3594 = vld [vmem:[%s1003 + $0x10] sm:$0xf]
      %v3595 = vld [vmem:[%s1003 + $0x18] sm:$0xf]
      %v3596 = vld [vmem:[%s1003 + $0x20] sm:$0xf]
      %v3597 = vld [vmem:[%s1003 + $0x28] sm:$0xf]
      %v3598 = vld [vmem:[%s1003 + $0x30] sm:$0xf]
      %v3599 = vld [vmem:[%s1003 + $0x38] sm:$0xf]
      %v3608 = vunpack.c.l.b16 %v3592
      %v3609 = vunpack.c.l.b16 %v3593
      %v3610 = vunpack.c.l.b16 %v3594
      %v3611 = vunpack.c.l.b16 %v3595
      %v3612 = vunpack.c.l.b16 %v3596
      %v3613 = vunpack.c.l.b16 %v3597
      %v3614 = vunpack.c.l.b16 %v3598
      %v3615 = vunpack.c.l.b16 %v3599
      %v3616 = vpack.c.b16 %v3609, %v3608
      %v3617 = vpack.c.b16 %v3611, %v3610
      %v3618 = vpack.c.b16 %v3613, %v3612
      %v3619 = vpack.c.b16 %v3615, %v3614
      %3624 = vst [vmem:[#allocation3 + $0x30] sm:$0xff] %v3616
      %3625 = vst [vmem:[#allocation3 + $0x78] sm:$0xff] %v3617
      %3626 = vst [vmem:[#allocation3 + $0xc0] sm:$0xff] %v3618
      %3627 = vst [vmem:[#allocation3 + $0x108] sm:$0xff] %v3619
      %v3628 = vld [vmem:[%s1014] sm:$0xf]
      %v3629 = vld [vmem:[%s1014 + $0x4] sm:$0x1]
      %v3630 = vld [vmem:[%s1014 + $0x8] sm:$0xf]
      %v3631 = vld [vmem:[%s1014 + $0xc] sm:$0x1]
      %v3632 = vld [vmem:[%s1014 + $0x10] sm:$0xf]
      %v3633 = vld [vmem:[%s1014 + $0x14] sm:$0x1]
      %v3634 = vld [vmem:[%s1014 + $0x18] sm:$0xf]
      %v3635 = vld [vmem:[%s1014 + $0x1c] sm:$0x1]
      %v3636 = vld [vmem:[%s1014 + $0x20] sm:$0xf]
      %v3637 = vld [vmem:[%s1014 + $0x24] sm:$0x1]
      %v3638 = vld [vmem:[%s1014 + $0x28] sm:$0xf]
      %v3639 = vld [vmem:[%s1014 + $0x2c] sm:$0x1]
      %v3640 = vld [vmem:[%s1014 + $0x30] sm:$0xf]
      %v3641 = vld [vmem:[%s1014 + $0x34] sm:$0x1]
      %v3642 = vld [vmem:[%s1014 + $0x38] sm:$0xf]
      %v3643 = vld [vmem:[%s1014 + $0x3c] sm:$0x1]
      %v3645 = vshrl.u32 %v3628, 16
      %v3647 = vrot.slane %v3645, 4
      %v3648 = vshll.u32 %v3628, 16
      %v3650 = vrot.slane %v3648, 5
      %v3651 = vor.u32 %v3647, %v3650
      %v3652 = vrot.slane %v3651, 4
      %v3654 = vshll.u32 %v3629, 16
      %v3656 = vrot.slane %v3654, 5
      %v3657 = vsel %vm1374, %v3652, %v3656
      %v3659 = vshrl.u32 %v3630, 16
      %v3661 = vrot.slane %v3659, 4
      %v3662 = vshll.u32 %v3630, 16
      %v3664 = vrot.slane %v3662, 5
      %v3665 = vor.u32 %v3661, %v3664
      %v3666 = vrot.slane %v3665, 4
      %v3668 = vshll.u32 %v3631, 16
      %v3670 = vrot.slane %v3668, 5
      %v3671 = vsel %vm1374, %v3666, %v3670
      %v3673 = vshrl.u32 %v3632, 16
      %v3675 = vrot.slane %v3673, 4
      %v3676 = vshll.u32 %v3632, 16
      %v3678 = vrot.slane %v3676, 5
      %v3679 = vor.u32 %v3675, %v3678
      %v3680 = vrot.slane %v3679, 4
      %v3682 = vshll.u32 %v3633, 16
      %v3684 = vrot.slane %v3682, 5
      %v3685 = vsel %vm1374, %v3680, %v3684
      %v3687 = vshrl.u32 %v3634, 16
      %v3689 = vrot.slane %v3687, 4
      %v3690 = vshll.u32 %v3634, 16
      %v3692 = vrot.slane %v3690, 5
      %v3693 = vor.u32 %v3689, %v3692
      %v3694 = vrot.slane %v3693, 4
      %v3696 = vshll.u32 %v3635, 16
      %v3698 = vrot.slane %v3696, 5
      %v3699 = vsel %vm1374, %v3694, %v3698
      %v3701 = vshrl.u32 %v3636, 16
      %v3703 = vrot.slane %v3701, 4
      %v3704 = vshll.u32 %v3636, 16
      %v3706 = vrot.slane %v3704, 5
      %v3707 = vor.u32 %v3703, %v3706
      %v3708 = vrot.slane %v3707, 4
      %v3710 = vshll.u32 %v3637, 16
      %v3712 = vrot.slane %v3710, 5
      %v3713 = vsel %vm1374, %v3708, %v3712
      %v3715 = vshrl.u32 %v3638, 16
      %v3717 = vrot.slane %v3715, 4
      %v3718 = vshll.u32 %v3638, 16
      %v3720 = vrot.slane %v3718, 5
      %v3721 = vor.u32 %v3717, %v3720
      %v3722 = vrot.slane %v3721, 4
      %v3724 = vshll.u32 %v3639, 16
      %v3726 = vrot.slane %v3724, 5
      %v3727 = vsel %vm1374, %v3722, %v3726
      %v3729 = vshrl.u32 %v3640, 16
      %v3731 = vrot.slane %v3729, 4
      %v3732 = vshll.u32 %v3640, 16
      %v3734 = vrot.slane %v3732, 5
      %v3735 = vor.u32 %v3731, %v3734
      %v3736 = vrot.slane %v3735, 4
      %v3738 = vshll.u32 %v3641, 16
      %v3740 = vrot.slane %v3738, 5
      %v3741 = vsel %vm1374, %v3736, %v3740
      %v3743 = vshrl.u32 %v3642, 16
      %v3745 = vrot.slane %v3743, 4
      %v3746 = vshll.u32 %v3642, 16
      %v3748 = vrot.slane %v3746, 5
      %v3749 = vor.u32 %v3745, %v3748
      %v3750 = vrot.slane %v3749, 4
      %v3752 = vshll.u32 %v3643, 16
      %v3754 = vrot.slane %v3752, 5
      %v3755 = vsel %vm1374, %v3750, %v3754
      %v3756 = vunpack.c.l.b16 %v3657
      %v3757 = vunpack.c.l.b16 %v3671
      %v3758 = vunpack.c.l.b16 %v3685
      %v3759 = vunpack.c.l.b16 %v3699
      %v3760 = vunpack.c.l.b16 %v3713
      %v3761 = vunpack.c.l.b16 %v3727
      %v3762 = vunpack.c.l.b16 %v3741
      %v3763 = vunpack.c.l.b16 %v3755
      %v3764 = vpack.c.b16 %v3757, %v3756
      %v3765 = vpack.c.b16 %v3759, %v3758
      %v3766 = vpack.c.b16 %v3761, %v3760
      %v3767 = vpack.c.b16 %v3763, %v3762
      %3772 = vst [vmem:[#allocation3 + $0x38] sm:$0xff] %v3764
      %3773 = vst [vmem:[#allocation3 + $0x80] sm:$0xff] %v3765
      %3774 = vst [vmem:[#allocation3 + $0xc8] sm:$0xff] %v3766
      %3775 = vst [vmem:[#allocation3 + $0x110] sm:$0xff] %v3767
      %v3776 = vld [vmem:[%s1003] sm:$0xf]
      %v3777 = vld [vmem:[%s1003 + $0x4] sm:$0x1]
      %v3778 = vld [vmem:[%s1003 + $0x8] sm:$0xf]
      %v3779 = vld [vmem:[%s1003 + $0xc] sm:$0x1]
      %v3780 = vld [vmem:[%s1003 + $0x10] sm:$0xf]
      %v3781 = vld [vmem:[%s1003 + $0x14] sm:$0x1]
      %v3782 = vld [vmem:[%s1003 + $0x18] sm:$0xf]
      %v3783 = vld [vmem:[%s1003 + $0x1c] sm:$0x1]
      %v3784 = vld [vmem:[%s1003 + $0x20] sm:$0xf]
      %v3785 = vld [vmem:[%s1003 + $0x24] sm:$0x1]
      %v3786 = vld [vmem:[%s1003 + $0x28] sm:$0xf]
      %v3787 = vld [vmem:[%s1003 + $0x2c] sm:$0x1]
      %v3788 = vld [vmem:[%s1003 + $0x30] sm:$0xf]
      %v3789 = vld [vmem:[%s1003 + $0x34] sm:$0x1]
      %v3790 = vld [vmem:[%s1003 + $0x38] sm:$0xf]
      %v3791 = vld [vmem:[%s1003 + $0x3c] sm:$0x1]
      %v3793 = vshrl.u32 %v3776, 16
      %v3795 = vrot.slane %v3793, 4
      %v3796 = vshll.u32 %v3776, 16
      %v3798 = vrot.slane %v3796, 5
      %v3799 = vor.u32 %v3795, %v3798
      %v3800 = vrot.slane %v3799, 4
      %v3802 = vshll.u32 %v3777, 16
      %v3804 = vrot.slane %v3802, 5
      %v3805 = vsel %vm1374, %v3800, %v3804
      %v3807 = vshrl.u32 %v3778, 16
      %v3809 = vrot.slane %v3807, 4
      %v3810 = vshll.u32 %v3778, 16
      %v3812 = vrot.slane %v3810, 5
      %v3813 = vor.u32 %v3809, %v3812
      %v3814 = vrot.slane %v3813, 4
      %v3816 = vshll.u32 %v3779, 16
      %v3818 = vrot.slane %v3816, 5
      %v3819 = vsel %vm1374, %v3814, %v3818
      %v3821 = vshrl.u32 %v3780, 16
      %v3823 = vrot.slane %v3821, 4
      %v3824 = vshll.u32 %v3780, 16
      %v3826 = vrot.slane %v3824, 5
      %v3827 = vor.u32 %v3823, %v3826
      %v3828 = vrot.slane %v3827, 4
      %v3830 = vshll.u32 %v3781, 16
      %v3832 = vrot.slane %v3830, 5
      %v3833 = vsel %vm1374, %v3828, %v3832
      %v3835 = vshrl.u32 %v3782, 16
      %v3837 = vrot.slane %v3835, 4
      %v3838 = vshll.u32 %v3782, 16
      %v3840 = vrot.slane %v3838, 5
      %v3841 = vor.u32 %v3837, %v3840
      %v3842 = vrot.slane %v3841, 4
      %v3844 = vshll.u32 %v3783, 16
      %v3846 = vrot.slane %v3844, 5
      %v3847 = vsel %vm1374, %v3842, %v3846
      %v3849 = vshrl.u32 %v3784, 16
      %v3851 = vrot.slane %v3849, 4
      %v3852 = vshll.u32 %v3784, 16
      %v3854 = vrot.slane %v3852, 5
      %v3855 = vor.u32 %v3851, %v3854
      %v3856 = vrot.slane %v3855, 4
      %v3858 = vshll.u32 %v3785, 16
      %v3860 = vrot.slane %v3858, 5
      %v3861 = vsel %vm1374, %v3856, %v3860
      %v3863 = vshrl.u32 %v3786, 16
      %v3865 = vrot.slane %v3863, 4
      %v3866 = vshll.u32 %v3786, 16
      %v3868 = vrot.slane %v3866, 5
      %v3869 = vor.u32 %v3865, %v3868
      %v3870 = vrot.slane %v3869, 4
      %v3872 = vshll.u32 %v3787, 16
      %v3874 = vrot.slane %v3872, 5
      %v3875 = vsel %vm1374, %v3870, %v3874
      %v3877 = vshrl.u32 %v3788, 16
      %v3879 = vrot.slane %v3877, 4
      %v3880 = vshll.u32 %v3788, 16
      %v3882 = vrot.slane %v3880, 5
      %v3883 = vor.u32 %v3879, %v3882
      %v3884 = vrot.slane %v3883, 4
      %v3886 = vshll.u32 %v3789, 16
      %v3888 = vrot.slane %v3886, 5
      %v3889 = vsel %vm1374, %v3884, %v3888
      %v3891 = vshrl.u32 %v3790, 16
      %v3893 = vrot.slane %v3891, 4
      %v3894 = vshll.u32 %v3790, 16
      %v3896 = vrot.slane %v3894, 5
      %v3897 = vor.u32 %v3893, %v3896
      %v3898 = vrot.slane %v3897, 4
      %v3900 = vshll.u32 %v3791, 16
      %v3902 = vrot.slane %v3900, 5
      %v3903 = vsel %vm1374, %v3898, %v3902
      %v3904 = vunpack.c.l.b16 %v3805
      %v3905 = vunpack.c.l.b16 %v3819
      %v3906 = vunpack.c.l.b16 %v3833
      %v3907 = vunpack.c.l.b16 %v3847
      %v3908 = vunpack.c.l.b16 %v3861
      %v3909 = vunpack.c.l.b16 %v3875
      %v3910 = vunpack.c.l.b16 %v3889
      %v3911 = vunpack.c.l.b16 %v3903
      %v3912 = vpack.c.b16 %v3905, %v3904
      %v3913 = vpack.c.b16 %v3907, %v3906
      %v3914 = vpack.c.b16 %v3909, %v3908
      %v3915 = vpack.c.b16 %v3911, %v3910
      %3920 = vst [vmem:[#allocation3 + $0x40] sm:$0xff] %v3912
      %3921 = vst [vmem:[#allocation3 + $0x88] sm:$0xff] %v3913
      %3922 = vst [vmem:[#allocation3 + $0xd0] sm:$0xff] %v3914
      %3923 = vst [vmem:[#allocation3 + $0x118] sm:$0xff] %v3915
      %v3924 = vld [vmem:[#allocation3] sm:$0xff]
      %v3925 = vld [vmem:[#allocation3 + $0x8] sm:$0xff]
      %v3926 = vld [vmem:[#allocation3 + $0x10] sm:$0xff]
      %v3927 = vld [vmem:[#allocation3 + $0x18] sm:$0xff]
      %v3928 = vld [vmem:[#allocation3 + $0x20] sm:$0xff]
      %v3929 = vld [vmem:[#allocation3 + $0x28] sm:$0xff]
      %v3930 = vld [vmem:[#allocation3 + $0x30] sm:$0xff]
      %v3931 = vld [vmem:[#allocation3 + $0x38] sm:$0xff]
      %v3932 = vld [vmem:[#allocation3 + $0x40] sm:$0xff]
      %v3933 = vld [vmem:[#allocation3 + $0x48] sm:$0xff]
      %v3934 = vld [vmem:[#allocation3 + $0x50] sm:$0xff]
      %v3935 = vld [vmem:[#allocation3 + $0x58] sm:$0xff]
      %v3936 = vld [vmem:[#allocation3 + $0x60] sm:$0xff]
      %v3937 = vld [vmem:[#allocation3 + $0x68] sm:$0xff]
      %v3938 = vld [vmem:[#allocation3 + $0x70] sm:$0xff]
      %v3939 = vld [vmem:[#allocation3 + $0x78] sm:$0xff]
      %v3940 = vld [vmem:[#allocation3 + $0x80] sm:$0xff]
      %v3941 = vld [vmem:[#allocation3 + $0x88] sm:$0xff]
      %v3942 = vld [vmem:[#allocation3 + $0x90] sm:$0xff]
      %v3943 = vld [vmem:[#allocation3 + $0x98] sm:$0xff]
      %v3944 = vld [vmem:[#allocation3 + $0xa0] sm:$0xff]
      %v3945 = vld [vmem:[#allocation3 + $0xa8] sm:$0xff]
      %v3946 = vld [vmem:[#allocation3 + $0xb0] sm:$0xff]
      %v3947 = vld [vmem:[#allocation3 + $0xb8] sm:$0xff]
      %v3948 = vld [vmem:[#allocation3 + $0xc0] sm:$0xff]
      %v3949 = vld [vmem:[#allocation3 + $0xc8] sm:$0xff]
      %v3950 = vld [vmem:[#allocation3 + $0xd0] sm:$0xff]
      %v3951 = vld [vmem:[#allocation3 + $0xd8] sm:$0xff]
      %v3952 = vld [vmem:[#allocation3 + $0xe0] sm:$0xff]
      %v3953 = vld [vmem:[#allocation3 + $0xe8] sm:$0xff]
      %v3954 = vld [vmem:[#allocation3 + $0xf0] sm:$0xff]
      %v3955 = vld [vmem:[#allocation3 + $0xf8] sm:$0xff]
      %v3956 = vld [vmem:[#allocation3 + $0x100] sm:$0xff]
      %v3957 = vld [vmem:[#allocation3 + $0x108] sm:$0xff]
      %v3958 = vld [vmem:[#allocation3 + $0x110] sm:$0xff]
      %v3959 = vld [vmem:[#allocation3 + $0x118] sm:$0xff]
      %v3960 = vld [vmem:[%s2] sm:$0xf]
      %v3961 = vld [vmem:[%s2 + $0x4] sm:$0xf]
      %v3962 = vld [vmem:[%s2 + $0x8] sm:$0xf]
      %v3963 = vld [vmem:[%s2 + $0xc] sm:$0xf]
      %v3964 = vld [vmem:[%s2 + $0x10] sm:$0xf]
      %v3965 = vld [vmem:[%s2 + $0x14] sm:$0xf]
      %v3966 = vld [vmem:[%s2 + $0x18] sm:$0xf]
      %v3967 = vld [vmem:[%s2 + $0x1c] sm:$0xf]
      %v3968 = vld [vmem:[%s2 + $0x20] sm:$0xf]
      %v3969 = vld [vmem:[%s2 + $0x24] sm:$0xf]
      %v3970 = vld [vmem:[%s2 + $0x28] sm:$0xf]
      %v3971 = vld [vmem:[%s2 + $0x2c] sm:$0xf]
      %v3972 = vld [vmem:[%s2 + $0x30] sm:$0xf]
      %v3973 = vld [vmem:[%s2 + $0x34] sm:$0xf]
      %v3974 = vld [vmem:[%s2 + $0x38] sm:$0xf]
      %v3975 = vld [vmem:[%s2 + $0x3c] sm:$0xf]
      %v3976 = vld [vmem:[%s2 + $0x40] sm:$0xf]
      %v3977 = vld [vmem:[%s2 + $0x44] sm:$0xf]
      %v3978 = vld [vmem:[%s2 + $0x48] sm:$0xf]
      %v3979 = vld [vmem:[%s2 + $0x4c] sm:$0xf]
      %v3980 = vld [vmem:[%s2 + $0x50] sm:$0xf]
      %v3981 = vld [vmem:[%s2 + $0x54] sm:$0xf]
      %v3982 = vld [vmem:[%s2 + $0x58] sm:$0xf]
      %v3983 = vld [vmem:[%s2 + $0x5c] sm:$0xf]
      %v3984 = vld [vmem:[%s2 + $0x60] sm:$0xf]
      %v3985 = vld [vmem:[%s2 + $0x64] sm:$0xf]
      %v3986 = vld [vmem:[%s2 + $0x68] sm:$0xf]
      %v3987 = vld [vmem:[%s2 + $0x6c] sm:$0xf]
      %v3988 = vld [vmem:[%s2 + $0x70] sm:$0xf]
      %v3989 = vld [vmem:[%s2 + $0x74] sm:$0xf]
      %v3990 = vld [vmem:[%s2 + $0x78] sm:$0xf]
      %v3991 = vld [vmem:[%s2 + $0x7c] sm:$0xf]
      %v3992 = vld [vmem:[%s2 + $0x80] sm:$0xf]
      %v3993 = vld [vmem:[%s2 + $0x84] sm:$0xf]
      %v3994 = vld [vmem:[%s2 + $0x88] sm:$0xf]
      %v3995 = vld [vmem:[%s2 + $0x8c] sm:$0xf]
      %v3996 = vld [vmem:[%s2 + $0x90] sm:$0xf]
      %v3997 = vld [vmem:[%s2 + $0x94] sm:$0xf]
      %v3998 = vld [vmem:[%s2 + $0x98] sm:$0xf]
      %v3999 = vld [vmem:[%s2 + $0x9c] sm:$0xf]
      %v4000 = vld [vmem:[%s2 + $0xa0] sm:$0xf]
      %v4001 = vld [vmem:[%s2 + $0xa4] sm:$0xf]
      %v4002 = vld [vmem:[%s2 + $0xa8] sm:$0xf]
      %v4003 = vld [vmem:[%s2 + $0xac] sm:$0xf]
      %v4004 = vld [vmem:[%s2 + $0xb0] sm:$0xf]
      %v4005 = vld [vmem:[%s2 + $0xb4] sm:$0xf]
      %v4006 = vld [vmem:[%s2 + $0xb8] sm:$0xf]
      %v4007 = vld [vmem:[%s2 + $0xbc] sm:$0xf]
      %v4008 = vld [vmem:[%s2 + $0xc0] sm:$0xf]
      %v4009 = vld [vmem:[%s2 + $0xc4] sm:$0xf]
      %v4010 = vld [vmem:[%s2 + $0xc8] sm:$0xf]
      %v4011 = vld [vmem:[%s2 + $0xcc] sm:$0xf]
      %v4012 = vld [vmem:[%s2 + $0xd0] sm:$0xf]
      %v4013 = vld [vmem:[%s2 + $0xd4] sm:$0xf]
      %v4014 = vld [vmem:[%s2 + $0xd8] sm:$0xf]
      %v4015 = vld [vmem:[%s2 + $0xdc] sm:$0xf]
      %v4016 = vld [vmem:[%s2 + $0xe0] sm:$0xf]
      %v4017 = vld [vmem:[%s2 + $0xe4] sm:$0xf]
      %v4018 = vld [vmem:[%s2 + $0xe8] sm:$0xf]
      %v4019 = vld [vmem:[%s2 + $0xec] sm:$0xf]
      %v4020 = vld [vmem:[%s2 + $0xf0] sm:$0xf]
      %v4021 = vld [vmem:[%s2 + $0xf4] sm:$0xf]
      %v4022 = vld [vmem:[%s2 + $0xf8] sm:$0xf]
      %v4023 = vld [vmem:[%s2 + $0xfc] sm:$0xf]
      %v4024 = vld [vmem:[%s2 + $0x100] sm:$0xf]
      %v4025 = vld [vmem:[%s2 + $0x104] sm:$0xf]
      %v4026 = vld [vmem:[%s2 + $0x108] sm:$0xf]
      %v4027 = vld [vmem:[%s2 + $0x10c] sm:$0xf]
      %v4028 = vld [vmem:[%s2 + $0x110] sm:$0xf]
      %v4029 = vld [vmem:[%s2 + $0x114] sm:$0xf]
      %v4030 = vld [vmem:[%s2 + $0x118] sm:$0xf]
      %v4031 = vld [vmem:[%s2 + $0x11c] sm:$0xf]
      %v4032 = vld [vmem:[%s2 + $0x120] sm:$0xf]
      %v4033 = vld [vmem:[%s2 + $0x124] sm:$0xf]
      %v4034 = vld [vmem:[%s2 + $0x128] sm:$0xf]
      %v4035 = vld [vmem:[%s2 + $0x12c] sm:$0xf]
      %v4036 = vld [vmem:[%s2 + $0x130] sm:$0xf]
      %v4037 = vld [vmem:[%s2 + $0x134] sm:$0xf]
      %v4038 = vld [vmem:[%s2 + $0x138] sm:$0xf]
      %v4039 = vld [vmem:[%s2 + $0x13c] sm:$0xf]
      %v4040 = vld [vmem:[%s2 + $0x140] sm:$0xf]
      %v4041 = vld [vmem:[%s2 + $0x144] sm:$0xf]
      %v4042 = vld [vmem:[%s2 + $0x148] sm:$0xf]
      %v4043 = vld [vmem:[%s2 + $0x14c] sm:$0xf]
      %v4044 = vld [vmem:[%s2 + $0x150] sm:$0xf]
      %v4045 = vld [vmem:[%s2 + $0x154] sm:$0xf]
      %v4046 = vld [vmem:[%s2 + $0x158] sm:$0xf]
      %v4047 = vld [vmem:[%s2 + $0x15c] sm:$0xf]
      %v4048 = vld [vmem:[%s2 + $0x160] sm:$0xf]
      %v4049 = vld [vmem:[%s2 + $0x164] sm:$0xf]
      %v4050 = vld [vmem:[%s2 + $0x168] sm:$0xf]
      %v4051 = vld [vmem:[%s2 + $0x16c] sm:$0xf]
      %v4052 = vld [vmem:[%s2 + $0x170] sm:$0xf]
      %v4053 = vld [vmem:[%s2 + $0x174] sm:$0xf]
      %v4054 = vld [vmem:[%s2 + $0x178] sm:$0xf]
      %v4055 = vld [vmem:[%s2 + $0x17c] sm:$0xf]
      %v4056 = vld [vmem:[%s2 + $0x180] sm:$0xf]
      %v4057 = vld [vmem:[%s2 + $0x184] sm:$0xf]
      %v4058 = vld [vmem:[%s2 + $0x188] sm:$0xf]
      %v4059 = vld [vmem:[%s2 + $0x18c] sm:$0xf]
      %v4060 = vld [vmem:[%s2 + $0x190] sm:$0xf]
      %v4061 = vld [vmem:[%s2 + $0x194] sm:$0xf]
      %v4062 = vld [vmem:[%s2 + $0x198] sm:$0xf]
      %v4063 = vld [vmem:[%s2 + $0x19c] sm:$0xf]
      %v4064 = vld [vmem:[%s2 + $0x1a0] sm:$0xf]
      %v4065 = vld [vmem:[%s2 + $0x1a4] sm:$0xf]
      %v4066 = vld [vmem:[%s2 + $0x1a8] sm:$0xf]
      %v4067 = vld [vmem:[%s2 + $0x1ac] sm:$0xf]
      %v4068 = vld [vmem:[%s2 + $0x1b0] sm:$0xf]
      %v4069 = vld [vmem:[%s2 + $0x1b4] sm:$0xf]
      %v4070 = vld [vmem:[%s2 + $0x1b8] sm:$0xf]
      %v4071 = vld [vmem:[%s2 + $0x1bc] sm:$0xf]
      %v4072 = vld [vmem:[%s2 + $0x1c0] sm:$0xf]
      %v4073 = vld [vmem:[%s2 + $0x1c4] sm:$0xf]
      %v4074 = vld [vmem:[%s2 + $0x1c8] sm:$0xf]
      %v4075 = vld [vmem:[%s2 + $0x1cc] sm:$0xf]
      %v4076 = vld [vmem:[%s2 + $0x1d0] sm:$0xf]
      %v4077 = vld [vmem:[%s2 + $0x1d4] sm:$0xf]
      %v4078 = vld [vmem:[%s2 + $0x1d8] sm:$0xf]
      %v4079 = vld [vmem:[%s2 + $0x1dc] sm:$0xf]
      %v4080 = vld [vmem:[%s2 + $0x1e0] sm:$0xf]
      %v4081 = vld [vmem:[%s2 + $0x1e4] sm:$0xf]
      %v4082 = vld [vmem:[%s2 + $0x1e8] sm:$0xf]
      %v4083 = vld [vmem:[%s2 + $0x1ec] sm:$0xf]
      %v4084 = vld [vmem:[%s2 + $0x1f0] sm:$0xf]
      %v4085 = vld [vmem:[%s2 + $0x1f4] sm:$0xf]
      %v4086 = vld [vmem:[%s2 + $0x1f8] sm:$0xf]
      %v4087 = vld [vmem:[%s2 + $0x1fc] sm:$0xf]
      %v4088 = vld [vmem:[%s2 + $0x200] sm:$0xf]
      %v4089 = vld [vmem:[%s2 + $0x204] sm:$0xf]
      %v4090 = vld [vmem:[%s2 + $0x208] sm:$0xf]
      %v4091 = vld [vmem:[%s2 + $0x20c] sm:$0xf]
      %v4092 = vld [vmem:[%s2 + $0x210] sm:$0xf]
      %v4093 = vld [vmem:[%s2 + $0x214] sm:$0xf]
      %v4094 = vld [vmem:[%s2 + $0x218] sm:$0xf]
      %v4095 = vld [vmem:[%s2 + $0x21c] sm:$0xf]
      %v4096 = vld [vmem:[%s2 + $0x220] sm:$0xf]
      %v4097 = vld [vmem:[%s2 + $0x224] sm:$0xf]
      %v4098 = vld [vmem:[%s2 + $0x228] sm:$0xf]
      %v4099 = vld [vmem:[%s2 + $0x22c] sm:$0xf]
      %v4100 = vld [vmem:[%s2 + $0x230] sm:$0xf]
      %v4101 = vld [vmem:[%s2 + $0x234] sm:$0xf]
      %v4102 = vld [vmem:[%s2 + $0x238] sm:$0xf]
      %v4103 = vld [vmem:[%s2 + $0x23c] sm:$0xf]
      %v4248 = vunpack.c.l.b16 %v3960
      %v4249 = vunpack.c.l.b16 %v3961
      %v4250 = vunpack.c.l.b16 %v3962
      %v4251 = vunpack.c.l.b16 %v3963
      %v4252 = vunpack.c.l.b16 %v3964
      %v4253 = vunpack.c.l.b16 %v3965
      %v4254 = vunpack.c.l.b16 %v3966
      %v4255 = vunpack.c.l.b16 %v3967
      %v4256 = vunpack.c.l.b16 %v3968
      %v4257 = vunpack.c.l.b16 %v3969
      %v4258 = vunpack.c.l.b16 %v3970
      %v4259 = vunpack.c.l.b16 %v3971
      %v4260 = vunpack.c.l.b16 %v3972
      %v4261 = vunpack.c.l.b16 %v3973
      %v4262 = vunpack.c.l.b16 %v3974
      %v4263 = vunpack.c.l.b16 %v3975
      %v4264 = vunpack.c.l.b16 %v3976
      %v4265 = vunpack.c.l.b16 %v3977
      %v4266 = vunpack.c.l.b16 %v3978
      %v4267 = vunpack.c.l.b16 %v3979
      %v4268 = vunpack.c.l.b16 %v3980
      %v4269 = vunpack.c.l.b16 %v3981
      %v4270 = vunpack.c.l.b16 %v3982
      %v4271 = vunpack.c.l.b16 %v3983
      %v4272 = vunpack.c.l.b16 %v3984
      %v4273 = vunpack.c.l.b16 %v3985
      %v4274 = vunpack.c.l.b16 %v3986
      %v4275 = vunpack.c.l.b16 %v3987
      %v4276 = vunpack.c.l.b16 %v3988
      %v4277 = vunpack.c.l.b16 %v3989
      %v4278 = vunpack.c.l.b16 %v3990
      %v4279 = vunpack.c.l.b16 %v3991
      %v4280 = vunpack.c.l.b16 %v3992
      %v4281 = vunpack.c.l.b16 %v3993
      %v4282 = vunpack.c.l.b16 %v3994
      %v4283 = vunpack.c.l.b16 %v3995
      %v4284 = vunpack.c.l.b16 %v3996
      %v4285 = vunpack.c.l.b16 %v3997
      %v4286 = vunpack.c.l.b16 %v3998
      %v4287 = vunpack.c.l.b16 %v3999
      %v4288 = vunpack.c.l.b16 %v4000
      %v4289 = vunpack.c.l.b16 %v4001
      %v4290 = vunpack.c.l.b16 %v4002
      %v4291 = vunpack.c.l.b16 %v4003
      %v4292 = vunpack.c.l.b16 %v4004
      %v4293 = vunpack.c.l.b16 %v4005
      %v4294 = vunpack.c.l.b16 %v4006
      %v4295 = vunpack.c.l.b16 %v4007
      %v4296 = vunpack.c.l.b16 %v4008
      %v4297 = vunpack.c.l.b16 %v4009
      %v4298 = vunpack.c.l.b16 %v4010
      %v4299 = vunpack.c.l.b16 %v4011
      %v4300 = vunpack.c.l.b16 %v4012
      %v4301 = vunpack.c.l.b16 %v4013
      %v4302 = vunpack.c.l.b16 %v4014
      %v4303 = vunpack.c.l.b16 %v4015
      %v4304 = vunpack.c.l.b16 %v4016
      %v4305 = vunpack.c.l.b16 %v4017
      %v4306 = vunpack.c.l.b16 %v4018
      %v4307 = vunpack.c.l.b16 %v4019
      %v4308 = vunpack.c.l.b16 %v4020
      %v4309 = vunpack.c.l.b16 %v4021
      %v4310 = vunpack.c.l.b16 %v4022
      %v4311 = vunpack.c.l.b16 %v4023
      %v4312 = vunpack.c.l.b16 %v4024
      %v4313 = vunpack.c.l.b16 %v4025
      %v4314 = vunpack.c.l.b16 %v4026
      %v4315 = vunpack.c.l.b16 %v4027
      %v4316 = vunpack.c.l.b16 %v4028
      %v4317 = vunpack.c.l.b16 %v4029
      %v4318 = vunpack.c.l.b16 %v4030
      %v4319 = vunpack.c.l.b16 %v4031
      %v4320 = vunpack.c.l.b16 %v4032
      %v4321 = vunpack.c.l.b16 %v4033
      %v4322 = vunpack.c.l.b16 %v4034
      %v4323 = vunpack.c.l.b16 %v4035
      %v4324 = vunpack.c.l.b16 %v4036
      %v4325 = vunpack.c.l.b16 %v4037
      %v4326 = vunpack.c.l.b16 %v4038
      %v4327 = vunpack.c.l.b16 %v4039
      %v4328 = vunpack.c.l.b16 %v4040
      %v4329 = vunpack.c.l.b16 %v4041
      %v4330 = vunpack.c.l.b16 %v4042
      %v4331 = vunpack.c.l.b16 %v4043
      %v4332 = vunpack.c.l.b16 %v4044
      %v4333 = vunpack.c.l.b16 %v4045
      %v4334 = vunpack.c.l.b16 %v4046
      %v4335 = vunpack.c.l.b16 %v4047
      %v4336 = vunpack.c.l.b16 %v4048
      %v4337 = vunpack.c.l.b16 %v4049
      %v4338 = vunpack.c.l.b16 %v4050
      %v4339 = vunpack.c.l.b16 %v4051
      %v4340 = vunpack.c.l.b16 %v4052
      %v4341 = vunpack.c.l.b16 %v4053
      %v4342 = vunpack.c.l.b16 %v4054
      %v4343 = vunpack.c.l.b16 %v4055
      %v4344 = vunpack.c.l.b16 %v4056
      %v4345 = vunpack.c.l.b16 %v4057
      %v4346 = vunpack.c.l.b16 %v4058
      %v4347 = vunpack.c.l.b16 %v4059
      %v4348 = vunpack.c.l.b16 %v4060
      %v4349 = vunpack.c.l.b16 %v4061
      %v4350 = vunpack.c.l.b16 %v4062
      %v4351 = vunpack.c.l.b16 %v4063
      %v4352 = vunpack.c.l.b16 %v4064
      %v4353 = vunpack.c.l.b16 %v4065
      %v4354 = vunpack.c.l.b16 %v4066
      %v4355 = vunpack.c.l.b16 %v4067
      %v4356 = vunpack.c.l.b16 %v4068
      %v4357 = vunpack.c.l.b16 %v4069
      %v4358 = vunpack.c.l.b16 %v4070
      %v4359 = vunpack.c.l.b16 %v4071
      %v4360 = vunpack.c.l.b16 %v4072
      %v4361 = vunpack.c.l.b16 %v4073
      %v4362 = vunpack.c.l.b16 %v4074
      %v4363 = vunpack.c.l.b16 %v4075
      %v4364 = vunpack.c.l.b16 %v4076
      %v4365 = vunpack.c.l.b16 %v4077
      %v4366 = vunpack.c.l.b16 %v4078
      %v4367 = vunpack.c.l.b16 %v4079
      %v4368 = vunpack.c.l.b16 %v4080
      %v4369 = vunpack.c.l.b16 %v4081
      %v4370 = vunpack.c.l.b16 %v4082
      %v4371 = vunpack.c.l.b16 %v4083
      %v4372 = vunpack.c.l.b16 %v4084
      %v4373 = vunpack.c.l.b16 %v4085
      %v4374 = vunpack.c.l.b16 %v4086
      %v4375 = vunpack.c.l.b16 %v4087
      %v4376 = vunpack.c.l.b16 %v4088
      %v4377 = vunpack.c.l.b16 %v4089
      %v4378 = vunpack.c.l.b16 %v4090
      %v4379 = vunpack.c.l.b16 %v4091
      %v4380 = vunpack.c.l.b16 %v4092
      %v4381 = vunpack.c.l.b16 %v4093
      %v4382 = vunpack.c.l.b16 %v4094
      %v4383 = vunpack.c.l.b16 %v4095
      %v4384 = vunpack.c.l.b16 %v4096
      %v4385 = vunpack.c.l.b16 %v4097
      %v4386 = vunpack.c.l.b16 %v4098
      %v4387 = vunpack.c.l.b16 %v4099
      %v4388 = vunpack.c.l.b16 %v4100
      %v4389 = vunpack.c.l.b16 %v4101
      %v4390 = vunpack.c.l.b16 %v4102
      %v4391 = vunpack.c.l.b16 %v4103
      %v4392 = vpack.c.b16 %v4249, %v4248
      %v4393 = vpack.c.b16 %v4251, %v4250
      %v4394 = vpack.c.b16 %v4253, %v4252
      %v4395 = vpack.c.b16 %v4255, %v4254
      %v4396 = vpack.c.b16 %v4257, %v4256
      %v4397 = vpack.c.b16 %v4259, %v4258
      %v4398 = vpack.c.b16 %v4261, %v4260
      %v4399 = vpack.c.b16 %v4263, %v4262
      %v4400 = vpack.c.b16 %v4265, %v4264
      %v4401 = vpack.c.b16 %v4267, %v4266
      %v4402 = vpack.c.b16 %v4269, %v4268
      %v4403 = vpack.c.b16 %v4271, %v4270
      %v4404 = vpack.c.b16 %v4273, %v4272
      %v4405 = vpack.c.b16 %v4275, %v4274
      %v4406 = vpack.c.b16 %v4277, %v4276
      %v4407 = vpack.c.b16 %v4279, %v4278
      %v4408 = vpack.c.b16 %v4281, %v4280
      %v4409 = vpack.c.b16 %v4283, %v4282
      %v4410 = vpack.c.b16 %v4285, %v4284
      %v4411 = vpack.c.b16 %v4287, %v4286
      %v4412 = vpack.c.b16 %v4289, %v4288
      %v4413 = vpack.c.b16 %v4291, %v4290
      %v4414 = vpack.c.b16 %v4293, %v4292
      %v4415 = vpack.c.b16 %v4295, %v4294
      %v4416 = vpack.c.b16 %v4297, %v4296
      %v4417 = vpack.c.b16 %v4299, %v4298
      %v4418 = vpack.c.b16 %v4301, %v4300
      %v4419 = vpack.c.b16 %v4303, %v4302
      %v4420 = vpack.c.b16 %v4305, %v4304
      %v4421 = vpack.c.b16 %v4307, %v4306
      %v4422 = vpack.c.b16 %v4309, %v4308
      %v4423 = vpack.c.b16 %v4311, %v4310
      %v4424 = vpack.c.b16 %v4313, %v4312
      %v4425 = vpack.c.b16 %v4315, %v4314
      %v4426 = vpack.c.b16 %v4317, %v4316
      %v4427 = vpack.c.b16 %v4319, %v4318
      %v4428 = vpack.c.b16 %v4321, %v4320
      %v4429 = vpack.c.b16 %v4323, %v4322
      %v4430 = vpack.c.b16 %v4325, %v4324
      %v4431 = vpack.c.b16 %v4327, %v4326
      %v4432 = vpack.c.b16 %v4329, %v4328
      %v4433 = vpack.c.b16 %v4331, %v4330
      %v4434 = vpack.c.b16 %v4333, %v4332
      %v4435 = vpack.c.b16 %v4335, %v4334
      %v4436 = vpack.c.b16 %v4337, %v4336
      %v4437 = vpack.c.b16 %v4339, %v4338
      %v4438 = vpack.c.b16 %v4341, %v4340
      %v4439 = vpack.c.b16 %v4343, %v4342
      %v4440 = vpack.c.b16 %v4345, %v4344
      %v4441 = vpack.c.b16 %v4347, %v4346
      %v4442 = vpack.c.b16 %v4349, %v4348
      %v4443 = vpack.c.b16 %v4351, %v4350
      %v4444 = vpack.c.b16 %v4353, %v4352
      %v4445 = vpack.c.b16 %v4355, %v4354
      %v4446 = vpack.c.b16 %v4357, %v4356
      %v4447 = vpack.c.b16 %v4359, %v4358
      %v4448 = vpack.c.b16 %v4361, %v4360
      %v4449 = vpack.c.b16 %v4363, %v4362
      %v4450 = vpack.c.b16 %v4365, %v4364
      %v4451 = vpack.c.b16 %v4367, %v4366
      %v4452 = vpack.c.b16 %v4369, %v4368
      %v4453 = vpack.c.b16 %v4371, %v4370
      %v4454 = vpack.c.b16 %v4373, %v4372
      %v4455 = vpack.c.b16 %v4375, %v4374
      %v4456 = vpack.c.b16 %v4377, %v4376
      %v4457 = vpack.c.b16 %v4379, %v4378
      %v4458 = vpack.c.b16 %v4381, %v4380
      %v4459 = vpack.c.b16 %v4383, %v4382
      %v4460 = vpack.c.b16 %v4385, %v4384
      %v4461 = vpack.c.b16 %v4387, %v4386
      %v4462 = vpack.c.b16 %v4389, %v4388
      %v4463 = vpack.c.b16 %v4391, %v4390
      %4536 = vmatprep.subr.bf16.mxu0 0
      %4537 = vmatpush1.bf16.msra.mxu0 %v4392
      %4538 = vmatprep.subr.bf16.mxu0 0
      %4539 = vmatpush1.bf16.msra.mxu0 %v4393
      %4540 = vmatprep.subr.bf16.mxu0 0
      %4541 = vmatpush1.bf16.msra.mxu0 %v4394
      %4542 = vmatprep.subr.bf16.mxu0 0
      %4543 = vmatpush1.bf16.msra.mxu0 %v4395
      %4544 = vmatprep.subr.bf16.mxu0 0
      %4545 = vmatpush1.bf16.msra.mxu0 %v4396
      %4546 = vmatprep.subr.bf16.mxu0 0
      %4547 = vmatpush1.bf16.msra.mxu0 %v4397
      %4548 = vmatprep.subr.bf16.mxu0 0
      %4549 = vmatpush1.bf16.msra.mxu0 %v4398
      %4550 = vmatprep.subr.bf16.mxu0 0
      %4551 = vmatpush1.bf16.msra.mxu0 %v4399
      %4552 = vmatprep.subr.bf16.mxu0 0
      %4553 = vmatpush1.bf16.msra.mxu0 %v4400
      %4554 = vmatprep.subr.bf16.mxu0 0
      %4555 = vmatpush1.bf16.msra.mxu0 %v4401
      %4556 = vmatprep.subr.bf16.mxu0 0
      %4557 = vmatpush1.bf16.msra.mxu0 %v4402
      %4558 = vmatprep.subr.bf16.mxu0 0
      %4559 = vmatpush1.bf16.msra.mxu0 %v4403
      %4560 = vmatprep.subr.bf16.mxu0 0
      %4561 = vmatpush1.bf16.msra.mxu0 %v4404
      %4562 = vmatprep.subr.bf16.mxu0 0
      %4563 = vmatpush1.bf16.msra.mxu0 %v4405
      %4564 = vmatprep.subr.bf16.mxu0 0
      %4565 = vmatpush1.bf16.msra.mxu0 %v4406
      %4566 = vmatprep.subr.bf16.mxu0 0
      %4567 = vmatpush1.bf16.msra.mxu0 %v4407
      %4568 = vmatprep.mubr.bf16.mxu0 %v3925
      %4569 = vmatmul.mubr.bf16.gmra.mrb[0].mxu0 %v3924
      %v4570 = vpop.f32.mrb[0].mxu0
      %v4571 = vadd.f32 0.0, %v4570
      %v4572 = vpop.f32.mrb[0].mxu0
      %v4573 = vpop.f32.mrb[0].mxu0
      %v4574 = vadd.f32 0.0, %v4573
      %v4575 = vpop.f32.mrb[0].mxu0
      %4576 = vmatprep.mubr.bf16.mxu0 %v3934
      %4577 = vmatmul.mubr.bf16.gmra.mrb[0].mxu0 %v3933
      %v4578 = vpop.f32.mrb[0].mxu0
      %v4579 = vadd.f32 0.0, %v4578
      %v4580 = vpop.f32.mrb[0].mxu0
      %v4581 = vpop.f32.mrb[0].mxu0
      %v4582 = vadd.f32 0.0, %v4581
      %v4583 = vpop.f32.mrb[0].mxu0
      %4584 = vmatprep.mubr.bf16.mxu0 %v3943
      %4585 = vmatmul.mubr.bf16.gmra.mrb[0].mxu0 %v3942
      %v4586 = vpop.f32.mrb[0].mxu0
      %v4587 = vadd.f32 0.0, %v4586
      %v4588 = vpop.f32.mrb[0].mxu0
      %v4589 = vpop.f32.mrb[0].mxu0
      %v4590 = vadd.f32 0.0, %v4589
      %v4591 = vpop.f32.mrb[0].mxu0
      %4592 = vmatprep.mubr.bf16.mxu0 %v3952
      %4593 = vmatmul.mubr.bf16.gmra.mrb[0].mxu0 %v3951
      %v4594 = vpop.f32.mrb[0].mxu0
      %v4595 = vadd.f32 0.0, %v4594
      %v4596 = vpop.f32.mrb[0].mxu0
      %v4597 = vpop.f32.mrb[0].mxu0
      %v4598 = vadd.f32 0.0, %v4597
      %v4599 = vpop.f32.mrb[0].mxu0
      %4600 = vdwg.mxu0
      %4601 = vmatprep.subr.bf16.mxu0 0
      %4602 = vmatpush1.bf16.msra.mxu0 %v4408
      %4603 = vmatprep.subr.bf16.mxu0 0
      %4604 = vmatpush1.bf16.msra.mxu0 %v4409
      %4605 = vmatprep.subr.bf16.mxu0 0
      %4606 = vmatpush1.bf16.msra.mxu0 %v4410
      %4607 = vmatprep.subr.bf16.mxu0 0
      %4608 = vmatpush1.bf16.msra.mxu0 %v4411
      %4609 = vmatprep.subr.bf16.mxu0 0
      %4610 = vmatpush1.bf16.msra.mxu0 %v4412
      %4611 = vmatprep.subr.bf16.mxu0 0
      %4612 = vmatpush1.bf16.msra.mxu0 %v4413
      %4613 = vmatprep.subr.bf16.mxu0 0
      %4614 = vmatpush1.bf16.msra.mxu0 %v4414
      %4615 = vmatprep.subr.bf16.mxu0 0
      %4616 = vmatpush1.bf16.msra.mxu0 %v4415
      %4617 = vmatprep.subr.bf16.mxu0 0
      %4618 = vmatpush1.bf16.msra.mxu0 %v4416
      %4619 = vmatprep.subr.bf16.mxu0 0
      %4620 = vmatpush1.bf16.msra.mxu0 %v4417
      %4621 = vmatprep.subr.bf16.mxu0 0
      %4622 = vmatpush1.bf16.msra.mxu0 %v4418
      %4623 = vmatprep.subr.bf16.mxu0 0
      %4624 = vmatpush1.bf16.msra.mxu0 %v4419
      %4625 = vmatprep.subr.bf16.mxu0 0
      %4626 = vmatpush1.bf16.msra.mxu0 %v4420
      %4627 = vmatprep.subr.bf16.mxu0 0
      %4628 = vmatpush1.bf16.msra.mxu0 %v4421
      %4629 = vmatprep.subr.bf16.mxu0 0
      %4630 = vmatpush1.bf16.msra.mxu0 %v4422
      %4631 = vmatprep.subr.bf16.mxu0 0
      %4632 = vmatpush1.bf16.msra.mxu0 %v4423
      %4633 = vmatprep.mubr.bf16.mxu0 %v3927
      %4634 = vmatmul.mubr.bf16.gmra.mrb[0].mxu0 %v3926
      %v4635 = vpop.f32.mrb[0].mxu0
      %v4636 = vadd.f32 %v4571, %v4635
      %v4637 = vpop.f32.mrb[0].mxu0
      %v4638 = vpop.f32.mrb[0].mxu0
      %v4639 = vadd.f32 %v4574, %v4638
      %v4640 = vpop.f32.mrb[0].mxu0
      %4641 = vmatprep.mubr.bf16.mxu0 %v3936
      %4642 = vmatmul.mubr.bf16.gmra.mrb[0].mxu0 %v3935
      %v4643 = vpop.f32.mrb[0].mxu0
      %v4644 = vadd.f32 %v4579, %v4643
      %v4645 = vpop.f32.mrb[0].mxu0
      %v4646 = vpop.f32.mrb[0].mxu0
      %v4647 = vadd.f32 %v4582, %v4646
      %v4648 = vpop.f32.mrb[0].mxu0
      %4649 = vmatprep.mubr.bf16.mxu0 %v3945
      %4650 = vmatmul.mubr.bf16.gmra.mrb[0].mxu0 %v3944
      %v4651 = vpop.f32.mrb[0].mxu0
      %v4652 = vadd.f32 %v4587, %v4651
      %v4653 = vpop.f32.mrb[0].mxu0
      %v4654 = vpop.f32.mrb[0].mxu0
      %v4655 = vadd.f32 %v4590, %v4654
      %v4656 = vpop.f32.mrb[0].mxu0
      %4657 = vmatprep.mubr.bf16.mxu0 %v3954
      %4658 = vmatmul.mubr.bf16.gmra.mrb[0].mxu0 %v3953
      %v4659 = vpop.f32.mrb[0].mxu0
      %v4660 = vadd.f32 %v4595, %v4659
      %v4661 = vpop.f32.mrb[0].mxu0
      %v4662 = vpop.f32.mrb[0].mxu0
      %v4663 = vadd.f32 %v4598, %v4662
      %v4664 = vpop.f32.mrb[0].mxu0
      %4665 = vdwg.mxu0
      %4666 = vmatprep.subr.bf16.mxu0 0
      %4667 = vmatpush1.bf16.msra.mxu0 %v4424
      %4668 = vmatprep.subr.bf16.mxu0 0
      %4669 = vmatpush1.bf16.msra.mxu0 %v4425
      %4670 = vmatprep.subr.bf16.mxu0 0
      %4671 = vmatpush1.bf16.msra.mxu0 %v4426
      %4672 = vmatprep.subr.bf16.mxu0 0
      %4673 = vmatpush1.bf16.msra.mxu0 %v4427
      %4674 = vmatprep.subr.bf16.mxu0 0
      %4675 = vmatpush1.bf16.msra.mxu0 %v4428
      %4676 = vmatprep.subr.bf16.mxu0 0
      %4677 = vmatpush1.bf16.msra.mxu0 %v4429
      %4678 = vmatprep.subr.bf16.mxu0 0
      %4679 = vmatpush1.bf16.msra.mxu0 %v4430
      %4680 = vmatprep.subr.bf16.mxu0 0
      %4681 = vmatpush1.bf16.msra.mxu0 %v4431
      %4682 = vmatprep.subr.bf16.mxu0 0
      %4683 = vmatpush1.bf16.msra.mxu0 %v4432
      %4684 = vmatprep.subr.bf16.mxu0 0
      %4685 = vmatpush1.bf16.msra.mxu0 %v4433
      %4686 = vmatprep.subr.bf16.mxu0 0
      %4687 = vmatpush1.bf16.msra.mxu0 %v4434
      %4688 = vmatprep.subr.bf16.mxu0 0
      %4689 = vmatpush1.bf16.msra.mxu0 %v4435
      %4690 = vmatprep.subr.bf16.mxu0 0
      %4691 = vmatpush1.bf16.msra.mxu0 %v4436
      %4692 = vmatprep.subr.bf16.mxu0 0
      %4693 = vmatpush1.bf16.msra.mxu0 %v4437
      %4694 = vmatprep.subr.bf16.mxu0 0
      %4695 = vmatpush1.bf16.msra.mxu0 %v4438
      %4696 = vmatprep.subr.bf16.mxu0 0
      %4697 = vmatpush1.bf16.msra.mxu0 %v4439
      %4698 = vmatprep.mubr.bf16.mxu0 %v3929
      %4699 = vmatmul.mubr.bf16.gmra.mrb[0].mxu0 %v3928
      %v4700 = vpop.f32.mrb[0].mxu0
      %v4701 = vadd.f32 %v4636, %v4700
      %v4702 = vpop.f32.mrb[0].mxu0
      %v4703 = vpop.f32.mrb[0].mxu0
      %v4704 = vadd.f32 %v4639, %v4703
      %v4705 = vpop.f32.mrb[0].mxu0
      %4706 = vmatprep.mubr.bf16.mxu0 %v3938
      %4707 = vmatmul.mubr.bf16.gmra.mrb[0].mxu0 %v3937
      %v4708 = vpop.f32.mrb[0].mxu0
      %v4709 = vadd.f32 %v4644, %v4708
      %v4710 = vpop.f32.mrb[0].mxu0
      %v4711 = vpop.f32.mrb[0].mxu0
      %v4712 = vadd.f32 %v4647, %v4711
      %v4713 = vpop.f32.mrb[0].mxu0
      %4714 = vmatprep.mubr.bf16.mxu0 %v3947
      %4715 = vmatmul.mubr.bf16.gmra.mrb[0].mxu0 %v3946
      %v4716 = vpop.f32.mrb[0].mxu0
      %v4717 = vadd.f32 %v4652, %v4716
      %v4718 = vpop.f32.mrb[0].mxu0
      %v4719 = vpop.f32.mrb[0].mxu0
      %v4720 = vadd.f32 %v4655, %v4719
      %v4721 = vpop.f32.mrb[0].mxu0
      %4722 = vmatprep.mubr.bf16.mxu0 %v3956
      %4723 = vmatmul.mubr.bf16.gmra.mrb[0].mxu0 %v3955
      %v4724 = vpop.f32.mrb[0].mxu0
      %v4725 = vadd.f32 %v4660, %v4724
      %v4726 = vpop.f32.mrb[0].mxu0
      %v4727 = vpop.f32.mrb[0].mxu0
      %v4728 = vadd.f32 %v4663, %v4727
      %v4729 = vpop.f32.mrb[0].mxu0
      %4730 = vdwg.mxu0
      %4731 = vmatprep.subr.bf16.mxu0 0
      %4732 = vmatpush1.bf16.msra.mxu0 %v4440
      %4733 = vmatprep.subr.bf16.mxu0 0
      %4734 = vmatpush1.bf16.msra.mxu0 %v4441
      %4735 = vmatprep.subr.bf16.mxu0 0
      %4736 = vmatpush1.bf16.msra.mxu0 %v4442
      %4737 = vmatprep.subr.bf16.mxu0 0
      %4738 = vmatpush1.bf16.msra.mxu0 %v4443
      %4739 = vmatprep.subr.bf16.mxu0 0
      %4740 = vmatpush1.bf16.msra.mxu0 %v4444
      %4741 = vmatprep.subr.bf16.mxu0 0
      %4742 = vmatpush1.bf16.msra.mxu0 %v4445
      %4743 = vmatprep.subr.bf16.mxu0 0
      %4744 = vmatpush1.bf16.msra.mxu0 %v4446
      %4745 = vmatprep.subr.bf16.mxu0 0
      %4746 = vmatpush1.bf16.msra.mxu0 %v4447
      %4747 = vmatprep.subr.bf16.mxu0 0
      %4748 = vmatpush1.bf16.msra.mxu0 %v4448
      %4749 = vmatprep.subr.bf16.mxu0 0
      %4750 = vmatpush1.bf16.msra.mxu0 %v4449
      %4751 = vmatprep.subr.bf16.mxu0 0
      %4752 = vmatpush1.bf16.msra.mxu0 %v4450
      %4753 = vmatprep.subr.bf16.mxu0 0
      %4754 = vmatpush1.bf16.msra.mxu0 %v4451
      %4755 = vmatprep.subr.bf16.mxu0 0
      %4756 = vmatpush1.bf16.msra.mxu0 %v4452
      %4757 = vmatprep.subr.bf16.mxu0 0
      %4758 = vmatpush1.bf16.msra.mxu0 %v4453
      %4759 = vmatprep.subr.bf16.mxu0 0
      %4760 = vmatpush1.bf16.msra.mxu0 %v4454
      %4761 = vmatprep.subr.bf16.mxu0 0
      %4762 = vmatpush1.bf16.msra.mxu0 %v4455
      %4763 = vmatprep.mubr.bf16.mxu0 %v3931
      %4764 = vmatmul.mubr.bf16.gmra.mrb[0].mxu0 %v3930
      %v4765 = vpop.f32.mrb[0].mxu0
      %v4766 = vadd.f32 %v4701, %v4765
      %v4767 = vpop.f32.mrb[0].mxu0
      %v4768 = vpop.f32.mrb[0].mxu0
      %v4769 = vadd.f32 %v4704, %v4768
      %v4770 = vpop.f32.mrb[0].mxu0
      %4771 = vmatprep.mubr.bf16.mxu0 %v3940
      %4772 = vmatmul.mubr.bf16.gmra.mrb[0].mxu0 %v3939
      %v4773 = vpop.f32.mrb[0].mxu0
      %v4774 = vadd.f32 %v4709, %v4773
      %v4775 = vpop.f32.mrb[0].mxu0
      %v4776 = vpop.f32.mrb[0].mxu0
      %v4777 = vadd.f32 %v4712, %v4776
      %v4778 = vpop.f32.mrb[0].mxu0
      %4779 = vmatprep.mubr.bf16.mxu0 %v3949
      %4780 = vmatmul.mubr.bf16.gmra.mrb[0].mxu0 %v3948
      %v4781 = vpop.f32.mrb[0].mxu0
      %v4782 = vadd.f32 %v4717, %v4781
      %v4783 = vpop.f32.mrb[0].mxu0
      %v4784 = vpop.f32.mrb[0].mxu0
      %v4785 = vadd.f32 %v4720, %v4784
      %v4786 = vpop.f32.mrb[0].mxu0
      %4787 = vmatprep.mubr.bf16.mxu0 %v3958
      %4788 = vmatmul.mubr.bf16.gmra.mrb[0].mxu0 %v3957
      %v4789 = vpop.f32.mrb[0].mxu0
      %v4790 = vadd.f32 %v4725, %v4789
      %v4791 = vpop.f32.mrb[0].mxu0
      %v4792 = vpop.f32.mrb[0].mxu0
      %v4793 = vadd.f32 %v4728, %v4792
      %v4794 = vpop.f32.mrb[0].mxu0
      %4795 = vdwg.mxu0
      %4796 = vmatprep.subr.bf16.mxu0 0
      %4797 = vmatpush1.bf16.msra.mxu0 %v4456
      %4798 = vmatprep.subr.bf16.mxu0 0
      %4799 = vmatpush1.bf16.msra.mxu0 %v4457
      %4800 = vmatprep.subr.bf16.mxu0 0
      %4801 = vmatpush1.bf16.msra.mxu0 %v4458
      %4802 = vmatprep.subr.bf16.mxu0 0
      %4803 = vmatpush1.bf16.msra.mxu0 %v4459
      %4804 = vmatprep.subr.bf16.mxu0 0
      %4805 = vmatpush1.bf16.msra.mxu0 %v4460
      %4806 = vmatprep.subr.bf16.mxu0 0
      %4807 = vmatpush1.bf16.msra.mxu0 %v4461
      %4808 = vmatprep.subr.bf16.mxu0 0
      %4809 = vmatpush1.bf16.msra.mxu0 %v4462
      %4810 = vmatprep.subr.bf16.mxu0 0
      %4811 = vmatpush1.bf16.msra.mxu0 %v4463
      %4812 = vmatprep.subr.bf16.mxu0 0
      %4813 = vmatpush1.bf16.msra.mxu0 0
      %4814 = vmatprep.subr.bf16.mxu0 0
      %4815 = vmatpush1.bf16.msra.mxu0 0
      %4816 = vmatprep.subr.bf16.mxu0 0
      %4817 = vmatpush1.bf16.msra.mxu0 0
      %4818 = vmatprep.subr.bf16.mxu0 0
      %4819 = vmatpush1.bf16.msra.mxu0 0
      %4820 = vmatprep.subr.bf16.mxu0 0
      %4821 = vmatpush1.bf16.msra.mxu0 0
      %4822 = vmatprep.subr.bf16.mxu0 0
      %4823 = vmatpush1.bf16.msra.mxu0 0
      %4824 = vmatprep.subr.bf16.mxu0 0
      %4825 = vmatpush1.bf16.msra.mxu0 0
      %4826 = vmatprep.subr.bf16.mxu0 0
      %4827 = vmatpush1.bf16.msra.mxu0 0
      %4828 = vmatprep.mubr.bf16.mxu0 0
      %4829 = vmatmul.mubr.bf16.gmra.mrb[0].mxu0 %v3932
      %v4830 = vpop.f32.mrb[0].mxu0
      %v4831 = vadd.f32 %v4766, %v4830
      %v4832 = vpop.f32.mrb[0].mxu0
      %v4833 = vpop.f32.mrb[0].mxu0
      %v4834 = vadd.f32 %v4769, %v4833
      %v4835 = vpop.f32.mrb[0].mxu0
      %4836 = vmatprep.mubr.bf16.mxu0 0
      %4837 = vmatmul.mubr.bf16.gmra.mrb[0].mxu0 %v3941
      %v4838 = vpop.f32.mrb[0].mxu0
      %v4839 = vadd.f32 %v4774, %v4838
      %v4840 = vpop.f32.mrb[0].mxu0
      %v4841 = vpop.f32.mrb[0].mxu0
      %v4842 = vadd.f32 %v4777, %v4841
      %v4843 = vpop.f32.mrb[0].mxu0
      %4844 = vmatprep.mubr.bf16.mxu0 0
      %4845 = vmatmul.mubr.bf16.gmra.mrb[0].mxu0 %v3950
      %v4846 = vpop.f32.mrb[0].mxu0
      %v4847 = vadd.f32 %v4782, %v4846
      %v4848 = vpop.f32.mrb[0].mxu0
      %v4849 = vpop.f32.mrb[0].mxu0
      %v4850 = vadd.f32 %v4785, %v4849
      %v4851 = vpop.f32.mrb[0].mxu0
      %4852 = vmatprep.mubr.bf16.mxu0 0
      %4853 = vmatmul.mubr.bf16.gmra.mrb[0].mxu0 %v3959
      %v4854 = vpop.f32.mrb[0].mxu0
      %v4855 = vadd.f32 %v4790, %v4854
      %v4856 = vpop.f32.mrb[0].mxu0
      %v4857 = vpop.f32.mrb[0].mxu0
      %v4858 = vadd.f32 %v4793, %v4857
      %v4859 = vpop.f32.mrb[0].mxu0
      %4860 = vdwg.mxu0
      %s4861 = scalar_lea.vmem %s170, 64
      %4862 = vst [vmem:[%s4861] sm:$0xff] %v4831
      %4863 = vst [vmem:[%s4861 + $0x8] sm:$0xff] %v4834
      %4864 = vst [vmem:[%s4861 + $0x10] sm:$0xff] %v4839
      %4865 = vst [vmem:[%s4861 + $0x18] sm:$0xff] %v4842
      %4866 = vst [vmem:[%s4861 + $0x20] sm:$0xff] %v4847
      %4867 = vst [vmem:[%s4861 + $0x28] sm:$0xff] %v4850
      %4868 = vst [vmem:[%s4861 + $0x30] sm:$0xff] %v4855
      %4869 = vst [vmem:[%s4861 + $0x38] sm:$0xff] %v4858
      %v4870 = vadd.f32 %v4831, %v4834
      %v4871 = vadd.f32 %v4870, %v4839
      %v4872 = vadd.f32 %v4871, %v4842
      %v4873 = vadd.f32 %v4872, %v4847
      %v4874 = vadd.f32 %v4873, %v4850
      %v4875 = vadd.f32 %v4874, %v4855
      %v4876 = vadd.f32 %v4875, %v4858
      %v4877 = vrot.slane %v4876, 4
      %v4878 = vadd.f32 %v4876, %v4877
      %v4879 = vrot.slane %v4878, 2
      %v4880 = vadd.f32 %v4878, %v4879
      %v4881 = vrot.slane %v4880, 1
      %v4882 = vadd.f32 %v4880, %v4881
      %v4883 = vadd.f32 %v2905, %v4882
      %v4884 = vmul.f32 %v4831, %v4831
      %v4885 = vmul.f32 %v4834, %v4834
      %v4886 = vmul.f32 %v4839, %v4839
      %v4887 = vmul.f32 %v4842, %v4842
      %v4888 = vmul.f32 %v4847, %v4847
      %v4889 = vmul.f32 %v4850, %v4850
      %v4890 = vmul.f32 %v4855, %v4855
      %v4891 = vmul.f32 %v4858, %v4858
      %v4892 = vadd.f32 %v4884, %v4885
      %v4893 = vadd.f32 %v4892, %v4886
      %v4894 = vadd.f32 %v4893, %v4887
      %v4895 = vadd.f32 %v4894, %v4888
      %v4896 = vadd.f32 %v4895, %v4889
      %v4897 = vadd.f32 %v4896, %v4890
      %v4898 = vadd.f32 %v4897, %v4891
      %v4899 = vrot.slane %v4898, 4
      %v4900 = vadd.f32 %v4898, %v4899
      %v4901 = vrot.slane %v4900, 2
      %v4902 = vadd.f32 %v4900, %v4901
      %v4903 = vrot.slane %v4902, 1
      %v4904 = vadd.f32 %v4902, %v4903
      %v4905 = vadd.f32 %v2927, %v4904
      %v4906 = vld [vmem:[%s640] sm:$0xf]
      %v4907 = vld [vmem:[%s640 + $0x8] sm:$0xf]
      %v4908 = vld [vmem:[%s640 + $0x10] sm:$0xf]
      %v4909 = vld [vmem:[%s640 + $0x18] sm:$0xf]
      %v4910 = vld [vmem:[%s640 + $0x20] sm:$0xf]
      %v4911 = vld [vmem:[%s640 + $0x28] sm:$0xf]
      %v4912 = vld [vmem:[%s640 + $0x30] sm:$0xf]
      %v4913 = vld [vmem:[%s640 + $0x38] sm:$0xf]
      %v4922 = vunpack.c.l.b16 %v4906
      %v4923 = vunpack.c.l.b16 %v4907
      %v4924 = vunpack.c.l.b16 %v4908
      %v4925 = vunpack.c.l.b16 %v4909
      %v4926 = vunpack.c.l.b16 %v4910
      %v4927 = vunpack.c.l.b16 %v4911
      %v4928 = vunpack.c.l.b16 %v4912
      %v4929 = vunpack.c.l.b16 %v4913
      %v4930 = vpack.c.b16 %v4923, %v4922
      %v4931 = vpack.c.b16 %v4925, %v4924
      %v4932 = vpack.c.b16 %v4927, %v4926
      %v4933 = vpack.c.b16 %v4929, %v4928
      %4938 = vst [vmem:[#allocation3] sm:$0xff] %v4930
      %4939 = vst [vmem:[#allocation3 + $0x48] sm:$0xff] %v4931
      %4940 = vst [vmem:[#allocation3 + $0x90] sm:$0xff] %v4932
      %4941 = vst [vmem:[#allocation3 + $0xd8] sm:$0xff] %v4933
      %v4942 = vld [vmem:[%s629] sm:$0xf]
      %v4943 = vld [vmem:[%s629 + $0x8] sm:$0xf]
      %v4944 = vld [vmem:[%s629 + $0x10] sm:$0xf]
      %v4945 = vld [vmem:[%s629 + $0x18] sm:$0xf]
      %v4946 = vld [vmem:[%s629 + $0x20] sm:$0xf]
      %v4947 = vld [vmem:[%s629 + $0x28] sm:$0xf]
      %v4948 = vld [vmem:[%s629 + $0x30] sm:$0xf]
      %v4949 = vld [vmem:[%s629 + $0x38] sm:$0xf]
      %v4958 = vunpack.c.l.b16 %v4942
      %v4959 = vunpack.c.l.b16 %v4943
      %v4960 = vunpack.c.l.b16 %v4944
      %v4961 = vunpack.c.l.b16 %v4945
      %v4962 = vunpack.c.l.b16 %v4946
      %v4963 = vunpack.c.l.b16 %v4947
      %v4964 = vunpack.c.l.b16 %v4948
      %v4965 = vunpack.c.l.b16 %v4949
      %v4966 = vpack.c.b16 %v4959, %v4958
      %v4967 = vpack.c.b16 %v4961, %v4960
      %v4968 = vpack.c.b16 %v4963, %v4962
      %v4969 = vpack.c.b16 %v4965, %v4964
      %4974 = vst [vmem:[#allocation3 + $0x8] sm:$0xff] %v4966
      %4975 = vst [vmem:[#allocation3 + $0x50] sm:$0xff] %v4967
      %4976 = vst [vmem:[#allocation3 + $0x98] sm:$0xff] %v4968
      %4977 = vst [vmem:[#allocation3 + $0xe0] sm:$0xff] %v4969
      %v4978 = vld [vmem:[%s640] sm:$0xf]
      %v4979 = vld [vmem:[%s640 + $0x4] sm:$0x1]
      %v4980 = vld [vmem:[%s640 + $0x8] sm:$0xf]
      %v4981 = vld [vmem:[%s640 + $0xc] sm:$0x1]
      %v4982 = vld [vmem:[%s640 + $0x10] sm:$0xf]
      %v4983 = vld [vmem:[%s640 + $0x14] sm:$0x1]
      %v4984 = vld [vmem:[%s640 + $0x18] sm:$0xf]
      %v4985 = vld [vmem:[%s640 + $0x1c] sm:$0x1]
      %v4986 = vld [vmem:[%s640 + $0x20] sm:$0xf]
      %v4987 = vld [vmem:[%s640 + $0x24] sm:$0x1]
      %v4988 = vld [vmem:[%s640 + $0x28] sm:$0xf]
      %v4989 = vld [vmem:[%s640 + $0x2c] sm:$0x1]
      %v4990 = vld [vmem:[%s640 + $0x30] sm:$0xf]
      %v4991 = vld [vmem:[%s640 + $0x34] sm:$0x1]
      %v4992 = vld [vmem:[%s640 + $0x38] sm:$0xf]
      %v4993 = vld [vmem:[%s640 + $0x3c] sm:$0x1]
      %v4995 = vshrl.u32 %v4978, 16
      %v4997 = vrot.slane %v4995, 4
      %v4998 = vshll.u32 %v4978, 16
      %v5000 = vrot.slane %v4998, 5
      %v5001 = vor.u32 %v4997, %v5000
      %v5002 = vrot.slane %v5001, 4
      %v5004 = vshll.u32 %v4979, 16
      %v5006 = vrot.slane %v5004, 5
      %v5007 = vsel %vm1374, %v5002, %v5006
      %v5009 = vshrl.u32 %v4980, 16
      %v5011 = vrot.slane %v5009, 4
      %v5012 = vshll.u32 %v4980, 16
      %v5014 = vrot.slane %v5012, 5
      %v5015 = vor.u32 %v5011, %v5014
      %v5016 = vrot.slane %v5015, 4
      %v5018 = vshll.u32 %v4981, 16
      %v5020 = vrot.slane %v5018, 5
      %v5021 = vsel %vm1374, %v5016, %v5020
      %v5023 = vshrl.u32 %v4982, 16
      %v5025 = vrot.slane %v5023, 4
      %v5026 = vshll.u32 %v4982, 16
      %v5028 = vrot.slane %v5026, 5
      %v5029 = vor.u32 %v5025, %v5028
      %v5030 = vrot.slane %v5029, 4
      %v5032 = vshll.u32 %v4983, 16
      %v5034 = vrot.slane %v5032, 5
      %v5035 = vsel %vm1374, %v5030, %v5034
      %v5037 = vshrl.u32 %v4984, 16
      %v5039 = vrot.slane %v5037, 4
      %v5040 = vshll.u32 %v4984, 16
      %v5042 = vrot.slane %v5040, 5
      %v5043 = vor.u32 %v5039, %v5042
      %v5044 = vrot.slane %v5043, 4
      %v5046 = vshll.u32 %v4985, 16
      %v5048 = vrot.slane %v5046, 5
      %v5049 = vsel %vm1374, %v5044, %v5048
      %v5051 = vshrl.u32 %v4986, 16
      %v5053 = vrot.slane %v5051, 4
      %v5054 = vshll.u32 %v4986, 16
      %v5056 = vrot.slane %v5054, 5
      %v5057 = vor.u32 %v5053, %v5056
      %v5058 = vrot.slane %v5057, 4
      %v5060 = vshll.u32 %v4987, 16
      %v5062 = vrot.slane %v5060, 5
      %v5063 = vsel %vm1374, %v5058, %v5062
      %v5065 = vshrl.u32 %v4988, 16
      %v5067 = vrot.slane %v5065, 4
      %v5068 = vshll.u32 %v4988, 16
      %v5070 = vrot.slane %v5068, 5
      %v5071 = vor.u32 %v5067, %v5070
      %v5072 = vrot.slane %v5071, 4
      %v5074 = vshll.u32 %v4989, 16
      %v5076 = vrot.slane %v5074, 5
      %v5077 = vsel %vm1374, %v5072, %v5076
      %v5079 = vshrl.u32 %v4990, 16
      %v5081 = vrot.slane %v5079, 4
      %v5082 = vshll.u32 %v4990, 16
      %v5084 = vrot.slane %v5082, 5
      %v5085 = vor.u32 %v5081, %v5084
      %v5086 = vrot.slane %v5085, 4
      %v5088 = vshll.u32 %v4991, 16
      %v5090 = vrot.slane %v5088, 5
      %v5091 = vsel %vm1374, %v5086, %v5090
      %v5093 = vshrl.u32 %v4992, 16
      %v5095 = vrot.slane %v5093, 4
      %v5096 = vshll.u32 %v4992, 16
      %v5098 = vrot.slane %v5096, 5
      %v5099 = vor.u32 %v5095, %v5098
      %v5100 = vrot.slane %v5099, 4
      %v5102 = vshll.u32 %v4993, 16
      %v5104 = vrot.slane %v5102, 5
      %v5105 = vsel %vm1374, %v5100, %v5104
      %v5106 = vunpack.c.l.b16 %v5007
      %v5107 = vunpack.c.l.b16 %v5021
      %v5108 = vunpack.c.l.b16 %v5035
      %v5109 = vunpack.c.l.b16 %v5049
      %v5110 = vunpack.c.l.b16 %v5063
      %v5111 = vunpack.c.l.b16 %v5077
      %v5112 = vunpack.c.l.b16 %v5091
      %v5113 = vunpack.c.l.b16 %v5105
      %v5114 = vpack.c.b16 %v5107, %v5106
      %v5115 = vpack.c.b16 %v5109, %v5108
      %v5116 = vpack.c.b16 %v5111, %v5110
      %v5117 = vpack.c.b16 %v5113, %v5112
      %5122 = vst [vmem:[#allocation3 + $0x10] sm:$0xff] %v5114
      %5123 = vst [vmem:[#allocation3 + $0x58] sm:$0xff] %v5115
      %5124 = vst [vmem:[#allocation3 + $0xa0] sm:$0xff] %v5116
      %5125 = vst [vmem:[#allocation3 + $0xe8] sm:$0xff] %v5117
      %v5126 = vld [vmem:[%s1014] sm:$0xf]
      %v5127 = vld [vmem:[%s1014 + $0x8] sm:$0xf]
      %v5128 = vld [vmem:[%s1014 + $0x10] sm:$0xf]
      %v5129 = vld [vmem:[%s1014 + $0x18] sm:$0xf]
      %v5130 = vld [vmem:[%s1014 + $0x20] sm:$0xf]
      %v5131 = vld [vmem:[%s1014 + $0x28] sm:$0xf]
      %v5132 = vld [vmem:[%s1014 + $0x30] sm:$0xf]
      %v5133 = vld [vmem:[%s1014 + $0x38] sm:$0xf]
      %v5142 = vunpack.c.l.b16 %v5126
      %v5143 = vunpack.c.l.b16 %v5127
      %v5144 = vunpack.c.l.b16 %v5128
      %v5145 = vunpack.c.l.b16 %v5129
      %v5146 = vunpack.c.l.b16 %v5130
      %v5147 = vunpack.c.l.b16 %v5131
      %v5148 = vunpack.c.l.b16 %v5132
      %v5149 = vunpack.c.l.b16 %v5133
      %v5150 = vpack.c.b16 %v5143, %v5142
      %v5151 = vpack.c.b16 %v5145, %v5144
      %v5152 = vpack.c.b16 %v5147, %v5146
      %v5153 = vpack.c.b16 %v5149, %v5148
      %5158 = vst [vmem:[#allocation3 + $0x18] sm:$0xff] %v5150
      %5159 = vst [vmem:[#allocation3 + $0x60] sm:$0xff] %v5151
      %5160 = vst [vmem:[#allocation3 + $0xa8] sm:$0xff] %v5152
      %5161 = vst [vmem:[#allocation3 + $0xf0] sm:$0xff] %v5153
      %v5162 = vld [vmem:[%s1003] sm:$0xf]
      %v5163 = vld [vmem:[%s1003 + $0x8] sm:$0xf]
      %v5164 = vld [vmem:[%s1003 + $0x10] sm:$0xf]
      %v5165 = vld [vmem:[%s1003 + $0x18] sm:$0xf]
      %v5166 = vld [vmem:[%s1003 + $0x20] sm:$0xf]
      %v5167 = vld [vmem:[%s1003 + $0x28] sm:$0xf]
      %v5168 = vld [vmem:[%s1003 + $0x30] sm:$0xf]
      %v5169 = vld [vmem:[%s1003 + $0x38] sm:$0xf]
      %v5178 = vunpack.c.l.b16 %v5162
      %v5179 = vunpack.c.l.b16 %v5163
      %v5180 = vunpack.c.l.b16 %v5164
      %v5181 = vunpack.c.l.b16 %v5165
      %v5182 = vunpack.c.l.b16 %v5166
      %v5183 = vunpack.c.l.b16 %v5167
      %v5184 = vunpack.c.l.b16 %v5168
      %v5185 = vunpack.c.l.b16 %v5169
      %v5186 = vpack.c.b16 %v5179, %v5178
      %v5187 = vpack.c.b16 %v5181, %v5180
      %v5188 = vpack.c.b16 %v5183, %v5182
      %v5189 = vpack.c.b16 %v5185, %v5184
      %5194 = vst [vmem:[#allocation3 + $0x20] sm:$0xff] %v5186
      %5195 = vst [vmem:[#allocation3 + $0x68] sm:$0xff] %v5187
      %5196 = vst [vmem:[#allocation3 + $0xb0] sm:$0xff] %v5188
      %5197 = vst [vmem:[#allocation3 + $0xf8] sm:$0xff] %v5189
      %v5198 = vld [vmem:[%s1014] sm:$0xf]
      %v5199 = vld [vmem:[%s1014 + $0x4] sm:$0x1]
      %v5200 = vld [vmem:[%s1014 + $0x8] sm:$0xf]
      %v5201 = vld [vmem:[%s1014 + $0xc] sm:$0x1]
      %v5202 = vld [vmem:[%s1014 + $0x10] sm:$0xf]
      %v5203 = vld [vmem:[%s1014 + $0x14] sm:$0x1]
      %v5204 = vld [vmem:[%s1014 + $0x18] sm:$0xf]
      %v5205 = vld [vmem:[%s1014 + $0x1c] sm:$0x1]
      %v5206 = vld [vmem:[%s1014 + $0x20] sm:$0xf]
      %v5207 = vld [vmem:[%s1014 + $0x24] sm:$0x1]
      %v5208 = vld [vmem:[%s1014 + $0x28] sm:$0xf]
      %v5209 = vld [vmem:[%s1014 + $0x2c] sm:$0x1]
      %v5210 = vld [vmem:[%s1014 + $0x30] sm:$0xf]
      %v5211 = vld [vmem:[%s1014 + $0x34] sm:$0x1]
      %v5212 = vld [vmem:[%s1014 + $0x38] sm:$0xf]
      %v5213 = vld [vmem:[%s1014 + $0x3c] sm:$0x1]
      %v5215 = vshrl.u32 %v5198, 16
      %v5217 = vrot.slane %v5215, 4
      %v5218 = vshll.u32 %v5198, 16
      %v5220 = vrot.slane %v5218, 5
      %v5221 = vor.u32 %v5217, %v5220
      %v5222 = vrot.slane %v5221, 4
      %v5224 = vshll.u32 %v5199, 16
      %v5226 = vrot.slane %v5224, 5
      %v5227 = vsel %vm1374, %v5222, %v5226
      %v5229 = vshrl.u32 %v5200, 16
      %v5231 = vrot.slane %v5229, 4
      %v5232 = vshll.u32 %v5200, 16
      %v5234 = vrot.slane %v5232, 5
      %v5235 = vor.u32 %v5231, %v5234
      %v5236 = vrot.slane %v5235, 4
      %v5238 = vshll.u32 %v5201, 16
      %v5240 = vrot.slane %v5238, 5
      %v5241 = vsel %vm1374, %v5236, %v5240
      %v5243 = vshrl.u32 %v5202, 16
      %v5245 = vrot.slane %v5243, 4
      %v5246 = vshll.u32 %v5202, 16
      %v5248 = vrot.slane %v5246, 5
      %v5249 = vor.u32 %v5245, %v5248
      %v5250 = vrot.slane %v5249, 4
      %v5252 = vshll.u32 %v5203, 16
      %v5254 = vrot.slane %v5252, 5
      %v5255 = vsel %vm1374, %v5250, %v5254
      %v5257 = vshrl.u32 %v5204, 16
      %v5259 = vrot.slane %v5257, 4
      %v5260 = vshll.u32 %v5204, 16
      %v5262 = vrot.slane %v5260, 5
      %v5263 = vor.u32 %v5259, %v5262
      %v5264 = vrot.slane %v5263, 4
      %v5266 = vshll.u32 %v5205, 16
      %v5268 = vrot.slane %v5266, 5
      %v5269 = vsel %vm1374, %v5264, %v5268
      %v5271 = vshrl.u32 %v5206, 16
      %v5273 = vrot.slane %v5271, 4
      %v5274 = vshll.u32 %v5206, 16
      %v5276 = vrot.slane %v5274, 5
      %v5277 = vor.u32 %v5273, %v5276
      %v5278 = vrot.slane %v5277, 4
      %v5280 = vshll.u32 %v5207, 16
      %v5282 = vrot.slane %v5280, 5
      %v5283 = vsel %vm1374, %v5278, %v5282
      %v5285 = vshrl.u32 %v5208, 16
      %v5287 = vrot.slane %v5285, 4
      %v5288 = vshll.u32 %v5208, 16
      %v5290 = vrot.slane %v5288, 5
      %v5291 = vor.u32 %v5287, %v5290
      %v5292 = vrot.slane %v5291, 4
      %v5294 = vshll.u32 %v5209, 16
      %v5296 = vrot.slane %v5294, 5
      %v5297 = vsel %vm1374, %v5292, %v5296
      %v5299 = vshrl.u32 %v5210, 16
      %v5301 = vrot.slane %v5299, 4
      %v5302 = vshll.u32 %v5210, 16
      %v5304 = vrot.slane %v5302, 5
      %v5305 = vor.u32 %v5301, %v5304
      %v5306 = vrot.slane %v5305, 4
      %v5308 = vshll.u32 %v5211, 16
      %v5310 = vrot.slane %v5308, 5
      %v5311 = vsel %vm1374, %v5306, %v5310
      %v5313 = vshrl.u32 %v5212, 16
      %v5315 = vrot.slane %v5313, 4
      %v5316 = vshll.u32 %v5212, 16
      %v5318 = vrot.slane %v5316, 5
      %v5319 = vor.u32 %v5315, %v5318
      %v5320 = vrot.slane %v5319, 4
      %v5322 = vshll.u32 %v5213, 16
      %v5324 = vrot.slane %v5322, 5
      %v5325 = vsel %vm1374, %v5320, %v5324
      %v5326 = vunpack.c.l.b16 %v5227
      %v5327 = vunpack.c.l.b16 %v5241
      %v5328 = vunpack.c.l.b16 %v5255
      %v5329 = vunpack.c.l.b16 %v5269
      %v5330 = vunpack.c.l.b16 %v5283
      %v5331 = vunpack.c.l.b16 %v5297
      %v5332 = vunpack.c.l.b16 %v5311
      %v5333 = vunpack.c.l.b16 %v5325
      %v5334 = vpack.c.b16 %v5327, %v5326
      %v5335 = vpack.c.b16 %v5329, %v5328
      %v5336 = vpack.c.b16 %v5331, %v5330
      %v5337 = vpack.c.b16 %v5333, %v5332
      %5342 = vst [vmem:[#allocation3 + $0x28] sm:$0xff] %v5334
      %5343 = vst [vmem:[#allocation3 + $0x70] sm:$0xff] %v5335
      %5344 = vst [vmem:[#allocation3 + $0xb8] sm:$0xff] %v5336
      %5345 = vst [vmem:[#allocation3 + $0x100] sm:$0xff] %v5337
      %s5346 = scalar_lea.vmem [#allocation2], 152
      %v5347 = vld [vmem:[%s5346] sm:$0xf]
      %v5348 = vld [vmem:[%s5346 + $0x8] sm:$0xf]
      %v5349 = vld [vmem:[%s5346 + $0x10] sm:$0xf]
      %v5350 = vld [vmem:[%s5346 + $0x18] sm:$0xf]
      %v5351 = vld [vmem:[%s5346 + $0x20] sm:$0xf]
      %v5352 = vld [vmem:[%s5346 + $0x28] sm:$0xf]
      %v5353 = vld [vmem:[%s5346 + $0x30] sm:$0xf]
      %v5354 = vld [vmem:[%s5346 + $0x38] sm:$0xf]
      %v5363 = vunpack.c.l.b16 %v5347
      %v5364 = vunpack.c.l.b16 %v5348
      %v5365 = vunpack.c.l.b16 %v5349
      %v5366 = vunpack.c.l.b16 %v5350
      %v5367 = vunpack.c.l.b16 %v5351
      %v5368 = vunpack.c.l.b16 %v5352
      %v5369 = vunpack.c.l.b16 %v5353
      %v5370 = vunpack.c.l.b16 %v5354
      %v5371 = vpack.c.b16 %v5364, %v5363
      %v5372 = vpack.c.b16 %v5366, %v5365
      %v5373 = vpack.c.b16 %v5368, %v5367
      %v5374 = vpack.c.b16 %v5370, %v5369
      %5379 = vst [vmem:[#allocation3 + $0x30] sm:$0xff] %v5371
      %5380 = vst [vmem:[#allocation3 + $0x78] sm:$0xff] %v5372
      %5381 = vst [vmem:[#allocation3 + $0xc0] sm:$0xff] %v5373
      %5382 = vst [vmem:[#allocation3 + $0x108] sm:$0xff] %v5374
      %s5383 = scalar_lea.vmem [#allocation2], 224
      %v5384 = vld [vmem:[%s5383] sm:$0xf]
      %v5385 = vld [vmem:[%s5383 + $0x8] sm:$0xf]
      %v5386 = vld [vmem:[%s5383 + $0x10] sm:$0xf]
      %v5387 = vld [vmem:[%s5383 + $0x18] sm:$0xf]
      %v5388 = vld [vmem:[%s5383 + $0x20] sm:$0xf]
      %v5389 = vld [vmem:[%s5383 + $0x28] sm:$0xf]
      %v5390 = vld [vmem:[%s5383 + $0x30] sm:$0xf]
      %v5391 = vld [vmem:[%s5383 + $0x38] sm:$0xf]
      %v5400 = vunpack.c.l.b16 %v5384
      %v5401 = vunpack.c.l.b16 %v5385
      %v5402 = vunpack.c.l.b16 %v5386
      %v5403 = vunpack.c.l.b16 %v5387
      %v5404 = vunpack.c.l.b16 %v5388
      %v5405 = vunpack.c.l.b16 %v5389
      %v5406 = vunpack.c.l.b16 %v5390
      %v5407 = vunpack.c.l.b16 %v5391
      %v5408 = vpack.c.b16 %v5401, %v5400
      %v5409 = vpack.c.b16 %v5403, %v5402
      %v5410 = vpack.c.b16 %v5405, %v5404
      %v5411 = vpack.c.b16 %v5407, %v5406
      %5416 = vst [vmem:[#allocation3 + $0x38] sm:$0xff] %v5408
      %5417 = vst [vmem:[#allocation3 + $0x80] sm:$0xff] %v5409
      %5418 = vst [vmem:[#allocation3 + $0xc8] sm:$0xff] %v5410
      %5419 = vst [vmem:[#allocation3 + $0x110] sm:$0xff] %v5411
      %v5420 = vld [vmem:[%s5346] sm:$0xf]
      %v5421 = vld [vmem:[%s5346 + $0x4] sm:$0x1]
      %v5422 = vld [vmem:[%s5346 + $0x8] sm:$0xf]
      %v5423 = vld [vmem:[%s5346 + $0xc] sm:$0x1]
      %v5424 = vld [vmem:[%s5346 + $0x10] sm:$0xf]
      %v5425 = vld [vmem:[%s5346 + $0x14] sm:$0x1]
      %v5426 = vld [vmem:[%s5346 + $0x18] sm:$0xf]
      %v5427 = vld [vmem:[%s5346 + $0x1c] sm:$0x1]
      %v5428 = vld [vmem:[%s5346 + $0x20] sm:$0xf]
      %v5429 = vld [vmem:[%s5346 + $0x24] sm:$0x1]
      %v5430 = vld [vmem:[%s5346 + $0x28] sm:$0xf]
      %v5431 = vld [vmem:[%s5346 + $0x2c] sm:$0x1]
      %v5432 = vld [vmem:[%s5346 + $0x30] sm:$0xf]
      %v5433 = vld [vmem:[%s5346 + $0x34] sm:$0x1]
      %v5434 = vld [vmem:[%s5346 + $0x38] sm:$0xf]
      %v5435 = vld [vmem:[%s5346 + $0x3c] sm:$0x1]
      %v5437 = vshrl.u32 %v5420, 16
      %v5439 = vrot.slane %v5437, 4
      %v5440 = vshll.u32 %v5420, 16
      %v5442 = vrot.slane %v5440, 5
      %v5443 = vor.u32 %v5439, %v5442
      %v5444 = vrot.slane %v5443, 4
      %v5446 = vshll.u32 %v5421, 16
      %v5448 = vrot.slane %v5446, 5
      %v5449 = vsel %vm1374, %v5444, %v5448
      %v5451 = vshrl.u32 %v5422, 16
      %v5453 = vrot.slane %v5451, 4
      %v5454 = vshll.u32 %v5422, 16
      %v5456 = vrot.slane %v5454, 5
      %v5457 = vor.u32 %v5453, %v5456
      %v5458 = vrot.slane %v5457, 4
      %v5460 = vshll.u32 %v5423, 16
      %v5462 = vrot.slane %v5460, 5
      %v5463 = vsel %vm1374, %v5458, %v5462
      %v5465 = vshrl.u32 %v5424, 16
      %v5467 = vrot.slane %v5465, 4
      %v5468 = vshll.u32 %v5424, 16
      %v5470 = vrot.slane %v5468, 5
      %v5471 = vor.u32 %v5467, %v5470
      %v5472 = vrot.slane %v5471, 4
      %v5474 = vshll.u32 %v5425, 16
      %v5476 = vrot.slane %v5474, 5
      %v5477 = vsel %vm1374, %v5472, %v5476
      %v5479 = vshrl.u32 %v5426, 16
      %v5481 = vrot.slane %v5479, 4
      %v5482 = vshll.u32 %v5426, 16
      %v5484 = vrot.slane %v5482, 5
      %v5485 = vor.u32 %v5481, %v5484
      %v5486 = vrot.slane %v5485, 4
      %v5488 = vshll.u32 %v5427, 16
      %v5490 = vrot.slane %v5488, 5
      %v5491 = vsel %vm1374, %v5486, %v5490
      %v5493 = vshrl.u32 %v5428, 16
      %v5495 = vrot.slane %v5493, 4
      %v5496 = vshll.u32 %v5428, 16
      %v5498 = vrot.slane %v5496, 5
      %v5499 = vor.u32 %v5495, %v5498
      %v5500 = vrot.slane %v5499, 4
      %v5502 = vshll.u32 %v5429, 16
      %v5504 = vrot.slane %v5502, 5
      %v5505 = vsel %vm1374, %v5500, %v5504
      %v5507 = vshrl.u32 %v5430, 16
      %v5509 = vrot.slane %v5507, 4
      %v5510 = vshll.u32 %v5430, 16
      %v5512 = vrot.slane %v5510, 5
      %v5513 = vor.u32 %v5509, %v5512
      %v5514 = vrot.slane %v5513, 4
      %v5516 = vshll.u32 %v5431, 16
      %v5518 = vrot.slane %v5516, 5
      %v5519 = vsel %vm1374, %v5514, %v5518
      %v5521 = vshrl.u32 %v5432, 16
      %v5523 = vrot.slane %v5521, 4
      %v5524 = vshll.u32 %v5432, 16
      %v5526 = vrot.slane %v5524, 5
      %v5527 = vor.u32 %v5523, %v5526
      %v5528 = vrot.slane %v5527, 4
      %v5530 = vshll.u32 %v5433, 16
      %v5532 = vrot.slane %v5530, 5
      %v5533 = vsel %vm1374, %v5528, %v5532
      %v5535 = vshrl.u32 %v5434, 16
      %v5537 = vrot.slane %v5535, 4
      %v5538 = vshll.u32 %v5434, 16
      %v5540 = vrot.slane %v5538, 5
      %v5541 = vor.u32 %v5537, %v5540
      %v5542 = vrot.slane %v5541, 4
      %v5544 = vshll.u32 %v5435, 16
      %v5546 = vrot.slane %v5544, 5
      %v5547 = vsel %vm1374, %v5542, %v5546
      %v5548 = vunpack.c.l.b16 %v5449
      %v5549 = vunpack.c.l.b16 %v5463
      %v5550 = vunpack.c.l.b16 %v5477
      %v5551 = vunpack.c.l.b16 %v5491
      %v5552 = vunpack.c.l.b16 %v5505
      %v5553 = vunpack.c.l.b16 %v5519
      %v5554 = vunpack.c.l.b16 %v5533
      %v5555 = vunpack.c.l.b16 %v5547
      %v5556 = vpack.c.b16 %v5549, %v5548
      %v5557 = vpack.c.b16 %v5551, %v5550
      %v5558 = vpack.c.b16 %v5553, %v5552
      %v5559 = vpack.c.b16 %v5555, %v5554
      %5564 = vst [vmem:[#allocation3 + $0x40] sm:$0xff] %v5556
      %5565 = vst [vmem:[#allocation3 + $0x88] sm:$0xff] %v5557
      %5566 = vst [vmem:[#allocation3 + $0xd0] sm:$0xff] %v5558
      %5567 = vst [vmem:[#allocation3 + $0x118] sm:$0xff] %v5559
      %v5568 = vld [vmem:[#allocation3] sm:$0xff]
      %v5569 = vld [vmem:[#allocation3 + $0x8] sm:$0xff]
      %v5570 = vld [vmem:[#allocation3 + $0x10] sm:$0xff]
      %v5571 = vld [vmem:[#allocation3 + $0x18] sm:$0xff]
      %v5572 = vld [vmem:[#allocation3 + $0x20] sm:$0xff]
      %v5573 = vld [vmem:[#allocation3 + $0x28] sm:$0xff]
      %v5574 = vld [vmem:[#allocation3 + $0x30] sm:$0xff]
      %v5575 = vld [vmem:[#allocation3 + $0x38] sm:$0xff]
      %v5576 = vld [vmem:[#allocation3 + $0x40] sm:$0xff]
      %v5577 = vld [vmem:[#allocation3 + $0x48] sm:$0xff]
      %v5578 = vld [vmem:[#allocation3 + $0x50] sm:$0xff]
      %v5579 = vld [vmem:[#allocation3 + $0x58] sm:$0xff]
      %v5580 = vld [vmem:[#allocation3 + $0x60] sm:$0xff]
      %v5581 = vld [vmem:[#allocation3 + $0x68] sm:$0xff]
      %v5582 = vld [vmem:[#allocation3 + $0x70] sm:$0xff]
      %v5583 = vld [vmem:[#allocation3 + $0x78] sm:$0xff]
      %v5584 = vld [vmem:[#allocation3 + $0x80] sm:$0xff]
      %v5585 = vld [vmem:[#allocation3 + $0x88] sm:$0xff]
      %v5586 = vld [vmem:[#allocation3 + $0x90] sm:$0xff]
      %v5587 = vld [vmem:[#allocation3 + $0x98] sm:$0xff]
      %v5588 = vld [vmem:[#allocation3 + $0xa0] sm:$0xff]
      %v5589 = vld [vmem:[#allocation3 + $0xa8] sm:$0xff]
      %v5590 = vld [vmem:[#allocation3 + $0xb0] sm:$0xff]
      %v5591 = vld [vmem:[#allocation3 + $0xb8] sm:$0xff]
      %v5592 = vld [vmem:[#allocation3 + $0xc0] sm:$0xff]
      %v5593 = vld [vmem:[#allocation3 + $0xc8] sm:$0xff]
      %v5594 = vld [vmem:[#allocation3 + $0xd0] sm:$0xff]
      %v5595 = vld [vmem:[#allocation3 + $0xd8] sm:$0xff]
      %v5596 = vld [vmem:[#allocation3 + $0xe0] sm:$0xff]
      %v5597 = vld [vmem:[#allocation3 + $0xe8] sm:$0xff]
      %v5598 = vld [vmem:[#allocation3 + $0xf0] sm:$0xff]
      %v5599 = vld [vmem:[#allocation3 + $0xf8] sm:$0xff]
      %v5600 = vld [vmem:[#allocation3 + $0x100] sm:$0xff]
      %v5601 = vld [vmem:[#allocation3 + $0x108] sm:$0xff]
      %v5602 = vld [vmem:[#allocation3 + $0x110] sm:$0xff]
      %v5603 = vld [vmem:[#allocation3 + $0x118] sm:$0xff]
      %v5604 = vld [vmem:[%s2] sm:$0xf]
      %v5605 = vld [vmem:[%s2 + $0x4] sm:$0xf]
      %v5606 = vld [vmem:[%s2 + $0x8] sm:$0xf]
      %v5607 = vld [vmem:[%s2 + $0xc] sm:$0xf]
      %v5608 = vld [vmem:[%s2 + $0x10] sm:$0xf]
      %v5609 = vld [vmem:[%s2 + $0x14] sm:$0xf]
      %v5610 = vld [vmem:[%s2 + $0x18] sm:$0xf]
      %v5611 = vld [vmem:[%s2 + $0x1c] sm:$0xf]
      %v5612 = vld [vmem:[%s2 + $0x20] sm:$0xf]
      %v5613 = vld [vmem:[%s2 + $0x24] sm:$0xf]
      %v5614 = vld [vmem:[%s2 + $0x28] sm:$0xf]
      %v5615 = vld [vmem:[%s2 + $0x2c] sm:$0xf]
      %v5616 = vld [vmem:[%s2 + $0x30] sm:$0xf]
      %v5617 = vld [vmem:[%s2 + $0x34] sm:$0xf]
      %v5618 = vld [vmem:[%s2 + $0x38] sm:$0xf]
      %v5619 = vld [vmem:[%s2 + $0x3c] sm:$0xf]
      %v5620 = vld [vmem:[%s2 + $0x40] sm:$0xf]
      %v5621 = vld [vmem:[%s2 + $0x44] sm:$0xf]
      %v5622 = vld [vmem:[%s2 + $0x48] sm:$0xf]
      %v5623 = vld [vmem:[%s2 + $0x4c] sm:$0xf]
      %v5624 = vld [vmem:[%s2 + $0x50] sm:$0xf]
      %v5625 = vld [vmem:[%s2 + $0x54] sm:$0xf]
      %v5626 = vld [vmem:[%s2 + $0x58] sm:$0xf]
      %v5627 = vld [vmem:[%s2 + $0x5c] sm:$0xf]
      %v5628 = vld [vmem:[%s2 + $0x60] sm:$0xf]
      %v5629 = vld [vmem:[%s2 + $0x64] sm:$0xf]
      %v5630 = vld [vmem:[%s2 + $0x68] sm:$0xf]
      %v5631 = vld [vmem:[%s2 + $0x6c] sm:$0xf]
      %v5632 = vld [vmem:[%s2 + $0x70] sm:$0xf]
      %v5633 = vld [vmem:[%s2 + $0x74] sm:$0xf]
      %v5634 = vld [vmem:[%s2 + $0x78] sm:$0xf]
      %v5635 = vld [vmem:[%s2 + $0x7c] sm:$0xf]
      %v5636 = vld [vmem:[%s2 + $0x80] sm:$0xf]
      %v5637 = vld [vmem:[%s2 + $0x84] sm:$0xf]
      %v5638 = vld [vmem:[%s2 + $0x88] sm:$0xf]
      %v5639 = vld [vmem:[%s2 + $0x8c] sm:$0xf]
      %v5640 = vld [vmem:[%s2 + $0x90] sm:$0xf]
      %v5641 = vld [vmem:[%s2 + $0x94] sm:$0xf]
      %v5642 = vld [vmem:[%s2 + $0x98] sm:$0xf]
      %v5643 = vld [vmem:[%s2 + $0x9c] sm:$0xf]
      %v5644 = vld [vmem:[%s2 + $0xa0] sm:$0xf]
      %v5645 = vld [vmem:[%s2 + $0xa4] sm:$0xf]
      %v5646 = vld [vmem:[%s2 + $0xa8] sm:$0xf]
      %v5647 = vld [vmem:[%s2 + $0xac] sm:$0xf]
      %v5648 = vld [vmem:[%s2 + $0xb0] sm:$0xf]
      %v5649 = vld [vmem:[%s2 + $0xb4] sm:$0xf]
      %v5650 = vld [vmem:[%s2 + $0xb8] sm:$0xf]
      %v5651 = vld [vmem:[%s2 + $0xbc] sm:$0xf]
      %v5652 = vld [vmem:[%s2 + $0xc0] sm:$0xf]
      %v5653 = vld [vmem:[%s2 + $0xc4] sm:$0xf]
      %v5654 = vld [vmem:[%s2 + $0xc8] sm:$0xf]
      %v5655 = vld [vmem:[%s2 + $0xcc] sm:$0xf]
      %v5656 = vld [vmem:[%s2 + $0xd0] sm:$0xf]
      %v5657 = vld [vmem:[%s2 + $0xd4] sm:$0xf]
      %v5658 = vld [vmem:[%s2 + $0xd8] sm:$0xf]
      %v5659 = vld [vmem:[%s2 + $0xdc] sm:$0xf]
      %v5660 = vld [vmem:[%s2 + $0xe0] sm:$0xf]
      %v5661 = vld [vmem:[%s2 + $0xe4] sm:$0xf]
      %v5662 = vld [vmem:[%s2 + $0xe8] sm:$0xf]
      %v5663 = vld [vmem:[%s2 + $0xec] sm:$0xf]
      %v5664 = vld [vmem:[%s2 + $0xf0] sm:$0xf]
      %v5665 = vld [vmem:[%s2 + $0xf4] sm:$0xf]
      %v5666 = vld [vmem:[%s2 + $0xf8] sm:$0xf]
      %v5667 = vld [vmem:[%s2 + $0xfc] sm:$0xf]
      %v5668 = vld [vmem:[%s2 + $0x100] sm:$0xf]
      %v5669 = vld [vmem:[%s2 + $0x104] sm:$0xf]
      %v5670 = vld [vmem:[%s2 + $0x108] sm:$0xf]
      %v5671 = vld [vmem:[%s2 + $0x10c] sm:$0xf]
      %v5672 = vld [vmem:[%s2 + $0x110] sm:$0xf]
      %v5673 = vld [vmem:[%s2 + $0x114] sm:$0xf]
      %v5674 = vld [vmem:[%s2 + $0x118] sm:$0xf]
      %v5675 = vld [vmem:[%s2 + $0x11c] sm:$0xf]
      %v5676 = vld [vmem:[%s2 + $0x120] sm:$0xf]
      %v5677 = vld [vmem:[%s2 + $0x124] sm:$0xf]
      %v5678 = vld [vmem:[%s2 + $0x128] sm:$0xf]
      %v5679 = vld [vmem:[%s2 + $0x12c] sm:$0xf]
      %v5680 = vld [vmem:[%s2 + $0x130] sm:$0xf]
      %v5681 = vld [vmem:[%s2 + $0x134] sm:$0xf]
      %v5682 = vld [vmem:[%s2 + $0x138] sm:$0xf]
      %v5683 = vld [vmem:[%s2 + $0x13c] sm:$0xf]
      %v5684 = vld [vmem:[%s2 + $0x140] sm:$0xf]
      %v5685 = vld [vmem:[%s2 + $0x144] sm:$0xf]
      %v5686 = vld [vmem:[%s2 + $0x148] sm:$0xf]
      %v5687 = vld [vmem:[%s2 + $0x14c] sm:$0xf]
      %v5688 = vld [vmem:[%s2 + $0x150] sm:$0xf]
      %v5689 = vld [vmem:[%s2 + $0x154] sm:$0xf]
      %v5690 = vld [vmem:[%s2 + $0x158] sm:$0xf]
      %v5691 = vld [vmem:[%s2 + $0x15c] sm:$0xf]
      %v5692 = vld [vmem:[%s2 + $0x160] sm:$0xf]
      %v5693 = vld [vmem:[%s2 + $0x164] sm:$0xf]
      %v5694 = vld [vmem:[%s2 + $0x168] sm:$0xf]
      %v5695 = vld [vmem:[%s2 + $0x16c] sm:$0xf]
      %v5696 = vld [vmem:[%s2 + $0x170] sm:$0xf]
      %v5697 = vld [vmem:[%s2 + $0x174] sm:$0xf]
      %v5698 = vld [vmem:[%s2 + $0x178] sm:$0xf]
      %v5699 = vld [vmem:[%s2 + $0x17c] sm:$0xf]
      %v5700 = vld [vmem:[%s2 + $0x180] sm:$0xf]
      %v5701 = vld [vmem:[%s2 + $0x184] sm:$0xf]
      %v5702 = vld [vmem:[%s2 + $0x188] sm:$0xf]
      %v5703 = vld [vmem:[%s2 + $0x18c] sm:$0xf]
      %v5704 = vld [vmem:[%s2 + $0x190] sm:$0xf]
      %v5705 = vld [vmem:[%s2 + $0x194] sm:$0xf]
      %v5706 = vld [vmem:[%s2 + $0x198] sm:$0xf]
      %v5707 = vld [vmem:[%s2 + $0x19c] sm:$0xf]
      %v5708 = vld [vmem:[%s2 + $0x1a0] sm:$0xf]
      %v5709 = vld [vmem:[%s2 + $0x1a4] sm:$0xf]
      %v5710 = vld [vmem:[%s2 + $0x1a8] sm:$0xf]
      %v5711 = vld [vmem:[%s2 + $0x1ac] sm:$0xf]
      %v5712 = vld [vmem:[%s2 + $0x1b0] sm:$0xf]
      %v5713 = vld [vmem:[%s2 + $0x1b4] sm:$0xf]
      %v5714 = vld [vmem:[%s2 + $0x1b8] sm:$0xf]
      %v5715 = vld [vmem:[%s2 + $0x1bc] sm:$0xf]
      %v5716 = vld [vmem:[%s2 + $0x1c0] sm:$0xf]
      %v5717 = vld [vmem:[%s2 + $0x1c4] sm:$0xf]
      %v5718 = vld [vmem:[%s2 + $0x1c8] sm:$0xf]
      %v5719 = vld [vmem:[%s2 + $0x1cc] sm:$0xf]
      %v5720 = vld [vmem:[%s2 + $0x1d0] sm:$0xf]
      %v5721 = vld [vmem:[%s2 + $0x1d4] sm:$0xf]
      %v5722 = vld [vmem:[%s2 + $0x1d8] sm:$0xf]
      %v5723 = vld [vmem:[%s2 + $0x1dc] sm:$0xf]
      %v5724 = vld [vmem:[%s2 + $0x1e0] sm:$0xf]
      %v5725 = vld [vmem:[%s2 + $0x1e4] sm:$0xf]
      %v5726 = vld [vmem:[%s2 + $0x1e8] sm:$0xf]
      %v5727 = vld [vmem:[%s2 + $0x1ec] sm:$0xf]
      %v5728 = vld [vmem:[%s2 + $0x1f0] sm:$0xf]
      %v5729 = vld [vmem:[%s2 + $0x1f4] sm:$0xf]
      %v5730 = vld [vmem:[%s2 + $0x1f8] sm:$0xf]
      %v5731 = vld [vmem:[%s2 + $0x1fc] sm:$0xf]
      %v5732 = vld [vmem:[%s2 + $0x200] sm:$0xf]
      %v5733 = vld [vmem:[%s2 + $0x204] sm:$0xf]
      %v5734 = vld [vmem:[%s2 + $0x208] sm:$0xf]
      %v5735 = vld [vmem:[%s2 + $0x20c] sm:$0xf]
      %v5736 = vld [vmem:[%s2 + $0x210] sm:$0xf]
      %v5737 = vld [vmem:[%s2 + $0x214] sm:$0xf]
      %v5738 = vld [vmem:[%s2 + $0x218] sm:$0xf]
      %v5739 = vld [vmem:[%s2 + $0x21c] sm:$0xf]
      %v5740 = vld [vmem:[%s2 + $0x220] sm:$0xf]
      %v5741 = vld [vmem:[%s2 + $0x224] sm:$0xf]
      %v5742 = vld [vmem:[%s2 + $0x228] sm:$0xf]
      %v5743 = vld [vmem:[%s2 + $0x22c] sm:$0xf]
      %v5744 = vld [vmem:[%s2 + $0x230] sm:$0xf]
      %v5745 = vld [vmem:[%s2 + $0x234] sm:$0xf]
      %v5746 = vld [vmem:[%s2 + $0x238] sm:$0xf]
      %v5747 = vld [vmem:[%s2 + $0x23c] sm:$0xf]
      %v5892 = vunpack.c.l.b16 %v5604
      %v5893 = vunpack.c.l.b16 %v5605
      %v5894 = vunpack.c.l.b16 %v5606
      %v5895 = vunpack.c.l.b16 %v5607
      %v5896 = vunpack.c.l.b16 %v5608
      %v5897 = vunpack.c.l.b16 %v5609
      %v5898 = vunpack.c.l.b16 %v5610
      %v5899 = vunpack.c.l.b16 %v5611
      %v5900 = vunpack.c.l.b16 %v5612
      %v5901 = vunpack.c.l.b16 %v5613
      %v5902 = vunpack.c.l.b16 %v5614
      %v5903 = vunpack.c.l.b16 %v5615
      %v5904 = vunpack.c.l.b16 %v5616
      %v5905 = vunpack.c.l.b16 %v5617
      %v5906 = vunpack.c.l.b16 %v5618
      %v5907 = vunpack.c.l.b16 %v5619
      %v5908 = vunpack.c.l.b16 %v5620
      %v5909 = vunpack.c.l.b16 %v5621
      %v5910 = vunpack.c.l.b16 %v5622
      %v5911 = vunpack.c.l.b16 %v5623
      %v5912 = vunpack.c.l.b16 %v5624
      %v5913 = vunpack.c.l.b16 %v5625
      %v5914 = vunpack.c.l.b16 %v5626
      %v5915 = vunpack.c.l.b16 %v5627
      %v5916 = vunpack.c.l.b16 %v5628
      %v5917 = vunpack.c.l.b16 %v5629
      %v5918 = vunpack.c.l.b16 %v5630
      %v5919 = vunpack.c.l.b16 %v5631
      %v5920 = vunpack.c.l.b16 %v5632
      %v5921 = vunpack.c.l.b16 %v5633
      %v5922 = vunpack.c.l.b16 %v5634
      %v5923 = vunpack.c.l.b16 %v5635
      %v5924 = vunpack.c.l.b16 %v5636
      %v5925 = vunpack.c.l.b16 %v5637
      %v5926 = vunpack.c.l.b16 %v5638
      %v5927 = vunpack.c.l.b16 %v5639
      %v5928 = vunpack.c.l.b16 %v5640
      %v5929 = vunpack.c.l.b16 %v5641
      %v5930 = vunpack.c.l.b16 %v5642
      %v5931 = vunpack.c.l.b16 %v5643
      %v5932 = vunpack.c.l.b16 %v5644
      %v5933 = vunpack.c.l.b16 %v5645
      %v5934 = vunpack.c.l.b16 %v5646
      %v5935 = vunpack.c.l.b16 %v5647
      %v5936 = vunpack.c.l.b16 %v5648
      %v5937 = vunpack.c.l.b16 %v5649
      %v5938 = vunpack.c.l.b16 %v5650
      %v5939 = vunpack.c.l.b16 %v5651
      %v5940 = vunpack.c.l.b16 %v5652
      %v5941 = vunpack.c.l.b16 %v5653
      %v5942 = vunpack.c.l.b16 %v5654
      %v5943 = vunpack.c.l.b16 %v5655
      %v5944 = vunpack.c.l.b16 %v5656
      %v5945 = vunpack.c.l.b16 %v5657
      %v5946 = vunpack.c.l.b16 %v5658
      %v5947 = vunpack.c.l.b16 %v5659
      %v5948 = vunpack.c.l.b16 %v5660
      %v5949 = vunpack.c.l.b16 %v5661
      %v5950 = vunpack.c.l.b16 %v5662
      %v5951 = vunpack.c.l.b16 %v5663
      %v5952 = vunpack.c.l.b16 %v5664
      %v5953 = vunpack.c.l.b16 %v5665
      %v5954 = vunpack.c.l.b16 %v5666
      %v5955 = vunpack.c.l.b16 %v5667
      %v5956 = vunpack.c.l.b16 %v5668
      %v5957 = vunpack.c.l.b16 %v5669
      %v5958 = vunpack.c.l.b16 %v5670
      %v5959 = vunpack.c.l.b16 %v5671
      %v5960 = vunpack.c.l.b16 %v5672
      %v5961 = vunpack.c.l.b16 %v5673
      %v5962 = vunpack.c.l.b16 %v5674
      %v5963 = vunpack.c.l.b16 %v5675
      %v5964 = vunpack.c.l.b16 %v5676
      %v5965 = vunpack.c.l.b16 %v5677
      %v5966 = vunpack.c.l.b16 %v5678
      %v5967 = vunpack.c.l.b16 %v5679
      %v5968 = vunpack.c.l.b16 %v5680
      %v5969 = vunpack.c.l.b16 %v5681
      %v5970 = vunpack.c.l.b16 %v5682
      %v5971 = vunpack.c.l.b16 %v5683
      %v5972 = vunpack.c.l.b16 %v5684
      %v5973 = vunpack.c.l.b16 %v5685
      %v5974 = vunpack.c.l.b16 %v5686
      %v5975 = vunpack.c.l.b16 %v5687
      %v5976 = vunpack.c.l.b16 %v5688
      %v5977 = vunpack.c.l.b16 %v5689
      %v5978 = vunpack.c.l.b16 %v5690
      %v5979 = vunpack.c.l.b16 %v5691
      %v5980 = vunpack.c.l.b16 %v5692
      %v5981 = vunpack.c.l.b16 %v5693
      %v5982 = vunpack.c.l.b16 %v5694
      %v5983 = vunpack.c.l.b16 %v5695
      %v5984 = vunpack.c.l.b16 %v5696
      %v5985 = vunpack.c.l.b16 %v5697
      %v5986 = vunpack.c.l.b16 %v5698
      %v5987 = vunpack.c.l.b16 %v5699
      %v5988 = vunpack.c.l.b16 %v5700
      %v5989 = vunpack.c.l.b16 %v5701
      %v5990 = vunpack.c.l.b16 %v5702
      %v5991 = vunpack.c.l.b16 %v5703
      %v5992 = vunpack.c.l.b16 %v5704
      %v5993 = vunpack.c.l.b16 %v5705
      %v5994 = vunpack.c.l.b16 %v5706
      %v5995 = vunpack.c.l.b16 %v5707
      %v5996 = vunpack.c.l.b16 %v5708
      %v5997 = vunpack.c.l.b16 %v5709
      %v5998 = vunpack.c.l.b16 %v5710
      %v5999 = vunpack.c.l.b16 %v5711
      %v6000 = vunpack.c.l.b16 %v5712
      %v6001 = vunpack.c.l.b16 %v5713
      %v6002 = vunpack.c.l.b16 %v5714
      %v6003 = vunpack.c.l.b16 %v5715
      %v6004 = vunpack.c.l.b16 %v5716
      %v6005 = vunpack.c.l.b16 %v5717
      %v6006 = vunpack.c.l.b16 %v5718
      %v6007 = vunpack.c.l.b16 %v5719
      %v6008 = vunpack.c.l.b16 %v5720
      %v6009 = vunpack.c.l.b16 %v5721
      %v6010 = vunpack.c.l.b16 %v5722
      %v6011 = vunpack.c.l.b16 %v5723
      %v6012 = vunpack.c.l.b16 %v5724
      %v6013 = vunpack.c.l.b16 %v5725
      %v6014 = vunpack.c.l.b16 %v5726
      %v6015 = vunpack.c.l.b16 %v5727
      %v6016 = vunpack.c.l.b16 %v5728
      %v6017 = vunpack.c.l.b16 %v5729
      %v6018 = vunpack.c.l.b16 %v5730
      %v6019 = vunpack.c.l.b16 %v5731
      %v6020 = vunpack.c.l.b16 %v5732
      %v6021 = vunpack.c.l.b16 %v5733
      %v6022 = vunpack.c.l.b16 %v5734
      %v6023 = vunpack.c.l.b16 %v5735
      %v6024 = vunpack.c.l.b16 %v5736
      %v6025 = vunpack.c.l.b16 %v5737
      %v6026 = vunpack.c.l.b16 %v5738
      %v6027 = vunpack.c.l.b16 %v5739
      %v6028 = vunpack.c.l.b16 %v5740
      %v6029 = vunpack.c.l.b16 %v5741
      %v6030 = vunpack.c.l.b16 %v5742
      %v6031 = vunpack.c.l.b16 %v5743
      %v6032 = vunpack.c.l.b16 %v5744
      %v6033 = vunpack.c.l.b16 %v5745
      %v6034 = vunpack.c.l.b16 %v5746
      %v6035 = vunpack.c.l.b16 %v5747
      %v6036 = vpack.c.b16 %v5893, %v5892
      %v6037 = vpack.c.b16 %v5895, %v5894
      %v6038 = vpack.c.b16 %v5897, %v5896
      %v6039 = vpack.c.b16 %v5899, %v5898
      %v6040 = vpack.c.b16 %v5901, %v5900
      %v6041 = vpack.c.b16 %v5903, %v5902
      %v6042 = vpack.c.b16 %v5905, %v5904
      %v6043 = vpack.c.b16 %v5907, %v5906
      %v6044 = vpack.c.b16 %v5909, %v5908
      %v6045 = vpack.c.b16 %v5911, %v5910
      %v6046 = vpack.c.b16 %v5913, %v5912
      %v6047 = vpack.c.b16 %v5915, %v5914
      %v6048 = vpack.c.b16 %v5917, %v5916
      %v6049 = vpack.c.b16 %v5919, %v5918
      %v6050 = vpack.c.b16 %v5921, %v5920
      %v6051 = vpack.c.b16 %v5923, %v5922
      %v6052 = vpack.c.b16 %v5925, %v5924
      %v6053 = vpack.c.b16 %v5927, %v5926
      %v6054 = vpack.c.b16 %v5929, %v5928
      %v6055 = vpack.c.b16 %v5931, %v5930
      %v6056 = vpack.c.b16 %v5933, %v5932
      %v6057 = vpack.c.b16 %v5935, %v5934
      %v6058 = vpack.c.b16 %v5937, %v5936
      %v6059 = vpack.c.b16 %v5939, %v5938
      %v6060 = vpack.c.b16 %v5941, %v5940
      %v6061 = vpack.c.b16 %v5943, %v5942
      %v6062 = vpack.c.b16 %v5945, %v5944
      %v6063 = vpack.c.b16 %v5947, %v5946
      %v6064 = vpack.c.b16 %v5949, %v5948
      %v6065 = vpack.c.b16 %v5951, %v5950
      %v6066 = vpack.c.b16 %v5953, %v5952
      %v6067 = vpack.c.b16 %v5955, %v5954
      %v6068 = vpack.c.b16 %v5957, %v5956
      %v6069 = vpack.c.b16 %v5959, %v5958
      %v6070 = vpack.c.b16 %v5961, %v5960
      %v6071 = vpack.c.b16 %v5963, %v5962
      %v6072 = vpack.c.b16 %v5965, %v5964
      %v6073 = vpack.c.b16 %v5967, %v5966
      %v6074 = vpack.c.b16 %v5969, %v5968
      %v6075 = vpack.c.b16 %v5971, %v5970
      %v6076 = vpack.c.b16 %v5973, %v5972
      %v6077 = vpack.c.b16 %v5975, %v5974
      %v6078 = vpack.c.b16 %v5977, %v5976
      %v6079 = vpack.c.b16 %v5979, %v5978
      %v6080 = vpack.c.b16 %v5981, %v5980
      %v6081 = vpack.c.b16 %v5983, %v5982
      %v6082 = vpack.c.b16 %v5985, %v5984
      %v6083 = vpack.c.b16 %v5987, %v5986
      %v6084 = vpack.c.b16 %v5989, %v5988
      %v6085 = vpack.c.b16 %v5991, %v5990
      %v6086 = vpack.c.b16 %v5993, %v5992
      %v6087 = vpack.c.b16 %v5995, %v5994
      %v6088 = vpack.c.b16 %v5997, %v5996
      %v6089 = vpack.c.b16 %v5999, %v5998
      %v6090 = vpack.c.b16 %v6001, %v6000
      %v6091 = vpack.c.b16 %v6003, %v6002
      %v6092 = vpack.c.b16 %v6005, %v6004
      %v6093 = vpack.c.b16 %v6007, %v6006
      %v6094 = vpack.c.b16 %v6009, %v6008
      %v6095 = vpack.c.b16 %v6011, %v6010
      %v6096 = vpack.c.b16 %v6013, %v6012
      %v6097 = vpack.c.b16 %v6015, %v6014
      %v6098 = vpack.c.b16 %v6017, %v6016
      %v6099 = vpack.c.b16 %v6019, %v6018
      %v6100 = vpack.c.b16 %v6021, %v6020
      %v6101 = vpack.c.b16 %v6023, %v6022
      %v6102 = vpack.c.b16 %v6025, %v6024
      %v6103 = vpack.c.b16 %v6027, %v6026
      %v6104 = vpack.c.b16 %v6029, %v6028
      %v6105 = vpack.c.b16 %v6031, %v6030
      %v6106 = vpack.c.b16 %v6033, %v6032
      %v6107 = vpack.c.b16 %v6035, %v6034
      %6180 = vmatprep.subr.bf16.mxu0 0
      %6181 = vmatpush1.bf16.msra.mxu0 %v6036
      %6182 = vmatprep.subr.bf16.mxu0 0
      %6183 = vmatpush1.bf16.msra.mxu0 %v6037
      %6184 = vmatprep.subr.bf16.mxu0 0
      %6185 = vmatpush1.bf16.msra.mxu0 %v6038
      %6186 = vmatprep.subr.bf16.mxu0 0
      %6187 = vmatpush1.bf16.msra.mxu0 %v6039
      %6188 = vmatprep.subr.bf16.mxu0 0
      %6189 = vmatpush1.bf16.msra.mxu0 %v6040
      %6190 = vmatprep.subr.bf16.mxu0 0
      %6191 = vmatpush1.bf16.msra.mxu0 %v6041
      %6192 = vmatprep.subr.bf16.mxu0 0
      %6193 = vmatpush1.bf16.msra.mxu0 %v6042
      %6194 = vmatprep.subr.bf16.mxu0 0
      %6195 = vmatpush1.bf16.msra.mxu0 %v6043
      %6196 = vmatprep.subr.bf16.mxu0 0
      %6197 = vmatpush1.bf16.msra.mxu0 %v6044
      %6198 = vmatprep.subr.bf16.mxu0 0
      %6199 = vmatpush1.bf16.msra.mxu0 %v6045
      %6200 = vmatprep.subr.bf16.mxu0 0
      %6201 = vmatpush1.bf16.msra.mxu0 %v6046
      %6202 = vmatprep.subr.bf16.mxu0 0
      %6203 = vmatpush1.bf16.msra.mxu0 %v6047
      %6204 = vmatprep.subr.bf16.mxu0 0
      %6205 = vmatpush1.bf16.msra.mxu0 %v6048
      %6206 = vmatprep.subr.bf16.mxu0 0
      %6207 = vmatpush1.bf16.msra.mxu0 %v6049
      %6208 = vmatprep.subr.bf16.mxu0 0
      %6209 = vmatpush1.bf16.msra.mxu0 %v6050
      %6210 = vmatprep.subr.bf16.mxu0 0
      %6211 = vmatpush1.bf16.msra.mxu0 %v6051
      %6212 = vmatprep.mubr.bf16.mxu0 %v5569
      %6213 = vmatmul.mubr.bf16.gmra.mrb[0].mxu0 %v5568
      %v6214 = vpop.f32.mrb[0].mxu0
      %v6215 = vadd.f32 0.0, %v6214
      %v6216 = vpop.f32.mrb[0].mxu0
      %v6217 = vpop.f32.mrb[0].mxu0
      %v6218 = vadd.f32 0.0, %v6217
      %v6219 = vpop.f32.mrb[0].mxu0
      %6220 = vmatprep.mubr.bf16.mxu0 %v5578
      %6221 = vmatmul.mubr.bf16.gmra.mrb[0].mxu0 %v5577
      %v6222 = vpop.f32.mrb[0].mxu0
      %v6223 = vadd.f32 0.0, %v6222
      %v6224 = vpop.f32.mrb[0].mxu0
      %v6225 = vpop.f32.mrb[0].mxu0
      %v6226 = vadd.f32 0.0, %v6225
      %v6227 = vpop.f32.mrb[0].mxu0
      %6228 = vmatprep.mubr.bf16.mxu0 %v5587
      %6229 = vmatmul.mubr.bf16.gmra.mrb[0].mxu0 %v5586
      %v6230 = vpop.f32.mrb[0].mxu0
      %v6231 = vadd.f32 0.0, %v6230
      %v6232 = vpop.f32.mrb[0].mxu0
      %v6233 = vpop.f32.mrb[0].mxu0
      %v6234 = vadd.f32 0.0, %v6233
      %v6235 = vpop.f32.mrb[0].mxu0
      %6236 = vmatprep.mubr.bf16.mxu0 %v5596
      %6237 = vmatmul.mubr.bf16.gmra.mrb[0].mxu0 %v5595
      %v6238 = vpop.f32.mrb[0].mxu0
      %v6239 = vadd.f32 0.0, %v6238
      %v6240 = vpop.f32.mrb[0].mxu0
      %v6241 = vpop.f32.mrb[0].mxu0
      %v6242 = vadd.f32 0.0, %v6241
      %v6243 = vpop.f32.mrb[0].mxu0
      %6244 = vdwg.mxu0
      %6245 = vmatprep.subr.bf16.mxu0 0
      %6246 = vmatpush1.bf16.msra.mxu0 %v6052
      %6247 = vmatprep.subr.bf16.mxu0 0
      %6248 = vmatpush1.bf16.msra.mxu0 %v6053
      %6249 = vmatprep.subr.bf16.mxu0 0
      %6250 = vmatpush1.bf16.msra.mxu0 %v6054
      %6251 = vmatprep.subr.bf16.mxu0 0
      %6252 = vmatpush1.bf16.msra.mxu0 %v6055
      %6253 = vmatprep.subr.bf16.mxu0 0
      %6254 = vmatpush1.bf16.msra.mxu0 %v6056
      %6255 = vmatprep.subr.bf16.mxu0 0
      %6256 = vmatpush1.bf16.msra.mxu0 %v6057
      %6257 = vmatprep.subr.bf16.mxu0 0
      %6258 = vmatpush1.bf16.msra.mxu0 %v6058
      %6259 = vmatprep.subr.bf16.mxu0 0
      %6260 = vmatpush1.bf16.msra.mxu0 %v6059
      %6261 = vmatprep.subr.bf16.mxu0 0
      %6262 = vmatpush1.bf16.msra.mxu0 %v6060
      %6263 = vmatprep.subr.bf16.mxu0 0
      %6264 = vmatpush1.bf16.msra.mxu0 %v6061
      %6265 = vmatprep.subr.bf16.mxu0 0
      %6266 = vmatpush1.bf16.msra.mxu0 %v6062
      %6267 = vmatprep.subr.bf16.mxu0 0
      %6268 = vmatpush1.bf16.msra.mxu0 %v6063
      %6269 = vmatprep.subr.bf16.mxu0 0
      %6270 = vmatpush1.bf16.msra.mxu0 %v6064
      %6271 = vmatprep.subr.bf16.mxu0 0
      %6272 = vmatpush1.bf16.msra.mxu0 %v6065
      %6273 = vmatprep.subr.bf16.mxu0 0
      %6274 = vmatpush1.bf16.msra.mxu0 %v6066
      %6275 = vmatprep.subr.bf16.mxu0 0
      %6276 = vmatpush1.bf16.msra.mxu0 %v6067
      %6277 = vmatprep.mubr.bf16.mxu0 %v5571
      %6278 = vmatmul.mubr.bf16.gmra.mrb[0].mxu0 %v5570
      %v6279 = vpop.f32.mrb[0].mxu0
      %v6280 = vadd.f32 %v6215, %v6279
      %v6281 = vpop.f32.mrb[0].mxu0
      %v6282 = vpop.f32.mrb[0].mxu0
      %v6283 = vadd.f32 %v6218, %v6282
      %v6284 = vpop.f32.mrb[0].mxu0
      %6285 = vmatprep.mubr.bf16.mxu0 %v5580
      %6286 = vmatmul.mubr.bf16.gmra.mrb[0].mxu0 %v5579
      %v6287 = vpop.f32.mrb[0].mxu0
      %v6288 = vadd.f32 %v6223, %v6287
      %v6289 = vpop.f32.mrb[0].mxu0
      %v6290 = vpop.f32.mrb[0].mxu0
      %v6291 = vadd.f32 %v6226, %v6290
      %v6292 = vpop.f32.mrb[0].mxu0
      %6293 = vmatprep.mubr.bf16.mxu0 %v5589
      %6294 = vmatmul.mubr.bf16.gmra.mrb[0].mxu0 %v5588
      %v6295 = vpop.f32.mrb[0].mxu0
      %v6296 = vadd.f32 %v6231, %v6295
      %v6297 = vpop.f32.mrb[0].mxu0
      %v6298 = vpop.f32.mrb[0].mxu0
      %v6299 = vadd.f32 %v6234, %v6298
      %v6300 = vpop.f32.mrb[0].mxu0
      %6301 = vmatprep.mubr.bf16.mxu0 %v5598
      %6302 = vmatmul.mubr.bf16.gmra.mrb[0].mxu0 %v5597
      %v6303 = vpop.f32.mrb[0].mxu0
      %v6304 = vadd.f32 %v6239, %v6303
      %v6305 = vpop.f32.mrb[0].mxu0
      %v6306 = vpop.f32.mrb[0].mxu0
      %v6307 = vadd.f32 %v6242, %v6306
      %v6308 = vpop.f32.mrb[0].mxu0
      %6309 = vdwg.mxu0
      %6310 = vmatprep.subr.bf16.mxu0 0
      %6311 = vmatpush1.bf16.msra.mxu0 %v6068
      %6312 = vmatprep.subr.bf16.mxu0 0
      %6313 = vmatpush1.bf16.msra.mxu0 %v6069
      %6314 = vmatprep.subr.bf16.mxu0 0
      %6315 = vmatpush1.bf16.msra.mxu0 %v6070
      %6316 = vmatprep.subr.bf16.mxu0 0
      %6317 = vmatpush1.bf16.msra.mxu0 %v6071
      %6318 = vmatprep.subr.bf16.mxu0 0
      %6319 = vmatpush1.bf16.msra.mxu0 %v6072
      %6320 = vmatprep.subr.bf16.mxu0 0
      %6321 = vmatpush1.bf16.msra.mxu0 %v6073
      %6322 = vmatprep.subr.bf16.mxu0 0
      %6323 = vmatpush1.bf16.msra.mxu0 %v6074
      %6324 = vmatprep.subr.bf16.mxu0 0
      %6325 = vmatpush1.bf16.msra.mxu0 %v6075
      %6326 = vmatprep.subr.bf16.mxu0 0
      %6327 = vmatpush1.bf16.msra.mxu0 %v6076
      %6328 = vmatprep.subr.bf16.mxu0 0
      %6329 = vmatpush1.bf16.msra.mxu0 %v6077
      %6330 = vmatprep.subr.bf16.mxu0 0
      %6331 = vmatpush1.bf16.msra.mxu0 %v6078
      %6332 = vmatprep.subr.bf16.mxu0 0
      %6333 = vmatpush1.bf16.msra.mxu0 %v6079
      %6334 = vmatprep.subr.bf16.mxu0 0
      %6335 = vmatpush1.bf16.msra.mxu0 %v6080
      %6336 = vmatprep.subr.bf16.mxu0 0
      %6337 = vmatpush1.bf16.msra.mxu0 %v6081
      %6338 = vmatprep.subr.bf16.mxu0 0
      %6339 = vmatpush1.bf16.msra.mxu0 %v6082
      %6340 = vmatprep.subr.bf16.mxu0 0
      %6341 = vmatpush1.bf16.msra.mxu0 %v6083
      %6342 = vmatprep.mubr.bf16.mxu0 %v5573
      %6343 = vmatmul.mubr.bf16.gmra.mrb[0].mxu0 %v5572
      %v6344 = vpop.f32.mrb[0].mxu0
      %v6345 = vadd.f32 %v6280, %v6344
      %v6346 = vpop.f32.mrb[0].mxu0
      %v6347 = vpop.f32.mrb[0].mxu0
      %v6348 = vadd.f32 %v6283, %v6347
      %v6349 = vpop.f32.mrb[0].mxu0
      %6350 = vmatprep.mubr.bf16.mxu0 %v5582
      %6351 = vmatmul.mubr.bf16.gmra.mrb[0].mxu0 %v5581
      %v6352 = vpop.f32.mrb[0].mxu0
      %v6353 = vadd.f32 %v6288, %v6352
      %v6354 = vpop.f32.mrb[0].mxu0
      %v6355 = vpop.f32.mrb[0].mxu0
      %v6356 = vadd.f32 %v6291, %v6355
      %v6357 = vpop.f32.mrb[0].mxu0
      %6358 = vmatprep.mubr.bf16.mxu0 %v5591
      %6359 = vmatmul.mubr.bf16.gmra.mrb[0].mxu0 %v5590
      %v6360 = vpop.f32.mrb[0].mxu0
      %v6361 = vadd.f32 %v6296, %v6360
      %v6362 = vpop.f32.mrb[0].mxu0
      %v6363 = vpop.f32.mrb[0].mxu0
      %v6364 = vadd.f32 %v6299, %v6363
      %v6365 = vpop.f32.mrb[0].mxu0
      %6366 = vmatprep.mubr.bf16.mxu0 %v5600
      %6367 = vmatmul.mubr.bf16.gmra.mrb[0].mxu0 %v5599
      %v6368 = vpop.f32.mrb[0].mxu0
      %v6369 = vadd.f32 %v6304, %v6368
      %v6370 = vpop.f32.mrb[0].mxu0
      %v6371 = vpop.f32.mrb[0].mxu0
      %v6372 = vadd.f32 %v6307, %v6371
      %v6373 = vpop.f32.mrb[0].mxu0
      %6374 = vdwg.mxu0
      %6375 = vmatprep.subr.bf16.mxu0 0
      %6376 = vmatpush1.bf16.msra.mxu0 %v6084
      %6377 = vmatprep.subr.bf16.mxu0 0
      %6378 = vmatpush1.bf16.msra.mxu0 %v6085
      %6379 = vmatprep.subr.bf16.mxu0 0
      %6380 = vmatpush1.bf16.msra.mxu0 %v6086
      %6381 = vmatprep.subr.bf16.mxu0 0
      %6382 = vmatpush1.bf16.msra.mxu0 %v6087
      %6383 = vmatprep.subr.bf16.mxu0 0
      %6384 = vmatpush1.bf16.msra.mxu0 %v6088
      %6385 = vmatprep.subr.bf16.mxu0 0
      %6386 = vmatpush1.bf16.msra.mxu0 %v6089
      %6387 = vmatprep.subr.bf16.mxu0 0
      %6388 = vmatpush1.bf16.msra.mxu0 %v6090
      %6389 = vmatprep.subr.bf16.mxu0 0
      %6390 = vmatpush1.bf16.msra.mxu0 %v6091
      %6391 = vmatprep.subr.bf16.mxu0 0
      %6392 = vmatpush1.bf16.msra.mxu0 %v6092
      %6393 = vmatprep.subr.bf16.mxu0 0
      %6394 = vmatpush1.bf16.msra.mxu0 %v6093
      %6395 = vmatprep.subr.bf16.mxu0 0
      %6396 = vmatpush1.bf16.msra.mxu0 %v6094
      %6397 = vmatprep.subr.bf16.mxu0 0
      %6398 = vmatpush1.bf16.msra.mxu0 %v6095
      %6399 = vmatprep.subr.bf16.mxu0 0
      %6400 = vmatpush1.bf16.msra.mxu0 %v6096
      %6401 = vmatprep.subr.bf16.mxu0 0
      %6402 = vmatpush1.bf16.msra.mxu0 %v6097
      %6403 = vmatprep.subr.bf16.mxu0 0
      %6404 = vmatpush1.bf16.msra.mxu0 %v6098
      %6405 = vmatprep.subr.bf16.mxu0 0
      %6406 = vmatpush1.bf16.msra.mxu0 %v6099
      %6407 = vmatprep.mubr.bf16.mxu0 %v5575
      %6408 = vmatmul.mubr.bf16.gmra.mrb[0].mxu0 %v5574
      %v6409 = vpop.f32.mrb[0].mxu0
      %v6410 = vadd.f32 %v6345, %v6409
      %v6411 = vpop.f32.mrb[0].mxu0
      %v6412 = vpop.f32.mrb[0].mxu0
      %v6413 = vadd.f32 %v6348, %v6412
      %v6414 = vpop.f32.mrb[0].mxu0
      %6415 = vmatprep.mubr.bf16.mxu0 %v5584
      %6416 = vmatmul.mubr.bf16.gmra.mrb[0].mxu0 %v5583
      %v6417 = vpop.f32.mrb[0].mxu0
      %v6418 = vadd.f32 %v6353, %v6417
      %v6419 = vpop.f32.mrb[0].mxu0
      %v6420 = vpop.f32.mrb[0].mxu0
      %v6421 = vadd.f32 %v6356, %v6420
      %v6422 = vpop.f32.mrb[0].mxu0
      %6423 = vmatprep.mubr.bf16.mxu0 %v5593
      %6424 = vmatmul.mubr.bf16.gmra.mrb[0].mxu0 %v5592
      %v6425 = vpop.f32.mrb[0].mxu0
      %v6426 = vadd.f32 %v6361, %v6425
      %v6427 = vpop.f32.mrb[0].mxu0
      %v6428 = vpop.f32.mrb[0].mxu0
      %v6429 = vadd.f32 %v6364, %v6428
      %v6430 = vpop.f32.mrb[0].mxu0
      %6431 = vmatprep.mubr.bf16.mxu0 %v5602
      %6432 = vmatmul.mubr.bf16.gmra.mrb[0].mxu0 %v5601
      %v6433 = vpop.f32.mrb[0].mxu0
      %v6434 = vadd.f32 %v6369, %v6433
      %v6435 = vpop.f32.mrb[0].mxu0
      %v6436 = vpop.f32.mrb[0].mxu0
      %v6437 = vadd.f32 %v6372, %v6436
      %v6438 = vpop.f32.mrb[0].mxu0
      %6439 = vdwg.mxu0
      %6440 = vmatprep.subr.bf16.mxu0 0
      %6441 = vmatpush1.bf16.msra.mxu0 %v6100
      %6442 = vmatprep.subr.bf16.mxu0 0
      %6443 = vmatpush1.bf16.msra.mxu0 %v6101
      %6444 = vmatprep.subr.bf16.mxu0 0
      %6445 = vmatpush1.bf16.msra.mxu0 %v6102
      %6446 = vmatprep.subr.bf16.mxu0 0
      %6447 = vmatpush1.bf16.msra.mxu0 %v6103
      %6448 = vmatprep.subr.bf16.mxu0 0
      %6449 = vmatpush1.bf16.msra.mxu0 %v6104
      %6450 = vmatprep.subr.bf16.mxu0 0
      %6451 = vmatpush1.bf16.msra.mxu0 %v6105
      %6452 = vmatprep.subr.bf16.mxu0 0
      %6453 = vmatpush1.bf16.msra.mxu0 %v6106
      %6454 = vmatprep.subr.bf16.mxu0 0
      %6455 = vmatpush1.bf16.msra.mxu0 %v6107
      %6456 = vmatprep.subr.bf16.mxu0 0
      %6457 = vmatpush1.bf16.msra.mxu0 0
      %6458 = vmatprep.subr.bf16.mxu0 0
      %6459 = vmatpush1.bf16.msra.mxu0 0
      %6460 = vmatprep.subr.bf16.mxu0 0
      %6461 = vmatpush1.bf16.msra.mxu0 0
      %6462 = vmatprep.subr.bf16.mxu0 0
      %6463 = vmatpush1.bf16.msra.mxu0 0
      %6464 = vmatprep.subr.bf16.mxu0 0
      %6465 = vmatpush1.bf16.msra.mxu0 0
      %6466 = vmatprep.subr.bf16.mxu0 0
      %6467 = vmatpush1.bf16.msra.mxu0 0
      %6468 = vmatprep.subr.bf16.mxu0 0
      %6469 = vmatpush1.bf16.msra.mxu0 0
      %6470 = vmatprep.subr.bf16.mxu0 0
      %6471 = vmatpush1.bf16.msra.mxu0 0
      %6472 = vmatprep.mubr.bf16.mxu0 0
      %6473 = vmatmul.mubr.bf16.gmra.mrb[0].mxu0 %v5576
      %v6474 = vpop.f32.mrb[0].mxu0
      %v6475 = vadd.f32 %v6410, %v6474
      %v6476 = vpop.f32.mrb[0].mxu0
      %v6477 = vpop.f32.mrb[0].mxu0
      %v6478 = vadd.f32 %v6413, %v6477
      %v6479 = vpop.f32.mrb[0].mxu0
      %6480 = vmatprep.mubr.bf16.mxu0 0
      %6481 = vmatmul.mubr.bf16.gmra.mrb[0].mxu0 %v5585
      %v6482 = vpop.f32.mrb[0].mxu0
      %v6483 = vadd.f32 %v6418, %v6482
      %v6484 = vpop.f32.mrb[0].mxu0
      %v6485 = vpop.f32.mrb[0].mxu0
      %v6486 = vadd.f32 %v6421, %v6485
      %v6487 = vpop.f32.mrb[0].mxu0
      %6488 = vmatprep.mubr.bf16.mxu0 0
      %6489 = vmatmul.mubr.bf16.gmra.mrb[0].mxu0 %v5594
      %v6490 = vpop.f32.mrb[0].mxu0
      %v6491 = vadd.f32 %v6426, %v6490
      %v6492 = vpop.f32.mrb[0].mxu0
      %v6493 = vpop.f32.mrb[0].mxu0
      %v6494 = vadd.f32 %v6429, %v6493
      %v6495 = vpop.f32.mrb[0].mxu0
      %6496 = vmatprep.mubr.bf16.mxu0 0
      %6497 = vmatmul.mubr.bf16.gmra.mrb[0].mxu0 %v5603
      %v6498 = vpop.f32.mrb[0].mxu0
      %v6499 = vadd.f32 %v6434, %v6498
      %v6500 = vpop.f32.mrb[0].mxu0
      %v6501 = vpop.f32.mrb[0].mxu0
      %v6502 = vadd.f32 %v6437, %v6501
      %v6503 = vpop.f32.mrb[0].mxu0
      %6504 = vdwg.mxu0
      %s6505 = scalar_lea.vmem %s170, 128
      %6506 = vst [vmem:[%s6505] sm:$0xff] %v6475
      %6507 = vst [vmem:[%s6505 + $0x8] sm:$0xff] %v6478
      %6508 = vst [vmem:[%s6505 + $0x10] sm:$0xff] %v6483
      %6509 = vst [vmem:[%s6505 + $0x18] sm:$0xff] %v6486
      %6510 = vst [vmem:[%s6505 + $0x20] sm:$0xff] %v6491
      %6511 = vst [vmem:[%s6505 + $0x28] sm:$0xff] %v6494
      %6512 = vst [vmem:[%s6505 + $0x30] sm:$0xff] %v6499
      %6513 = vst [vmem:[%s6505 + $0x38] sm:$0xff] %v6502
      %v6514 = vadd.f32 %v6475, %v6478
      %v6515 = vadd.f32 %v6514, %v6483
      %v6516 = vadd.f32 %v6515, %v6486
      %v6517 = vadd.f32 %v6516, %v6491
      %v6518 = vadd.f32 %v6517, %v6494
      %v6519 = vadd.f32 %v6518, %v6499
      %v6520 = vadd.f32 %v6519, %v6502
      %v6521 = vrot.slane %v6520, 4
      %v6522 = vadd.f32 %v6520, %v6521
      %v6523 = vrot.slane %v6522, 2
      %v6524 = vadd.f32 %v6522, %v6523
      %v6525 = vrot.slane %v6524, 1
      %v6526 = vadd.f32 %v6524, %v6525
      %v6527 = vadd.f32 %v4883, %v6526
      %v6528 = vmul.f32 %v6475, %v6475
      %v6529 = vmul.f32 %v6478, %v6478
      %v6530 = vmul.f32 %v6483, %v6483
      %v6531 = vmul.f32 %v6486, %v6486
      %v6532 = vmul.f32 %v6491, %v6491
      %v6533 = vmul.f32 %v6494, %v6494
      %v6534 = vmul.f32 %v6499, %v6499
      %v6535 = vmul.f32 %v6502, %v6502
      %v6536 = vadd.f32 %v6528, %v6529
      %v6537 = vadd.f32 %v6536, %v6530
      %v6538 = vadd.f32 %v6537, %v6531
      %v6539 = vadd.f32 %v6538, %v6532
      %v6540 = vadd.f32 %v6539, %v6533
      %v6541 = vadd.f32 %v6540, %v6534
      %v6542 = vadd.f32 %v6541, %v6535
      %v6543 = vrot.slane %v6542, 4
      %v6544 = vadd.f32 %v6542, %v6543
      %v6545 = vrot.slane %v6544, 2
      %v6546 = vadd.f32 %v6544, %v6545
      %v6547 = vrot.slane %v6546, 1
      %v6548 = vadd.f32 %v6546, %v6547
      %v6549 = vadd.f32 %v4905, %v6548
      %v6550 = vld [vmem:[%s629] sm:$0xf]
      %v6551 = vld [vmem:[%s629 + $0x8] sm:$0xf]
      %v6552 = vld [vmem:[%s629 + $0x10] sm:$0xf]
      %v6553 = vld [vmem:[%s629 + $0x18] sm:$0xf]
      %v6554 = vld [vmem:[%s629 + $0x20] sm:$0xf]
      %v6555 = vld [vmem:[%s629 + $0x28] sm:$0xf]
      %v6556 = vld [vmem:[%s629 + $0x30] sm:$0xf]
      %v6557 = vld [vmem:[%s629 + $0x38] sm:$0xf]
      %v6566 = vunpack.c.l.b16 %v6550
      %v6567 = vunpack.c.l.b16 %v6551
      %v6568 = vunpack.c.l.b16 %v6552
      %v6569 = vunpack.c.l.b16 %v6553
      %v6570 = vunpack.c.l.b16 %v6554
      %v6571 = vunpack.c.l.b16 %v6555
      %v6572 = vunpack.c.l.b16 %v6556
      %v6573 = vunpack.c.l.b16 %v6557
      %v6574 = vpack.c.b16 %v6567, %v6566
      %v6575 = vpack.c.b16 %v6569, %v6568
      %v6576 = vpack.c.b16 %v6571, %v6570
      %v6577 = vpack.c.b16 %v6573, %v6572
      %6582 = vst [vmem:[#allocation3] sm:$0xff] %v6574
      %6583 = vst [vmem:[#allocation3 + $0x48] sm:$0xff] %v6575
      %6584 = vst [vmem:[#allocation3 + $0x90] sm:$0xff] %v6576
      %6585 = vst [vmem:[#allocation3 + $0xd8] sm:$0xff] %v6577
      %v6586 = vld [vmem:[%s640] sm:$0xf]
      %v6587 = vld [vmem:[%s640 + $0x4] sm:$0x1]
      %v6588 = vld [vmem:[%s640 + $0x8] sm:$0xf]
      %v6589 = vld [vmem:[%s640 + $0xc] sm:$0x1]
      %v6590 = vld [vmem:[%s640 + $0x10] sm:$0xf]
      %v6591 = vld [vmem:[%s640 + $0x14] sm:$0x1]
      %v6592 = vld [vmem:[%s640 + $0x18] sm:$0xf]
      %v6593 = vld [vmem:[%s640 + $0x1c] sm:$0x1]
      %v6594 = vld [vmem:[%s640 + $0x20] sm:$0xf]
      %v6595 = vld [vmem:[%s640 + $0x24] sm:$0x1]
      %v6596 = vld [vmem:[%s640 + $0x28] sm:$0xf]
      %v6597 = vld [vmem:[%s640 + $0x2c] sm:$0x1]
      %v6598 = vld [vmem:[%s640 + $0x30] sm:$0xf]
      %v6599 = vld [vmem:[%s640 + $0x34] sm:$0x1]
      %v6600 = vld [vmem:[%s640 + $0x38] sm:$0xf]
      %v6601 = vld [vmem:[%s640 + $0x3c] sm:$0x1]
      %v6603 = vshrl.u32 %v6586, 16
      %v6605 = vrot.slane %v6603, 4
      %v6606 = vshll.u32 %v6586, 16
      %v6608 = vrot.slane %v6606, 5
      %v6609 = vor.u32 %v6605, %v6608
      %v6610 = vrot.slane %v6609, 4
      %v6612 = vshll.u32 %v6587, 16
      %v6614 = vrot.slane %v6612, 5
      %v6615 = vsel %vm1374, %v6610, %v6614
      %v6617 = vshrl.u32 %v6588, 16
      %v6619 = vrot.slane %v6617, 4
      %v6620 = vshll.u32 %v6588, 16
      %v6622 = vrot.slane %v6620, 5
      %v6623 = vor.u32 %v6619, %v6622
      %v6624 = vrot.slane %v6623, 4
      %v6626 = vshll.u32 %v6589, 16
      %v6628 = vrot.slane %v6626, 5
      %v6629 = vsel %vm1374, %v6624, %v6628
      %v6631 = vshrl.u32 %v6590, 16
      %v6633 = vrot.slane %v6631, 4
      %v6634 = vshll.u32 %v6590, 16
      %v6636 = vrot.slane %v6634, 5
      %v6637 = vor.u32 %v6633, %v6636
      %v6638 = vrot.slane %v6637, 4
      %v6640 = vshll.u32 %v6591, 16
      %v6642 = vrot.slane %v6640, 5
      %v6643 = vsel %vm1374, %v6638, %v6642
      %v6645 = vshrl.u32 %v6592, 16
      %v6647 = vrot.slane %v6645, 4
      %v6648 = vshll.u32 %v6592, 16
      %v6650 = vrot.slane %v6648, 5
      %v6651 = vor.u32 %v6647, %v6650
      %v6652 = vrot.slane %v6651, 4
      %v6654 = vshll.u32 %v6593, 16
      %v6656 = vrot.slane %v6654, 5
      %v6657 = vsel %vm1374, %v6652, %v6656
      %v6659 = vshrl.u32 %v6594, 16
      %v6661 = vrot.slane %v6659, 4
      %v6662 = vshll.u32 %v6594, 16
      %v6664 = vrot.slane %v6662, 5
      %v6665 = vor.u32 %v6661, %v6664
      %v6666 = vrot.slane %v6665, 4
      %v6668 = vshll.u32 %v6595, 16
      %v6670 = vrot.slane %v6668, 5
      %v6671 = vsel %vm1374, %v6666, %v6670
      %v6673 = vshrl.u32 %v6596, 16
      %v6675 = vrot.slane %v6673, 4
      %v6676 = vshll.u32 %v6596, 16
      %v6678 = vrot.slane %v6676, 5
      %v6679 = vor.u32 %v6675, %v6678
      %v6680 = vrot.slane %v6679, 4
      %v6682 = vshll.u32 %v6597, 16
      %v6684 = vrot.slane %v6682, 5
      %v6685 = vsel %vm1374, %v6680, %v6684
      %v6687 = vshrl.u32 %v6598, 16
      %v6689 = vrot.slane %v6687, 4
      %v6690 = vshll.u32 %v6598, 16
      %v6692 = vrot.slane %v6690, 5
      %v6693 = vor.u32 %v6689, %v6692
      %v6694 = vrot.slane %v6693, 4
      %v6696 = vshll.u32 %v6599, 16
      %v6698 = vrot.slane %v6696, 5
      %v6699 = vsel %vm1374, %v6694, %v6698
      %v6701 = vshrl.u32 %v6600, 16
      %v6703 = vrot.slane %v6701, 4
      %v6704 = vshll.u32 %v6600, 16
      %v6706 = vrot.slane %v6704, 5
      %v6707 = vor.u32 %v6703, %v6706
      %v6708 = vrot.slane %v6707, 4
      %v6710 = vshll.u32 %v6601, 16
      %v6712 = vrot.slane %v6710, 5
      %v6713 = vsel %vm1374, %v6708, %v6712
      %v6714 = vunpack.c.l.b16 %v6615
      %v6715 = vunpack.c.l.b16 %v6629
      %v6716 = vunpack.c.l.b16 %v6643
      %v6717 = vunpack.c.l.b16 %v6657
      %v6718 = vunpack.c.l.b16 %v6671
      %v6719 = vunpack.c.l.b16 %v6685
      %v6720 = vunpack.c.l.b16 %v6699
      %v6721 = vunpack.c.l.b16 %v6713
      %v6722 = vpack.c.b16 %v6715, %v6714
      %v6723 = vpack.c.b16 %v6717, %v6716
      %v6724 = vpack.c.b16 %v6719, %v6718
      %v6725 = vpack.c.b16 %v6721, %v6720
      %6730 = vst [vmem:[#allocation3 + $0x8] sm:$0xff] %v6722
      %6731 = vst [vmem:[#allocation3 + $0x50] sm:$0xff] %v6723
      %6732 = vst [vmem:[#allocation3 + $0x98] sm:$0xff] %v6724
      %6733 = vst [vmem:[#allocation3 + $0xe0] sm:$0xff] %v6725
      %v6734 = vld [vmem:[%s629] sm:$0xf]
      %v6735 = vld [vmem:[%s629 + $0x4] sm:$0x1]
      %v6736 = vld [vmem:[%s629 + $0x8] sm:$0xf]
      %v6737 = vld [vmem:[%s629 + $0xc] sm:$0x1]
      %v6738 = vld [vmem:[%s629 + $0x10] sm:$0xf]
      %v6739 = vld [vmem:[%s629 + $0x14] sm:$0x1]
      %v6740 = vld [vmem:[%s629 + $0x18] sm:$0xf]
      %v6741 = vld [vmem:[%s629 + $0x1c] sm:$0x1]
      %v6742 = vld [vmem:[%s629 + $0x20] sm:$0xf]
      %v6743 = vld [vmem:[%s629 + $0x24] sm:$0x1]
      %v6744 = vld [vmem:[%s629 + $0x28] sm:$0xf]
      %v6745 = vld [vmem:[%s629 + $0x2c] sm:$0x1]
      %v6746 = vld [vmem:[%s629 + $0x30] sm:$0xf]
      %v6747 = vld [vmem:[%s629 + $0x34] sm:$0x1]
      %v6748 = vld [vmem:[%s629 + $0x38] sm:$0xf]
      %v6749 = vld [vmem:[%s629 + $0x3c] sm:$0x1]
      %v6751 = vshrl.u32 %v6734, 16
      %v6753 = vrot.slane %v6751, 4
      %v6754 = vshll.u32 %v6734, 16
      %v6756 = vrot.slane %v6754, 5
      %v6757 = vor.u32 %v6753, %v6756
      %v6758 = vrot.slane %v6757, 4
      %v6760 = vshll.u32 %v6735, 16
      %v6762 = vrot.slane %v6760, 5
      %v6763 = vsel %vm1374, %v6758, %v6762
      %v6765 = vshrl.u32 %v6736, 16
      %v6767 = vrot.slane %v6765, 4
      %v6768 = vshll.u32 %v6736, 16
      %v6770 = vrot.slane %v6768, 5
      %v6771 = vor.u32 %v6767, %v6770
      %v6772 = vrot.slane %v6771, 4
      %v6774 = vshll.u32 %v6737, 16
      %v6776 = vrot.slane %v6774, 5
      %v6777 = vsel %vm1374, %v6772, %v6776
      %v6779 = vshrl.u32 %v6738, 16
      %v6781 = vrot.slane %v6779, 4
      %v6782 = vshll.u32 %v6738, 16
      %v6784 = vrot.slane %v6782, 5
      %v6785 = vor.u32 %v6781, %v6784
      %v6786 = vrot.slane %v6785, 4
      %v6788 = vshll.u32 %v6739, 16
      %v6790 = vrot.slane %v6788, 5
      %v6791 = vsel %vm1374, %v6786, %v6790
      %v6793 = vshrl.u32 %v6740, 16
      %v6795 = vrot.slane %v6793, 4
      %v6796 = vshll.u32 %v6740, 16
      %v6798 = vrot.slane %v6796, 5
      %v6799 = vor.u32 %v6795, %v6798
      %v6800 = vrot.slane %v6799, 4
      %v6802 = vshll.u32 %v6741, 16
      %v6804 = vrot.slane %v6802, 5
      %v6805 = vsel %vm1374, %v6800, %v6804
      %v6807 = vshrl.u32 %v6742, 16
      %v6809 = vrot.slane %v6807, 4
      %v6810 = vshll.u32 %v6742, 16
      %v6812 = vrot.slane %v6810, 5
      %v6813 = vor.u32 %v6809, %v6812
      %v6814 = vrot.slane %v6813, 4
      %v6816 = vshll.u32 %v6743, 16
      %v6818 = vrot.slane %v6816, 5
      %v6819 = vsel %vm1374, %v6814, %v6818
      %v6821 = vshrl.u32 %v6744, 16
      %v6823 = vrot.slane %v6821, 4
      %v6824 = vshll.u32 %v6744, 16
      %v6826 = vrot.slane %v6824, 5
      %v6827 = vor.u32 %v6823, %v6826
      %v6828 = vrot.slane %v6827, 4
      %v6830 = vshll.u32 %v6745, 16
      %v6832 = vrot.slane %v6830, 5
      %v6833 = vsel %vm1374, %v6828, %v6832
      %v6835 = vshrl.u32 %v6746, 16
      %v6837 = vrot.slane %v6835, 4
      %v6838 = vshll.u32 %v6746, 16
      %v6840 = vrot.slane %v6838, 5
      %v6841 = vor.u32 %v6837, %v6840
      %v6842 = vrot.slane %v6841, 4
      %v6844 = vshll.u32 %v6747, 16
      %v6846 = vrot.slane %v6844, 5
      %v6847 = vsel %vm1374, %v6842, %v6846
      %v6849 = vshrl.u32 %v6748, 16
      %v6851 = vrot.slane %v6849, 4
      %v6852 = vshll.u32 %v6748, 16
      %v6854 = vrot.slane %v6852, 5
      %v6855 = vor.u32 %v6851, %v6854
      %v6856 = vrot.slane %v6855, 4
      %v6858 = vshll.u32 %v6749, 16
      %v6860 = vrot.slane %v6858, 5
      %v6861 = vsel %vm1374, %v6856, %v6860
      %v6862 = vunpack.c.l.b16 %v6763
      %v6863 = vunpack.c.l.b16 %v6777
      %v6864 = vunpack.c.l.b16 %v6791
      %v6865 = vunpack.c.l.b16 %v6805
      %v6866 = vunpack.c.l.b16 %v6819
      %v6867 = vunpack.c.l.b16 %v6833
      %v6868 = vunpack.c.l.b16 %v6847
      %v6869 = vunpack.c.l.b16 %v6861
      %v6870 = vpack.c.b16 %v6863, %v6862
      %v6871 = vpack.c.b16 %v6865, %v6864
      %v6872 = vpack.c.b16 %v6867, %v6866
      %v6873 = vpack.c.b16 %v6869, %v6868
      %6878 = vst [vmem:[#allocation3 + $0x10] sm:$0xff] %v6870
      %6879 = vst [vmem:[#allocation3 + $0x58] sm:$0xff] %v6871
      %6880 = vst [vmem:[#allocation3 + $0xa0] sm:$0xff] %v6872
      %6881 = vst [vmem:[#allocation3 + $0xe8] sm:$0xff] %v6873
      %v6882 = vld [vmem:[%s1003] sm:$0xf]
      %v6883 = vld [vmem:[%s1003 + $0x8] sm:$0xf]
      %v6884 = vld [vmem:[%s1003 + $0x10] sm:$0xf]
      %v6885 = vld [vmem:[%s1003 + $0x18] sm:$0xf]
      %v6886 = vld [vmem:[%s1003 + $0x20] sm:$0xf]
      %v6887 = vld [vmem:[%s1003 + $0x28] sm:$0xf]
      %v6888 = vld [vmem:[%s1003 + $0x30] sm:$0xf]
      %v6889 = vld [vmem:[%s1003 + $0x38] sm:$0xf]
      %v6898 = vunpack.c.l.b16 %v6882
      %v6899 = vunpack.c.l.b16 %v6883
      %v6900 = vunpack.c.l.b16 %v6884
      %v6901 = vunpack.c.l.b16 %v6885
      %v6902 = vunpack.c.l.b16 %v6886
      %v6903 = vunpack.c.l.b16 %v6887
      %v6904 = vunpack.c.l.b16 %v6888
      %v6905 = vunpack.c.l.b16 %v6889
      %v6906 = vpack.c.b16 %v6899, %v6898
      %v6907 = vpack.c.b16 %v6901, %v6900
      %v6908 = vpack.c.b16 %v6903, %v6902
      %v6909 = vpack.c.b16 %v6905, %v6904
      %6914 = vst [vmem:[#allocation3 + $0x18] sm:$0xff] %v6906
      %6915 = vst [vmem:[#allocation3 + $0x60] sm:$0xff] %v6907
      %6916 = vst [vmem:[#allocation3 + $0xa8] sm:$0xff] %v6908
      %6917 = vst [vmem:[#allocation3 + $0xf0] sm:$0xff] %v6909
      %v6918 = vld [vmem:[%s1014] sm:$0xf]
      %v6919 = vld [vmem:[%s1014 + $0x4] sm:$0x1]
      %v6920 = vld [vmem:[%s1014 + $0x8] sm:$0xf]
      %v6921 = vld [vmem:[%s1014 + $0xc] sm:$0x1]
      %v6922 = vld [vmem:[%s1014 + $0x10] sm:$0xf]
      %v6923 = vld [vmem:[%s1014 + $0x14] sm:$0x1]
      %v6924 = vld [vmem:[%s1014 + $0x18] sm:$0xf]
      %v6925 = vld [vmem:[%s1014 + $0x1c] sm:$0x1]
      %v6926 = vld [vmem:[%s1014 + $0x20] sm:$0xf]
      %v6927 = vld [vmem:[%s1014 + $0x24] sm:$0x1]
      %v6928 = vld [vmem:[%s1014 + $0x28] sm:$0xf]
      %v6929 = vld [vmem:[%s1014 + $0x2c] sm:$0x1]
      %v6930 = vld [vmem:[%s1014 + $0x30] sm:$0xf]
      %v6931 = vld [vmem:[%s1014 + $0x34] sm:$0x1]
      %v6932 = vld [vmem:[%s1014 + $0x38] sm:$0xf]
      %v6933 = vld [vmem:[%s1014 + $0x3c] sm:$0x1]
      %v6935 = vshrl.u32 %v6918, 16
      %v6937 = vrot.slane %v6935, 4
      %v6938 = vshll.u32 %v6918, 16
      %v6940 = vrot.slane %v6938, 5
      %v6941 = vor.u32 %v6937, %v6940
      %v6942 = vrot.slane %v6941, 4
      %v6944 = vshll.u32 %v6919, 16
      %v6946 = vrot.slane %v6944, 5
      %v6947 = vsel %vm1374, %v6942, %v6946
      %v6949 = vshrl.u32 %v6920, 16
      %v6951 = vrot.slane %v6949, 4
      %v6952 = vshll.u32 %v6920, 16
      %v6954 = vrot.slane %v6952, 5
      %v6955 = vor.u32 %v6951, %v6954
      %v6956 = vrot.slane %v6955, 4
      %v6958 = vshll.u32 %v6921, 16
      %v6960 = vrot.slane %v6958, 5
      %v6961 = vsel %vm1374, %v6956, %v6960
      %v6963 = vshrl.u32 %v6922, 16
      %v6965 = vrot.slane %v6963, 4
      %v6966 = vshll.u32 %v6922, 16
      %v6968 = vrot.slane %v6966, 5
      %v6969 = vor.u32 %v6965, %v6968
      %v6970 = vrot.slane %v6969, 4
      %v6972 = vshll.u32 %v6923, 16
      %v6974 = vrot.slane %v6972, 5
      %v6975 = vsel %vm1374, %v6970, %v6974
      %v6977 = vshrl.u32 %v6924, 16
      %v6979 = vrot.slane %v6977, 4
      %v6980 = vshll.u32 %v6924, 16
      %v6982 = vrot.slane %v6980, 5
      %v6983 = vor.u32 %v6979, %v6982
      %v6984 = vrot.slane %v6983, 4
      %v6986 = vshll.u32 %v6925, 16
      %v6988 = vrot.slane %v6986, 5
      %v6989 = vsel %vm1374, %v6984, %v6988
      %v6991 = vshrl.u32 %v6926, 16
      %v6993 = vrot.slane %v6991, 4
      %v6994 = vshll.u32 %v6926, 16
      %v6996 = vrot.slane %v6994, 5
      %v6997 = vor.u32 %v6993, %v6996
      %v6998 = vrot.slane %v6997, 4
      %v7000 = vshll.u32 %v6927, 16
      %v7002 = vrot.slane %v7000, 5
      %v7003 = vsel %vm1374, %v6998, %v7002
      %v7005 = vshrl.u32 %v6928, 16
      %v7007 = vrot.slane %v7005, 4
      %v7008 = vshll.u32 %v6928, 16
      %v7010 = vrot.slane %v7008, 5
      %v7011 = vor.u32 %v7007, %v7010
      %v7012 = vrot.slane %v7011, 4
      %v7014 = vshll.u32 %v6929, 16
      %v7016 = vrot.slane %v7014, 5
      %v7017 = vsel %vm1374, %v7012, %v7016
      %v7019 = vshrl.u32 %v6930, 16
      %v7021 = vrot.slane %v7019, 4
      %v7022 = vshll.u32 %v6930, 16
      %v7024 = vrot.slane %v7022, 5
      %v7025 = vor.u32 %v7021, %v7024
      %v7026 = vrot.slane %v7025, 4
      %v7028 = vshll.u32 %v6931, 16
      %v7030 = vrot.slane %v7028, 5
      %v7031 = vsel %vm1374, %v7026, %v7030
      %v7033 = vshrl.u32 %v6932, 16
      %v7035 = vrot.slane %v7033, 4
      %v7036 = vshll.u32 %v6932, 16
      %v7038 = vrot.slane %v7036, 5
      %v7039 = vor.u32 %v7035, %v7038
      %v7040 = vrot.slane %v7039, 4
      %v7042 = vshll.u32 %v6933, 16
      %v7044 = vrot.slane %v7042, 5
      %v7045 = vsel %vm1374, %v7040, %v7044
      %v7046 = vunpack.c.l.b16 %v6947
      %v7047 = vunpack.c.l.b16 %v6961
      %v7048 = vunpack.c.l.b16 %v6975
      %v7049 = vunpack.c.l.b16 %v6989
      %v7050 = vunpack.c.l.b16 %v7003
      %v7051 = vunpack.c.l.b16 %v7017
      %v7052 = vunpack.c.l.b16 %v7031
      %v7053 = vunpack.c.l.b16 %v7045
      %v7054 = vpack.c.b16 %v7047, %v7046
      %v7055 = vpack.c.b16 %v7049, %v7048
      %v7056 = vpack.c.b16 %v7051, %v7050
      %v7057 = vpack.c.b16 %v7053, %v7052
      %7062 = vst [vmem:[#allocation3 + $0x20] sm:$0xff] %v7054
      %7063 = vst [vmem:[#allocation3 + $0x68] sm:$0xff] %v7055
      %7064 = vst [vmem:[#allocation3 + $0xb0] sm:$0xff] %v7056
      %7065 = vst [vmem:[#allocation3 + $0xf8] sm:$0xff] %v7057
      %v7066 = vld [vmem:[%s1003] sm:$0xf]
      %v7067 = vld [vmem:[%s1003 + $0x4] sm:$0x1]
      %v7068 = vld [vmem:[%s1003 + $0x8] sm:$0xf]
      %v7069 = vld [vmem:[%s1003 + $0xc] sm:$0x1]
      %v7070 = vld [vmem:[%s1003 + $0x10] sm:$0xf]
      %v7071 = vld [vmem:[%s1003 + $0x14] sm:$0x1]
      %v7072 = vld [vmem:[%s1003 + $0x18] sm:$0xf]
      %v7073 = vld [vmem:[%s1003 + $0x1c] sm:$0x1]
      %v7074 = vld [vmem:[%s1003 + $0x20] sm:$0xf]
      %v7075 = vld [vmem:[%s1003 + $0x24] sm:$0x1]
      %v7076 = vld [vmem:[%s1003 + $0x28] sm:$0xf]
      %v7077 = vld [vmem:[%s1003 + $0x2c] sm:$0x1]
      %v7078 = vld [vmem:[%s1003 + $0x30] sm:$0xf]
      %v7079 = vld [vmem:[%s1003 + $0x34] sm:$0x1]
      %v7080 = vld [vmem:[%s1003 + $0x38] sm:$0xf]
      %v7081 = vld [vmem:[%s1003 + $0x3c] sm:$0x1]
      %v7083 = vshrl.u32 %v7066, 16
      %v7085 = vrot.slane %v7083, 4
      %v7086 = vshll.u32 %v7066, 16
      %v7088 = vrot.slane %v7086, 5
      %v7089 = vor.u32 %v7085, %v7088
      %v7090 = vrot.slane %v7089, 4
      %v7092 = vshll.u32 %v7067, 16
      %v7094 = vrot.slane %v7092, 5
      %v7095 = vsel %vm1374, %v7090, %v7094
      %v7097 = vshrl.u32 %v7068, 16
      %v7099 = vrot.slane %v7097, 4
      %v7100 = vshll.u32 %v7068, 16
      %v7102 = vrot.slane %v7100, 5
      %v7103 = vor.u32 %v7099, %v7102
      %v7104 = vrot.slane %v7103, 4
      %v7106 = vshll.u32 %v7069, 16
      %v7108 = vrot.slane %v7106, 5
      %v7109 = vsel %vm1374, %v7104, %v7108
      %v7111 = vshrl.u32 %v7070, 16
      %v7113 = vrot.slane %v7111, 4
      %v7114 = vshll.u32 %v7070, 16
      %v7116 = vrot.slane %v7114, 5
      %v7117 = vor.u32 %v7113, %v7116
      %v7118 = vrot.slane %v7117, 4
      %v7120 = vshll.u32 %v7071, 16
      %v7122 = vrot.slane %v7120, 5
      %v7123 = vsel %vm1374, %v7118, %v7122
      %v7125 = vshrl.u32 %v7072, 16
      %v7127 = vrot.slane %v7125, 4
      %v7128 = vshll.u32 %v7072, 16
      %v7130 = vrot.slane %v7128, 5
      %v7131 = vor.u32 %v7127, %v7130
      %v7132 = vrot.slane %v7131, 4
      %v7134 = vshll.u32 %v7073, 16
      %v7136 = vrot.slane %v7134, 5
      %v7137 = vsel %vm1374, %v7132, %v7136
      %v7139 = vshrl.u32 %v7074, 16
      %v7141 = vrot.slane %v7139, 4
      %v7142 = vshll.u32 %v7074, 16
      %v7144 = vrot.slane %v7142, 5
      %v7145 = vor.u32 %v7141, %v7144
      %v7146 = vrot.slane %v7145, 4
      %v7148 = vshll.u32 %v7075, 16
      %v7150 = vrot.slane %v7148, 5
      %v7151 = vsel %vm1374, %v7146, %v7150
      %v7153 = vshrl.u32 %v7076, 16
      %v7155 = vrot.slane %v7153, 4
      %v7156 = vshll.u32 %v7076, 16
      %v7158 = vrot.slane %v7156, 5
      %v7159 = vor.u32 %v7155, %v7158
      %v7160 = vrot.slane %v7159, 4
      %v7162 = vshll.u32 %v7077, 16
      %v7164 = vrot.slane %v7162, 5
      %v7165 = vsel %vm1374, %v7160, %v7164
      %v7167 = vshrl.u32 %v7078, 16
      %v7169 = vrot.slane %v7167, 4
      %v7170 = vshll.u32 %v7078, 16
      %v7172 = vrot.slane %v7170, 5
      %v7173 = vor.u32 %v7169, %v7172
      %v7174 = vrot.slane %v7173, 4
      %v7176 = vshll.u32 %v7079, 16
      %v7178 = vrot.slane %v7176, 5
      %v7179 = vsel %vm1374, %v7174, %v7178
      %v7181 = vshrl.u32 %v7080, 16
      %v7183 = vrot.slane %v7181, 4
      %v7184 = vshll.u32 %v7080, 16
      %v7186 = vrot.slane %v7184, 5
      %v7187 = vor.u32 %v7183, %v7186
      %v7188 = vrot.slane %v7187, 4
      %v7190 = vshll.u32 %v7081, 16
      %v7192 = vrot.slane %v7190, 5
      %v7193 = vsel %vm1374, %v7188, %v7192
      %v7194 = vunpack.c.l.b16 %v7095
      %v7195 = vunpack.c.l.b16 %v7109
      %v7196 = vunpack.c.l.b16 %v7123
      %v7197 = vunpack.c.l.b16 %v7137
      %v7198 = vunpack.c.l.b16 %v7151
      %v7199 = vunpack.c.l.b16 %v7165
      %v7200 = vunpack.c.l.b16 %v7179
      %v7201 = vunpack.c.l.b16 %v7193
      %v7202 = vpack.c.b16 %v7195, %v7194
      %v7203 = vpack.c.b16 %v7197, %v7196
      %v7204 = vpack.c.b16 %v7199, %v7198
      %v7205 = vpack.c.b16 %v7201, %v7200
      %7210 = vst [vmem:[#allocation3 + $0x28] sm:$0xff] %v7202
      %7211 = vst [vmem:[#allocation3 + $0x70] sm:$0xff] %v7203
      %7212 = vst [vmem:[#allocation3 + $0xb8] sm:$0xff] %v7204
      %7213 = vst [vmem:[#allocation3 + $0x100] sm:$0xff] %v7205
      %v7214 = vld [vmem:[%s5383] sm:$0xf]
      %v7215 = vld [vmem:[%s5383 + $0x8] sm:$0xf]
      %v7216 = vld [vmem:[%s5383 + $0x10] sm:$0xf]
      %v7217 = vld [vmem:[%s5383 + $0x18] sm:$0xf]
      %v7218 = vld [vmem:[%s5383 + $0x20] sm:$0xf]
      %v7219 = vld [vmem:[%s5383 + $0x28] sm:$0xf]
      %v7220 = vld [vmem:[%s5383 + $0x30] sm:$0xf]
      %v7221 = vld [vmem:[%s5383 + $0x38] sm:$0xf]
      %v7230 = vunpack.c.l.b16 %v7214
      %v7231 = vunpack.c.l.b16 %v7215
      %v7232 = vunpack.c.l.b16 %v7216
      %v7233 = vunpack.c.l.b16 %v7217
      %v7234 = vunpack.c.l.b16 %v7218
      %v7235 = vunpack.c.l.b16 %v7219
      %v7236 = vunpack.c.l.b16 %v7220
      %v7237 = vunpack.c.l.b16 %v7221
      %v7238 = vpack.c.b16 %v7231, %v7230
      %v7239 = vpack.c.b16 %v7233, %v7232
      %v7240 = vpack.c.b16 %v7235, %v7234
      %v7241 = vpack.c.b16 %v7237, %v7236
      %7246 = vst [vmem:[#allocation3 + $0x30] sm:$0xff] %v7238
      %7247 = vst [vmem:[#allocation3 + $0x78] sm:$0xff] %v7239
      %7248 = vst [vmem:[#allocation3 + $0xc0] sm:$0xff] %v7240
      %7249 = vst [vmem:[#allocation3 + $0x108] sm:$0xff] %v7241
      %v7250 = vld [vmem:[%s5346] sm:$0xf]
      %v7251 = vld [vmem:[%s5346 + $0x4] sm:$0x1]
      %v7252 = vld [vmem:[%s5346 + $0x8] sm:$0xf]
      %v7253 = vld [vmem:[%s5346 + $0xc] sm:$0x1]
      %v7254 = vld [vmem:[%s5346 + $0x10] sm:$0xf]
      %v7255 = vld [vmem:[%s5346 + $0x14] sm:$0x1]
      %v7256 = vld [vmem:[%s5346 + $0x18] sm:$0xf]
      %v7257 = vld [vmem:[%s5346 + $0x1c] sm:$0x1]
      %v7258 = vld [vmem:[%s5346 + $0x20] sm:$0xf]
      %v7259 = vld [vmem:[%s5346 + $0x24] sm:$0x1]
      %v7260 = vld [vmem:[%s5346 + $0x28] sm:$0xf]
      %v7261 = vld [vmem:[%s5346 + $0x2c] sm:$0x1]
      %v7262 = vld [vmem:[%s5346 + $0x30] sm:$0xf]
      %v7263 = vld [vmem:[%s5346 + $0x34] sm:$0x1]
      %v7264 = vld [vmem:[%s5346 + $0x38] sm:$0xf]
      %v7265 = vld [vmem:[%s5346 + $0x3c] sm:$0x1]
      %v7267 = vshrl.u32 %v7250, 16
      %v7269 = vrot.slane %v7267, 4
      %v7270 = vshll.u32 %v7250, 16
      %v7272 = vrot.slane %v7270, 5
      %v7273 = vor.u32 %v7269, %v7272
      %v7274 = vrot.slane %v7273, 4
      %v7276 = vshll.u32 %v7251, 16
      %v7278 = vrot.slane %v7276, 5
      %v7279 = vsel %vm1374, %v7274, %v7278
      %v7281 = vshrl.u32 %v7252, 16
      %v7283 = vrot.slane %v7281, 4
      %v7284 = vshll.u32 %v7252, 16
      %v7286 = vrot.slane %v7284, 5
      %v7287 = vor.u32 %v7283, %v7286
      %v7288 = vrot.slane %v7287, 4
      %v7290 = vshll.u32 %v7253, 16
      %v7292 = vrot.slane %v7290, 5
      %v7293 = vsel %vm1374, %v7288, %v7292
      %v7295 = vshrl.u32 %v7254, 16
      %v7297 = vrot.slane %v7295, 4
      %v7298 = vshll.u32 %v7254, 16
      %v7300 = vrot.slane %v7298, 5
      %v7301 = vor.u32 %v7297, %v7300
      %v7302 = vrot.slane %v7301, 4
      %v7304 = vshll.u32 %v7255, 16
      %v7306 = vrot.slane %v7304, 5
      %v7307 = vsel %vm1374, %v7302, %v7306
      %v7309 = vshrl.u32 %v7256, 16
      %v7311 = vrot.slane %v7309, 4
      %v7312 = vshll.u32 %v7256, 16
      %v7314 = vrot.slane %v7312, 5
      %v7315 = vor.u32 %v7311, %v7314
      %v7316 = vrot.slane %v7315, 4
      %v7318 = vshll.u32 %v7257, 16
      %v7320 = vrot.slane %v7318, 5
      %v7321 = vsel %vm1374, %v7316, %v7320
      %v7323 = vshrl.u32 %v7258, 16
      %v7325 = vrot.slane %v7323, 4
      %v7326 = vshll.u32 %v7258, 16
      %v7328 = vrot.slane %v7326, 5
      %v7329 = vor.u32 %v7325, %v7328
      %v7330 = vrot.slane %v7329, 4
      %v7332 = vshll.u32 %v7259, 16
      %v7334 = vrot.slane %v7332, 5
      %v7335 = vsel %vm1374, %v7330, %v7334
      %v7337 = vshrl.u32 %v7260, 16
      %v7339 = vrot.slane %v7337, 4
      %v7340 = vshll.u32 %v7260, 16
      %v7342 = vrot.slane %v7340, 5
      %v7343 = vor.u32 %v7339, %v7342
      %v7344 = vrot.slane %v7343, 4
      %v7346 = vshll.u32 %v7261, 16
      %v7348 = vrot.slane %v7346, 5
      %v7349 = vsel %vm1374, %v7344, %v7348
      %v7351 = vshrl.u32 %v7262, 16
      %v7353 = vrot.slane %v7351, 4
      %v7354 = vshll.u32 %v7262, 16
      %v7356 = vrot.slane %v7354, 5
      %v7357 = vor.u32 %v7353, %v7356
      %v7358 = vrot.slane %v7357, 4
      %v7360 = vshll.u32 %v7263, 16
      %v7362 = vrot.slane %v7360, 5
      %v7363 = vsel %vm1374, %v7358, %v7362
      %v7365 = vshrl.u32 %v7264, 16
      %v7367 = vrot.slane %v7365, 4
      %v7368 = vshll.u32 %v7264, 16
      %v7370 = vrot.slane %v7368, 5
      %v7371 = vor.u32 %v7367, %v7370
      %v7372 = vrot.slane %v7371, 4
      %v7374 = vshll.u32 %v7265, 16
      %v7376 = vrot.slane %v7374, 5
      %v7377 = vsel %vm1374, %v7372, %v7376
      %v7378 = vunpack.c.l.b16 %v7279
      %v7379 = vunpack.c.l.b16 %v7293
      %v7380 = vunpack.c.l.b16 %v7307
      %v7381 = vunpack.c.l.b16 %v7321
      %v7382 = vunpack.c.l.b16 %v7335
      %v7383 = vunpack.c.l.b16 %v7349
      %v7384 = vunpack.c.l.b16 %v7363
      %v7385 = vunpack.c.l.b16 %v7377
      %v7386 = vpack.c.b16 %v7379, %v7378
      %v7387 = vpack.c.b16 %v7381, %v7380
      %v7388 = vpack.c.b16 %v7383, %v7382
      %v7389 = vpack.c.b16 %v7385, %v7384
      %7394 = vst [vmem:[#allocation3 + $0x38] sm:$0xff] %v7386
      %7395 = vst [vmem:[#allocation3 + $0x80] sm:$0xff] %v7387
      %7396 = vst [vmem:[#allocation3 + $0xc8] sm:$0xff] %v7388
      %7397 = vst [vmem:[#allocation3 + $0x110] sm:$0xff] %v7389
      %v7398 = vld [vmem:[%s5383] sm:$0xf]
      %v7399 = vld [vmem:[%s5383 + $0x4] sm:$0x1]
      %v7400 = vld [vmem:[%s5383 + $0x8] sm:$0xf]
      %v7401 = vld [vmem:[%s5383 + $0xc] sm:$0x1]
      %v7402 = vld [vmem:[%s5383 + $0x10] sm:$0xf]
      %v7403 = vld [vmem:[%s5383 + $0x14] sm:$0x1]
      %v7404 = vld [vmem:[%s5383 + $0x18] sm:$0xf]
      %v7405 = vld [vmem:[%s5383 + $0x1c] sm:$0x1]
      %v7406 = vld [vmem:[%s5383 + $0x20] sm:$0xf]
      %v7407 = vld [vmem:[%s5383 + $0x24] sm:$0x1]
      %v7408 = vld [vmem:[%s5383 + $0x28] sm:$0xf]
      %v7409 = vld [vmem:[%s5383 + $0x2c] sm:$0x1]
      %v7410 = vld [vmem:[%s5383 + $0x30] sm:$0xf]
      %v7411 = vld [vmem:[%s5383 + $0x34] sm:$0x1]
      %v7412 = vld [vmem:[%s5383 + $0x38] sm:$0xf]
      %v7413 = vld [vmem:[%s5383 + $0x3c] sm:$0x1]
      %v7415 = vshrl.u32 %v7398, 16
      %v7417 = vrot.slane %v7415, 4
      %v7418 = vshll.u32 %v7398, 16
      %v7420 = vrot.slane %v7418, 5
      %v7421 = vor.u32 %v7417, %v7420
      %v7422 = vrot.slane %v7421, 4
      %v7424 = vshll.u32 %v7399, 16
      %v7426 = vrot.slane %v7424, 5
      %v7427 = vsel %vm1374, %v7422, %v7426
      %v7429 = vshrl.u32 %v7400, 16
      %v7431 = vrot.slane %v7429, 4
      %v7432 = vshll.u32 %v7400, 16
      %v7434 = vrot.slane %v7432, 5
      %v7435 = vor.u32 %v7431, %v7434
      %v7436 = vrot.slane %v7435, 4
      %v7438 = vshll.u32 %v7401, 16
      %v7440 = vrot.slane %v7438, 5
      %v7441 = vsel %vm1374, %v7436, %v7440
      %v7443 = vshrl.u32 %v7402, 16
      %v7445 = vrot.slane %v7443, 4
      %v7446 = vshll.u32 %v7402, 16
      %v7448 = vrot.slane %v7446, 5
      %v7449 = vor.u32 %v7445, %v7448
      %v7450 = vrot.slane %v7449, 4
      %v7452 = vshll.u32 %v7403, 16
      %v7454 = vrot.slane %v7452, 5
      %v7455 = vsel %vm1374, %v7450, %v7454
      %v7457 = vshrl.u32 %v7404, 16
      %v7459 = vrot.slane %v7457, 4
      %v7460 = vshll.u32 %v7404, 16
      %v7462 = vrot.slane %v7460, 5
      %v7463 = vor.u32 %v7459, %v7462
      %v7464 = vrot.slane %v7463, 4
      %v7466 = vshll.u32 %v7405, 16
      %v7468 = vrot.slane %v7466, 5
      %v7469 = vsel %vm1374, %v7464, %v7468
      %v7471 = vshrl.u32 %v7406, 16
      %v7473 = vrot.slane %v7471, 4
      %v7474 = vshll.u32 %v7406, 16
      %v7476 = vrot.slane %v7474, 5
      %v7477 = vor.u32 %v7473, %v7476
      %v7478 = vrot.slane %v7477, 4
      %v7480 = vshll.u32 %v7407, 16
      %v7482 = vrot.slane %v7480, 5
      %v7483 = vsel %vm1374, %v7478, %v7482
      %v7485 = vshrl.u32 %v7408, 16
      %v7487 = vrot.slane %v7485, 4
      %v7488 = vshll.u32 %v7408, 16
      %v7490 = vrot.slane %v7488, 5
      %v7491 = vor.u32 %v7487, %v7490
      %v7492 = vrot.slane %v7491, 4
      %v7494 = vshll.u32 %v7409, 16
      %v7496 = vrot.slane %v7494, 5
      %v7497 = vsel %vm1374, %v7492, %v7496
      %v7499 = vshrl.u32 %v7410, 16
      %v7501 = vrot.slane %v7499, 4
      %v7502 = vshll.u32 %v7410, 16
      %v7504 = vrot.slane %v7502, 5
      %v7505 = vor.u32 %v7501, %v7504
      %v7506 = vrot.slane %v7505, 4
      %v7508 = vshll.u32 %v7411, 16
      %v7510 = vrot.slane %v7508, 5
      %v7511 = vsel %vm1374, %v7506, %v7510
      %v7513 = vshrl.u32 %v7412, 16
      %v7515 = vrot.slane %v7513, 4
      %v7516 = vshll.u32 %v7412, 16
      %v7518 = vrot.slane %v7516, 5
      %v7519 = vor.u32 %v7515, %v7518
      %v7520 = vrot.slane %v7519, 4
      %v7522 = vshll.u32 %v7413, 16
      %v7524 = vrot.slane %v7522, 5
      %v7525 = vsel %vm1374, %v7520, %v7524
      %v7526 = vunpack.c.l.b16 %v7427
      %v7527 = vunpack.c.l.b16 %v7441
      %v7528 = vunpack.c.l.b16 %v7455
      %v7529 = vunpack.c.l.b16 %v7469
      %v7530 = vunpack.c.l.b16 %v7483
      %v7531 = vunpack.c.l.b16 %v7497
      %v7532 = vunpack.c.l.b16 %v7511
      %v7533 = vunpack.c.l.b16 %v7525
      %v7534 = vpack.c.b16 %v7527, %v7526
      %v7535 = vpack.c.b16 %v7529, %v7528
      %v7536 = vpack.c.b16 %v7531, %v7530
      %v7537 = vpack.c.b16 %v7533, %v7532
      %7542 = vst [vmem:[#allocation3 + $0x40] sm:$0xff] %v7534
      %7543 = vst [vmem:[#allocation3 + $0x88] sm:$0xff] %v7535
      %7544 = vst [vmem:[#allocation3 + $0xd0] sm:$0xff] %v7536
      %7545 = vst [vmem:[#allocation3 + $0x118] sm:$0xff] %v7537
      %v7546 = vld [vmem:[#allocation3] sm:$0xff]
      %v7547 = vld [vmem:[#allocation3 + $0x8] sm:$0xff]
      %v7548 = vld [vmem:[#allocation3 + $0x10] sm:$0xff]
      %v7549 = vld [vmem:[#allocation3 + $0x18] sm:$0xff]
      %v7550 = vld [vmem:[#allocation3 + $0x20] sm:$0xff]
      %v7551 = vld [vmem:[#allocation3 + $0x28] sm:$0xff]
      %v7552 = vld [vmem:[#allocation3 + $0x30] sm:$0xff]
      %v7553 = vld [vmem:[#allocation3 + $0x38] sm:$0xff]
      %v7554 = vld [vmem:[#allocation3 + $0x40] sm:$0xff]
      %v7555 = vld [vmem:[#allocation3 + $0x48] sm:$0xff]
      %v7556 = vld [vmem:[#allocation3 + $0x50] sm:$0xff]
      %v7557 = vld [vmem:[#allocation3 + $0x58] sm:$0xff]
      %v7558 = vld [vmem:[#allocation3 + $0x60] sm:$0xff]
      %v7559 = vld [vmem:[#allocation3 + $0x68] sm:$0xff]
      %v7560 = vld [vmem:[#allocation3 + $0x70] sm:$0xff]
      %v7561 = vld [vmem:[#allocation3 + $0x78] sm:$0xff]
      %v7562 = vld [vmem:[#allocation3 + $0x80] sm:$0xff]
      %v7563 = vld [vmem:[#allocation3 + $0x88] sm:$0xff]
      %v7564 = vld [vmem:[#allocation3 + $0x90] sm:$0xff]
      %v7565 = vld [vmem:[#allocation3 + $0x98] sm:$0xff]
      %v7566 = vld [vmem:[#allocation3 + $0xa0] sm:$0xff]
      %v7567 = vld [vmem:[#allocation3 + $0xa8] sm:$0xff]
      %v7568 = vld [vmem:[#allocation3 + $0xb0] sm:$0xff]
      %v7569 = vld [vmem:[#allocation3 + $0xb8] sm:$0xff]
      %v7570 = vld [vmem:[#allocation3 + $0xc0] sm:$0xff]
      %v7571 = vld [vmem:[#allocation3 + $0xc8] sm:$0xff]
      %v7572 = vld [vmem:[#allocation3 + $0xd0] sm:$0xff]
      %v7573 = vld [vmem:[#allocation3 + $0xd8] sm:$0xff]
      %v7574 = vld [vmem:[#allocation3 + $0xe0] sm:$0xff]
      %v7575 = vld [vmem:[#allocation3 + $0xe8] sm:$0xff]
      %v7576 = vld [vmem:[#allocation3 + $0xf0] sm:$0xff]
      %v7577 = vld [vmem:[#allocation3 + $0xf8] sm:$0xff]
      %v7578 = vld [vmem:[#allocation3 + $0x100] sm:$0xff]
      %v7579 = vld [vmem:[#allocation3 + $0x108] sm:$0xff]
      %v7580 = vld [vmem:[#allocation3 + $0x110] sm:$0xff]
      %v7581 = vld [vmem:[#allocation3 + $0x118] sm:$0xff]
      %v7582 = vld [vmem:[%s2] sm:$0xf]
      %v7583 = vld [vmem:[%s2 + $0x4] sm:$0xf]
      %v7584 = vld [vmem:[%s2 + $0x8] sm:$0xf]
      %v7585 = vld [vmem:[%s2 + $0xc] sm:$0xf]
      %v7586 = vld [vmem:[%s2 + $0x10] sm:$0xf]
      %v7587 = vld [vmem:[%s2 + $0x14] sm:$0xf]
      %v7588 = vld [vmem:[%s2 + $0x18] sm:$0xf]
      %v7589 = vld [vmem:[%s2 + $0x1c] sm:$0xf]
      %v7590 = vld [vmem:[%s2 + $0x20] sm:$0xf]
      %v7591 = vld [vmem:[%s2 + $0x24] sm:$0xf]
      %v7592 = vld [vmem:[%s2 + $0x28] sm:$0xf]
      %v7593 = vld [vmem:[%s2 + $0x2c] sm:$0xf]
      %v7594 = vld [vmem:[%s2 + $0x30] sm:$0xf]
      %v7595 = vld [vmem:[%s2 + $0x34] sm:$0xf]
      %v7596 = vld [vmem:[%s2 + $0x38] sm:$0xf]
      %v7597 = vld [vmem:[%s2 + $0x3c] sm:$0xf]
      %v7598 = vld [vmem:[%s2 + $0x40] sm:$0xf]
      %v7599 = vld [vmem:[%s2 + $0x44] sm:$0xf]
      %v7600 = vld [vmem:[%s2 + $0x48] sm:$0xf]
      %v7601 = vld [vmem:[%s2 + $0x4c] sm:$0xf]
      %v7602 = vld [vmem:[%s2 + $0x50] sm:$0xf]
      %v7603 = vld [vmem:[%s2 + $0x54] sm:$0xf]
      %v7604 = vld [vmem:[%s2 + $0x58] sm:$0xf]
      %v7605 = vld [vmem:[%s2 + $0x5c] sm:$0xf]
      %v7606 = vld [vmem:[%s2 + $0x60] sm:$0xf]
      %v7607 = vld [vmem:[%s2 + $0x64] sm:$0xf]
      %v7608 = vld [vmem:[%s2 + $0x68] sm:$0xf]
      %v7609 = vld [vmem:[%s2 + $0x6c] sm:$0xf]
      %v7610 = vld [vmem:[%s2 + $0x70] sm:$0xf]
      %v7611 = vld [vmem:[%s2 + $0x74] sm:$0xf]
      %v7612 = vld [vmem:[%s2 + $0x78] sm:$0xf]
      %v7613 = vld [vmem:[%s2 + $0x7c] sm:$0xf]
      %v7614 = vld [vmem:[%s2 + $0x80] sm:$0xf]
      %v7615 = vld [vmem:[%s2 + $0x84] sm:$0xf]
      %v7616 = vld [vmem:[%s2 + $0x88] sm:$0xf]
      %v7617 = vld [vmem:[%s2 + $0x8c] sm:$0xf]
      %v7618 = vld [vmem:[%s2 + $0x90] sm:$0xf]
      %v7619 = vld [vmem:[%s2 + $0x94] sm:$0xf]
      %v7620 = vld [vmem:[%s2 + $0x98] sm:$0xf]
      %v7621 = vld [vmem:[%s2 + $0x9c] sm:$0xf]
      %v7622 = vld [vmem:[%s2 + $0xa0] sm:$0xf]
      %v7623 = vld [vmem:[%s2 + $0xa4] sm:$0xf]
      %v7624 = vld [vmem:[%s2 + $0xa8] sm:$0xf]
      %v7625 = vld [vmem:[%s2 + $0xac] sm:$0xf]
      %v7626 = vld [vmem:[%s2 + $0xb0] sm:$0xf]
      %v7627 = vld [vmem:[%s2 + $0xb4] sm:$0xf]
      %v7628 = vld [vmem:[%s2 + $0xb8] sm:$0xf]
      %v7629 = vld [vmem:[%s2 + $0xbc] sm:$0xf]
      %v7630 = vld [vmem:[%s2 + $0xc0] sm:$0xf]
      %v7631 = vld [vmem:[%s2 + $0xc4] sm:$0xf]
      %v7632 = vld [vmem:[%s2 + $0xc8] sm:$0xf]
      %v7633 = vld [vmem:[%s2 + $0xcc] sm:$0xf]
      %v7634 = vld [vmem:[%s2 + $0xd0] sm:$0xf]
      %v7635 = vld [vmem:[%s2 + $0xd4] sm:$0xf]
      %v7636 = vld [vmem:[%s2 + $0xd8] sm:$0xf]
      %v7637 = vld [vmem:[%s2 + $0xdc] sm:$0xf]
      %v7638 = vld [vmem:[%s2 + $0xe0] sm:$0xf]
      %v7639 = vld [vmem:[%s2 + $0xe4] sm:$0xf]
      %v7640 = vld [vmem:[%s2 + $0xe8] sm:$0xf]
      %v7641 = vld [vmem:[%s2 + $0xec] sm:$0xf]
      %v7642 = vld [vmem:[%s2 + $0xf0] sm:$0xf]
      %v7643 = vld [vmem:[%s2 + $0xf4] sm:$0xf]
      %v7644 = vld [vmem:[%s2 + $0xf8] sm:$0xf]
      %v7645 = vld [vmem:[%s2 + $0xfc] sm:$0xf]
      %v7646 = vld [vmem:[%s2 + $0x100] sm:$0xf]
      %v7647 = vld [vmem:[%s2 + $0x104] sm:$0xf]
      %v7648 = vld [vmem:[%s2 + $0x108] sm:$0xf]
      %v7649 = vld [vmem:[%s2 + $0x10c] sm:$0xf]
      %v7650 = vld [vmem:[%s2 + $0x110] sm:$0xf]
      %v7651 = vld [vmem:[%s2 + $0x114] sm:$0xf]
      %v7652 = vld [vmem:[%s2 + $0x118] sm:$0xf]
      %v7653 = vld [vmem:[%s2 + $0x11c] sm:$0xf]
      %v7654 = vld [vmem:[%s2 + $0x120] sm:$0xf]
      %v7655 = vld [vmem:[%s2 + $0x124] sm:$0xf]
      %v7656 = vld [vmem:[%s2 + $0x128] sm:$0xf]
      %v7657 = vld [vmem:[%s2 + $0x12c] sm:$0xf]
      %v7658 = vld [vmem:[%s2 + $0x130] sm:$0xf]
      %v7659 = vld [vmem:[%s2 + $0x134] sm:$0xf]
      %v7660 = vld [vmem:[%s2 + $0x138] sm:$0xf]
      %v7661 = vld [vmem:[%s2 + $0x13c] sm:$0xf]
      %v7662 = vld [vmem:[%s2 + $0x140] sm:$0xf]
      %v7663 = vld [vmem:[%s2 + $0x144] sm:$0xf]
      %v7664 = vld [vmem:[%s2 + $0x148] sm:$0xf]
      %v7665 = vld [vmem:[%s2 + $0x14c] sm:$0xf]
      %v7666 = vld [vmem:[%s2 + $0x150] sm:$0xf]
      %v7667 = vld [vmem:[%s2 + $0x154] sm:$0xf]
      %v7668 = vld [vmem:[%s2 + $0x158] sm:$0xf]
      %v7669 = vld [vmem:[%s2 + $0x15c] sm:$0xf]
      %v7670 = vld [vmem:[%s2 + $0x160] sm:$0xf]
      %v7671 = vld [vmem:[%s2 + $0x164] sm:$0xf]
      %v7672 = vld [vmem:[%s2 + $0x168] sm:$0xf]
      %v7673 = vld [vmem:[%s2 + $0x16c] sm:$0xf]
      %v7674 = vld [vmem:[%s2 + $0x170] sm:$0xf]
      %v7675 = vld [vmem:[%s2 + $0x174] sm:$0xf]
      %v7676 = vld [vmem:[%s2 + $0x178] sm:$0xf]
      %v7677 = vld [vmem:[%s2 + $0x17c] sm:$0xf]
      %v7678 = vld [vmem:[%s2 + $0x180] sm:$0xf]
      %v7679 = vld [vmem:[%s2 + $0x184] sm:$0xf]
      %v7680 = vld [vmem:[%s2 + $0x188] sm:$0xf]
      %v7681 = vld [vmem:[%s2 + $0x18c] sm:$0xf]
      %v7682 = vld [vmem:[%s2 + $0x190] sm:$0xf]
      %v7683 = vld [vmem:[%s2 + $0x194] sm:$0xf]
      %v7684 = vld [vmem:[%s2 + $0x198] sm:$0xf]
      %v7685 = vld [vmem:[%s2 + $0x19c] sm:$0xf]
      %v7686 = vld [vmem:[%s2 + $0x1a0] sm:$0xf]
      %v7687 = vld [vmem:[%s2 + $0x1a4] sm:$0xf]
      %v7688 = vld [vmem:[%s2 + $0x1a8] sm:$0xf]
      %v7689 = vld [vmem:[%s2 + $0x1ac] sm:$0xf]
      %v7690 = vld [vmem:[%s2 + $0x1b0] sm:$0xf]
      %v7691 = vld [vmem:[%s2 + $0x1b4] sm:$0xf]
      %v7692 = vld [vmem:[%s2 + $0x1b8] sm:$0xf]
      %v7693 = vld [vmem:[%s2 + $0x1bc] sm:$0xf]
      %v7694 = vld [vmem:[%s2 + $0x1c0] sm:$0xf]
      %v7695 = vld [vmem:[%s2 + $0x1c4] sm:$0xf]
      %v7696 = vld [vmem:[%s2 + $0x1c8] sm:$0xf]
      %v7697 = vld [vmem:[%s2 + $0x1cc] sm:$0xf]
      %v7698 = vld [vmem:[%s2 + $0x1d0] sm:$0xf]
      %v7699 = vld [vmem:[%s2 + $0x1d4] sm:$0xf]
      %v7700 = vld [vmem:[%s2 + $0x1d8] sm:$0xf]
      %v7701 = vld [vmem:[%s2 + $0x1dc] sm:$0xf]
      %v7702 = vld [vmem:[%s2 + $0x1e0] sm:$0xf]
      %v7703 = vld [vmem:[%s2 + $0x1e4] sm:$0xf]
      %v7704 = vld [vmem:[%s2 + $0x1e8] sm:$0xf]
      %v7705 = vld [vmem:[%s2 + $0x1ec] sm:$0xf]
      %v7706 = vld [vmem:[%s2 + $0x1f0] sm:$0xf]
      %v7707 = vld [vmem:[%s2 + $0x1f4] sm:$0xf]
      %v7708 = vld [vmem:[%s2 + $0x1f8] sm:$0xf]
      %v7709 = vld [vmem:[%s2 + $0x1fc] sm:$0xf]
      %v7710 = vld [vmem:[%s2 + $0x200] sm:$0xf]
      %v7711 = vld [vmem:[%s2 + $0x204] sm:$0xf]
      %v7712 = vld [vmem:[%s2 + $0x208] sm:$0xf]
      %v7713 = vld [vmem:[%s2 + $0x20c] sm:$0xf]
      %v7714 = vld [vmem:[%s2 + $0x210] sm:$0xf]
      %v7715 = vld [vmem:[%s2 + $0x214] sm:$0xf]
      %v7716 = vld [vmem:[%s2 + $0x218] sm:$0xf]
      %v7717 = vld [vmem:[%s2 + $0x21c] sm:$0xf]
      %v7718 = vld [vmem:[%s2 + $0x220] sm:$0xf]
      %v7719 = vld [vmem:[%s2 + $0x224] sm:$0xf]
      %v7720 = vld [vmem:[%s2 + $0x228] sm:$0xf]
      %v7721 = vld [vmem:[%s2 + $0x22c] sm:$0xf]
      %v7722 = vld [vmem:[%s2 + $0x230] sm:$0xf]
      %v7723 = vld [vmem:[%s2 + $0x234] sm:$0xf]
      %v7724 = vld [vmem:[%s2 + $0x238] sm:$0xf]
      %v7725 = vld [vmem:[%s2 + $0x23c] sm:$0xf]
      %v7870 = vunpack.c.l.b16 %v7582
      %v7871 = vunpack.c.l.b16 %v7583
      %v7872 = vunpack.c.l.b16 %v7584
      %v7873 = vunpack.c.l.b16 %v7585
      %v7874 = vunpack.c.l.b16 %v7586
      %v7875 = vunpack.c.l.b16 %v7587
      %v7876 = vunpack.c.l.b16 %v7588
      %v7877 = vunpack.c.l.b16 %v7589
      %v7878 = vunpack.c.l.b16 %v7590
      %v7879 = vunpack.c.l.b16 %v7591
      %v7880 = vunpack.c.l.b16 %v7592
      %v7881 = vunpack.c.l.b16 %v7593
      %v7882 = vunpack.c.l.b16 %v7594
      %v7883 = vunpack.c.l.b16 %v7595
      %v7884 = vunpack.c.l.b16 %v7596
      %v7885 = vunpack.c.l.b16 %v7597
      %v7886 = vunpack.c.l.b16 %v7598
      %v7887 = vunpack.c.l.b16 %v7599
      %v7888 = vunpack.c.l.b16 %v7600
      %v7889 = vunpack.c.l.b16 %v7601
      %v7890 = vunpack.c.l.b16 %v7602
      %v7891 = vunpack.c.l.b16 %v7603
      %v7892 = vunpack.c.l.b16 %v7604
      %v7893 = vunpack.c.l.b16 %v7605
      %v7894 = vunpack.c.l.b16 %v7606
      %v7895 = vunpack.c.l.b16 %v7607
      %v7896 = vunpack.c.l.b16 %v7608
      %v7897 = vunpack.c.l.b16 %v7609
      %v7898 = vunpack.c.l.b16 %v7610
      %v7899 = vunpack.c.l.b16 %v7611
      %v7900 = vunpack.c.l.b16 %v7612
      %v7901 = vunpack.c.l.b16 %v7613
      %v7902 = vunpack.c.l.b16 %v7614
      %v7903 = vunpack.c.l.b16 %v7615
      %v7904 = vunpack.c.l.b16 %v7616
      %v7905 = vunpack.c.l.b16 %v7617
      %v7906 = vunpack.c.l.b16 %v7618
      %v7907 = vunpack.c.l.b16 %v7619
      %v7908 = vunpack.c.l.b16 %v7620
      %v7909 = vunpack.c.l.b16 %v7621
      %v7910 = vunpack.c.l.b16 %v7622
      %v7911 = vunpack.c.l.b16 %v7623
      %v7912 = vunpack.c.l.b16 %v7624
      %v7913 = vunpack.c.l.b16 %v7625
      %v7914 = vunpack.c.l.b16 %v7626
      %v7915 = vunpack.c.l.b16 %v7627
      %v7916 = vunpack.c.l.b16 %v7628
      %v7917 = vunpack.c.l.b16 %v7629
      %v7918 = vunpack.c.l.b16 %v7630
      %v7919 = vunpack.c.l.b16 %v7631
      %v7920 = vunpack.c.l.b16 %v7632
      %v7921 = vunpack.c.l.b16 %v7633
      %v7922 = vunpack.c.l.b16 %v7634
      %v7923 = vunpack.c.l.b16 %v7635
      %v7924 = vunpack.c.l.b16 %v7636
      %v7925 = vunpack.c.l.b16 %v7637
      %v7926 = vunpack.c.l.b16 %v7638
      %v7927 = vunpack.c.l.b16 %v7639
      %v7928 = vunpack.c.l.b16 %v7640
      %v7929 = vunpack.c.l.b16 %v7641
      %v7930 = vunpack.c.l.b16 %v7642
      %v7931 = vunpack.c.l.b16 %v7643
      %v7932 = vunpack.c.l.b16 %v7644
      %v7933 = vunpack.c.l.b16 %v7645
      %v7934 = vunpack.c.l.b16 %v7646
      %v7935 = vunpack.c.l.b16 %v7647
      %v7936 = vunpack.c.l.b16 %v7648
      %v7937 = vunpack.c.l.b16 %v7649
      %v7938 = vunpack.c.l.b16 %v7650
      %v7939 = vunpack.c.l.b16 %v7651
      %v7940 = vunpack.c.l.b16 %v7652
      %v7941 = vunpack.c.l.b16 %v7653
      %v7942 = vunpack.c.l.b16 %v7654
      %v7943 = vunpack.c.l.b16 %v7655
      %v7944 = vunpack.c.l.b16 %v7656
      %v7945 = vunpack.c.l.b16 %v7657
      %v7946 = vunpack.c.l.b16 %v7658
      %v7947 = vunpack.c.l.b16 %v7659
      %v7948 = vunpack.c.l.b16 %v7660
      %v7949 = vunpack.c.l.b16 %v7661
      %v7950 = vunpack.c.l.b16 %v7662
      %v7951 = vunpack.c.l.b16 %v7663
      %v7952 = vunpack.c.l.b16 %v7664
      %v7953 = vunpack.c.l.b16 %v7665
      %v7954 = vunpack.c.l.b16 %v7666
      %v7955 = vunpack.c.l.b16 %v7667
      %v7956 = vunpack.c.l.b16 %v7668
      %v7957 = vunpack.c.l.b16 %v7669
      %v7958 = vunpack.c.l.b16 %v7670
      %v7959 = vunpack.c.l.b16 %v7671
      %v7960 = vunpack.c.l.b16 %v7672
      %v7961 = vunpack.c.l.b16 %v7673
      %v7962 = vunpack.c.l.b16 %v7674
      %v7963 = vunpack.c.l.b16 %v7675
      %v7964 = vunpack.c.l.b16 %v7676
      %v7965 = vunpack.c.l.b16 %v7677
      %v7966 = vunpack.c.l.b16 %v7678
      %v7967 = vunpack.c.l.b16 %v7679
      %v7968 = vunpack.c.l.b16 %v7680
      %v7969 = vunpack.c.l.b16 %v7681
      %v7970 = vunpack.c.l.b16 %v7682
      %v7971 = vunpack.c.l.b16 %v7683
      %v7972 = vunpack.c.l.b16 %v7684
      %v7973 = vunpack.c.l.b16 %v7685
      %v7974 = vunpack.c.l.b16 %v7686
      %v7975 = vunpack.c.l.b16 %v7687
      %v7976 = vunpack.c.l.b16 %v7688
      %v7977 = vunpack.c.l.b16 %v7689
      %v7978 = vunpack.c.l.b16 %v7690
      %v7979 = vunpack.c.l.b16 %v7691
      %v7980 = vunpack.c.l.b16 %v7692
      %v7981 = vunpack.c.l.b16 %v7693
      %v7982 = vunpack.c.l.b16 %v7694
      %v7983 = vunpack.c.l.b16 %v7695
      %v7984 = vunpack.c.l.b16 %v7696
      %v7985 = vunpack.c.l.b16 %v7697
      %v7986 = vunpack.c.l.b16 %v7698
      %v7987 = vunpack.c.l.b16 %v7699
      %v7988 = vunpack.c.l.b16 %v7700
      %v7989 = vunpack.c.l.b16 %v7701
      %v7990 = vunpack.c.l.b16 %v7702
      %v7991 = vunpack.c.l.b16 %v7703
      %v7992 = vunpack.c.l.b16 %v7704
      %v7993 = vunpack.c.l.b16 %v7705
      %v7994 = vunpack.c.l.b16 %v7706
      %v7995 = vunpack.c.l.b16 %v7707
      %v7996 = vunpack.c.l.b16 %v7708
      %v7997 = vunpack.c.l.b16 %v7709
      %v7998 = vunpack.c.l.b16 %v7710
      %v7999 = vunpack.c.l.b16 %v7711
      %v8000 = vunpack.c.l.b16 %v7712
      %v8001 = vunpack.c.l.b16 %v7713
      %v8002 = vunpack.c.l.b16 %v7714
      %v8003 = vunpack.c.l.b16 %v7715
      %v8004 = vunpack.c.l.b16 %v7716
      %v8005 = vunpack.c.l.b16 %v7717
      %v8006 = vunpack.c.l.b16 %v7718
      %v8007 = vunpack.c.l.b16 %v7719
      %v8008 = vunpack.c.l.b16 %v7720
      %v8009 = vunpack.c.l.b16 %v7721
      %v8010 = vunpack.c.l.b16 %v7722
      %v8011 = vunpack.c.l.b16 %v7723
      %v8012 = vunpack.c.l.b16 %v7724
      %v8013 = vunpack.c.l.b16 %v7725
      %v8014 = vpack.c.b16 %v7871, %v7870
      %v8015 = vpack.c.b16 %v7873, %v7872
      %v8016 = vpack.c.b16 %v7875, %v7874
      %v8017 = vpack.c.b16 %v7877, %v7876
      %v8018 = vpack.c.b16 %v7879, %v7878
      %v8019 = vpack.c.b16 %v7881, %v7880
      %v8020 = vpack.c.b16 %v7883, %v7882
      %v8021 = vpack.c.b16 %v7885, %v7884
      %v8022 = vpack.c.b16 %v7887, %v7886
      %v8023 = vpack.c.b16 %v7889, %v7888
      %v8024 = vpack.c.b16 %v7891, %v7890
      %v8025 = vpack.c.b16 %v7893, %v7892
      %v8026 = vpack.c.b16 %v7895, %v7894
      %v8027 = vpack.c.b16 %v7897, %v7896
      %v8028 = vpack.c.b16 %v7899, %v7898
      %v8029 = vpack.c.b16 %v7901, %v7900
      %v8030 = vpack.c.b16 %v7903, %v7902
      %v8031 = vpack.c.b16 %v7905, %v7904
      %v8032 = vpack.c.b16 %v7907, %v7906
      %v8033 = vpack.c.b16 %v7909, %v7908
      %v8034 = vpack.c.b16 %v7911, %v7910
      %v8035 = vpack.c.b16 %v7913, %v7912
      %v8036 = vpack.c.b16 %v7915, %v7914
      %v8037 = vpack.c.b16 %v7917, %v7916
      %v8038 = vpack.c.b16 %v7919, %v7918
      %v8039 = vpack.c.b16 %v7921, %v7920
      %v8040 = vpack.c.b16 %v7923, %v7922
      %v8041 = vpack.c.b16 %v7925, %v7924
      %v8042 = vpack.c.b16 %v7927, %v7926
      %v8043 = vpack.c.b16 %v7929, %v7928
      %v8044 = vpack.c.b16 %v7931, %v7930
      %v8045 = vpack.c.b16 %v7933, %v7932
      %v8046 = vpack.c.b16 %v7935, %v7934
      %v8047 = vpack.c.b16 %v7937, %v7936
      %v8048 = vpack.c.b16 %v7939, %v7938
      %v8049 = vpack.c.b16 %v7941, %v7940
      %v8050 = vpack.c.b16 %v7943, %v7942
      %v8051 = vpack.c.b16 %v7945, %v7944
      %v8052 = vpack.c.b16 %v7947, %v7946
      %v8053 = vpack.c.b16 %v7949, %v7948
      %v8054 = vpack.c.b16 %v7951, %v7950
      %v8055 = vpack.c.b16 %v7953, %v7952
      %v8056 = vpack.c.b16 %v7955, %v7954
      %v8057 = vpack.c.b16 %v7957, %v7956
      %v8058 = vpack.c.b16 %v7959, %v7958
      %v8059 = vpack.c.b16 %v7961, %v7960
      %v8060 = vpack.c.b16 %v7963, %v7962
      %v8061 = vpack.c.b16 %v7965, %v7964
      %v8062 = vpack.c.b16 %v7967, %v7966
      %v8063 = vpack.c.b16 %v7969, %v7968
      %v8064 = vpack.c.b16 %v7971, %v7970
      %v8065 = vpack.c.b16 %v7973, %v7972
      %v8066 = vpack.c.b16 %v7975, %v7974
      %v8067 = vpack.c.b16 %v7977, %v7976
      %v8068 = vpack.c.b16 %v7979, %v7978
      %v8069 = vpack.c.b16 %v7981, %v7980
      %v8070 = vpack.c.b16 %v7983, %v7982
      %v8071 = vpack.c.b16 %v7985, %v7984
      %v8072 = vpack.c.b16 %v7987, %v7986
      %v8073 = vpack.c.b16 %v7989, %v7988
      %v8074 = vpack.c.b16 %v7991, %v7990
      %v8075 = vpack.c.b16 %v7993, %v7992
      %v8076 = vpack.c.b16 %v7995, %v7994
      %v8077 = vpack.c.b16 %v7997, %v7996
      %v8078 = vpack.c.b16 %v7999, %v7998
      %v8079 = vpack.c.b16 %v8001, %v8000
      %v8080 = vpack.c.b16 %v8003, %v8002
      %v8081 = vpack.c.b16 %v8005, %v8004
      %v8082 = vpack.c.b16 %v8007, %v8006
      %v8083 = vpack.c.b16 %v8009, %v8008
      %v8084 = vpack.c.b16 %v8011, %v8010
      %v8085 = vpack.c.b16 %v8013, %v8012
      %8158 = vmatprep.subr.bf16.mxu0 0
      %8159 = vmatpush1.bf16.msra.mxu0 %v8014
      %8160 = vmatprep.subr.bf16.mxu0 0
      %8161 = vmatpush1.bf16.msra.mxu0 %v8015
      %8162 = vmatprep.subr.bf16.mxu0 0
      %8163 = vmatpush1.bf16.msra.mxu0 %v8016
      %8164 = vmatprep.subr.bf16.mxu0 0
      %8165 = vmatpush1.bf16.msra.mxu0 %v8017
      %8166 = vmatprep.subr.bf16.mxu0 0
      %8167 = vmatpush1.bf16.msra.mxu0 %v8018
      %8168 = vmatprep.subr.bf16.mxu0 0
      %8169 = vmatpush1.bf16.msra.mxu0 %v8019
      %8170 = vmatprep.subr.bf16.mxu0 0
      %8171 = vmatpush1.bf16.msra.mxu0 %v8020
      %8172 = vmatprep.subr.bf16.mxu0 0
      %8173 = vmatpush1.bf16.msra.mxu0 %v8021
      %8174 = vmatprep.subr.bf16.mxu0 0
      %8175 = vmatpush1.bf16.msra.mxu0 %v8022
      %8176 = vmatprep.subr.bf16.mxu0 0
      %8177 = vmatpush1.bf16.msra.mxu0 %v8023
      %8178 = vmatprep.subr.bf16.mxu0 0
      %8179 = vmatpush1.bf16.msra.mxu0 %v8024
      %8180 = vmatprep.subr.bf16.mxu0 0
      %8181 = vmatpush1.bf16.msra.mxu0 %v8025
      %8182 = vmatprep.subr.bf16.mxu0 0
      %8183 = vmatpush1.bf16.msra.mxu0 %v8026
      %8184 = vmatprep.subr.bf16.mxu0 0
      %8185 = vmatpush1.bf16.msra.mxu0 %v8027
      %8186 = vmatprep.subr.bf16.mxu0 0
      %8187 = vmatpush1.bf16.msra.mxu0 %v8028
      %8188 = vmatprep.subr.bf16.mxu0 0
      %8189 = vmatpush1.bf16.msra.mxu0 %v8029
      %8190 = vmatprep.mubr.bf16.mxu0 %v7547
      %8191 = vmatmul.mubr.bf16.gmra.mrb[0].mxu0 %v7546
      %v8192 = vpop.f32.mrb[0].mxu0
      %v8193 = vadd.f32 0.0, %v8192
      %v8194 = vpop.f32.mrb[0].mxu0
      %v8195 = vpop.f32.mrb[0].mxu0
      %v8196 = vadd.f32 0.0, %v8195
      %v8197 = vpop.f32.mrb[0].mxu0
      %8198 = vmatprep.mubr.bf16.mxu0 %v7556
      %8199 = vmatmul.mubr.bf16.gmra.mrb[0].mxu0 %v7555
      %v8200 = vpop.f32.mrb[0].mxu0
      %v8201 = vadd.f32 0.0, %v8200
      %v8202 = vpop.f32.mrb[0].mxu0
      %v8203 = vpop.f32.mrb[0].mxu0
      %v8204 = vadd.f32 0.0, %v8203
      %v8205 = vpop.f32.mrb[0].mxu0
      %8206 = vmatprep.mubr.bf16.mxu0 %v7565
      %8207 = vmatmul.mubr.bf16.gmra.mrb[0].mxu0 %v7564
      %v8208 = vpop.f32.mrb[0].mxu0
      %v8209 = vadd.f32 0.0, %v8208
      %v8210 = vpop.f32.mrb[0].mxu0
      %v8211 = vpop.f32.mrb[0].mxu0
      %v8212 = vadd.f32 0.0, %v8211
      %v8213 = vpop.f32.mrb[0].mxu0
      %8214 = vmatprep.mubr.bf16.mxu0 %v7574
      %8215 = vmatmul.mubr.bf16.gmra.mrb[0].mxu0 %v7573
      %v8216 = vpop.f32.mrb[0].mxu0
      %v8217 = vadd.f32 0.0, %v8216
      %v8218 = vpop.f32.mrb[0].mxu0
      %v8219 = vpop.f32.mrb[0].mxu0
      %v8220 = vadd.f32 0.0, %v8219
      %v8221 = vpop.f32.mrb[0].mxu0
      %8222 = vdwg.mxu0
      %8223 = vmatprep.subr.bf16.mxu0 0
      %8224 = vmatpush1.bf16.msra.mxu0 %v8030
      %8225 = vmatprep.subr.bf16.mxu0 0
      %8226 = vmatpush1.bf16.msra.mxu0 %v8031
      %8227 = vmatprep.subr.bf16.mxu0 0
      %8228 = vmatpush1.bf16.msra.mxu0 %v8032
      %8229 = vmatprep.subr.bf16.mxu0 0
      %8230 = vmatpush1.bf16.msra.mxu0 %v8033
      %8231 = vmatprep.subr.bf16.mxu0 0
      %8232 = vmatpush1.bf16.msra.mxu0 %v8034
      %8233 = vmatprep.subr.bf16.mxu0 0
      %8234 = vmatpush1.bf16.msra.mxu0 %v8035
      %8235 = vmatprep.subr.bf16.mxu0 0
      %8236 = vmatpush1.bf16.msra.mxu0 %v8036
      %8237 = vmatprep.subr.bf16.mxu0 0
      %8238 = vmatpush1.bf16.msra.mxu0 %v8037
      %8239 = vmatprep.subr.bf16.mxu0 0
      %8240 = vmatpush1.bf16.msra.mxu0 %v8038
      %8241 = vmatprep.subr.bf16.mxu0 0
      %8242 = vmatpush1.bf16.msra.mxu0 %v8039
      %8243 = vmatprep.subr.bf16.mxu0 0
      %8244 = vmatpush1.bf16.msra.mxu0 %v8040
      %8245 = vmatprep.subr.bf16.mxu0 0
      %8246 = vmatpush1.bf16.msra.mxu0 %v8041
      %8247 = vmatprep.subr.bf16.mxu0 0
      %8248 = vmatpush1.bf16.msra.mxu0 %v8042
      %8249 = vmatprep.subr.bf16.mxu0 0
      %8250 = vmatpush1.bf16.msra.mxu0 %v8043
      %8251 = vmatprep.subr.bf16.mxu0 0
      %8252 = vmatpush1.bf16.msra.mxu0 %v8044
      %8253 = vmatprep.subr.bf16.mxu0 0
      %8254 = vmatpush1.bf16.msra.mxu0 %v8045
      %8255 = vmatprep.mubr.bf16.mxu0 %v7549
      %8256 = vmatmul.mubr.bf16.gmra.mrb[0].mxu0 %v7548
      %v8257 = vpop.f32.mrb[0].mxu0
      %v8258 = vadd.f32 %v8193, %v8257
      %v8259 = vpop.f32.mrb[0].mxu0
      %v8260 = vpop.f32.mrb[0].mxu0
      %v8261 = vadd.f32 %v8196, %v8260
      %v8262 = vpop.f32.mrb[0].mxu0
      %8263 = vmatprep.mubr.bf16.mxu0 %v7558
      %8264 = vmatmul.mubr.bf16.gmra.mrb[0].mxu0 %v7557
      %v8265 = vpop.f32.mrb[0].mxu0
      %v8266 = vadd.f32 %v8201, %v8265
      %v8267 = vpop.f32.mrb[0].mxu0
      %v8268 = vpop.f32.mrb[0].mxu0
      %v8269 = vadd.f32 %v8204, %v8268
      %v8270 = vpop.f32.mrb[0].mxu0
      %8271 = vmatprep.mubr.bf16.mxu0 %v7567
      %8272 = vmatmul.mubr.bf16.gmra.mrb[0].mxu0 %v7566
      %v8273 = vpop.f32.mrb[0].mxu0
      %v8274 = vadd.f32 %v8209, %v8273
      %v8275 = vpop.f32.mrb[0].mxu0
      %v8276 = vpop.f32.mrb[0].mxu0
      %v8277 = vadd.f32 %v8212, %v8276
      %v8278 = vpop.f32.mrb[0].mxu0
      %8279 = vmatprep.mubr.bf16.mxu0 %v7576
      %8280 = vmatmul.mubr.bf16.gmra.mrb[0].mxu0 %v7575
      %v8281 = vpop.f32.mrb[0].mxu0
      %v8282 = vadd.f32 %v8217, %v8281
      %v8283 = vpop.f32.mrb[0].mxu0
      %v8284 = vpop.f32.mrb[0].mxu0
      %v8285 = vadd.f32 %v8220, %v8284
      %v8286 = vpop.f32.mrb[0].mxu0
      %8287 = vdwg.mxu0
      %8288 = vmatprep.subr.bf16.mxu0 0
      %8289 = vmatpush1.bf16.msra.mxu0 %v8046
      %8290 = vmatprep.subr.bf16.mxu0 0
      %8291 = vmatpush1.bf16.msra.mxu0 %v8047
      %8292 = vmatprep.subr.bf16.mxu0 0
      %8293 = vmatpush1.bf16.msra.mxu0 %v8048
      %8294 = vmatprep.subr.bf16.mxu0 0
      %8295 = vmatpush1.bf16.msra.mxu0 %v8049
      %8296 = vmatprep.subr.bf16.mxu0 0
      %8297 = vmatpush1.bf16.msra.mxu0 %v8050
      %8298 = vmatprep.subr.bf16.mxu0 0
      %8299 = vmatpush1.bf16.msra.mxu0 %v8051
      %8300 = vmatprep.subr.bf16.mxu0 0
      %8301 = vmatpush1.bf16.msra.mxu0 %v8052
      %8302 = vmatprep.subr.bf16.mxu0 0
      %8303 = vmatpush1.bf16.msra.mxu0 %v8053
      %8304 = vmatprep.subr.bf16.mxu0 0
      %8305 = vmatpush1.bf16.msra.mxu0 %v8054
      %8306 = vmatprep.subr.bf16.mxu0 0
      %8307 = vmatpush1.bf16.msra.mxu0 %v8055
      %8308 = vmatprep.subr.bf16.mxu0 0
      %8309 = vmatpush1.bf16.msra.mxu0 %v8056
      %8310 = vmatprep.subr.bf16.mxu0 0
      %8311 = vmatpush1.bf16.msra.mxu0 %v8057
      %8312 = vmatprep.subr.bf16.mxu0 0
      %8313 = vmatpush1.bf16.msra.mxu0 %v8058
      %8314 = vmatprep.subr.bf16.mxu0 0
      %8315 = vmatpush1.bf16.msra.mxu0 %v8059
      %8316 = vmatprep.subr.bf16.mxu0 0
      %8317 = vmatpush1.bf16.msra.mxu0 %v8060
      %8318 = vmatprep.subr.bf16.mxu0 0
      %8319 = vmatpush1.bf16.msra.mxu0 %v8061
      %8320 = vmatprep.mubr.bf16.mxu0 %v7551
      %8321 = vmatmul.mubr.bf16.gmra.mrb[0].mxu0 %v7550
      %v8322 = vpop.f32.mrb[0].mxu0
      %v8323 = vadd.f32 %v8258, %v8322
      %v8324 = vpop.f32.mrb[0].mxu0
      %v8325 = vpop.f32.mrb[0].mxu0
      %v8326 = vadd.f32 %v8261, %v8325
      %v8327 = vpop.f32.mrb[0].mxu0
      %8328 = vmatprep.mubr.bf16.mxu0 %v7560
      %8329 = vmatmul.mubr.bf16.gmra.mrb[0].mxu0 %v7559
      %v8330 = vpop.f32.mrb[0].mxu0
      %v8331 = vadd.f32 %v8266, %v8330
      %v8332 = vpop.f32.mrb[0].mxu0
      %v8333 = vpop.f32.mrb[0].mxu0
      %v8334 = vadd.f32 %v8269, %v8333
      %v8335 = vpop.f32.mrb[0].mxu0
      %8336 = vmatprep.mubr.bf16.mxu0 %v7569
      %8337 = vmatmul.mubr.bf16.gmra.mrb[0].mxu0 %v7568
      %v8338 = vpop.f32.mrb[0].mxu0
      %v8339 = vadd.f32 %v8274, %v8338
      %v8340 = vpop.f32.mrb[0].mxu0
      %v8341 = vpop.f32.mrb[0].mxu0
      %v8342 = vadd.f32 %v8277, %v8341
      %v8343 = vpop.f32.mrb[0].mxu0
      %8344 = vmatprep.mubr.bf16.mxu0 %v7578
      %8345 = vmatmul.mubr.bf16.gmra.mrb[0].mxu0 %v7577
      %v8346 = vpop.f32.mrb[0].mxu0
      %v8347 = vadd.f32 %v8282, %v8346
      %v8348 = vpop.f32.mrb[0].mxu0
      %v8349 = vpop.f32.mrb[0].mxu0
      %v8350 = vadd.f32 %v8285, %v8349
      %v8351 = vpop.f32.mrb[0].mxu0
      %8352 = vdwg.mxu0
      %8353 = vmatprep.subr.bf16.mxu0 0
      %8354 = vmatpush1.bf16.msra.mxu0 %v8062
      %8355 = vmatprep.subr.bf16.mxu0 0
      %8356 = vmatpush1.bf16.msra.mxu0 %v8063
      %8357 = vmatprep.subr.bf16.mxu0 0
      %8358 = vmatpush1.bf16.msra.mxu0 %v8064
      %8359 = vmatprep.subr.bf16.mxu0 0
      %8360 = vmatpush1.bf16.msra.mxu0 %v8065
      %8361 = vmatprep.subr.bf16.mxu0 0
      %8362 = vmatpush1.bf16.msra.mxu0 %v8066
      %8363 = vmatprep.subr.bf16.mxu0 0
      %8364 = vmatpush1.bf16.msra.mxu0 %v8067
      %8365 = vmatprep.subr.bf16.mxu0 0
      %8366 = vmatpush1.bf16.msra.mxu0 %v8068
      %8367 = vmatprep.subr.bf16.mxu0 0
      %8368 = vmatpush1.bf16.msra.mxu0 %v8069
      %8369 = vmatprep.subr.bf16.mxu0 0
      %8370 = vmatpush1.bf16.msra.mxu0 %v8070
      %8371 = vmatprep.subr.bf16.mxu0 0
      %8372 = vmatpush1.bf16.msra.mxu0 %v8071
      %8373 = vmatprep.subr.bf16.mxu0 0
      %8374 = vmatpush1.bf16.msra.mxu0 %v8072
      %8375 = vmatprep.subr.bf16.mxu0 0
      %8376 = vmatpush1.bf16.msra.mxu0 %v8073
      %8377 = vmatprep.subr.bf16.mxu0 0
      %8378 = vmatpush1.bf16.msra.mxu0 %v8074
      %8379 = vmatprep.subr.bf16.mxu0 0
      %8380 = vmatpush1.bf16.msra.mxu0 %v8075
      %8381 = vmatprep.subr.bf16.mxu0 0
      %8382 = vmatpush1.bf16.msra.mxu0 %v8076
      %8383 = vmatprep.subr.bf16.mxu0 0
      %8384 = vmatpush1.bf16.msra.mxu0 %v8077
      %8385 = vmatprep.mubr.bf16.mxu0 %v7553
      %8386 = vmatmul.mubr.bf16.gmra.mrb[0].mxu0 %v7552
      %v8387 = vpop.f32.mrb[0].mxu0
      %v8388 = vadd.f32 %v8323, %v8387
      %v8389 = vpop.f32.mrb[0].mxu0
      %v8390 = vpop.f32.mrb[0].mxu0
      %v8391 = vadd.f32 %v8326, %v8390
      %v8392 = vpop.f32.mrb[0].mxu0
      %8393 = vmatprep.mubr.bf16.mxu0 %v7562
      %8394 = vmatmul.mubr.bf16.gmra.mrb[0].mxu0 %v7561
      %v8395 = vpop.f32.mrb[0].mxu0
      %v8396 = vadd.f32 %v8331, %v8395
      %v8397 = vpop.f32.mrb[0].mxu0
      %v8398 = vpop.f32.mrb[0].mxu0
      %v8399 = vadd.f32 %v8334, %v8398
      %v8400 = vpop.f32.mrb[0].mxu0
      %8401 = vmatprep.mubr.bf16.mxu0 %v7571
      %8402 = vmatmul.mubr.bf16.gmra.mrb[0].mxu0 %v7570
      %v8403 = vpop.f32.mrb[0].mxu0
      %v8404 = vadd.f32 %v8339, %v8403
      %v8405 = vpop.f32.mrb[0].mxu0
      %v8406 = vpop.f32.mrb[0].mxu0
      %v8407 = vadd.f32 %v8342, %v8406
      %v8408 = vpop.f32.mrb[0].mxu0
      %8409 = vmatprep.mubr.bf16.mxu0 %v7580
      %8410 = vmatmul.mubr.bf16.gmra.mrb[0].mxu0 %v7579
      %v8411 = vpop.f32.mrb[0].mxu0
      %v8412 = vadd.f32 %v8347, %v8411
      %v8413 = vpop.f32.mrb[0].mxu0
      %v8414 = vpop.f32.mrb[0].mxu0
      %v8415 = vadd.f32 %v8350, %v8414
      %v8416 = vpop.f32.mrb[0].mxu0
      %8417 = vdwg.mxu0
      %8418 = vmatprep.subr.bf16.mxu0 0
      %8419 = vmatpush1.bf16.msra.mxu0 %v8078
      %8420 = vmatprep.subr.bf16.mxu0 0
      %8421 = vmatpush1.bf16.msra.mxu0 %v8079
      %8422 = vmatprep.subr.bf16.mxu0 0
      %8423 = vmatpush1.bf16.msra.mxu0 %v8080
      %8424 = vmatprep.subr.bf16.mxu0 0
      %8425 = vmatpush1.bf16.msra.mxu0 %v8081
      %8426 = vmatprep.subr.bf16.mxu0 0
      %8427 = vmatpush1.bf16.msra.mxu0 %v8082
      %8428 = vmatprep.subr.bf16.mxu0 0
      %8429 = vmatpush1.bf16.msra.mxu0 %v8083
      %8430 = vmatprep.subr.bf16.mxu0 0
      %8431 = vmatpush1.bf16.msra.mxu0 %v8084
      %8432 = vmatprep.subr.bf16.mxu0 0
      %8433 = vmatpush1.bf16.msra.mxu0 %v8085
      %8434 = vmatprep.subr.bf16.mxu0 0
      %8435 = vmatpush1.bf16.msra.mxu0 0
      %8436 = vmatprep.subr.bf16.mxu0 0
      %8437 = vmatpush1.bf16.msra.mxu0 0
      %8438 = vmatprep.subr.bf16.mxu0 0
      %8439 = vmatpush1.bf16.msra.mxu0 0
      %8440 = vmatprep.subr.bf16.mxu0 0
      %8441 = vmatpush1.bf16.msra.mxu0 0
      %8442 = vmatprep.subr.bf16.mxu0 0
      %8443 = vmatpush1.bf16.msra.mxu0 0
      %8444 = vmatprep.subr.bf16.mxu0 0
      %8445 = vmatpush1.bf16.msra.mxu0 0
      %8446 = vmatprep.subr.bf16.mxu0 0
      %8447 = vmatpush1.bf16.msra.mxu0 0
      %8448 = vmatprep.subr.bf16.mxu0 0
      %8449 = vmatpush1.bf16.msra.mxu0 0
      %8450 = vmatprep.mubr.bf16.mxu0 0
      %8451 = vmatmul.mubr.bf16.gmra.mrb[0].mxu0 %v7554
      %v8452 = vpop.f32.mrb[0].mxu0
      %v8453 = vadd.f32 %v8388, %v8452
      %v8454 = vpop.f32.mrb[0].mxu0
      %v8455 = vpop.f32.mrb[0].mxu0
      %v8456 = vadd.f32 %v8391, %v8455
      %v8457 = vpop.f32.mrb[0].mxu0
      %8458 = vmatprep.mubr.bf16.mxu0 0
      %8459 = vmatmul.mubr.bf16.gmra.mrb[0].mxu0 %v7563
      %v8460 = vpop.f32.mrb[0].mxu0
      %v8461 = vadd.f32 %v8396, %v8460
      %v8462 = vpop.f32.mrb[0].mxu0
      %v8463 = vpop.f32.mrb[0].mxu0
      %v8464 = vadd.f32 %v8399, %v8463
      %v8465 = vpop.f32.mrb[0].mxu0
      %8466 = vmatprep.mubr.bf16.mxu0 0
      %8467 = vmatmul.mubr.bf16.gmra.mrb[0].mxu0 %v7572
      %v8468 = vpop.f32.mrb[0].mxu0
      %v8469 = vadd.f32 %v8404, %v8468
      %v8470 = vpop.f32.mrb[0].mxu0
      %v8471 = vpop.f32.mrb[0].mxu0
      %v8472 = vadd.f32 %v8407, %v8471
      %v8473 = vpop.f32.mrb[0].mxu0
      %8474 = vmatprep.mubr.bf16.mxu0 0
      %8475 = vmatmul.mubr.bf16.gmra.mrb[0].mxu0 %v7581
      %v8476 = vpop.f32.mrb[0].mxu0
      %v8477 = vadd.f32 %v8412, %v8476
      %v8478 = vpop.f32.mrb[0].mxu0
      %v8479 = vpop.f32.mrb[0].mxu0
      %v8480 = vadd.f32 %v8415, %v8479
      %v8481 = vpop.f32.mrb[0].mxu0
      %8482 = vdwg.mxu0
      %s8483 = scalar_lea.vmem %s170, 192
      %8484 = vst [vmem:[%s8483] sm:$0xff] %v8453
      %8485 = vst [vmem:[%s8483 + $0x8] sm:$0xff] %v8456
      %8486 = vst [vmem:[%s8483 + $0x10] sm:$0xff] %v8461
      %8487 = vst [vmem:[%s8483 + $0x18] sm:$0xff] %v8464
      %8488 = vst [vmem:[%s8483 + $0x20] sm:$0xff] %v8469
      %8489 = vst [vmem:[%s8483 + $0x28] sm:$0xff] %v8472
      %8490 = vst [vmem:[%s8483 + $0x30] sm:$0xff] %v8477
      %8491 = vst [vmem:[%s8483 + $0x38] sm:$0xff] %v8480
      %v8492 = vadd.f32 %v8453, %v8456
      %v8493 = vadd.f32 %v8492, %v8461
      %v8494 = vadd.f32 %v8493, %v8464
      %v8495 = vadd.f32 %v8494, %v8469
      %v8496 = vadd.f32 %v8495, %v8472
      %v8497 = vadd.f32 %v8496, %v8477
      %v8498 = vadd.f32 %v8497, %v8480
      %v8499 = vrot.slane %v8498, 4
      %v8500 = vadd.f32 %v8498, %v8499
      %v8501 = vrot.slane %v8500, 2
      %v8502 = vadd.f32 %v8500, %v8501
      %v8503 = vrot.slane %v8502, 1
      %v8504 = vadd.f32 %v8502, %v8503
      %v8505 = vadd.f32 %v6527, %v8504
      %v8506 = vmul.f32 %v8453, %v8453
      %v8507 = vmul.f32 %v8456, %v8456
      %v8508 = vmul.f32 %v8461, %v8461
      %v8509 = vmul.f32 %v8464, %v8464
      %v8510 = vmul.f32 %v8469, %v8469
      %v8511 = vmul.f32 %v8472, %v8472
      %v8512 = vmul.f32 %v8477, %v8477
      %v8513 = vmul.f32 %v8480, %v8480
      %v8514 = vadd.f32 %v8506, %v8507
      %v8515 = vadd.f32 %v8514, %v8508
      %v8516 = vadd.f32 %v8515, %v8509
      %v8517 = vadd.f32 %v8516, %v8510
      %v8518 = vadd.f32 %v8517, %v8511
      %v8519 = vadd.f32 %v8518, %v8512
      %v8520 = vadd.f32 %v8519, %v8513
      %v8521 = vrot.slane %v8520, 4
      %v8522 = vadd.f32 %v8520, %v8521
      %v8523 = vrot.slane %v8522, 2
      %v8524 = vadd.f32 %v8522, %v8523
      %v8525 = vrot.slane %v8524, 1
      %v8526 = vadd.f32 %v8524, %v8525
      %v8527 = vadd.f32 %v6549, %v8526
      %v8528 = vmul.f32 %v8505, %v533
      %v8529 = vmul.f32 %v8527, %v533
      %v8530 = vmul.f32 %v8528, %v8528
      %v8531 = vsub.f32 %v8529, %v8530
      %v8532 = vmax.f32 %v8531, 0.0
      %v8533 = vadd.f32 %v8532, 1e-05
      %v8534 = vrsqrt.pop %v8533
      %v8535 = vld [vmem:[%s170] sm:$0xff]
      %v8536 = vld [vmem:[%s170 + $0x8] sm:$0xff]
      %v8537 = vld [vmem:[%s170 + $0x10] sm:$0xff]
      %v8538 = vld [vmem:[%s170 + $0x18] sm:$0xff]
      %v8539 = vld [vmem:[%s170 + $0x20] sm:$0xff]
      %v8540 = vld [vmem:[%s170 + $0x28] sm:$0xff]
      %v8541 = vld [vmem:[%s170 + $0x30] sm:$0xff]
      %v8542 = vld [vmem:[%s170 + $0x38] sm:$0xff]
      %v8543 = vsub.f32 %v8535, %v8528
      %v8544 = vsub.f32 %v8536, %v8528
      %v8545 = vsub.f32 %v8537, %v8528
      %v8546 = vsub.f32 %v8538, %v8528
      %v8547 = vsub.f32 %v8539, %v8528
      %v8548 = vsub.f32 %v8540, %v8528
      %v8549 = vsub.f32 %v8541, %v8528
      %v8550 = vsub.f32 %v8542, %v8528
      %v8551 = vmul.f32 %v8543, %v8534
      %v8552 = vmul.f32 %v8544, %v8534
      %v8553 = vmul.f32 %v8545, %v8534
      %v8554 = vmul.f32 %v8546, %v8534
      %v8555 = vmul.f32 %v8547, %v8534
      %v8556 = vmul.f32 %v8548, %v8534
      %v8557 = vmul.f32 %v8549, %v8534
      %v8558 = vmul.f32 %v8550, %v8534
      %v8559 = vmul.f32 %v8551, 0.5
      %v8560 = vmul.f32 %v8552, 0.5
      %v8561 = vmul.f32 %v8553, 0.5
      %v8562 = vmul.f32 %v8554, 0.5
      %v8563 = vmul.f32 %v8555, 0.5
      %v8564 = vmul.f32 %v8556, 0.5
      %v8565 = vmul.f32 %v8557, 0.5
      %v8566 = vmul.f32 %v8558, 0.5
      %v8567 = vmul.f32 %v8551, 0.70710677
      %v8568 = vmul.f32 %v8552, 0.70710677
      %v8569 = vmul.f32 %v8553, 0.70710677
      %v8570 = vmul.f32 %v8554, 0.70710677
      %v8571 = vmul.f32 %v8555, 0.70710677
      %v8572 = vmul.f32 %v8556, 0.70710677
      %v8573 = vmul.f32 %v8557, 0.70710677
      %v8574 = vmul.f32 %v8558, 0.70710677
      %v8575 = verf.f32.pop %v8567
      %v8576 = verf.f32.pop %v8568
      %v8577 = verf.f32.pop %v8569
      %v8578 = verf.f32.pop %v8570
      %v8579 = verf.f32.pop %v8571
      %v8580 = verf.f32.pop %v8572
      %v8581 = verf.f32.pop %v8573
      %v8582 = verf.f32.pop %v8574
      %v8583 = vadd.f32 %v8575, 1.0
      %v8584 = vadd.f32 %v8576, 1.0
      %v8585 = vadd.f32 %v8577, 1.0
      %v8586 = vadd.f32 %v8578, 1.0
      %v8587 = vadd.f32 %v8579, 1.0
      %v8588 = vadd.f32 %v8580, 1.0
      %v8589 = vadd.f32 %v8581, 1.0
      %v8590 = vadd.f32 %v8582, 1.0
      %v8591 = vmul.f32 %v8559, %v8583
      %v8592 = vmul.f32 %v8560, %v8584
      %v8593 = vmul.f32 %v8561, %v8585
      %v8594 = vmul.f32 %v8562, %v8586
      %v8595 = vmul.f32 %v8563, %v8587
      %v8596 = vmul.f32 %v8564, %v8588
      %v8597 = vmul.f32 %v8565, %v8589
      %v8598 = vmul.f32 %v8566, %v8590
      %8599 = vst [vmem:[%s170] sm:$0xff] %v8591
      %8600 = vst [vmem:[%s170 + $0x8] sm:$0xff] %v8592
      %8601 = vst [vmem:[%s170 + $0x10] sm:$0xff] %v8593
      %8602 = vst [vmem:[%s170 + $0x18] sm:$0xff] %v8594
      %8603 = vst [vmem:[%s170 + $0x20] sm:$0xff] %v8595
      %8604 = vst [vmem:[%s170 + $0x28] sm:$0xff] %v8596
      %8605 = vst [vmem:[%s170 + $0x30] sm:$0xff] %v8597
      %8606 = vst [vmem:[%s170 + $0x38] sm:$0xff] %v8598
      %v8607 = vld [vmem:[%s4861] sm:$0xff]
      %v8608 = vld [vmem:[%s4861 + $0x8] sm:$0xff]
      %v8609 = vld [vmem:[%s4861 + $0x10] sm:$0xff]
      %v8610 = vld [vmem:[%s4861 + $0x18] sm:$0xff]
      %v8611 = vld [vmem:[%s4861 + $0x20] sm:$0xff]
      %v8612 = vld [vmem:[%s4861 + $0x28] sm:$0xff]
      %v8613 = vld [vmem:[%s4861 + $0x30] sm:$0xff]
      %v8614 = vld [vmem:[%s4861 + $0x38] sm:$0xff]
      %v8615 = vsub.f32 %v8607, %v8528
      %v8616 = vsub.f32 %v8608, %v8528
      %v8617 = vsub.f32 %v8609, %v8528
      %v8618 = vsub.f32 %v8610, %v8528
      %v8619 = vsub.f32 %v8611, %v8528
      %v8620 = vsub.f32 %v8612, %v8528
      %v8621 = vsub.f32 %v8613, %v8528
      %v8622 = vsub.f32 %v8614, %v8528
      %v8623 = vmul.f32 %v8615, %v8534
      %v8624 = vmul.f32 %v8616, %v8534
      %v8625 = vmul.f32 %v8617, %v8534
      %v8626 = vmul.f32 %v8618, %v8534
      %v8627 = vmul.f32 %v8619, %v8534
      %v8628 = vmul.f32 %v8620, %v8534
      %v8629 = vmul.f32 %v8621, %v8534
      %v8630 = vmul.f32 %v8622, %v8534
      %v8631 = vmul.f32 %v8623, 0.5
      %v8632 = vmul.f32 %v8624, 0.5
      %v8633 = vmul.f32 %v8625, 0.5
      %v8634 = vmul.f32 %v8626, 0.5
      %v8635 = vmul.f32 %v8627, 0.5
      %v8636 = vmul.f32 %v8628, 0.5
      %v8637 = vmul.f32 %v8629, 0.5
      %v8638 = vmul.f32 %v8630, 0.5
      %v8639 = vmul.f32 %v8623, 0.70710677
      %v8640 = vmul.f32 %v8624, 0.70710677
      %v8641 = vmul.f32 %v8625, 0.70710677
      %v8642 = vmul.f32 %v8626, 0.70710677
      %v8643 = vmul.f32 %v8627, 0.70710677
      %v8644 = vmul.f32 %v8628, 0.70710677
      %v8645 = vmul.f32 %v8629, 0.70710677
      %v8646 = vmul.f32 %v8630, 0.70710677
      %v8647 = verf.f32.pop %v8639
      %v8648 = verf.f32.pop %v8640
      %v8649 = verf.f32.pop %v8641
      %v8650 = verf.f32.pop %v8642
      %v8651 = verf.f32.pop %v8643
      %v8652 = verf.f32.pop %v8644
      %v8653 = verf.f32.pop %v8645
      %v8654 = verf.f32.pop %v8646
      %v8655 = vadd.f32 %v8647, 1.0
      %v8656 = vadd.f32 %v8648, 1.0
      %v8657 = vadd.f32 %v8649, 1.0
      %v8658 = vadd.f32 %v8650, 1.0
      %v8659 = vadd.f32 %v8651, 1.0
      %v8660 = vadd.f32 %v8652, 1.0
      %v8661 = vadd.f32 %v8653, 1.0
      %v8662 = vadd.f32 %v8654, 1.0
      %v8663 = vmul.f32 %v8631, %v8655
      %v8664 = vmul.f32 %v8632, %v8656
      %v8665 = vmul.f32 %v8633, %v8657
      %v8666 = vmul.f32 %v8634, %v8658
      %v8667 = vmul.f32 %v8635, %v8659
      %v8668 = vmul.f32 %v8636, %v8660
      %v8669 = vmul.f32 %v8637, %v8661
      %v8670 = vmul.f32 %v8638, %v8662
      %8671 = vst [vmem:[%s4861] sm:$0xff] %v8663
      %8672 = vst [vmem:[%s4861 + $0x8] sm:$0xff] %v8664
      %8673 = vst [vmem:[%s4861 + $0x10] sm:$0xff] %v8665
      %8674 = vst [vmem:[%s4861 + $0x18] sm:$0xff] %v8666
      %8675 = vst [vmem:[%s4861 + $0x20] sm:$0xff] %v8667
      %8676 = vst [vmem:[%s4861 + $0x28] sm:$0xff] %v8668
      %8677 = vst [vmem:[%s4861 + $0x30] sm:$0xff] %v8669
      %8678 = vst [vmem:[%s4861 + $0x38] sm:$0xff] %v8670
      %v8679 = vld [vmem:[%s6505] sm:$0xff]
      %v8680 = vld [vmem:[%s6505 + $0x8] sm:$0xff]
      %v8681 = vld [vmem:[%s6505 + $0x10] sm:$0xff]
      %v8682 = vld [vmem:[%s6505 + $0x18] sm:$0xff]
      %v8683 = vld [vmem:[%s6505 + $0x20] sm:$0xff]
      %v8684 = vld [vmem:[%s6505 + $0x28] sm:$0xff]
      %v8685 = vld [vmem:[%s6505 + $0x30] sm:$0xff]
      %v8686 = vld [vmem:[%s6505 + $0x38] sm:$0xff]
      %v8687 = vsub.f32 %v8679, %v8528
      %v8688 = vsub.f32 %v8680, %v8528
      %v8689 = vsub.f32 %v8681, %v8528
      %v8690 = vsub.f32 %v8682, %v8528
      %v8691 = vsub.f32 %v8683, %v8528
      %v8692 = vsub.f32 %v8684, %v8528
      %v8693 = vsub.f32 %v8685, %v8528
      %v8694 = vsub.f32 %v8686, %v8528
      %v8695 = vmul.f32 %v8687, %v8534
      %v8696 = vmul.f32 %v8688, %v8534
      %v8697 = vmul.f32 %v8689, %v8534
      %v8698 = vmul.f32 %v8690, %v8534
      %v8699 = vmul.f32 %v8691, %v8534
      %v8700 = vmul.f32 %v8692, %v8534
      %v8701 = vmul.f32 %v8693, %v8534
      %v8702 = vmul.f32 %v8694, %v8534
      %v8703 = vmul.f32 %v8695, 0.5
      %v8704 = vmul.f32 %v8696, 0.5
      %v8705 = vmul.f32 %v8697, 0.5
      %v8706 = vmul.f32 %v8698, 0.5
      %v8707 = vmul.f32 %v8699, 0.5
      %v8708 = vmul.f32 %v8700, 0.5
      %v8709 = vmul.f32 %v8701, 0.5
      %v8710 = vmul.f32 %v8702, 0.5
      %v8711 = vmul.f32 %v8695, 0.70710677
      %v8712 = vmul.f32 %v8696, 0.70710677
      %v8713 = vmul.f32 %v8697, 0.70710677
      %v8714 = vmul.f32 %v8698, 0.70710677
      %v8715 = vmul.f32 %v8699, 0.70710677
      %v8716 = vmul.f32 %v8700, 0.70710677
      %v8717 = vmul.f32 %v8701, 0.70710677
      %v8718 = vmul.f32 %v8702, 0.70710677
      %v8719 = verf.f32.pop %v8711
      %v8720 = verf.f32.pop %v8712
      %v8721 = verf.f32.pop %v8713
      %v8722 = verf.f32.pop %v8714
      %v8723 = verf.f32.pop %v8715
      %v8724 = verf.f32.pop %v8716
      %v8725 = verf.f32.pop %v8717
      %v8726 = verf.f32.pop %v8718
      %v8727 = vadd.f32 %v8719, 1.0
      %v8728 = vadd.f32 %v8720, 1.0
      %v8729 = vadd.f32 %v8721, 1.0
      %v8730 = vadd.f32 %v8722, 1.0
      %v8731 = vadd.f32 %v8723, 1.0
      %v8732 = vadd.f32 %v8724, 1.0
      %v8733 = vadd.f32 %v8725, 1.0
      %v8734 = vadd.f32 %v8726, 1.0
      %v8735 = vmul.f32 %v8703, %v8727
      %v8736 = vmul.f32 %v8704, %v8728
      %v8737 = vmul.f32 %v8705, %v8729
      %v8738 = vmul.f32 %v8706, %v8730
      %v8739 = vmul.f32 %v8707, %v8731
      %v8740 = vmul.f32 %v8708, %v8732
      %v8741 = vmul.f32 %v8709, %v8733
      %v8742 = vmul.f32 %v8710, %v8734
      %8743 = vst [vmem:[%s6505] sm:$0xff] %v8735
      %8744 = vst [vmem:[%s6505 + $0x8] sm:$0xff] %v8736
      %8745 = vst [vmem:[%s6505 + $0x10] sm:$0xff] %v8737
      %8746 = vst [vmem:[%s6505 + $0x18] sm:$0xff] %v8738
      %8747 = vst [vmem:[%s6505 + $0x20] sm:$0xff] %v8739
      %8748 = vst [vmem:[%s6505 + $0x28] sm:$0xff] %v8740
      %8749 = vst [vmem:[%s6505 + $0x30] sm:$0xff] %v8741
      %8750 = vst [vmem:[%s6505 + $0x38] sm:$0xff] %v8742
      %v8751 = vld [vmem:[%s8483] sm:$0xff]
      %v8752 = vld [vmem:[%s8483 + $0x8] sm:$0xff]
      %v8753 = vld [vmem:[%s8483 + $0x10] sm:$0xff]
      %v8754 = vld [vmem:[%s8483 + $0x18] sm:$0xff]
      %v8755 = vld [vmem:[%s8483 + $0x20] sm:$0xff]
      %v8756 = vld [vmem:[%s8483 + $0x28] sm:$0xff]
      %v8757 = vld [vmem:[%s8483 + $0x30] sm:$0xff]
      %v8758 = vld [vmem:[%s8483 + $0x38] sm:$0xff]
      %v8759 = vsub.f32 %v8751, %v8528
      %v8760 = vsub.f32 %v8752, %v8528
      %v8761 = vsub.f32 %v8753, %v8528
      %v8762 = vsub.f32 %v8754, %v8528
      %v8763 = vsub.f32 %v8755, %v8528
      %v8764 = vsub.f32 %v8756, %v8528
      %v8765 = vsub.f32 %v8757, %v8528
      %v8766 = vsub.f32 %v8758, %v8528
      %v8767 = vmul.f32 %v8759, %v8534
      %v8768 = vmul.f32 %v8760, %v8534
      %v8769 = vmul.f32 %v8761, %v8534
      %v8770 = vmul.f32 %v8762, %v8534
      %v8771 = vmul.f32 %v8763, %v8534
      %v8772 = vmul.f32 %v8764, %v8534
      %v8773 = vmul.f32 %v8765, %v8534
      %v8774 = vmul.f32 %v8766, %v8534
      %v8775 = vmul.f32 %v8767, 0.5
      %v8776 = vmul.f32 %v8768, 0.5
      %v8777 = vmul.f32 %v8769, 0.5
      %v8778 = vmul.f32 %v8770, 0.5
      %v8779 = vmul.f32 %v8771, 0.5
      %v8780 = vmul.f32 %v8772, 0.5
      %v8781 = vmul.f32 %v8773, 0.5
      %v8782 = vmul.f32 %v8774, 0.5
      %v8783 = vmul.f32 %v8767, 0.70710677
      %v8784 = vmul.f32 %v8768, 0.70710677
      %v8785 = vmul.f32 %v8769, 0.70710677
      %v8786 = vmul.f32 %v8770, 0.70710677
      %v8787 = vmul.f32 %v8771, 0.70710677
      %v8788 = vmul.f32 %v8772, 0.70710677
      %v8789 = vmul.f32 %v8773, 0.70710677
      %v8790 = vmul.f32 %v8774, 0.70710677
      %v8791 = verf.f32.pop %v8783
      %v8792 = verf.f32.pop %v8784
      %v8793 = verf.f32.pop %v8785
      %v8794 = verf.f32.pop %v8786
      %v8795 = verf.f32.pop %v8787
      %v8796 = verf.f32.pop %v8788
      %v8797 = verf.f32.pop %v8789
      %v8798 = verf.f32.pop %v8790
      %v8799 = vadd.f32 %v8791, 1.0
      %v8800 = vadd.f32 %v8792, 1.0
      %v8801 = vadd.f32 %v8793, 1.0
      %v8802 = vadd.f32 %v8794, 1.0
      %v8803 = vadd.f32 %v8795, 1.0
      %v8804 = vadd.f32 %v8796, 1.0
      %v8805 = vadd.f32 %v8797, 1.0
      %v8806 = vadd.f32 %v8798, 1.0
      %v8807 = vmul.f32 %v8775, %v8799
      %v8808 = vmul.f32 %v8776, %v8800
      %v8809 = vmul.f32 %v8777, %v8801
      %v8810 = vmul.f32 %v8778, %v8802
      %v8811 = vmul.f32 %v8779, %v8803
      %v8812 = vmul.f32 %v8780, %v8804
      %v8813 = vmul.f32 %v8781, %v8805
      %v8814 = vmul.f32 %v8782, %v8806
      %8815 = vst [vmem:[%s8483] sm:$0xff] %v8807
      %8816 = vst [vmem:[%s8483 + $0x8] sm:$0xff] %v8808
      %8817 = vst [vmem:[%s8483 + $0x10] sm:$0xff] %v8809
      %8818 = vst [vmem:[%s8483 + $0x18] sm:$0xff] %v8810
      %8819 = vst [vmem:[%s8483 + $0x20] sm:$0xff] %v8811
      %8820 = vst [vmem:[%s8483 + $0x28] sm:$0xff] %v8812
      %8821 = vst [vmem:[%s8483 + $0x30] sm:$0xff] %v8813
      %8822 = vst [vmem:[%s8483 + $0x38] sm:$0xff] %v8814
      %p8823 = scmp.lt.s32.totalorder %s14, 1
      %s8824 = scalar_select %p8823, %s14, 1
      %s8825 = smul.addr %s8824, 32
      %s8826 = smul.addr %s8825, 8
      %s8827 = scalar_lea.vmem %s3, %s8826
      // Predicated region
      $region33: #{ginka_upsample.1} parent=31 // pred_check
        %p8828 = pneg %p100
      $region34: #{ginka_upsample.1} parent=31 // pred_check_branch
        %8830 = sbr.rel (%p8828) target = $region36
      $region35: #{ginka_upsample.1} parent=31 // pred_region
        _
      $region36: #{ginka_upsample.1} parent=31 // pred_fallthru
        _
    $region32: #{ginka_upsample.1} parent=5 // pred_fallthru
      _
    %p8831 = scmp.le.s32.totalorder 2, %s9
    // Predicated region
    $region37: #{ginka_upsample.1} parent=5 // pred_check
      %p8832 = pneg %p8831
    $region38: #{ginka_upsample.1} parent=5 // pred_check_branch
      %8834 = sbr.rel (%p8832) target = $region40
    $region39: #{ginka_upsample.1} parent=5 // pred_region
      %s8835 = ssub.s32 %s9, 2
      // Predicated region
      $region41: #{ginka_upsample.1} parent=39 // pred_check
        %p8836 = pneg %p106
      $region42: #{ginka_upsample.1} parent=39 // pred_check_branch
        %8838 = sbr.rel (%p8836) target = $region44
      $region43: #{ginka_upsample.1} parent=39 // pred_region
        %p8839 = scmp.lt.s32.totalorder %s15, 1
        %s8840 = scalar_select %p8839, %s15, 1
        %s8841 = smul.addr %s8840, 32
        %s8842 = smul.addr %s8841, 8
        %s8843 = scalar_lea.vmem %s3, %s8842
      $region44: #{ginka_upsample.1} parent=39 // pred_fallthru
        _
    $region40: #{ginka_upsample.1} parent=5 // pred_fallthru
      _
  $region6: #{ginka_upsample.1} parent=0 // loop_footer
    %s13 = sadd.s32 1, %s9
  $region7: #{ginka_upsample.1} parent=0 // loop_footer_branch
    %8 = sbr.rel target = $region3
  $region8: #{ginka_upsample.1} parent=0 // loop_exit
    _

</llo_original>
